<compile_context>
chip_gen: v6e
topology: v6e:2x2x1
jax: 0.10.0
libtpu: 0.0.40
codegen_flags: <defaults>
</compile_context>

<pallas_src>
import jax
import jax.numpy as jnp
from jax.experimental import pallas as pl
from jax.experimental.pallas import tpu as pltpu

FEATURE = 16     # feature_size (LSTM input size)
HIDDEN = 32      # LSTM hidden size
LAYERS = 5       # num_layers
OUT = 6          # fc output features
OUT_PAD = 128    # lane-dense FC output width (sliced to OUT in the wrapper)


def _lstm_kernel(x_ref,        # (T, B, F)       f32  time-major input
                 wih0_ref,     # (F, 4H)         f32  layer-0 input weights (transposed)
                 wihr_ref,     # (L-1, H, 4H)    f32  layers 1..L-1 input weights (transposed)
                 whh_ref,      # (L, H, 4H)      f32  recurrent weights (transposed)
                 b_ref,        # (L, 1, 4H)      f32  b_ih + b_hh per layer
                 fcw_ref,      # (H, OUT_PAD)    f32  fc weight (transposed, zero-padded)
                 fcb_ref,      # (1, OUT_PAD)    f32  fc bias (zero-padded)
                 out_ref):     # (B, OUT_PAD)    f32
    T, B, _ = x_ref.shape
    H = HIDDEN

    h0 = jnp.zeros((B, H), jnp.float32)
    c0 = jnp.zeros((B, H), jnp.float32)

    def run_layer(inputs, wih, whh, b, keep_seq):
        # Hoisted input projection + bias: T independent MXU matmuls, none on
        # the serialized recurrence path.
        gx = [jnp.dot(v, wih, preferred_element_type=jnp.float32) + b for v in inputs]
        h, c = h0, c0
        outs = []
        for t in range(T):                                   # fully unrolled (T static)
            gates = gx[t] + jnp.dot(h, whh, preferred_element_type=jnp.float32)
            sg = jax.nn.sigmoid(gates)                       # one EUP pass, full 4H lanes
            th = jnp.tanh(gates)                             # one EUP pass, full 4H lanes
            i_g = sg[:, 0 * H:1 * H]
            f_g = sg[:, 1 * H:2 * H]
            g_g = th[:, 2 * H:3 * H]
            o_g = sg[:, 3 * H:4 * H]
            c = f_g * c + i_g * g_g
            h = o_g * jnp.tanh(c)
            if keep_seq:
                outs.append(h)                               # feeds next layer (vregs only)
        return outs, h

    # Layer 0: ReLU fused into the (hoisted) input loads.
    xs = [jnp.maximum(x_ref[t], 0.0) for t in range(T)]
    seq, h = run_layer(xs, wih0_ref[...], whh_ref[0], b_ref[0], keep_seq=True)

    # Layers 1 .. L-1 (zero initial state per layer, hx=None).
    # The top layer skips materialising its output sequence.
    for l in range(1, LAYERS):
        seq, h = run_layer(seq, wihr_ref[l - 1], whh_ref[l], b_ref[l],
                           keep_seq=(l < LAYERS - 1))

    # fc(r_out[:, -1, :]) with a lane-dense padded weight -> unmasked-lane store.
    out_ref[...] = (jnp.dot(h, fcw_ref[...], preferred_element_type=jnp.float32)
                    + fcb_ref[...])


def lstm_forward(x, params):
    """x: (B, T, F) float32 -> (B, OUT) float32."""
    B, T, _ = x.shape
    x_tm = jnp.transpose(x, (1, 0, 2))  # (T, B, F), time-major for the kernel

    n_in = 7
    out_pad = pl.pallas_call(
        _lstm_kernel,
        out_shape=jax.ShapeDtypeStruct((B, OUT_PAD), jnp.float32),
        in_specs=[pl.BlockSpec(memory_space=pltpu.MemorySpace.VMEM)] * n_in,
        out_specs=pl.BlockSpec(memory_space=pltpu.MemorySpace.VMEM),
    )(x_tm,
      params["wih0_t"], params["wihr_t"], params["whh_t"], params["b"],
      params["fcw_pad"], params["fcb_pad"])
    return out_pad[:, :OUT]


def init_params(key):
    """Deterministic PyTorch-style init: U(-1/sqrt(H), 1/sqrt(H))."""
    k = 1.0 / jnp.sqrt(jnp.float32(HIDDEN))
    keys = jax.random.split(key, 4 * LAYERS + 2)
    u = lambda kk, shape: jax.random.uniform(kk, shape, jnp.float32, -k, k)

    w_ih, w_hh, b_sum = [], [], []
    for l in range(LAYERS):
        in_sz = FEATURE if l == 0 else HIDDEN
        w_ih.append(u(keys[4 * l + 0], (4 * HIDDEN, in_sz)))
        w_hh.append(u(keys[4 * l + 1], (4 * HIDDEN, HIDDEN)))
        b_ih = u(keys[4 * l + 2], (4 * HIDDEN,))
        b_hh = u(keys[4 * l + 3], (4 * HIDDEN,))
        b_sum.append(b_ih + b_hh)

    fc_w = u(keys[-2], (OUT, HIDDEN))
    fc_b = u(keys[-1], (OUT,))

    # Lane-dense FC: pad (H, OUT) -> (H, OUT_PAD) and (OUT,) -> (1, OUT_PAD).
    fcw_pad = jnp.zeros((HIDDEN, OUT_PAD), jnp.float32).at[:, :OUT].set(fc_w.T)
    fcb_pad = jnp.zeros((1, OUT_PAD), jnp.float32).at[:, :OUT].set(fc_b)

    params = {
        "wih0_t": w_ih[0].T,                                        # (F, 4H)
        "wihr_t": jnp.stack([w.T for w in w_ih[1:]]),               # (L-1, H, 4H)
        "whh_t": jnp.stack([w.T for w in w_hh]),                    # (L, H, 4H)
        "b": jnp.stack([b.reshape(1, 4 * HIDDEN) for b in b_sum]),  # (L, 1, 4H)
        "fcw_pad": fcw_pad,                                         # (H, OUT_PAD)
        "fcb_pad": fcb_pad,                                         # (1, OUT_PAD)
    }
    # raw copies for the pure-JAX reference
    raw = {"w_ih": w_ih, "w_hh": w_hh, "b": b_sum, "fc_w": fc_w, "fc_b": fc_b}
    return params, raw


def reference_forward(x, raw):
    """Pure-JAX reference matching torch.nn.LSTM semantics (gate order i,f,g,o)."""
    B, T, _ = x.shape
    H = HIDDEN
    seq = jnp.maximum(x, 0.0)  # ReLU
    for l in range(LAYERS):
        w_ih, w_hh, b = raw["w_ih"][l], raw["w_hh"][l], raw["b"][l]
        h = jnp.zeros((B, H), jnp.float32)
        c = jnp.zeros((B, H), jnp.float32)
        outs = []
        for t in range(T):
            gates = seq[:, t, :] @ w_ih.T + h @ w_hh.T + b
            i_g = jax.nn.sigmoid(gates[:, 0 * H:1 * H])
            f_g = jax.nn.sigmoid(gates[:, 1 * H:2 * H])
            g_g = jnp.tanh(gates[:, 2 * H:3 * H])
            o_g = jax.nn.sigmoid(gates[:, 3 * H:4 * H])
            c = f_g * c + i_g * g_g
            h = o_g * jnp.tanh(c)
            outs.append(h)
        seq = jnp.stack(outs, axis=1)
    return seq[:, -1, :] @ raw["fc_w"].T + raw["fc_b"]


if __name__ == "__main__":
    key = jax.random.PRNGKey(0)
    kp, kx = jax.random.split(key)
    params, raw = init_params(kp)

    B, T = 2, 8
    x = jax.random.normal(kx, (B, T, FEATURE), jnp.float32)

    out = jax.block_until_ready(lstm_forward(x, params))
    ref = reference_forward(x, raw)

    assert out.shape == (B, OUT), out.shape
    assert jnp.allclose(out, ref, atol=1e-3, rtol=1e-3), (out, ref)
    print("KERNEL_OK")
</pallas_src>

<mosaic_0001>
module attributes {stable_mosaic.version = 11 : i64} {
  func.func @_lstm_kernel(%arg0: memref<8x2x16xf32, #tpu.memory_space<vmem>>, %arg1: memref<16x128xf32, #tpu.memory_space<vmem>>, %arg2: memref<4x32x128xf32, #tpu.memory_space<vmem>>, %arg3: memref<5x32x128xf32, #tpu.memory_space<vmem>>, %arg4: memref<5x1x128xf32, #tpu.memory_space<vmem>>, %arg5: memref<32x128xf32, #tpu.memory_space<vmem>>, %arg6: memref<1x128xf32, #tpu.memory_space<vmem>>, %arg7: memref<2x128xf32, #tpu.memory_space<vmem>>) attributes {dimension_semantics = [], scalar_prefetch = 0 : i64, scratch_operands = 0 : i64, tpu.core_type = #tpu.core_type<tc>} {
    %cst = arith.constant 0.000000e+00 : f32
    %0 = vector.broadcast %cst : f32 to vector<2x32xf32>
    %cst_0 = arith.constant 0.000000e+00 : f32
    %1 = vector.broadcast %cst_0 : f32 to vector<2x32xf32>
    %c0 = arith.constant 0 : index
    %c0_1 = arith.constant 0 : index
    %c0_2 = arith.constant 0 : index
    %2 = vector.load %arg0[%c0, %c0_1, %c0_2] : memref<8x2x16xf32, #tpu.memory_space<vmem>>, vector<1x2x16xf32>
    %3 = vector.shape_cast %2 : vector<1x2x16xf32> to vector<2x16xf32>
    %cst_3 = arith.constant 0.000000e+00 : f32
    %4 = vector.broadcast %cst_3 : f32 to vector<2x16xf32>
    %5 = arith.maximumf %3, %4 : vector<2x16xf32>
    %c1 = arith.constant 1 : index
    %c0_4 = arith.constant 0 : index
    %c0_5 = arith.constant 0 : index
    %6 = vector.load %arg0[%c1, %c0_4, %c0_5] : memref<8x2x16xf32, #tpu.memory_space<vmem>>, vector<1x2x16xf32>
    %7 = vector.shape_cast %6 : vector<1x2x16xf32> to vector<2x16xf32>
    %cst_6 = arith.constant 0.000000e+00 : f32
    %8 = vector.broadcast %cst_6 : f32 to vector<2x16xf32>
    %9 = arith.maximumf %7, %8 : vector<2x16xf32>
    %c2 = arith.constant 2 : index
    %c0_7 = arith.constant 0 : index
    %c0_8 = arith.constant 0 : index
    %10 = vector.load %arg0[%c2, %c0_7, %c0_8] : memref<8x2x16xf32, #tpu.memory_space<vmem>>, vector<1x2x16xf32>
    %11 = vector.shape_cast %10 : vector<1x2x16xf32> to vector<2x16xf32>
    %cst_9 = arith.constant 0.000000e+00 : f32
    %12 = vector.broadcast %cst_9 : f32 to vector<2x16xf32>
    %13 = arith.maximumf %11, %12 : vector<2x16xf32>
    %c3 = arith.constant 3 : index
    %c0_10 = arith.constant 0 : index
    %c0_11 = arith.constant 0 : index
    %14 = vector.load %arg0[%c3, %c0_10, %c0_11] : memref<8x2x16xf32, #tpu.memory_space<vmem>>, vector<1x2x16xf32>
    %15 = vector.shape_cast %14 : vector<1x2x16xf32> to vector<2x16xf32>
    %cst_12 = arith.constant 0.000000e+00 : f32
    %16 = vector.broadcast %cst_12 : f32 to vector<2x16xf32>
    %17 = arith.maximumf %15, %16 : vector<2x16xf32>
    %c4 = arith.constant 4 : index
    %c0_13 = arith.constant 0 : index
    %c0_14 = arith.constant 0 : index
    %18 = vector.load %arg0[%c4, %c0_13, %c0_14] : memref<8x2x16xf32, #tpu.memory_space<vmem>>, vector<1x2x16xf32>
    %19 = vector.shape_cast %18 : vector<1x2x16xf32> to vector<2x16xf32>
    %cst_15 = arith.constant 0.000000e+00 : f32
    %20 = vector.broadcast %cst_15 : f32 to vector<2x16xf32>
    %21 = arith.maximumf %19, %20 : vector<2x16xf32>
    %c5 = arith.constant 5 : index
    %c0_16 = arith.constant 0 : index
    %c0_17 = arith.constant 0 : index
    %22 = vector.load %arg0[%c5, %c0_16, %c0_17] : memref<8x2x16xf32, #tpu.memory_space<vmem>>, vector<1x2x16xf32>
    %23 = vector.shape_cast %22 : vector<1x2x16xf32> to vector<2x16xf32>
    %cst_18 = arith.constant 0.000000e+00 : f32
    %24 = vector.broadcast %cst_18 : f32 to vector<2x16xf32>
    %25 = arith.maximumf %23, %24 : vector<2x16xf32>
    %c6 = arith.constant 6 : index
    %c0_19 = arith.constant 0 : index
    %c0_20 = arith.constant 0 : index
    %26 = vector.load %arg0[%c6, %c0_19, %c0_20] : memref<8x2x16xf32, #tpu.memory_space<vmem>>, vector<1x2x16xf32>
    %27 = vector.shape_cast %26 : vector<1x2x16xf32> to vector<2x16xf32>
    %cst_21 = arith.constant 0.000000e+00 : f32
    %28 = vector.broadcast %cst_21 : f32 to vector<2x16xf32>
    %29 = arith.maximumf %27, %28 : vector<2x16xf32>
    %c7 = arith.constant 7 : index
    %c0_22 = arith.constant 0 : index
    %c0_23 = arith.constant 0 : index
    %30 = vector.load %arg0[%c7, %c0_22, %c0_23] : memref<8x2x16xf32, #tpu.memory_space<vmem>>, vector<1x2x16xf32>
    %31 = vector.shape_cast %30 : vector<1x2x16xf32> to vector<2x16xf32>
    %cst_24 = arith.constant 0.000000e+00 : f32
    %32 = vector.broadcast %cst_24 : f32 to vector<2x16xf32>
    %33 = arith.maximumf %31, %32 : vector<2x16xf32>
    %c0_25 = arith.constant 0 : index
    %c0_26 = arith.constant 0 : index
    %34 = vector.load %arg1[%c0_25, %c0_26] : memref<16x128xf32, #tpu.memory_space<vmem>>, vector<16x128xf32>
    %c0_27 = arith.constant 0 : index
    %c0_28 = arith.constant 0 : index
    %c0_29 = arith.constant 0 : index
    %35 = vector.load %arg3[%c0_27, %c0_28, %c0_29] : memref<5x32x128xf32, #tpu.memory_space<vmem>>, vector<1x32x128xf32>
    %36 = vector.shape_cast %35 : vector<1x32x128xf32> to vector<32x128xf32>
    %c0_30 = arith.constant 0 : index
    %c0_31 = arith.constant 0 : index
    %c0_32 = arith.constant 0 : index
    %37 = vector.load %arg4[%c0_30, %c0_31, %c0_32] : memref<5x1x128xf32, #tpu.memory_space<vmem>>, vector<1x1x128xf32>
    %38 = vector.shape_cast %37 : vector<1x1x128xf32> to vector<1x128xf32>
    %cst_33 = arith.constant dense<0.000000e+00> : vector<2x128xf32>
    %39 = tpu.matmul %5, %34, %cst_33 {dimension_numbers = #tpu.dot_dimension_numbers<[1], [0], [0], [1], [0, 0, 1, 1], [], []>} : vector<2x16xf32>, vector<16x128xf32>, vector<2x128xf32> -> vector<2x128xf32>
    %40 = vector.broadcast %38 : vector<1x128xf32> to vector<2x128xf32>
    %41 = arith.addf %39, %40 : vector<2x128xf32>
    %cst_34 = arith.constant dense<0.000000e+00> : vector<2x128xf32>
    %42 = tpu.matmul %9, %34, %cst_34 {dimension_numbers = #tpu.dot_dimension_numbers<[1], [0], [0], [1], [0, 0, 1, 1], [], []>} : vector<2x16xf32>, vector<16x128xf32>, vector<2x128xf32> -> vector<2x128xf32>
    %43 = vector.broadcast %38 : vector<1x128xf32> to vector<2x128xf32>
    %44 = arith.addf %42, %43 : vector<2x128xf32>
    %cst_35 = arith.constant dense<0.000000e+00> : vector<2x128xf32>
    %45 = tpu.matmul %13, %34, %cst_35 {dimension_numbers = #tpu.dot_dimension_numbers<[1], [0], [0], [1], [0, 0, 1, 1], [], []>} : vector<2x16xf32>, vector<16x128xf32>, vector<2x128xf32> -> vector<2x128xf32>
    %46 = vector.broadcast %38 : vector<1x128xf32> to vector<2x128xf32>
    %47 = arith.addf %45, %46 : vector<2x128xf32>
    %cst_36 = arith.constant dense<0.000000e+00> : vector<2x128xf32>
    %48 = tpu.matmul %17, %34, %cst_36 {dimension_numbers = #tpu.dot_dimension_numbers<[1], [0], [0], [1], [0, 0, 1, 1], [], []>} : vector<2x16xf32>, vector<16x128xf32>, vector<2x128xf32> -> vector<2x128xf32>
    %49 = vector.broadcast %38 : vector<1x128xf32> to vector<2x128xf32>
    %50 = arith.addf %48, %49 : vector<2x128xf32>
    %cst_37 = arith.constant dense<0.000000e+00> : vector<2x128xf32>
    %51 = tpu.matmul %21, %34, %cst_37 {dimension_numbers = #tpu.dot_dimension_numbers<[1], [0], [0], [1], [0, 0, 1, 1], [], []>} : vector<2x16xf32>, vector<16x128xf32>, vector<2x128xf32> -> vector<2x128xf32>
    %52 = vector.broadcast %38 : vector<1x128xf32> to vector<2x128xf32>
    %53 = arith.addf %51, %52 : vector<2x128xf32>
    %cst_38 = arith.constant dense<0.000000e+00> : vector<2x128xf32>
    %54 = tpu.matmul %25, %34, %cst_38 {dimension_numbers = #tpu.dot_dimension_numbers<[1], [0], [0], [1], [0, 0, 1, 1], [], []>} : vector<2x16xf32>, vector<16x128xf32>, vector<2x128xf32> -> vector<2x128xf32>
    %55 = vector.broadcast %38 : vector<1x128xf32> to vector<2x128xf32>
    %56 = arith.addf %54, %55 : vector<2x128xf32>
    %cst_39 = arith.constant dense<0.000000e+00> : vector<2x128xf32>
    %57 = tpu.matmul %29, %34, %cst_39 {dimension_numbers = #tpu.dot_dimension_numbers<[1], [0], [0], [1], [0, 0, 1, 1], [], []>} : vector<2x16xf32>, vector<16x128xf32>, vector<2x128xf32> -> vector<2x128xf32>
    %58 = vector.broadcast %38 : vector<1x128xf32> to vector<2x128xf32>
    %59 = arith.addf %57, %58 : vector<2x128xf32>
    %cst_40 = arith.constant dense<0.000000e+00> : vector<2x128xf32>
    %60 = tpu.matmul %33, %34, %cst_40 {dimension_numbers = #tpu.dot_dimension_numbers<[1], [0], [0], [1], [0, 0, 1, 1], [], []>} : vector<2x16xf32>, vector<16x128xf32>, vector<2x128xf32> -> vector<2x128xf32>
    %61 = vector.broadcast %38 : vector<1x128xf32> to vector<2x128xf32>
    %62 = arith.addf %60, %61 : vector<2x128xf32>
    %cst_41 = arith.constant dense<0.000000e+00> : vector<2x128xf32>
    %63 = tpu.matmul %0, %36, %cst_41 {dimension_numbers = #tpu.dot_dimension_numbers<[1], [0], [0], [1], [0, 0, 1, 1], [], []>} : vector<2x32xf32>, vector<32x128xf32>, vector<2x128xf32> -> vector<2x128xf32>
    %64 = arith.addf %41, %63 : vector<2x128xf32>
    %65 = arith.negf %64 : vector<2x128xf32>
    %66 = math.exp %65 : vector<2x128xf32>
    %cst_42 = arith.constant 1.000000e+00 : f32
    %67 = vector.broadcast %cst_42 : f32 to vector<2x128xf32>
    %68 = arith.addf %67, %66 : vector<2x128xf32>
    %69 = arith.divf %67, %68 : vector<2x128xf32>
    %70 = math.tanh %64 : vector<2x128xf32>
    %71 = vector.extract_strided_slice %69 {offsets = [0, 0], sizes = [2, 32], strides = [1, 1]} : vector<2x128xf32> to vector<2x32xf32>
    %72 = vector.extract_strided_slice %69 {offsets = [0, 32], sizes = [2, 32], strides = [1, 1]} : vector<2x128xf32> to vector<2x32xf32>
    %73 = vector.extract_strided_slice %70 {offsets = [0, 64], sizes = [2, 32], strides = [1, 1]} : vector<2x128xf32> to vector<2x32xf32>
    %74 = vector.extract_strided_slice %69 {offsets = [0, 96], sizes = [2, 32], strides = [1, 1]} : vector<2x128xf32> to vector<2x32xf32>
    %75 = arith.mulf %72, %1 : vector<2x32xf32>
    %76 = arith.mulf %71, %73 : vector<2x32xf32>
    %77 = arith.addf %75, %76 : vector<2x32xf32>
    %78 = math.tanh %77 : vector<2x32xf32>
    %79 = arith.mulf %74, %78 : vector<2x32xf32>
    %cst_43 = arith.constant dense<0.000000e+00> : vector<2x128xf32>
    %80 = tpu.matmul %79, %36, %cst_43 {dimension_numbers = #tpu.dot_dimension_numbers<[1], [0], [0], [1], [0, 0, 1, 1], [], []>} : vector<2x32xf32>, vector<32x128xf32>, vector<2x128xf32> -> vector<2x128xf32>
    %81 = arith.addf %44, %80 : vector<2x128xf32>
    %82 = arith.negf %81 : vector<2x128xf32>
    %83 = math.exp %82 : vector<2x128xf32>
    %cst_44 = arith.constant 1.000000e+00 : f32
    %84 = vector.broadcast %cst_44 : f32 to vector<2x128xf32>
    %85 = arith.addf %84, %83 : vector<2x128xf32>
    %86 = arith.divf %84, %85 : vector<2x128xf32>
    %87 = math.tanh %81 : vector<2x128xf32>
    %88 = vector.extract_strided_slice %86 {offsets = [0, 0], sizes = [2, 32], strides = [1, 1]} : vector<2x128xf32> to vector<2x32xf32>
    %89 = vector.extract_strided_slice %86 {offsets = [0, 32], sizes = [2, 32], strides = [1, 1]} : vector<2x128xf32> to vector<2x32xf32>
    %90 = vector.extract_strided_slice %87 {offsets = [0, 64], sizes = [2, 32], strides = [1, 1]} : vector<2x128xf32> to vector<2x32xf32>
    %91 = vector.extract_strided_slice %86 {offsets = [0, 96], sizes = [2, 32], strides = [1, 1]} : vector<2x128xf32> to vector<2x32xf32>
    %92 = arith.mulf %89, %77 : vector<2x32xf32>
    %93 = arith.mulf %88, %90 : vector<2x32xf32>
    %94 = arith.addf %92, %93 : vector<2x32xf32>
    %95 = math.tanh %94 : vector<2x32xf32>
    %96 = arith.mulf %91, %95 : vector<2x32xf32>
    %cst_45 = arith.constant dense<0.000000e+00> : vector<2x128xf32>
    %97 = tpu.matmul %96, %36, %cst_45 {dimension_numbers = #tpu.dot_dimension_numbers<[1], [0], [0], [1], [0, 0, 1, 1], [], []>} : vector<2x32xf32>, vector<32x128xf32>, vector<2x128xf32> -> vector<2x128xf32>
    %98 = arith.addf %47, %97 : vector<2x128xf32>
    %99 = arith.negf %98 : vector<2x128xf32>
    %100 = math.exp %99 : vector<2x128xf32>
    %cst_46 = arith.constant 1.000000e+00 : f32
    %101 = vector.broadcast %cst_46 : f32 to vector<2x128xf32>
    %102 = arith.addf %101, %100 : vector<2x128xf32>
    %103 = arith.divf %101, %102 : vector<2x128xf32>
    %104 = math.tanh %98 : vector<2x128xf32>
    %105 = vector.extract_strided_slice %103 {offsets = [0, 0], sizes = [2, 32], strides = [1, 1]} : vector<2x128xf32> to vector<2x32xf32>
    %106 = vector.extract_strided_slice %103 {offsets = [0, 32], sizes = [2, 32], strides = [1, 1]} : vector<2x128xf32> to vector<2x32xf32>
    %107 = vector.extract_strided_slice %104 {offsets = [0, 64], sizes = [2, 32], strides = [1, 1]} : vector<2x128xf32> to vector<2x32xf32>
    %108 = vector.extract_strided_slice %103 {offsets = [0, 96], sizes = [2, 32], strides = [1, 1]} : vector<2x128xf32> to vector<2x32xf32>
    %109 = arith.mulf %106, %94 : vector<2x32xf32>
    %110 = arith.mulf %105, %107 : vector<2x32xf32>
    %111 = arith.addf %109, %110 : vector<2x32xf32>
    %112 = math.tanh %111 : vector<2x32xf32>
    %113 = arith.mulf %108, %112 : vector<2x32xf32>
    %cst_47 = arith.constant dense<0.000000e+00> : vector<2x128xf32>
    %114 = tpu.matmul %113, %36, %cst_47 {dimension_numbers = #tpu.dot_dimension_numbers<[1], [0], [0], [1], [0, 0, 1, 1], [], []>} : vector<2x32xf32>, vector<32x128xf32>, vector<2x128xf32> -> vector<2x128xf32>
    %115 = arith.addf %50, %114 : vector<2x128xf32>
    %116 = arith.negf %115 : vector<2x128xf32>
    %117 = math.exp %116 : vector<2x128xf32>
    %cst_48 = arith.constant 1.000000e+00 : f32
    %118 = vector.broadcast %cst_48 : f32 to vector<2x128xf32>
    %119 = arith.addf %118, %117 : vector<2x128xf32>
    %120 = arith.divf %118, %119 : vector<2x128xf32>
    %121 = math.tanh %115 : vector<2x128xf32>
    %122 = vector.extract_strided_slice %120 {offsets = [0, 0], sizes = [2, 32], strides = [1, 1]} : vector<2x128xf32> to vector<2x32xf32>
    %123 = vector.extract_strided_slice %120 {offsets = [0, 32], sizes = [2, 32], strides = [1, 1]} : vector<2x128xf32> to vector<2x32xf32>
    %124 = vector.extract_strided_slice %121 {offsets = [0, 64], sizes = [2, 32], strides = [1, 1]} : vector<2x128xf32> to vector<2x32xf32>
    %125 = vector.extract_strided_slice %120 {offsets = [0, 96], sizes = [2, 32], strides = [1, 1]} : vector<2x128xf32> to vector<2x32xf32>
    %126 = arith.mulf %123, %111 : vector<2x32xf32>
    %127 = arith.mulf %122, %124 : vector<2x32xf32>
    %128 = arith.addf %126, %127 : vector<2x32xf32>
    %129 = math.tanh %128 : vector<2x32xf32>
    %130 = arith.mulf %125, %129 : vector<2x32xf32>
    %cst_49 = arith.constant dense<0.000000e+00> : vector<2x128xf32>
    %131 = tpu.matmul %130, %36, %cst_49 {dimension_numbers = #tpu.dot_dimension_numbers<[1], [0], [0], [1], [0, 0, 1, 1], [], []>} : vector<2x32xf32>, vector<32x128xf32>, vector<2x128xf32> -> vector<2x128xf32>
    %132 = arith.addf %53, %131 : vector<2x128xf32>
    %133 = arith.negf %132 : vector<2x128xf32>
    %134 = math.exp %133 : vector<2x128xf32>
    %cst_50 = arith.constant 1.000000e+00 : f32
    %135 = vector.broadcast %cst_50 : f32 to vector<2x128xf32>
    %136 = arith.addf %135, %134 : vector<2x128xf32>
    %137 = arith.divf %135, %136 : vector<2x128xf32>
    %138 = math.tanh %132 : vector<2x128xf32>
    %139 = vector.extract_strided_slice %137 {offsets = [0, 0], sizes = [2, 32], strides = [1, 1]} : vector<2x128xf32> to vector<2x32xf32>
    %140 = vector.extract_strided_slice %137 {offsets = [0, 32], sizes = [2, 32], strides = [1, 1]} : vector<2x128xf32> to vector<2x32xf32>
    %141 = vector.extract_strided_slice %138 {offsets = [0, 64], sizes = [2, 32], strides = [1, 1]} : vector<2x128xf32> to vector<2x32xf32>
    %142 = vector.extract_strided_slice %137 {offsets = [0, 96], sizes = [2, 32], strides = [1, 1]} : vector<2x128xf32> to vector<2x32xf32>
    %143 = arith.mulf %140, %128 : vector<2x32xf32>
    %144 = arith.mulf %139, %141 : vector<2x32xf32>
    %145 = arith.addf %143, %144 : vector<2x32xf32>
    %146 = math.tanh %145 : vector<2x32xf32>
    %147 = arith.mulf %142, %146 : vector<2x32xf32>
    %cst_51 = arith.constant dense<0.000000e+00> : vector<2x128xf32>
    %148 = tpu.matmul %147, %36, %cst_51 {dimension_numbers = #tpu.dot_dimension_numbers<[1], [0], [0], [1], [0, 0, 1, 1], [], []>} : vector<2x32xf32>, vector<32x128xf32>, vector<2x128xf32> -> vector<2x128xf32>
    %149 = arith.addf %56, %148 : vector<2x128xf32>
    %150 = arith.negf %149 : vector<2x128xf32>
    %151 = math.exp %150 : vector<2x128xf32>
    %cst_52 = arith.constant 1.000000e+00 : f32
    %152 = vector.broadcast %cst_52 : f32 to vector<2x128xf32>
    %153 = arith.addf %152, %151 : vector<2x128xf32>
    %154 = arith.divf %152, %153 : vector<2x128xf32>
    %155 = math.tanh %149 : vector<2x128xf32>
    %156 = vector.extract_strided_slice %154 {offsets = [0, 0], sizes = [2, 32], strides = [1, 1]} : vector<2x128xf32> to vector<2x32xf32>
    %157 = vector.extract_strided_slice %154 {offsets = [0, 32], sizes = [2, 32], strides = [1, 1]} : vector<2x128xf32> to vector<2x32xf32>
    %158 = vector.extract_strided_slice %155 {offsets = [0, 64], sizes = [2, 32], strides = [1, 1]} : vector<2x128xf32> to vector<2x32xf32>
    %159 = vector.extract_strided_slice %154 {offsets = [0, 96], sizes = [2, 32], strides = [1, 1]} : vector<2x128xf32> to vector<2x32xf32>
    %160 = arith.mulf %157, %145 : vector<2x32xf32>
    %161 = arith.mulf %156, %158 : vector<2x32xf32>
    %162 = arith.addf %160, %161 : vector<2x32xf32>
    %163 = math.tanh %162 : vector<2x32xf32>
    %164 = arith.mulf %159, %163 : vector<2x32xf32>
    %cst_53 = arith.constant dense<0.000000e+00> : vector<2x128xf32>
    %165 = tpu.matmul %164, %36, %cst_53 {dimension_numbers = #tpu.dot_dimension_numbers<[1], [0], [0], [1], [0, 0, 1, 1], [], []>} : vector<2x32xf32>, vector<32x128xf32>, vector<2x128xf32> -> vector<2x128xf32>
    %166 = arith.addf %59, %165 : vector<2x128xf32>
    %167 = arith.negf %166 : vector<2x128xf32>
    %168 = math.exp %167 : vector<2x128xf32>
    %cst_54 = arith.constant 1.000000e+00 : f32
    %169 = vector.broadcast %cst_54 : f32 to vector<2x128xf32>
    %170 = arith.addf %169, %168 : vector<2x128xf32>
    %171 = arith.divf %169, %170 : vector<2x128xf32>
    %172 = math.tanh %166 : vector<2x128xf32>
    %173 = vector.extract_strided_slice %171 {offsets = [0, 0], sizes = [2, 32], strides = [1, 1]} : vector<2x128xf32> to vector<2x32xf32>
    %174 = vector.extract_strided_slice %171 {offsets = [0, 32], sizes = [2, 32], strides = [1, 1]} : vector<2x128xf32> to vector<2x32xf32>
    %175 = vector.extract_strided_slice %172 {offsets = [0, 64], sizes = [2, 32], strides = [1, 1]} : vector<2x128xf32> to vector<2x32xf32>
    %176 = vector.extract_strided_slice %171 {offsets = [0, 96], sizes = [2, 32], strides = [1, 1]} : vector<2x128xf32> to vector<2x32xf32>
    %177 = arith.mulf %174, %162 : vector<2x32xf32>
    %178 = arith.mulf %173, %175 : vector<2x32xf32>
    %179 = arith.addf %177, %178 : vector<2x32xf32>
    %180 = math.tanh %179 : vector<2x32xf32>
    %181 = arith.mulf %176, %180 : vector<2x32xf32>
    %cst_55 = arith.constant dense<0.000000e+00> : vector<2x128xf32>
    %182 = tpu.matmul %181, %36, %cst_55 {dimension_numbers = #tpu.dot_dimension_numbers<[1], [0], [0], [1], [0, 0, 1, 1], [], []>} : vector<2x32xf32>, vector<32x128xf32>, vector<2x128xf32> -> vector<2x128xf32>
    %183 = arith.addf %62, %182 : vector<2x128xf32>
    %184 = arith.negf %183 : vector<2x128xf32>
    %185 = math.exp %184 : vector<2x128xf32>
    %cst_56 = arith.constant 1.000000e+00 : f32
    %186 = vector.broadcast %cst_56 : f32 to vector<2x128xf32>
    %187 = arith.addf %186, %185 : vector<2x128xf32>
    %188 = arith.divf %186, %187 : vector<2x128xf32>
    %189 = math.tanh %183 : vector<2x128xf32>
    %190 = vector.extract_strided_slice %188 {offsets = [0, 0], sizes = [2, 32], strides = [1, 1]} : vector<2x128xf32> to vector<2x32xf32>
    %191 = vector.extract_strided_slice %188 {offsets = [0, 32], sizes = [2, 32], strides = [1, 1]} : vector<2x128xf32> to vector<2x32xf32>
    %192 = vector.extract_strided_slice %189 {offsets = [0, 64], sizes = [2, 32], strides = [1, 1]} : vector<2x128xf32> to vector<2x32xf32>
    %193 = vector.extract_strided_slice %188 {offsets = [0, 96], sizes = [2, 32], strides = [1, 1]} : vector<2x128xf32> to vector<2x32xf32>
    %194 = arith.mulf %191, %179 : vector<2x32xf32>
    %195 = arith.mulf %190, %192 : vector<2x32xf32>
    %196 = arith.addf %194, %195 : vector<2x32xf32>
    %197 = math.tanh %196 : vector<2x32xf32>
    %198 = arith.mulf %193, %197 : vector<2x32xf32>
    %c0_57 = arith.constant 0 : index
    %c0_58 = arith.constant 0 : index
    %c0_59 = arith.constant 0 : index
    %199 = vector.load %arg2[%c0_57, %c0_58, %c0_59] : memref<4x32x128xf32, #tpu.memory_space<vmem>>, vector<1x32x128xf32>
    %200 = vector.shape_cast %199 : vector<1x32x128xf32> to vector<32x128xf32>
    %c1_60 = arith.constant 1 : index
    %c0_61 = arith.constant 0 : index
    %c0_62 = arith.constant 0 : index
    %201 = vector.load %arg3[%c1_60, %c0_61, %c0_62] : memref<5x32x128xf32, #tpu.memory_space<vmem>>, vector<1x32x128xf32>
    %202 = vector.shape_cast %201 : vector<1x32x128xf32> to vector<32x128xf32>
    %c1_63 = arith.constant 1 : index
    %c0_64 = arith.constant 0 : index
    %c0_65 = arith.constant 0 : index
    %203 = vector.load %arg4[%c1_63, %c0_64, %c0_65] : memref<5x1x128xf32, #tpu.memory_space<vmem>>, vector<1x1x128xf32>
    %204 = vector.shape_cast %203 : vector<1x1x128xf32> to vector<1x128xf32>
    %cst_66 = arith.constant dense<0.000000e+00> : vector<2x128xf32>
    %205 = tpu.matmul %79, %200, %cst_66 {dimension_numbers = #tpu.dot_dimension_numbers<[1], [0], [0], [1], [0, 0, 1, 1], [], []>} : vector<2x32xf32>, vector<32x128xf32>, vector<2x128xf32> -> vector<2x128xf32>
    %206 = vector.broadcast %204 : vector<1x128xf32> to vector<2x128xf32>
    %207 = arith.addf %205, %206 : vector<2x128xf32>
    %cst_67 = arith.constant dense<0.000000e+00> : vector<2x128xf32>
    %208 = tpu.matmul %96, %200, %cst_67 {dimension_numbers = #tpu.dot_dimension_numbers<[1], [0], [0], [1], [0, 0, 1, 1], [], []>} : vector<2x32xf32>, vector<32x128xf32>, vector<2x128xf32> -> vector<2x128xf32>
    %209 = vector.broadcast %204 : vector<1x128xf32> to vector<2x128xf32>
    %210 = arith.addf %208, %209 : vector<2x128xf32>
    %cst_68 = arith.constant dense<0.000000e+00> : vector<2x128xf32>
    %211 = tpu.matmul %113, %200, %cst_68 {dimension_numbers = #tpu.dot_dimension_numbers<[1], [0], [0], [1], [0, 0, 1, 1], [], []>} : vector<2x32xf32>, vector<32x128xf32>, vector<2x128xf32> -> vector<2x128xf32>
    %212 = vector.broadcast %204 : vector<1x128xf32> to vector<2x128xf32>
    %213 = arith.addf %211, %212 : vector<2x128xf32>
    %cst_69 = arith.constant dense<0.000000e+00> : vector<2x128xf32>
    %214 = tpu.matmul %130, %200, %cst_69 {dimension_numbers = #tpu.dot_dimension_numbers<[1], [0], [0], [1], [0, 0, 1, 1], [], []>} : vector<2x32xf32>, vector<32x128xf32>, vector<2x128xf32> -> vector<2x128xf32>
    %215 = vector.broadcast %204 : vector<1x128xf32> to vector<2x128xf32>
    %216 = arith.addf %214, %215 : vector<2x128xf32>
    %cst_70 = arith.constant dense<0.000000e+00> : vector<2x128xf32>
    %217 = tpu.matmul %147, %200, %cst_70 {dimension_numbers = #tpu.dot_dimension_numbers<[1], [0], [0], [1], [0, 0, 1, 1], [], []>} : vector<2x32xf32>, vector<32x128xf32>, vector<2x128xf32> -> vector<2x128xf32>
    %218 = vector.broadcast %204 : vector<1x128xf32> to vector<2x128xf32>
    %219 = arith.addf %217, %218 : vector<2x128xf32>
    %cst_71 = arith.constant dense<0.000000e+00> : vector<2x128xf32>
    %220 = tpu.matmul %164, %200, %cst_71 {dimension_numbers = #tpu.dot_dimension_numbers<[1], [0], [0], [1], [0, 0, 1, 1], [], []>} : vector<2x32xf32>, vector<32x128xf32>, vector<2x128xf32> -> vector<2x128xf32>
    %221 = vector.broadcast %204 : vector<1x128xf32> to vector<2x128xf32>
    %222 = arith.addf %220, %221 : vector<2x128xf32>
    %cst_72 = arith.constant dense<0.000000e+00> : vector<2x128xf32>
    %223 = tpu.matmul %181, %200, %cst_72 {dimension_numbers = #tpu.dot_dimension_numbers<[1], [0], [0], [1], [0, 0, 1, 1], [], []>} : vector<2x32xf32>, vector<32x128xf32>, vector<2x128xf32> -> vector<2x128xf32>
    %224 = vector.broadcast %204 : vector<1x128xf32> to vector<2x128xf32>
    %225 = arith.addf %223, %224 : vector<2x128xf32>
    %cst_73 = arith.constant dense<0.000000e+00> : vector<2x128xf32>
    %226 = tpu.matmul %198, %200, %cst_73 {dimension_numbers = #tpu.dot_dimension_numbers<[1], [0], [0], [1], [0, 0, 1, 1], [], []>} : vector<2x32xf32>, vector<32x128xf32>, vector<2x128xf32> -> vector<2x128xf32>
    %227 = vector.broadcast %204 : vector<1x128xf32> to vector<2x128xf32>
    %228 = arith.addf %226, %227 : vector<2x128xf32>
    %cst_74 = arith.constant dense<0.000000e+00> : vector<2x128xf32>
    %229 = tpu.matmul %0, %202, %cst_74 {dimension_numbers = #tpu.dot_dimension_numbers<[1], [0], [0], [1], [0, 0, 1, 1], [], []>} : vector<2x32xf32>, vector<32x128xf32>, vector<2x128xf32> -> vector<2x128xf32>
    %230 = arith.addf %207, %229 : vector<2x128xf32>
    %231 = arith.negf %230 : vector<2x128xf32>
    %232 = math.exp %231 : vector<2x128xf32>
    %cst_75 = arith.constant 1.000000e+00 : f32
    %233 = vector.broadcast %cst_75 : f32 to vector<2x128xf32>
    %234 = arith.addf %233, %232 : vector<2x128xf32>
    %235 = arith.divf %233, %234 : vector<2x128xf32>
    %236 = math.tanh %230 : vector<2x128xf32>
    %237 = vector.extract_strided_slice %235 {offsets = [0, 0], sizes = [2, 32], strides = [1, 1]} : vector<2x128xf32> to vector<2x32xf32>
    %238 = vector.extract_strided_slice %235 {offsets = [0, 32], sizes = [2, 32], strides = [1, 1]} : vector<2x128xf32> to vector<2x32xf32>
    %239 = vector.extract_strided_slice %236 {offsets = [0, 64], sizes = [2, 32], strides = [1, 1]} : vector<2x128xf32> to vector<2x32xf32>
    %240 = vector.extract_strided_slice %235 {offsets = [0, 96], sizes = [2, 32], strides = [1, 1]} : vector<2x128xf32> to vector<2x32xf32>
    %241 = arith.mulf %238, %1 : vector<2x32xf32>
    %242 = arith.mulf %237, %239 : vector<2x32xf32>
    %243 = arith.addf %241, %242 : vector<2x32xf32>
    %244 = math.tanh %243 : vector<2x32xf32>
    %245 = arith.mulf %240, %244 : vector<2x32xf32>
    %cst_76 = arith.constant dense<0.000000e+00> : vector<2x128xf32>
    %246 = tpu.matmul %245, %202, %cst_76 {dimension_numbers = #tpu.dot_dimension_numbers<[1], [0], [0], [1], [0, 0, 1, 1], [], []>} : vector<2x32xf32>, vector<32x128xf32>, vector<2x128xf32> -> vector<2x128xf32>
    %247 = arith.addf %210, %246 : vector<2x128xf32>
    %248 = arith.negf %247 : vector<2x128xf32>
    %249 = math.exp %248 : vector<2x128xf32>
    %cst_77 = arith.constant 1.000000e+00 : f32
    %250 = vector.broadcast %cst_77 : f32 to vector<2x128xf32>
    %251 = arith.addf %250, %249 : vector<2x128xf32>
    %252 = arith.divf %250, %251 : vector<2x128xf32>
    %253 = math.tanh %247 : vector<2x128xf32>
    %254 = vector.extract_strided_slice %252 {offsets = [0, 0], sizes = [2, 32], strides = [1, 1]} : vector<2x128xf32> to vector<2x32xf32>
    %255 = vector.extract_strided_slice %252 {offsets = [0, 32], sizes = [2, 32], strides = [1, 1]} : vector<2x128xf32> to vector<2x32xf32>
    %256 = vector.extract_strided_slice %253 {offsets = [0, 64], sizes = [2, 32], strides = [1, 1]} : vector<2x128xf32> to vector<2x32xf32>
    %257 = vector.extract_strided_slice %252 {offsets = [0, 96], sizes = [2, 32], strides = [1, 1]} : vector<2x128xf32> to vector<2x32xf32>
    %258 = arith.mulf %255, %243 : vector<2x32xf32>
    %259 = arith.mulf %254, %256 : vector<2x32xf32>
    %260 = arith.addf %258, %259 : vector<2x32xf32>
    %261 = math.tanh %260 : vector<2x32xf32>
    %262 = arith.mulf %257, %261 : vector<2x32xf32>
    %cst_78 = arith.constant dense<0.000000e+00> : vector<2x128xf32>
    %263 = tpu.matmul %262, %202, %cst_78 {dimension_numbers = #tpu.dot_dimension_numbers<[1], [0], [0], [1], [0, 0, 1, 1], [], []>} : vector<2x32xf32>, vector<32x128xf32>, vector<2x128xf32> -> vector<2x128xf32>
    %264 = arith.addf %213, %263 : vector<2x128xf32>
    %265 = arith.negf %264 : vector<2x128xf32>
    %266 = math.exp %265 : vector<2x128xf32>
    %cst_79 = arith.constant 1.000000e+00 : f32
    %267 = vector.broadcast %cst_79 : f32 to vector<2x128xf32>
    %268 = arith.addf %267, %266 : vector<2x128xf32>
    %269 = arith.divf %267, %268 : vector<2x128xf32>
    %270 = math.tanh %264 : vector<2x128xf32>
    %271 = vector.extract_strided_slice %269 {offsets = [0, 0], sizes = [2, 32], strides = [1, 1]} : vector<2x128xf32> to vector<2x32xf32>
    %272 = vector.extract_strided_slice %269 {offsets = [0, 32], sizes = [2, 32], strides = [1, 1]} : vector<2x128xf32> to vector<2x32xf32>
    %273 = vector.extract_strided_slice %270 {offsets = [0, 64], sizes = [2, 32], strides = [1, 1]} : vector<2x128xf32> to vector<2x32xf32>
    %274 = vector.extract_strided_slice %269 {offsets = [0, 96], sizes = [2, 32], strides = [1, 1]} : vector<2x128xf32> to vector<2x32xf32>
    %275 = arith.mulf %272, %260 : vector<2x32xf32>
    %276 = arith.mulf %271, %273 : vector<2x32xf32>
    %277 = arith.addf %275, %276 : vector<2x32xf32>
    %278 = math.tanh %277 : vector<2x32xf32>
    %279 = arith.mulf %274, %278 : vector<2x32xf32>
    %cst_80 = arith.constant dense<0.000000e+00> : vector<2x128xf32>
    %280 = tpu.matmul %279, %202, %cst_80 {dimension_numbers = #tpu.dot_dimension_numbers<[1], [0], [0], [1], [0, 0, 1, 1], [], []>} : vector<2x32xf32>, vector<32x128xf32>, vector<2x128xf32> -> vector<2x128xf32>
    %281 = arith.addf %216, %280 : vector<2x128xf32>
    %282 = arith.negf %281 : vector<2x128xf32>
    %283 = math.exp %282 : vector<2x128xf32>
    %cst_81 = arith.constant 1.000000e+00 : f32
    %284 = vector.broadcast %cst_81 : f32 to vector<2x128xf32>
    %285 = arith.addf %284, %283 : vector<2x128xf32>
    %286 = arith.divf %284, %285 : vector<2x128xf32>
    %287 = math.tanh %281 : vector<2x128xf32>
    %288 = vector.extract_strided_slice %286 {offsets = [0, 0], sizes = [2, 32], strides = [1, 1]} : vector<2x128xf32> to vector<2x32xf32>
    %289 = vector.extract_strided_slice %286 {offsets = [0, 32], sizes = [2, 32], strides = [1, 1]} : vector<2x128xf32> to vector<2x32xf32>
    %290 = vector.extract_strided_slice %287 {offsets = [0, 64], sizes = [2, 32], strides = [1, 1]} : vector<2x128xf32> to vector<2x32xf32>
    %291 = vector.extract_strided_slice %286 {offsets = [0, 96], sizes = [2, 32], strides = [1, 1]} : vector<2x128xf32> to vector<2x32xf32>
    %292 = arith.mulf %289, %277 : vector<2x32xf32>
    %293 = arith.mulf %288, %290 : vector<2x32xf32>
    %294 = arith.addf %292, %293 : vector<2x32xf32>
    %295 = math.tanh %294 : vector<2x32xf32>
    %296 = arith.mulf %291, %295 : vector<2x32xf32>
    %cst_82 = arith.constant dense<0.000000e+00> : vector<2x128xf32>
    %297 = tpu.matmul %296, %202, %cst_82 {dimension_numbers = #tpu.dot_dimension_numbers<[1], [0], [0], [1], [0, 0, 1, 1], [], []>} : vector<2x32xf32>, vector<32x128xf32>, vector<2x128xf32> -> vector<2x128xf32>
    %298 = arith.addf %219, %297 : vector<2x128xf32>
    %299 = arith.negf %298 : vector<2x128xf32>
    %300 = math.exp %299 : vector<2x128xf32>
    %cst_83 = arith.constant 1.000000e+00 : f32
    %301 = vector.broadcast %cst_83 : f32 to vector<2x128xf32>
    %302 = arith.addf %301, %300 : vector<2x128xf32>
    %303 = arith.divf %301, %302 : vector<2x128xf32>
    %304 = math.tanh %298 : vector<2x128xf32>
    %305 = vector.extract_strided_slice %303 {offsets = [0, 0], sizes = [2, 32], strides = [1, 1]} : vector<2x128xf32> to vector<2x32xf32>
    %306 = vector.extract_strided_slice %303 {offsets = [0, 32], sizes = [2, 32], strides = [1, 1]} : vector<2x128xf32> to vector<2x32xf32>
    %307 = vector.extract_strided_slice %304 {offsets = [0, 64], sizes = [2, 32], strides = [1, 1]} : vector<2x128xf32> to vector<2x32xf32>
    %308 = vector.extract_strided_slice %303 {offsets = [0, 96], sizes = [2, 32], strides = [1, 1]} : vector<2x128xf32> to vector<2x32xf32>
    %309 = arith.mulf %306, %294 : vector<2x32xf32>
    %310 = arith.mulf %305, %307 : vector<2x32xf32>
    %311 = arith.addf %309, %310 : vector<2x32xf32>
    %312 = math.tanh %311 : vector<2x32xf32>
    %313 = arith.mulf %308, %312 : vector<2x32xf32>
    %cst_84 = arith.constant dense<0.000000e+00> : vector<2x128xf32>
    %314 = tpu.matmul %313, %202, %cst_84 {dimension_numbers = #tpu.dot_dimension_numbers<[1], [0], [0], [1], [0, 0, 1, 1], [], []>} : vector<2x32xf32>, vector<32x128xf32>, vector<2x128xf32> -> vector<2x128xf32>
    %315 = arith.addf %222, %314 : vector<2x128xf32>
    %316 = arith.negf %315 : vector<2x128xf32>
    %317 = math.exp %316 : vector<2x128xf32>
    %cst_85 = arith.constant 1.000000e+00 : f32
    %318 = vector.broadcast %cst_85 : f32 to vector<2x128xf32>
    %319 = arith.addf %318, %317 : vector<2x128xf32>
    %320 = arith.divf %318, %319 : vector<2x128xf32>
    %321 = math.tanh %315 : vector<2x128xf32>
    %322 = vector.extract_strided_slice %320 {offsets = [0, 0], sizes = [2, 32], strides = [1, 1]} : vector<2x128xf32> to vector<2x32xf32>
    %323 = vector.extract_strided_slice %320 {offsets = [0, 32], sizes = [2, 32], strides = [1, 1]} : vector<2x128xf32> to vector<2x32xf32>
    %324 = vector.extract_strided_slice %321 {offsets = [0, 64], sizes = [2, 32], strides = [1, 1]} : vector<2x128xf32> to vector<2x32xf32>
    %325 = vector.extract_strided_slice %320 {offsets = [0, 96], sizes = [2, 32], strides = [1, 1]} : vector<2x128xf32> to vector<2x32xf32>
    %326 = arith.mulf %323, %311 : vector<2x32xf32>
    %327 = arith.mulf %322, %324 : vector<2x32xf32>
    %328 = arith.addf %326, %327 : vector<2x32xf32>
    %329 = math.tanh %328 : vector<2x32xf32>
    %330 = arith.mulf %325, %329 : vector<2x32xf32>
    %cst_86 = arith.constant dense<0.000000e+00> : vector<2x128xf32>
    %331 = tpu.matmul %330, %202, %cst_86 {dimension_numbers = #tpu.dot_dimension_numbers<[1], [0], [0], [1], [0, 0, 1, 1], [], []>} : vector<2x32xf32>, vector<32x128xf32>, vector<2x128xf32> -> vector<2x128xf32>
    %332 = arith.addf %225, %331 : vector<2x128xf32>
    %333 = arith.negf %332 : vector<2x128xf32>
    %334 = math.exp %333 : vector<2x128xf32>
    %cst_87 = arith.constant 1.000000e+00 : f32
    %335 = vector.broadcast %cst_87 : f32 to vector<2x128xf32>
    %336 = arith.addf %335, %334 : vector<2x128xf32>
    %337 = arith.divf %335, %336 : vector<2x128xf32>
    %338 = math.tanh %332 : vector<2x128xf32>
    %339 = vector.extract_strided_slice %337 {offsets = [0, 0], sizes = [2, 32], strides = [1, 1]} : vector<2x128xf32> to vector<2x32xf32>
    %340 = vector.extract_strided_slice %337 {offsets = [0, 32], sizes = [2, 32], strides = [1, 1]} : vector<2x128xf32> to vector<2x32xf32>
    %341 = vector.extract_strided_slice %338 {offsets = [0, 64], sizes = [2, 32], strides = [1, 1]} : vector<2x128xf32> to vector<2x32xf32>
    %342 = vector.extract_strided_slice %337 {offsets = [0, 96], sizes = [2, 32], strides = [1, 1]} : vector<2x128xf32> to vector<2x32xf32>
    %343 = arith.mulf %340, %328 : vector<2x32xf32>
    %344 = arith.mulf %339, %341 : vector<2x32xf32>
    %345 = arith.addf %343, %344 : vector<2x32xf32>
    %346 = math.tanh %345 : vector<2x32xf32>
    %347 = arith.mulf %342, %346 : vector<2x32xf32>
    %cst_88 = arith.constant dense<0.000000e+00> : vector<2x128xf32>
    %348 = tpu.matmul %347, %202, %cst_88 {dimension_numbers = #tpu.dot_dimension_numbers<[1], [0], [0], [1], [0, 0, 1, 1], [], []>} : vector<2x32xf32>, vector<32x128xf32>, vector<2x128xf32> -> vector<2x128xf32>
    %349 = arith.addf %228, %348 : vector<2x128xf32>
    %350 = arith.negf %349 : vector<2x128xf32>
    %351 = math.exp %350 : vector<2x128xf32>
    %cst_89 = arith.constant 1.000000e+00 : f32
    %352 = vector.broadcast %cst_89 : f32 to vector<2x128xf32>
    %353 = arith.addf %352, %351 : vector<2x128xf32>
    %354 = arith.divf %352, %353 : vector<2x128xf32>
    %355 = math.tanh %349 : vector<2x128xf32>
    %356 = vector.extract_strided_slice %354 {offsets = [0, 0], sizes = [2, 32], strides = [1, 1]} : vector<2x128xf32> to vector<2x32xf32>
    %357 = vector.extract_strided_slice %354 {offsets = [0, 32], sizes = [2, 32], strides = [1, 1]} : vector<2x128xf32> to vector<2x32xf32>
    %358 = vector.extract_strided_slice %355 {offsets = [0, 64], sizes = [2, 32], strides = [1, 1]} : vector<2x128xf32> to vector<2x32xf32>
    %359 = vector.extract_strided_slice %354 {offsets = [0, 96], sizes = [2, 32], strides = [1, 1]} : vector<2x128xf32> to vector<2x32xf32>
    %360 = arith.mulf %357, %345 : vector<2x32xf32>
    %361 = arith.mulf %356, %358 : vector<2x32xf32>
    %362 = arith.addf %360, %361 : vector<2x32xf32>
    %363 = math.tanh %362 : vector<2x32xf32>
    %364 = arith.mulf %359, %363 : vector<2x32xf32>
    %c1_90 = arith.constant 1 : index
    %c0_91 = arith.constant 0 : index
    %c0_92 = arith.constant 0 : index
    %365 = vector.load %arg2[%c1_90, %c0_91, %c0_92] : memref<4x32x128xf32, #tpu.memory_space<vmem>>, vector<1x32x128xf32>
    %366 = vector.shape_cast %365 : vector<1x32x128xf32> to vector<32x128xf32>
    %c2_93 = arith.constant 2 : index
    %c0_94 = arith.constant 0 : index
    %c0_95 = arith.constant 0 : index
    %367 = vector.load %arg3[%c2_93, %c0_94, %c0_95] : memref<5x32x128xf32, #tpu.memory_space<vmem>>, vector<1x32x128xf32>
    %368 = vector.shape_cast %367 : vector<1x32x128xf32> to vector<32x128xf32>
    %c2_96 = arith.constant 2 : index
    %c0_97 = arith.constant 0 : index
    %c0_98 = arith.constant 0 : index
    %369 = vector.load %arg4[%c2_96, %c0_97, %c0_98] : memref<5x1x128xf32, #tpu.memory_space<vmem>>, vector<1x1x128xf32>
    %370 = vector.shape_cast %369 : vector<1x1x128xf32> to vector<1x128xf32>
    %cst_99 = arith.constant dense<0.000000e+00> : vector<2x128xf32>
    %371 = tpu.matmul %245, %366, %cst_99 {dimension_numbers = #tpu.dot_dimension_numbers<[1], [0], [0], [1], [0, 0, 1, 1], [], []>} : vector<2x32xf32>, vector<32x128xf32>, vector<2x128xf32> -> vector<2x128xf32>
    %372 = vector.broadcast %370 : vector<1x128xf32> to vector<2x128xf32>
    %373 = arith.addf %371, %372 : vector<2x128xf32>
    %cst_100 = arith.constant dense<0.000000e+00> : vector<2x128xf32>
    %374 = tpu.matmul %262, %366, %cst_100 {dimension_numbers = #tpu.dot_dimension_numbers<[1], [0], [0], [1], [0, 0, 1, 1], [], []>} : vector<2x32xf32>, vector<32x128xf32>, vector<2x128xf32> -> vector<2x128xf32>
    %375 = vector.broadcast %370 : vector<1x128xf32> to vector<2x128xf32>
    %376 = arith.addf %374, %375 : vector<2x128xf32>
    %cst_101 = arith.constant dense<0.000000e+00> : vector<2x128xf32>
    %377 = tpu.matmul %279, %366, %cst_101 {dimension_numbers = #tpu.dot_dimension_numbers<[1], [0], [0], [1], [0, 0, 1, 1], [], []>} : vector<2x32xf32>, vector<32x128xf32>, vector<2x128xf32> -> vector<2x128xf32>
    %378 = vector.broadcast %370 : vector<1x128xf32> to vector<2x128xf32>
    %379 = arith.addf %377, %378 : vector<2x128xf32>
    %cst_102 = arith.constant dense<0.000000e+00> : vector<2x128xf32>
    %380 = tpu.matmul %296, %366, %cst_102 {dimension_numbers = #tpu.dot_dimension_numbers<[1], [0], [0], [1], [0, 0, 1, 1], [], []>} : vector<2x32xf32>, vector<32x128xf32>, vector<2x128xf32> -> vector<2x128xf32>
    %381 = vector.broadcast %370 : vector<1x128xf32> to vector<2x128xf32>
    %382 = arith.addf %380, %381 : vector<2x128xf32>
    %cst_103 = arith.constant dense<0.000000e+00> : vector<2x128xf32>
    %383 = tpu.matmul %313, %366, %cst_103 {dimension_numbers = #tpu.dot_dimension_numbers<[1], [0], [0], [1], [0, 0, 1, 1], [], []>} : vector<2x32xf32>, vector<32x128xf32>, vector<2x128xf32> -> vector<2x128xf32>
    %384 = vector.broadcast %370 : vector<1x128xf32> to vector<2x128xf32>
    %385 = arith.addf %383, %384 : vector<2x128xf32>
    %cst_104 = arith.constant dense<0.000000e+00> : vector<2x128xf32>
    %386 = tpu.matmul %330, %366, %cst_104 {dimension_numbers = #tpu.dot_dimension_numbers<[1], [0], [0], [1], [0, 0, 1, 1], [], []>} : vector<2x32xf32>, vector<32x128xf32>, vector<2x128xf32> -> vector<2x128xf32>
    %387 = vector.broadcast %370 : vector<1x128xf32> to vector<2x128xf32>
    %388 = arith.addf %386, %387 : vector<2x128xf32>
    %cst_105 = arith.constant dense<0.000000e+00> : vector<2x128xf32>
    %389 = tpu.matmul %347, %366, %cst_105 {dimension_numbers = #tpu.dot_dimension_numbers<[1], [0], [0], [1], [0, 0, 1, 1], [], []>} : vector<2x32xf32>, vector<32x128xf32>, vector<2x128xf32> -> vector<2x128xf32>
    %390 = vector.broadcast %370 : vector<1x128xf32> to vector<2x128xf32>
    %391 = arith.addf %389, %390 : vector<2x128xf32>
    %cst_106 = arith.constant dense<0.000000e+00> : vector<2x128xf32>
    %392 = tpu.matmul %364, %366, %cst_106 {dimension_numbers = #tpu.dot_dimension_numbers<[1], [0], [0], [1], [0, 0, 1, 1], [], []>} : vector<2x32xf32>, vector<32x128xf32>, vector<2x128xf32> -> vector<2x128xf32>
    %393 = vector.broadcast %370 : vector<1x128xf32> to vector<2x128xf32>
    %394 = arith.addf %392, %393 : vector<2x128xf32>
    %cst_107 = arith.constant dense<0.000000e+00> : vector<2x128xf32>
    %395 = tpu.matmul %0, %368, %cst_107 {dimension_numbers = #tpu.dot_dimension_numbers<[1], [0], [0], [1], [0, 0, 1, 1], [], []>} : vector<2x32xf32>, vector<32x128xf32>, vector<2x128xf32> -> vector<2x128xf32>
    %396 = arith.addf %373, %395 : vector<2x128xf32>
    %397 = arith.negf %396 : vector<2x128xf32>
    %398 = math.exp %397 : vector<2x128xf32>
    %cst_108 = arith.constant 1.000000e+00 : f32
    %399 = vector.broadcast %cst_108 : f32 to vector<2x128xf32>
    %400 = arith.addf %399, %398 : vector<2x128xf32>
    %401 = arith.divf %399, %400 : vector<2x128xf32>
    %402 = math.tanh %396 : vector<2x128xf32>
    %403 = vector.extract_strided_slice %401 {offsets = [0, 0], sizes = [2, 32], strides = [1, 1]} : vector<2x128xf32> to vector<2x32xf32>
    %404 = vector.extract_strided_slice %401 {offsets = [0, 32], sizes = [2, 32], strides = [1, 1]} : vector<2x128xf32> to vector<2x32xf32>
    %405 = vector.extract_strided_slice %402 {offsets = [0, 64], sizes = [2, 32], strides = [1, 1]} : vector<2x128xf32> to vector<2x32xf32>
    %406 = vector.extract_strided_slice %401 {offsets = [0, 96], sizes = [2, 32], strides = [1, 1]} : vector<2x128xf32> to vector<2x32xf32>
    %407 = arith.mulf %404, %1 : vector<2x32xf32>
    %408 = arith.mulf %403, %405 : vector<2x32xf32>
    %409 = arith.addf %407, %408 : vector<2x32xf32>
    %410 = math.tanh %409 : vector<2x32xf32>
    %411 = arith.mulf %406, %410 : vector<2x32xf32>
    %cst_109 = arith.constant dense<0.000000e+00> : vector<2x128xf32>
    %412 = tpu.matmul %411, %368, %cst_109 {dimension_numbers = #tpu.dot_dimension_numbers<[1], [0], [0], [1], [0, 0, 1, 1], [], []>} : vector<2x32xf32>, vector<32x128xf32>, vector<2x128xf32> -> vector<2x128xf32>
    %413 = arith.addf %376, %412 : vector<2x128xf32>
    %414 = arith.negf %413 : vector<2x128xf32>
    %415 = math.exp %414 : vector<2x128xf32>
    %cst_110 = arith.constant 1.000000e+00 : f32
    %416 = vector.broadcast %cst_110 : f32 to vector<2x128xf32>
    %417 = arith.addf %416, %415 : vector<2x128xf32>
    %418 = arith.divf %416, %417 : vector<2x128xf32>
    %419 = math.tanh %413 : vector<2x128xf32>
    %420 = vector.extract_strided_slice %418 {offsets = [0, 0], sizes = [2, 32], strides = [1, 1]} : vector<2x128xf32> to vector<2x32xf32>
    %421 = vector.extract_strided_slice %418 {offsets = [0, 32], sizes = [2, 32], strides = [1, 1]} : vector<2x128xf32> to vector<2x32xf32>
    %422 = vector.extract_strided_slice %419 {offsets = [0, 64], sizes = [2, 32], strides = [1, 1]} : vector<2x128xf32> to vector<2x32xf32>
    %423 = vector.extract_strided_slice %418 {offsets = [0, 96], sizes = [2, 32], strides = [1, 1]} : vector<2x128xf32> to vector<2x32xf32>
    %424 = arith.mulf %421, %409 : vector<2x32xf32>
    %425 = arith.mulf %420, %422 : vector<2x32xf32>
    %426 = arith.addf %424, %425 : vector<2x32xf32>
    %427 = math.tanh %426 : vector<2x32xf32>
    %428 = arith.mulf %423, %427 : vector<2x32xf32>
    %cst_111 = arith.constant dense<0.000000e+00> : vector<2x128xf32>
    %429 = tpu.matmul %428, %368, %cst_111 {dimension_numbers = #tpu.dot_dimension_numbers<[1], [0], [0], [1], [0, 0, 1, 1], [], []>} : vector<2x32xf32>, vector<32x128xf32>, vector<2x128xf32> -> vector<2x128xf32>
    %430 = arith.addf %379, %429 : vector<2x128xf32>
    %431 = arith.negf %430 : vector<2x128xf32>
    %432 = math.exp %431 : vector<2x128xf32>
    %cst_112 = arith.constant 1.000000e+00 : f32
    %433 = vector.broadcast %cst_112 : f32 to vector<2x128xf32>
    %434 = arith.addf %433, %432 : vector<2x128xf32>
    %435 = arith.divf %433, %434 : vector<2x128xf32>
    %436 = math.tanh %430 : vector<2x128xf32>
    %437 = vector.extract_strided_slice %435 {offsets = [0, 0], sizes = [2, 32], strides = [1, 1]} : vector<2x128xf32> to vector<2x32xf32>
    %438 = vector.extract_strided_slice %435 {offsets = [0, 32], sizes = [2, 32], strides = [1, 1]} : vector<2x128xf32> to vector<2x32xf32>
    %439 = vector.extract_strided_slice %436 {offsets = [0, 64], sizes = [2, 32], strides = [1, 1]} : vector<2x128xf32> to vector<2x32xf32>
    %440 = vector.extract_strided_slice %435 {offsets = [0, 96], sizes = [2, 32], strides = [1, 1]} : vector<2x128xf32> to vector<2x32xf32>
    %441 = arith.mulf %438, %426 : vector<2x32xf32>
    %442 = arith.mulf %437, %439 : vector<2x32xf32>
    %443 = arith.addf %441, %442 : vector<2x32xf32>
    %444 = math.tanh %443 : vector<2x32xf32>
    %445 = arith.mulf %440, %444 : vector<2x32xf32>
    %cst_113 = arith.constant dense<0.000000e+00> : vector<2x128xf32>
    %446 = tpu.matmul %445, %368, %cst_113 {dimension_numbers = #tpu.dot_dimension_numbers<[1], [0], [0], [1], [0, 0, 1, 1], [], []>} : vector<2x32xf32>, vector<32x128xf32>, vector<2x128xf32> -> vector<2x128xf32>
    %447 = arith.addf %382, %446 : vector<2x128xf32>
    %448 = arith.negf %447 : vector<2x128xf32>
    %449 = math.exp %448 : vector<2x128xf32>
    %cst_114 = arith.constant 1.000000e+00 : f32
    %450 = vector.broadcast %cst_114 : f32 to vector<2x128xf32>
    %451 = arith.addf %450, %449 : vector<2x128xf32>
    %452 = arith.divf %450, %451 : vector<2x128xf32>
    %453 = math.tanh %447 : vector<2x128xf32>
    %454 = vector.extract_strided_slice %452 {offsets = [0, 0], sizes = [2, 32], strides = [1, 1]} : vector<2x128xf32> to vector<2x32xf32>
    %455 = vector.extract_strided_slice %452 {offsets = [0, 32], sizes = [2, 32], strides = [1, 1]} : vector<2x128xf32> to vector<2x32xf32>
    %456 = vector.extract_strided_slice %453 {offsets = [0, 64], sizes = [2, 32], strides = [1, 1]} : vector<2x128xf32> to vector<2x32xf32>
    %457 = vector.extract_strided_slice %452 {offsets = [0, 96], sizes = [2, 32], strides = [1, 1]} : vector<2x128xf32> to vector<2x32xf32>
    %458 = arith.mulf %455, %443 : vector<2x32xf32>
    %459 = arith.mulf %454, %456 : vector<2x32xf32>
    %460 = arith.addf %458, %459 : vector<2x32xf32>
    %461 = math.tanh %460 : vector<2x32xf32>
    %462 = arith.mulf %457, %461 : vector<2x32xf32>
    %cst_115 = arith.constant dense<0.000000e+00> : vector<2x128xf32>
    %463 = tpu.matmul %462, %368, %cst_115 {dimension_numbers = #tpu.dot_dimension_numbers<[1], [0], [0], [1], [0, 0, 1, 1], [], []>} : vector<2x32xf32>, vector<32x128xf32>, vector<2x128xf32> -> vector<2x128xf32>
    %464 = arith.addf %385, %463 : vector<2x128xf32>
    %465 = arith.negf %464 : vector<2x128xf32>
    %466 = math.exp %465 : vector<2x128xf32>
    %cst_116 = arith.constant 1.000000e+00 : f32
    %467 = vector.broadcast %cst_116 : f32 to vector<2x128xf32>
    %468 = arith.addf %467, %466 : vector<2x128xf32>
    %469 = arith.divf %467, %468 : vector<2x128xf32>
    %470 = math.tanh %464 : vector<2x128xf32>
    %471 = vector.extract_strided_slice %469 {offsets = [0, 0], sizes = [2, 32], strides = [1, 1]} : vector<2x128xf32> to vector<2x32xf32>
    %472 = vector.extract_strided_slice %469 {offsets = [0, 32], sizes = [2, 32], strides = [1, 1]} : vector<2x128xf32> to vector<2x32xf32>
    %473 = vector.extract_strided_slice %470 {offsets = [0, 64], sizes = [2, 32], strides = [1, 1]} : vector<2x128xf32> to vector<2x32xf32>
    %474 = vector.extract_strided_slice %469 {offsets = [0, 96], sizes = [2, 32], strides = [1, 1]} : vector<2x128xf32> to vector<2x32xf32>
    %475 = arith.mulf %472, %460 : vector<2x32xf32>
    %476 = arith.mulf %471, %473 : vector<2x32xf32>
    %477 = arith.addf %475, %476 : vector<2x32xf32>
    %478 = math.tanh %477 : vector<2x32xf32>
    %479 = arith.mulf %474, %478 : vector<2x32xf32>
    %cst_117 = arith.constant dense<0.000000e+00> : vector<2x128xf32>
    %480 = tpu.matmul %479, %368, %cst_117 {dimension_numbers = #tpu.dot_dimension_numbers<[1], [0], [0], [1], [0, 0, 1, 1], [], []>} : vector<2x32xf32>, vector<32x128xf32>, vector<2x128xf32> -> vector<2x128xf32>
    %481 = arith.addf %388, %480 : vector<2x128xf32>
    %482 = arith.negf %481 : vector<2x128xf32>
    %483 = math.exp %482 : vector<2x128xf32>
    %cst_118 = arith.constant 1.000000e+00 : f32
    %484 = vector.broadcast %cst_118 : f32 to vector<2x128xf32>
    %485 = arith.addf %484, %483 : vector<2x128xf32>
    %486 = arith.divf %484, %485 : vector<2x128xf32>
    %487 = math.tanh %481 : vector<2x128xf32>
    %488 = vector.extract_strided_slice %486 {offsets = [0, 0], sizes = [2, 32], strides = [1, 1]} : vector<2x128xf32> to vector<2x32xf32>
    %489 = vector.extract_strided_slice %486 {offsets = [0, 32], sizes = [2, 32], strides = [1, 1]} : vector<2x128xf32> to vector<2x32xf32>
    %490 = vector.extract_strided_slice %487 {offsets = [0, 64], sizes = [2, 32], strides = [1, 1]} : vector<2x128xf32> to vector<2x32xf32>
    %491 = vector.extract_strided_slice %486 {offsets = [0, 96], sizes = [2, 32], strides = [1, 1]} : vector<2x128xf32> to vector<2x32xf32>
    %492 = arith.mulf %489, %477 : vector<2x32xf32>
    %493 = arith.mulf %488, %490 : vector<2x32xf32>
    %494 = arith.addf %492, %493 : vector<2x32xf32>
    %495 = math.tanh %494 : vector<2x32xf32>
    %496 = arith.mulf %491, %495 : vector<2x32xf32>
    %cst_119 = arith.constant dense<0.000000e+00> : vector<2x128xf32>
    %497 = tpu.matmul %496, %368, %cst_119 {dimension_numbers = #tpu.dot_dimension_numbers<[1], [0], [0], [1], [0, 0, 1, 1], [], []>} : vector<2x32xf32>, vector<32x128xf32>, vector<2x128xf32> -> vector<2x128xf32>
    %498 = arith.addf %391, %497 : vector<2x128xf32>
    %499 = arith.negf %498 : vector<2x128xf32>
    %500 = math.exp %499 : vector<2x128xf32>
    %cst_120 = arith.constant 1.000000e+00 : f32
    %501 = vector.broadcast %cst_120 : f32 to vector<2x128xf32>
    %502 = arith.addf %501, %500 : vector<2x128xf32>
    %503 = arith.divf %501, %502 : vector<2x128xf32>
    %504 = math.tanh %498 : vector<2x128xf32>
    %505 = vector.extract_strided_slice %503 {offsets = [0, 0], sizes = [2, 32], strides = [1, 1]} : vector<2x128xf32> to vector<2x32xf32>
    %506 = vector.extract_strided_slice %503 {offsets = [0, 32], sizes = [2, 32], strides = [1, 1]} : vector<2x128xf32> to vector<2x32xf32>
    %507 = vector.extract_strided_slice %504 {offsets = [0, 64], sizes = [2, 32], strides = [1, 1]} : vector<2x128xf32> to vector<2x32xf32>
    %508 = vector.extract_strided_slice %503 {offsets = [0, 96], sizes = [2, 32], strides = [1, 1]} : vector<2x128xf32> to vector<2x32xf32>
    %509 = arith.mulf %506, %494 : vector<2x32xf32>
    %510 = arith.mulf %505, %507 : vector<2x32xf32>
    %511 = arith.addf %509, %510 : vector<2x32xf32>
    %512 = math.tanh %511 : vector<2x32xf32>
    %513 = arith.mulf %508, %512 : vector<2x32xf32>
    %cst_121 = arith.constant dense<0.000000e+00> : vector<2x128xf32>
    %514 = tpu.matmul %513, %368, %cst_121 {dimension_numbers = #tpu.dot_dimension_numbers<[1], [0], [0], [1], [0, 0, 1, 1], [], []>} : vector<2x32xf32>, vector<32x128xf32>, vector<2x128xf32> -> vector<2x128xf32>
    %515 = arith.addf %394, %514 : vector<2x128xf32>
    %516 = arith.negf %515 : vector<2x128xf32>
    %517 = math.exp %516 : vector<2x128xf32>
    %cst_122 = arith.constant 1.000000e+00 : f32
    %518 = vector.broadcast %cst_122 : f32 to vector<2x128xf32>
    %519 = arith.addf %518, %517 : vector<2x128xf32>
    %520 = arith.divf %518, %519 : vector<2x128xf32>
    %521 = math.tanh %515 : vector<2x128xf32>
    %522 = vector.extract_strided_slice %520 {offsets = [0, 0], sizes = [2, 32], strides = [1, 1]} : vector<2x128xf32> to vector<2x32xf32>
    %523 = vector.extract_strided_slice %520 {offsets = [0, 32], sizes = [2, 32], strides = [1, 1]} : vector<2x128xf32> to vector<2x32xf32>
    %524 = vector.extract_strided_slice %521 {offsets = [0, 64], sizes = [2, 32], strides = [1, 1]} : vector<2x128xf32> to vector<2x32xf32>
    %525 = vector.extract_strided_slice %520 {offsets = [0, 96], sizes = [2, 32], strides = [1, 1]} : vector<2x128xf32> to vector<2x32xf32>
    %526 = arith.mulf %523, %511 : vector<2x32xf32>
    %527 = arith.mulf %522, %524 : vector<2x32xf32>
    %528 = arith.addf %526, %527 : vector<2x32xf32>
    %529 = math.tanh %528 : vector<2x32xf32>
    %530 = arith.mulf %525, %529 : vector<2x32xf32>
    %c2_123 = arith.constant 2 : index
    %c0_124 = arith.constant 0 : index
    %c0_125 = arith.constant 0 : index
    %531 = vector.load %arg2[%c2_123, %c0_124, %c0_125] : memref<4x32x128xf32, #tpu.memory_space<vmem>>, vector<1x32x128xf32>
    %532 = vector.shape_cast %531 : vector<1x32x128xf32> to vector<32x128xf32>
    %c3_126 = arith.constant 3 : index
    %c0_127 = arith.constant 0 : index
    %c0_128 = arith.constant 0 : index
    %533 = vector.load %arg3[%c3_126, %c0_127, %c0_128] : memref<5x32x128xf32, #tpu.memory_space<vmem>>, vector<1x32x128xf32>
    %534 = vector.shape_cast %533 : vector<1x32x128xf32> to vector<32x128xf32>
    %c3_129 = arith.constant 3 : index
    %c0_130 = arith.constant 0 : index
    %c0_131 = arith.constant 0 : index
    %535 = vector.load %arg4[%c3_129, %c0_130, %c0_131] : memref<5x1x128xf32, #tpu.memory_space<vmem>>, vector<1x1x128xf32>
    %536 = vector.shape_cast %535 : vector<1x1x128xf32> to vector<1x128xf32>
    %cst_132 = arith.constant dense<0.000000e+00> : vector<2x128xf32>
    %537 = tpu.matmul %411, %532, %cst_132 {dimension_numbers = #tpu.dot_dimension_numbers<[1], [0], [0], [1], [0, 0, 1, 1], [], []>} : vector<2x32xf32>, vector<32x128xf32>, vector<2x128xf32> -> vector<2x128xf32>
    %538 = vector.broadcast %536 : vector<1x128xf32> to vector<2x128xf32>
    %539 = arith.addf %537, %538 : vector<2x128xf32>
    %cst_133 = arith.constant dense<0.000000e+00> : vector<2x128xf32>
    %540 = tpu.matmul %428, %532, %cst_133 {dimension_numbers = #tpu.dot_dimension_numbers<[1], [0], [0], [1], [0, 0, 1, 1], [], []>} : vector<2x32xf32>, vector<32x128xf32>, vector<2x128xf32> -> vector<2x128xf32>
    %541 = vector.broadcast %536 : vector<1x128xf32> to vector<2x128xf32>
    %542 = arith.addf %540, %541 : vector<2x128xf32>
    %cst_134 = arith.constant dense<0.000000e+00> : vector<2x128xf32>
    %543 = tpu.matmul %445, %532, %cst_134 {dimension_numbers = #tpu.dot_dimension_numbers<[1], [0], [0], [1], [0, 0, 1, 1], [], []>} : vector<2x32xf32>, vector<32x128xf32>, vector<2x128xf32> -> vector<2x128xf32>
    %544 = vector.broadcast %536 : vector<1x128xf32> to vector<2x128xf32>
    %545 = arith.addf %543, %544 : vector<2x128xf32>
    %cst_135 = arith.constant dense<0.000000e+00> : vector<2x128xf32>
    %546 = tpu.matmul %462, %532, %cst_135 {dimension_numbers = #tpu.dot_dimension_numbers<[1], [0], [0], [1], [0, 0, 1, 1], [], []>} : vector<2x32xf32>, vector<32x128xf32>, vector<2x128xf32> -> vector<2x128xf32>
    %547 = vector.broadcast %536 : vector<1x128xf32> to vector<2x128xf32>
    %548 = arith.addf %546, %547 : vector<2x128xf32>
    %cst_136 = arith.constant dense<0.000000e+00> : vector<2x128xf32>
    %549 = tpu.matmul %479, %532, %cst_136 {dimension_numbers = #tpu.dot_dimension_numbers<[1], [0], [0], [1], [0, 0, 1, 1], [], []>} : vector<2x32xf32>, vector<32x128xf32>, vector<2x128xf32> -> vector<2x128xf32>
    %550 = vector.broadcast %536 : vector<1x128xf32> to vector<2x128xf32>
    %551 = arith.addf %549, %550 : vector<2x128xf32>
    %cst_137 = arith.constant dense<0.000000e+00> : vector<2x128xf32>
    %552 = tpu.matmul %496, %532, %cst_137 {dimension_numbers = #tpu.dot_dimension_numbers<[1], [0], [0], [1], [0, 0, 1, 1], [], []>} : vector<2x32xf32>, vector<32x128xf32>, vector<2x128xf32> -> vector<2x128xf32>
    %553 = vector.broadcast %536 : vector<1x128xf32> to vector<2x128xf32>
    %554 = arith.addf %552, %553 : vector<2x128xf32>
    %cst_138 = arith.constant dense<0.000000e+00> : vector<2x128xf32>
    %555 = tpu.matmul %513, %532, %cst_138 {dimension_numbers = #tpu.dot_dimension_numbers<[1], [0], [0], [1], [0, 0, 1, 1], [], []>} : vector<2x32xf32>, vector<32x128xf32>, vector<2x128xf32> -> vector<2x128xf32>
    %556 = vector.broadcast %536 : vector<1x128xf32> to vector<2x128xf32>
    %557 = arith.addf %555, %556 : vector<2x128xf32>
    %cst_139 = arith.constant dense<0.000000e+00> : vector<2x128xf32>
    %558 = tpu.matmul %530, %532, %cst_139 {dimension_numbers = #tpu.dot_dimension_numbers<[1], [0], [0], [1], [0, 0, 1, 1], [], []>} : vector<2x32xf32>, vector<32x128xf32>, vector<2x128xf32> -> vector<2x128xf32>
    %559 = vector.broadcast %536 : vector<1x128xf32> to vector<2x128xf32>
    %560 = arith.addf %558, %559 : vector<2x128xf32>
    %cst_140 = arith.constant dense<0.000000e+00> : vector<2x128xf32>
    %561 = tpu.matmul %0, %534, %cst_140 {dimension_numbers = #tpu.dot_dimension_numbers<[1], [0], [0], [1], [0, 0, 1, 1], [], []>} : vector<2x32xf32>, vector<32x128xf32>, vector<2x128xf32> -> vector<2x128xf32>
    %562 = arith.addf %539, %561 : vector<2x128xf32>
    %563 = arith.negf %562 : vector<2x128xf32>
    %564 = math.exp %563 : vector<2x128xf32>
    %cst_141 = arith.constant 1.000000e+00 : f32
    %565 = vector.broadcast %cst_141 : f32 to vector<2x128xf32>
    %566 = arith.addf %565, %564 : vector<2x128xf32>
    %567 = arith.divf %565, %566 : vector<2x128xf32>
    %568 = math.tanh %562 : vector<2x128xf32>
    %569 = vector.extract_strided_slice %567 {offsets = [0, 0], sizes = [2, 32], strides = [1, 1]} : vector<2x128xf32> to vector<2x32xf32>
    %570 = vector.extract_strided_slice %567 {offsets = [0, 32], sizes = [2, 32], strides = [1, 1]} : vector<2x128xf32> to vector<2x32xf32>
    %571 = vector.extract_strided_slice %568 {offsets = [0, 64], sizes = [2, 32], strides = [1, 1]} : vector<2x128xf32> to vector<2x32xf32>
    %572 = vector.extract_strided_slice %567 {offsets = [0, 96], sizes = [2, 32], strides = [1, 1]} : vector<2x128xf32> to vector<2x32xf32>
    %573 = arith.mulf %570, %1 : vector<2x32xf32>
    %574 = arith.mulf %569, %571 : vector<2x32xf32>
    %575 = arith.addf %573, %574 : vector<2x32xf32>
    %576 = math.tanh %575 : vector<2x32xf32>
    %577 = arith.mulf %572, %576 : vector<2x32xf32>
    %cst_142 = arith.constant dense<0.000000e+00> : vector<2x128xf32>
    %578 = tpu.matmul %577, %534, %cst_142 {dimension_numbers = #tpu.dot_dimension_numbers<[1], [0], [0], [1], [0, 0, 1, 1], [], []>} : vector<2x32xf32>, vector<32x128xf32>, vector<2x128xf32> -> vector<2x128xf32>
    %579 = arith.addf %542, %578 : vector<2x128xf32>
    %580 = arith.negf %579 : vector<2x128xf32>
    %581 = math.exp %580 : vector<2x128xf32>
    %cst_143 = arith.constant 1.000000e+00 : f32
    %582 = vector.broadcast %cst_143 : f32 to vector<2x128xf32>
    %583 = arith.addf %582, %581 : vector<2x128xf32>
    %584 = arith.divf %582, %583 : vector<2x128xf32>
    %585 = math.tanh %579 : vector<2x128xf32>
    %586 = vector.extract_strided_slice %584 {offsets = [0, 0], sizes = [2, 32], strides = [1, 1]} : vector<2x128xf32> to vector<2x32xf32>
    %587 = vector.extract_strided_slice %584 {offsets = [0, 32], sizes = [2, 32], strides = [1, 1]} : vector<2x128xf32> to vector<2x32xf32>
    %588 = vector.extract_strided_slice %585 {offsets = [0, 64], sizes = [2, 32], strides = [1, 1]} : vector<2x128xf32> to vector<2x32xf32>
    %589 = vector.extract_strided_slice %584 {offsets = [0, 96], sizes = [2, 32], strides = [1, 1]} : vector<2x128xf32> to vector<2x32xf32>
    %590 = arith.mulf %587, %575 : vector<2x32xf32>
    %591 = arith.mulf %586, %588 : vector<2x32xf32>
    %592 = arith.addf %590, %591 : vector<2x32xf32>
    %593 = math.tanh %592 : vector<2x32xf32>
    %594 = arith.mulf %589, %593 : vector<2x32xf32>
    %cst_144 = arith.constant dense<0.000000e+00> : vector<2x128xf32>
    %595 = tpu.matmul %594, %534, %cst_144 {dimension_numbers = #tpu.dot_dimension_numbers<[1], [0], [0], [1], [0, 0, 1, 1], [], []>} : vector<2x32xf32>, vector<32x128xf32>, vector<2x128xf32> -> vector<2x128xf32>
    %596 = arith.addf %545, %595 : vector<2x128xf32>
    %597 = arith.negf %596 : vector<2x128xf32>
    %598 = math.exp %597 : vector<2x128xf32>
    %cst_145 = arith.constant 1.000000e+00 : f32
    %599 = vector.broadcast %cst_145 : f32 to vector<2x128xf32>
    %600 = arith.addf %599, %598 : vector<2x128xf32>
    %601 = arith.divf %599, %600 : vector<2x128xf32>
    %602 = math.tanh %596 : vector<2x128xf32>
    %603 = vector.extract_strided_slice %601 {offsets = [0, 0], sizes = [2, 32], strides = [1, 1]} : vector<2x128xf32> to vector<2x32xf32>
    %604 = vector.extract_strided_slice %601 {offsets = [0, 32], sizes = [2, 32], strides = [1, 1]} : vector<2x128xf32> to vector<2x32xf32>
    %605 = vector.extract_strided_slice %602 {offsets = [0, 64], sizes = [2, 32], strides = [1, 1]} : vector<2x128xf32> to vector<2x32xf32>
    %606 = vector.extract_strided_slice %601 {offsets = [0, 96], sizes = [2, 32], strides = [1, 1]} : vector<2x128xf32> to vector<2x32xf32>
    %607 = arith.mulf %604, %592 : vector<2x32xf32>
    %608 = arith.mulf %603, %605 : vector<2x32xf32>
    %609 = arith.addf %607, %608 : vector<2x32xf32>
    %610 = math.tanh %609 : vector<2x32xf32>
    %611 = arith.mulf %606, %610 : vector<2x32xf32>
    %cst_146 = arith.constant dense<0.000000e+00> : vector<2x128xf32>
    %612 = tpu.matmul %611, %534, %cst_146 {dimension_numbers = #tpu.dot_dimension_numbers<[1], [0], [0], [1], [0, 0, 1, 1], [], []>} : vector<2x32xf32>, vector<32x128xf32>, vector<2x128xf32> -> vector<2x128xf32>
    %613 = arith.addf %548, %612 : vector<2x128xf32>
    %614 = arith.negf %613 : vector<2x128xf32>
    %615 = math.exp %614 : vector<2x128xf32>
    %cst_147 = arith.constant 1.000000e+00 : f32
    %616 = vector.broadcast %cst_147 : f32 to vector<2x128xf32>
    %617 = arith.addf %616, %615 : vector<2x128xf32>
    %618 = arith.divf %616, %617 : vector<2x128xf32>
    %619 = math.tanh %613 : vector<2x128xf32>
    %620 = vector.extract_strided_slice %618 {offsets = [0, 0], sizes = [2, 32], strides = [1, 1]} : vector<2x128xf32> to vector<2x32xf32>
    %621 = vector.extract_strided_slice %618 {offsets = [0, 32], sizes = [2, 32], strides = [1, 1]} : vector<2x128xf32> to vector<2x32xf32>
    %622 = vector.extract_strided_slice %619 {offsets = [0, 64], sizes = [2, 32], strides = [1, 1]} : vector<2x128xf32> to vector<2x32xf32>
    %623 = vector.extract_strided_slice %618 {offsets = [0, 96], sizes = [2, 32], strides = [1, 1]} : vector<2x128xf32> to vector<2x32xf32>
    %624 = arith.mulf %621, %609 : vector<2x32xf32>
    %625 = arith.mulf %620, %622 : vector<2x32xf32>
    %626 = arith.addf %624, %625 : vector<2x32xf32>
    %627 = math.tanh %626 : vector<2x32xf32>
    %628 = arith.mulf %623, %627 : vector<2x32xf32>
    %cst_148 = arith.constant dense<0.000000e+00> : vector<2x128xf32>
    %629 = tpu.matmul %628, %534, %cst_148 {dimension_numbers = #tpu.dot_dimension_numbers<[1], [0], [0], [1], [0, 0, 1, 1], [], []>} : vector<2x32xf32>, vector<32x128xf32>, vector<2x128xf32> -> vector<2x128xf32>
    %630 = arith.addf %551, %629 : vector<2x128xf32>
    %631 = arith.negf %630 : vector<2x128xf32>
    %632 = math.exp %631 : vector<2x128xf32>
    %cst_149 = arith.constant 1.000000e+00 : f32
    %633 = vector.broadcast %cst_149 : f32 to vector<2x128xf32>
    %634 = arith.addf %633, %632 : vector<2x128xf32>
    %635 = arith.divf %633, %634 : vector<2x128xf32>
    %636 = math.tanh %630 : vector<2x128xf32>
    %637 = vector.extract_strided_slice %635 {offsets = [0, 0], sizes = [2, 32], strides = [1, 1]} : vector<2x128xf32> to vector<2x32xf32>
    %638 = vector.extract_strided_slice %635 {offsets = [0, 32], sizes = [2, 32], strides = [1, 1]} : vector<2x128xf32> to vector<2x32xf32>
    %639 = vector.extract_strided_slice %636 {offsets = [0, 64], sizes = [2, 32], strides = [1, 1]} : vector<2x128xf32> to vector<2x32xf32>
    %640 = vector.extract_strided_slice %635 {offsets = [0, 96], sizes = [2, 32], strides = [1, 1]} : vector<2x128xf32> to vector<2x32xf32>
    %641 = arith.mulf %638, %626 : vector<2x32xf32>
    %642 = arith.mulf %637, %639 : vector<2x32xf32>
    %643 = arith.addf %641, %642 : vector<2x32xf32>
    %644 = math.tanh %643 : vector<2x32xf32>
    %645 = arith.mulf %640, %644 : vector<2x32xf32>
    %cst_150 = arith.constant dense<0.000000e+00> : vector<2x128xf32>
    %646 = tpu.matmul %645, %534, %cst_150 {dimension_numbers = #tpu.dot_dimension_numbers<[1], [0], [0], [1], [0, 0, 1, 1], [], []>} : vector<2x32xf32>, vector<32x128xf32>, vector<2x128xf32> -> vector<2x128xf32>
    %647 = arith.addf %554, %646 : vector<2x128xf32>
    %648 = arith.negf %647 : vector<2x128xf32>
    %649 = math.exp %648 : vector<2x128xf32>
    %cst_151 = arith.constant 1.000000e+00 : f32
    %650 = vector.broadcast %cst_151 : f32 to vector<2x128xf32>
    %651 = arith.addf %650, %649 : vector<2x128xf32>
    %652 = arith.divf %650, %651 : vector<2x128xf32>
    %653 = math.tanh %647 : vector<2x128xf32>
    %654 = vector.extract_strided_slice %652 {offsets = [0, 0], sizes = [2, 32], strides = [1, 1]} : vector<2x128xf32> to vector<2x32xf32>
    %655 = vector.extract_strided_slice %652 {offsets = [0, 32], sizes = [2, 32], strides = [1, 1]} : vector<2x128xf32> to vector<2x32xf32>
    %656 = vector.extract_strided_slice %653 {offsets = [0, 64], sizes = [2, 32], strides = [1, 1]} : vector<2x128xf32> to vector<2x32xf32>
    %657 = vector.extract_strided_slice %652 {offsets = [0, 96], sizes = [2, 32], strides = [1, 1]} : vector<2x128xf32> to vector<2x32xf32>
    %658 = arith.mulf %655, %643 : vector<2x32xf32>
    %659 = arith.mulf %654, %656 : vector<2x32xf32>
    %660 = arith.addf %658, %659 : vector<2x32xf32>
    %661 = math.tanh %660 : vector<2x32xf32>
    %662 = arith.mulf %657, %661 : vector<2x32xf32>
    %cst_152 = arith.constant dense<0.000000e+00> : vector<2x128xf32>
    %663 = tpu.matmul %662, %534, %cst_152 {dimension_numbers = #tpu.dot_dimension_numbers<[1], [0], [0], [1], [0, 0, 1, 1], [], []>} : vector<2x32xf32>, vector<32x128xf32>, vector<2x128xf32> -> vector<2x128xf32>
    %664 = arith.addf %557, %663 : vector<2x128xf32>
    %665 = arith.negf %664 : vector<2x128xf32>
    %666 = math.exp %665 : vector<2x128xf32>
    %cst_153 = arith.constant 1.000000e+00 : f32
    %667 = vector.broadcast %cst_153 : f32 to vector<2x128xf32>
    %668 = arith.addf %667, %666 : vector<2x128xf32>
    %669 = arith.divf %667, %668 : vector<2x128xf32>
    %670 = math.tanh %664 : vector<2x128xf32>
    %671 = vector.extract_strided_slice %669 {offsets = [0, 0], sizes = [2, 32], strides = [1, 1]} : vector<2x128xf32> to vector<2x32xf32>
    %672 = vector.extract_strided_slice %669 {offsets = [0, 32], sizes = [2, 32], strides = [1, 1]} : vector<2x128xf32> to vector<2x32xf32>
    %673 = vector.extract_strided_slice %670 {offsets = [0, 64], sizes = [2, 32], strides = [1, 1]} : vector<2x128xf32> to vector<2x32xf32>
    %674 = vector.extract_strided_slice %669 {offsets = [0, 96], sizes = [2, 32], strides = [1, 1]} : vector<2x128xf32> to vector<2x32xf32>
    %675 = arith.mulf %672, %660 : vector<2x32xf32>
    %676 = arith.mulf %671, %673 : vector<2x32xf32>
    %677 = arith.addf %675, %676 : vector<2x32xf32>
    %678 = math.tanh %677 : vector<2x32xf32>
    %679 = arith.mulf %674, %678 : vector<2x32xf32>
    %cst_154 = arith.constant dense<0.000000e+00> : vector<2x128xf32>
    %680 = tpu.matmul %679, %534, %cst_154 {dimension_numbers = #tpu.dot_dimension_numbers<[1], [0], [0], [1], [0, 0, 1, 1], [], []>} : vector<2x32xf32>, vector<32x128xf32>, vector<2x128xf32> -> vector<2x128xf32>
    %681 = arith.addf %560, %680 : vector<2x128xf32>
    %682 = arith.negf %681 : vector<2x128xf32>
    %683 = math.exp %682 : vector<2x128xf32>
    %cst_155 = arith.constant 1.000000e+00 : f32
    %684 = vector.broadcast %cst_155 : f32 to vector<2x128xf32>
    %685 = arith.addf %684, %683 : vector<2x128xf32>
    %686 = arith.divf %684, %685 : vector<2x128xf32>
    %687 = math.tanh %681 : vector<2x128xf32>
    %688 = vector.extract_strided_slice %686 {offsets = [0, 0], sizes = [2, 32], strides = [1, 1]} : vector<2x128xf32> to vector<2x32xf32>
    %689 = vector.extract_strided_slice %686 {offsets = [0, 32], sizes = [2, 32], strides = [1, 1]} : vector<2x128xf32> to vector<2x32xf32>
    %690 = vector.extract_strided_slice %687 {offsets = [0, 64], sizes = [2, 32], strides = [1, 1]} : vector<2x128xf32> to vector<2x32xf32>
    %691 = vector.extract_strided_slice %686 {offsets = [0, 96], sizes = [2, 32], strides = [1, 1]} : vector<2x128xf32> to vector<2x32xf32>
    %692 = arith.mulf %689, %677 : vector<2x32xf32>
    %693 = arith.mulf %688, %690 : vector<2x32xf32>
    %694 = arith.addf %692, %693 : vector<2x32xf32>
    %695 = math.tanh %694 : vector<2x32xf32>
    %696 = arith.mulf %691, %695 : vector<2x32xf32>
    %c3_156 = arith.constant 3 : index
    %c0_157 = arith.constant 0 : index
    %c0_158 = arith.constant 0 : index
    %697 = vector.load %arg2[%c3_156, %c0_157, %c0_158] : memref<4x32x128xf32, #tpu.memory_space<vmem>>, vector<1x32x128xf32>
    %698 = vector.shape_cast %697 : vector<1x32x128xf32> to vector<32x128xf32>
    %c4_159 = arith.constant 4 : index
    %c0_160 = arith.constant 0 : index
    %c0_161 = arith.constant 0 : index
    %699 = vector.load %arg3[%c4_159, %c0_160, %c0_161] : memref<5x32x128xf32, #tpu.memory_space<vmem>>, vector<1x32x128xf32>
    %700 = vector.shape_cast %699 : vector<1x32x128xf32> to vector<32x128xf32>
    %c4_162 = arith.constant 4 : index
    %c0_163 = arith.constant 0 : index
    %c0_164 = arith.constant 0 : index
    %701 = vector.load %arg4[%c4_162, %c0_163, %c0_164] : memref<5x1x128xf32, #tpu.memory_space<vmem>>, vector<1x1x128xf32>
    %702 = vector.shape_cast %701 : vector<1x1x128xf32> to vector<1x128xf32>
    %cst_165 = arith.constant dense<0.000000e+00> : vector<2x128xf32>
    %703 = tpu.matmul %577, %698, %cst_165 {dimension_numbers = #tpu.dot_dimension_numbers<[1], [0], [0], [1], [0, 0, 1, 1], [], []>} : vector<2x32xf32>, vector<32x128xf32>, vector<2x128xf32> -> vector<2x128xf32>
    %704 = vector.broadcast %702 : vector<1x128xf32> to vector<2x128xf32>
    %705 = arith.addf %703, %704 : vector<2x128xf32>
    %cst_166 = arith.constant dense<0.000000e+00> : vector<2x128xf32>
    %706 = tpu.matmul %594, %698, %cst_166 {dimension_numbers = #tpu.dot_dimension_numbers<[1], [0], [0], [1], [0, 0, 1, 1], [], []>} : vector<2x32xf32>, vector<32x128xf32>, vector<2x128xf32> -> vector<2x128xf32>
    %707 = vector.broadcast %702 : vector<1x128xf32> to vector<2x128xf32>
    %708 = arith.addf %706, %707 : vector<2x128xf32>
    %cst_167 = arith.constant dense<0.000000e+00> : vector<2x128xf32>
    %709 = tpu.matmul %611, %698, %cst_167 {dimension_numbers = #tpu.dot_dimension_numbers<[1], [0], [0], [1], [0, 0, 1, 1], [], []>} : vector<2x32xf32>, vector<32x128xf32>, vector<2x128xf32> -> vector<2x128xf32>
    %710 = vector.broadcast %702 : vector<1x128xf32> to vector<2x128xf32>
    %711 = arith.addf %709, %710 : vector<2x128xf32>
    %cst_168 = arith.constant dense<0.000000e+00> : vector<2x128xf32>
    %712 = tpu.matmul %628, %698, %cst_168 {dimension_numbers = #tpu.dot_dimension_numbers<[1], [0], [0], [1], [0, 0, 1, 1], [], []>} : vector<2x32xf32>, vector<32x128xf32>, vector<2x128xf32> -> vector<2x128xf32>
    %713 = vector.broadcast %702 : vector<1x128xf32> to vector<2x128xf32>
    %714 = arith.addf %712, %713 : vector<2x128xf32>
    %cst_169 = arith.constant dense<0.000000e+00> : vector<2x128xf32>
    %715 = tpu.matmul %645, %698, %cst_169 {dimension_numbers = #tpu.dot_dimension_numbers<[1], [0], [0], [1], [0, 0, 1, 1], [], []>} : vector<2x32xf32>, vector<32x128xf32>, vector<2x128xf32> -> vector<2x128xf32>
    %716 = vector.broadcast %702 : vector<1x128xf32> to vector<2x128xf32>
    %717 = arith.addf %715, %716 : vector<2x128xf32>
    %cst_170 = arith.constant dense<0.000000e+00> : vector<2x128xf32>
    %718 = tpu.matmul %662, %698, %cst_170 {dimension_numbers = #tpu.dot_dimension_numbers<[1], [0], [0], [1], [0, 0, 1, 1], [], []>} : vector<2x32xf32>, vector<32x128xf32>, vector<2x128xf32> -> vector<2x128xf32>
    %719 = vector.broadcast %702 : vector<1x128xf32> to vector<2x128xf32>
    %720 = arith.addf %718, %719 : vector<2x128xf32>
    %cst_171 = arith.constant dense<0.000000e+00> : vector<2x128xf32>
    %721 = tpu.matmul %679, %698, %cst_171 {dimension_numbers = #tpu.dot_dimension_numbers<[1], [0], [0], [1], [0, 0, 1, 1], [], []>} : vector<2x32xf32>, vector<32x128xf32>, vector<2x128xf32> -> vector<2x128xf32>
    %722 = vector.broadcast %702 : vector<1x128xf32> to vector<2x128xf32>
    %723 = arith.addf %721, %722 : vector<2x128xf32>
    %cst_172 = arith.constant dense<0.000000e+00> : vector<2x128xf32>
    %724 = tpu.matmul %696, %698, %cst_172 {dimension_numbers = #tpu.dot_dimension_numbers<[1], [0], [0], [1], [0, 0, 1, 1], [], []>} : vector<2x32xf32>, vector<32x128xf32>, vector<2x128xf32> -> vector<2x128xf32>
    %725 = vector.broadcast %702 : vector<1x128xf32> to vector<2x128xf32>
    %726 = arith.addf %724, %725 : vector<2x128xf32>
    %cst_173 = arith.constant dense<0.000000e+00> : vector<2x128xf32>
    %727 = tpu.matmul %0, %700, %cst_173 {dimension_numbers = #tpu.dot_dimension_numbers<[1], [0], [0], [1], [0, 0, 1, 1], [], []>} : vector<2x32xf32>, vector<32x128xf32>, vector<2x128xf32> -> vector<2x128xf32>
    %728 = arith.addf %705, %727 : vector<2x128xf32>
    %729 = arith.negf %728 : vector<2x128xf32>
    %730 = math.exp %729 : vector<2x128xf32>
    %cst_174 = arith.constant 1.000000e+00 : f32
    %731 = vector.broadcast %cst_174 : f32 to vector<2x128xf32>
    %732 = arith.addf %731, %730 : vector<2x128xf32>
    %733 = arith.divf %731, %732 : vector<2x128xf32>
    %734 = math.tanh %728 : vector<2x128xf32>
    %735 = vector.extract_strided_slice %733 {offsets = [0, 0], sizes = [2, 32], strides = [1, 1]} : vector<2x128xf32> to vector<2x32xf32>
    %736 = vector.extract_strided_slice %733 {offsets = [0, 32], sizes = [2, 32], strides = [1, 1]} : vector<2x128xf32> to vector<2x32xf32>
    %737 = vector.extract_strided_slice %734 {offsets = [0, 64], sizes = [2, 32], strides = [1, 1]} : vector<2x128xf32> to vector<2x32xf32>
    %738 = vector.extract_strided_slice %733 {offsets = [0, 96], sizes = [2, 32], strides = [1, 1]} : vector<2x128xf32> to vector<2x32xf32>
    %739 = arith.mulf %736, %1 : vector<2x32xf32>
    %740 = arith.mulf %735, %737 : vector<2x32xf32>
    %741 = arith.addf %739, %740 : vector<2x32xf32>
    %742 = math.tanh %741 : vector<2x32xf32>
    %743 = arith.mulf %738, %742 : vector<2x32xf32>
    %cst_175 = arith.constant dense<0.000000e+00> : vector<2x128xf32>
    %744 = tpu.matmul %743, %700, %cst_175 {dimension_numbers = #tpu.dot_dimension_numbers<[1], [0], [0], [1], [0, 0, 1, 1], [], []>} : vector<2x32xf32>, vector<32x128xf32>, vector<2x128xf32> -> vector<2x128xf32>
    %745 = arith.addf %708, %744 : vector<2x128xf32>
    %746 = arith.negf %745 : vector<2x128xf32>
    %747 = math.exp %746 : vector<2x128xf32>
    %cst_176 = arith.constant 1.000000e+00 : f32
    %748 = vector.broadcast %cst_176 : f32 to vector<2x128xf32>
    %749 = arith.addf %748, %747 : vector<2x128xf32>
    %750 = arith.divf %748, %749 : vector<2x128xf32>
    %751 = math.tanh %745 : vector<2x128xf32>
    %752 = vector.extract_strided_slice %750 {offsets = [0, 0], sizes = [2, 32], strides = [1, 1]} : vector<2x128xf32> to vector<2x32xf32>
    %753 = vector.extract_strided_slice %750 {offsets = [0, 32], sizes = [2, 32], strides = [1, 1]} : vector<2x128xf32> to vector<2x32xf32>
    %754 = vector.extract_strided_slice %751 {offsets = [0, 64], sizes = [2, 32], strides = [1, 1]} : vector<2x128xf32> to vector<2x32xf32>
    %755 = vector.extract_strided_slice %750 {offsets = [0, 96], sizes = [2, 32], strides = [1, 1]} : vector<2x128xf32> to vector<2x32xf32>
    %756 = arith.mulf %753, %741 : vector<2x32xf32>
    %757 = arith.mulf %752, %754 : vector<2x32xf32>
    %758 = arith.addf %756, %757 : vector<2x32xf32>
    %759 = math.tanh %758 : vector<2x32xf32>
    %760 = arith.mulf %755, %759 : vector<2x32xf32>
    %cst_177 = arith.constant dense<0.000000e+00> : vector<2x128xf32>
    %761 = tpu.matmul %760, %700, %cst_177 {dimension_numbers = #tpu.dot_dimension_numbers<[1], [0], [0], [1], [0, 0, 1, 1], [], []>} : vector<2x32xf32>, vector<32x128xf32>, vector<2x128xf32> -> vector<2x128xf32>
    %762 = arith.addf %711, %761 : vector<2x128xf32>
    %763 = arith.negf %762 : vector<2x128xf32>
    %764 = math.exp %763 : vector<2x128xf32>
    %cst_178 = arith.constant 1.000000e+00 : f32
    %765 = vector.broadcast %cst_178 : f32 to vector<2x128xf32>
    %766 = arith.addf %765, %764 : vector<2x128xf32>
    %767 = arith.divf %765, %766 : vector<2x128xf32>
    %768 = math.tanh %762 : vector<2x128xf32>
    %769 = vector.extract_strided_slice %767 {offsets = [0, 0], sizes = [2, 32], strides = [1, 1]} : vector<2x128xf32> to vector<2x32xf32>
    %770 = vector.extract_strided_slice %767 {offsets = [0, 32], sizes = [2, 32], strides = [1, 1]} : vector<2x128xf32> to vector<2x32xf32>
    %771 = vector.extract_strided_slice %768 {offsets = [0, 64], sizes = [2, 32], strides = [1, 1]} : vector<2x128xf32> to vector<2x32xf32>
    %772 = vector.extract_strided_slice %767 {offsets = [0, 96], sizes = [2, 32], strides = [1, 1]} : vector<2x128xf32> to vector<2x32xf32>
    %773 = arith.mulf %770, %758 : vector<2x32xf32>
    %774 = arith.mulf %769, %771 : vector<2x32xf32>
    %775 = arith.addf %773, %774 : vector<2x32xf32>
    %776 = math.tanh %775 : vector<2x32xf32>
    %777 = arith.mulf %772, %776 : vector<2x32xf32>
    %cst_179 = arith.constant dense<0.000000e+00> : vector<2x128xf32>
    %778 = tpu.matmul %777, %700, %cst_179 {dimension_numbers = #tpu.dot_dimension_numbers<[1], [0], [0], [1], [0, 0, 1, 1], [], []>} : vector<2x32xf32>, vector<32x128xf32>, vector<2x128xf32> -> vector<2x128xf32>
    %779 = arith.addf %714, %778 : vector<2x128xf32>
    %780 = arith.negf %779 : vector<2x128xf32>
    %781 = math.exp %780 : vector<2x128xf32>
    %cst_180 = arith.constant 1.000000e+00 : f32
    %782 = vector.broadcast %cst_180 : f32 to vector<2x128xf32>
    %783 = arith.addf %782, %781 : vector<2x128xf32>
    %784 = arith.divf %782, %783 : vector<2x128xf32>
    %785 = math.tanh %779 : vector<2x128xf32>
    %786 = vector.extract_strided_slice %784 {offsets = [0, 0], sizes = [2, 32], strides = [1, 1]} : vector<2x128xf32> to vector<2x32xf32>
    %787 = vector.extract_strided_slice %784 {offsets = [0, 32], sizes = [2, 32], strides = [1, 1]} : vector<2x128xf32> to vector<2x32xf32>
    %788 = vector.extract_strided_slice %785 {offsets = [0, 64], sizes = [2, 32], strides = [1, 1]} : vector<2x128xf32> to vector<2x32xf32>
    %789 = vector.extract_strided_slice %784 {offsets = [0, 96], sizes = [2, 32], strides = [1, 1]} : vector<2x128xf32> to vector<2x32xf32>
    %790 = arith.mulf %787, %775 : vector<2x32xf32>
    %791 = arith.mulf %786, %788 : vector<2x32xf32>
    %792 = arith.addf %790, %791 : vector<2x32xf32>
    %793 = math.tanh %792 : vector<2x32xf32>
    %794 = arith.mulf %789, %793 : vector<2x32xf32>
    %cst_181 = arith.constant dense<0.000000e+00> : vector<2x128xf32>
    %795 = tpu.matmul %794, %700, %cst_181 {dimension_numbers = #tpu.dot_dimension_numbers<[1], [0], [0], [1], [0, 0, 1, 1], [], []>} : vector<2x32xf32>, vector<32x128xf32>, vector<2x128xf32> -> vector<2x128xf32>
    %796 = arith.addf %717, %795 : vector<2x128xf32>
    %797 = arith.negf %796 : vector<2x128xf32>
    %798 = math.exp %797 : vector<2x128xf32>
    %cst_182 = arith.constant 1.000000e+00 : f32
    %799 = vector.broadcast %cst_182 : f32 to vector<2x128xf32>
    %800 = arith.addf %799, %798 : vector<2x128xf32>
    %801 = arith.divf %799, %800 : vector<2x128xf32>
    %802 = math.tanh %796 : vector<2x128xf32>
    %803 = vector.extract_strided_slice %801 {offsets = [0, 0], sizes = [2, 32], strides = [1, 1]} : vector<2x128xf32> to vector<2x32xf32>
    %804 = vector.extract_strided_slice %801 {offsets = [0, 32], sizes = [2, 32], strides = [1, 1]} : vector<2x128xf32> to vector<2x32xf32>
    %805 = vector.extract_strided_slice %802 {offsets = [0, 64], sizes = [2, 32], strides = [1, 1]} : vector<2x128xf32> to vector<2x32xf32>
    %806 = vector.extract_strided_slice %801 {offsets = [0, 96], sizes = [2, 32], strides = [1, 1]} : vector<2x128xf32> to vector<2x32xf32>
    %807 = arith.mulf %804, %792 : vector<2x32xf32>
    %808 = arith.mulf %803, %805 : vector<2x32xf32>
    %809 = arith.addf %807, %808 : vector<2x32xf32>
    %810 = math.tanh %809 : vector<2x32xf32>
    %811 = arith.mulf %806, %810 : vector<2x32xf32>
    %cst_183 = arith.constant dense<0.000000e+00> : vector<2x128xf32>
    %812 = tpu.matmul %811, %700, %cst_183 {dimension_numbers = #tpu.dot_dimension_numbers<[1], [0], [0], [1], [0, 0, 1, 1], [], []>} : vector<2x32xf32>, vector<32x128xf32>, vector<2x128xf32> -> vector<2x128xf32>
    %813 = arith.addf %720, %812 : vector<2x128xf32>
    %814 = arith.negf %813 : vector<2x128xf32>
    %815 = math.exp %814 : vector<2x128xf32>
    %cst_184 = arith.constant 1.000000e+00 : f32
    %816 = vector.broadcast %cst_184 : f32 to vector<2x128xf32>
    %817 = arith.addf %816, %815 : vector<2x128xf32>
    %818 = arith.divf %816, %817 : vector<2x128xf32>
    %819 = math.tanh %813 : vector<2x128xf32>
    %820 = vector.extract_strided_slice %818 {offsets = [0, 0], sizes = [2, 32], strides = [1, 1]} : vector<2x128xf32> to vector<2x32xf32>
    %821 = vector.extract_strided_slice %818 {offsets = [0, 32], sizes = [2, 32], strides = [1, 1]} : vector<2x128xf32> to vector<2x32xf32>
    %822 = vector.extract_strided_slice %819 {offsets = [0, 64], sizes = [2, 32], strides = [1, 1]} : vector<2x128xf32> to vector<2x32xf32>
    %823 = vector.extract_strided_slice %818 {offsets = [0, 96], sizes = [2, 32], strides = [1, 1]} : vector<2x128xf32> to vector<2x32xf32>
    %824 = arith.mulf %821, %809 : vector<2x32xf32>
    %825 = arith.mulf %820, %822 : vector<2x32xf32>
    %826 = arith.addf %824, %825 : vector<2x32xf32>
    %827 = math.tanh %826 : vector<2x32xf32>
    %828 = arith.mulf %823, %827 : vector<2x32xf32>
    %cst_185 = arith.constant dense<0.000000e+00> : vector<2x128xf32>
    %829 = tpu.matmul %828, %700, %cst_185 {dimension_numbers = #tpu.dot_dimension_numbers<[1], [0], [0], [1], [0, 0, 1, 1], [], []>} : vector<2x32xf32>, vector<32x128xf32>, vector<2x128xf32> -> vector<2x128xf32>
    %830 = arith.addf %723, %829 : vector<2x128xf32>
    %831 = arith.negf %830 : vector<2x128xf32>
    %832 = math.exp %831 : vector<2x128xf32>
    %cst_186 = arith.constant 1.000000e+00 : f32
    %833 = vector.broadcast %cst_186 : f32 to vector<2x128xf32>
    %834 = arith.addf %833, %832 : vector<2x128xf32>
    %835 = arith.divf %833, %834 : vector<2x128xf32>
    %836 = math.tanh %830 : vector<2x128xf32>
    %837 = vector.extract_strided_slice %835 {offsets = [0, 0], sizes = [2, 32], strides = [1, 1]} : vector<2x128xf32> to vector<2x32xf32>
    %838 = vector.extract_strided_slice %835 {offsets = [0, 32], sizes = [2, 32], strides = [1, 1]} : vector<2x128xf32> to vector<2x32xf32>
    %839 = vector.extract_strided_slice %836 {offsets = [0, 64], sizes = [2, 32], strides = [1, 1]} : vector<2x128xf32> to vector<2x32xf32>
    %840 = vector.extract_strided_slice %835 {offsets = [0, 96], sizes = [2, 32], strides = [1, 1]} : vector<2x128xf32> to vector<2x32xf32>
    %841 = arith.mulf %838, %826 : vector<2x32xf32>
    %842 = arith.mulf %837, %839 : vector<2x32xf32>
    %843 = arith.addf %841, %842 : vector<2x32xf32>
    %844 = math.tanh %843 : vector<2x32xf32>
    %845 = arith.mulf %840, %844 : vector<2x32xf32>
    %cst_187 = arith.constant dense<0.000000e+00> : vector<2x128xf32>
    %846 = tpu.matmul %845, %700, %cst_187 {dimension_numbers = #tpu.dot_dimension_numbers<[1], [0], [0], [1], [0, 0, 1, 1], [], []>} : vector<2x32xf32>, vector<32x128xf32>, vector<2x128xf32> -> vector<2x128xf32>
    %847 = arith.addf %726, %846 : vector<2x128xf32>
    %848 = arith.negf %847 : vector<2x128xf32>
    %849 = math.exp %848 : vector<2x128xf32>
    %cst_188 = arith.constant 1.000000e+00 : f32
    %850 = vector.broadcast %cst_188 : f32 to vector<2x128xf32>
    %851 = arith.addf %850, %849 : vector<2x128xf32>
    %852 = arith.divf %850, %851 : vector<2x128xf32>
    %853 = math.tanh %847 : vector<2x128xf32>
    %854 = vector.extract_strided_slice %852 {offsets = [0, 0], sizes = [2, 32], strides = [1, 1]} : vector<2x128xf32> to vector<2x32xf32>
    %855 = vector.extract_strided_slice %852 {offsets = [0, 32], sizes = [2, 32], strides = [1, 1]} : vector<2x128xf32> to vector<2x32xf32>
    %856 = vector.extract_strided_slice %853 {offsets = [0, 64], sizes = [2, 32], strides = [1, 1]} : vector<2x128xf32> to vector<2x32xf32>
    %857 = vector.extract_strided_slice %852 {offsets = [0, 96], sizes = [2, 32], strides = [1, 1]} : vector<2x128xf32> to vector<2x32xf32>
    %858 = arith.mulf %855, %843 : vector<2x32xf32>
    %859 = arith.mulf %854, %856 : vector<2x32xf32>
    %860 = arith.addf %858, %859 : vector<2x32xf32>
    %861 = math.tanh %860 : vector<2x32xf32>
    %862 = arith.mulf %857, %861 : vector<2x32xf32>
    %c0_189 = arith.constant 0 : index
    %c0_190 = arith.constant 0 : index
    %863 = vector.load %arg5[%c0_189, %c0_190] : memref<32x128xf32, #tpu.memory_space<vmem>>, vector<32x128xf32>
    %cst_191 = arith.constant dense<0.000000e+00> : vector<2x128xf32>
    %864 = tpu.matmul %862, %863, %cst_191 {dimension_numbers = #tpu.dot_dimension_numbers<[1], [0], [0], [1], [0, 0, 1, 1], [], []>} : vector<2x32xf32>, vector<32x128xf32>, vector<2x128xf32> -> vector<2x128xf32>
    %c0_192 = arith.constant 0 : index
    %c0_193 = arith.constant 0 : index
    %865 = vector.load %arg6[%c0_192, %c0_193] : memref<1x128xf32, #tpu.memory_space<vmem>>, vector<1x128xf32>
    %866 = vector.broadcast %865 : vector<1x128xf32> to vector<2x128xf32>
    %867 = arith.addf %864, %866 : vector<2x128xf32>
    %c0_194 = arith.constant 0 : index
    %c0_195 = arith.constant 0 : index
    %868 = vector.load %arg7[%c0_194, %c0_195] : memref<2x128xf32, #tpu.memory_space<vmem>>, vector<2x128xf32>
    tpu.vector_store %arg7[%c0_194, %c0_195], %867 {strides = array<i32>} : memref<2x128xf32, #tpu.memory_space<vmem>>, vector<2x128xf32>,
    return
  }
}

</mosaic_0001>

<llo_original>
// kernel: tpu_custom_call.1
$region0: #{tpu_custom_call.1}
  #allocation0 [shape = 'u32[]', space=smem, size = 0x4, offset = 0x4, fixed_abs, tag = 'smem constant byte address 0x4 - core index']
  #allocation1 [shape = 'u32[144,128]{1,0:T(1,128)}', space=vmem, size = 0x12000, scoped, tag = 'internal scratch']
  %s0 = inlined_call_operand.hbm [shape: f32[8,2,16], index: 0, kind: input, shape index: {}]
  %s1 = inlined_call_operand.hbm [shape: f32[16,128], index: 1, kind: input, shape index: {}]
  %s2 = inlined_call_operand.hbm [shape: f32[4,32,128], index: 2, kind: input, shape index: {}]
  %s3 = inlined_call_operand.hbm [shape: f32[5,32,128], index: 3, kind: input, shape index: {}]
  %s4 = inlined_call_operand.vmem [shape: f32[5,1,128], index: 4, kind: input, shape index: {}]
  %s5 = inlined_call_operand.hbm [shape: f32[32,128], index: 5, kind: input, shape index: {}]
  %s6 = inlined_call_operand.vmem [shape: f32[1,128], index: 6, kind: input, shape index: {}]
  %s7 = inlined_call_operand.hbm [shape: f32[2,128], index: 7, kind: output, shape index: {}]
  %s8 = sld [smem:[#allocation0]]
  $region58: #{tpu_custom_call.1} parent=0
    _
  %s10 = ssub.s32 1, %s8
  %s11 = scalar_select 0, %s10, %s8
  $region1: #{tpu_custom_call.1} parent=0
    #allocation2 [shape = 'u8[8192]{0}', space=vmem, size = 0x2000, scoped, tag = 'input window, operand 0, single buffered']
    #allocation3 [shape = 's32[1]{0}', space=sflag, size = 0x4, scoped, tag = 'scoped memory for tpu_custom_call.1']
    #allocation4 [shape = 's32[1]{0}', space=sflag, size = 0x4, scoped, tag = 'scoped memory for tpu_custom_call.1']
    #allocation5 [shape = 'u8[8192]{0}', space=vmem, size = 0x2000, scoped, tag = 'input window, operand 1, single buffered']
    #allocation6 [shape = 's32[1]{0}', space=sflag, size = 0x4, scoped, tag = 'scoped memory for tpu_custom_call.1']
    #allocation7 [shape = 'u8[65536]{0}', space=vmem, size = 0x10000, scoped, tag = 'input window, operand 2, single buffered']
    #allocation8 [shape = 'u8[81920]{0}', space=vmem, size = 0x14000, scoped, tag = 'input window, operand 3, single buffered']
    #allocation9 [shape = 's32[1]{0}', space=sflag, size = 0x4, scoped, tag = 'scoped memory for tpu_custom_call.1']
    #allocation10 [shape = 'u8[16384]{0}', space=vmem, size = 0x4000, scoped, tag = 'input window, operand 5, single buffered']
    #allocation11 [shape = 'u8[1024]{0}', space=vmem, size = 0x400, scoped, tag = 'output window, operand 0, single buffered']
    %12 = vsyncpa [#allocation3], 0
    %13 = vsyncpa [#allocation6], 0
    %14 = vsyncpa [#allocation9], 0
    %15 = vsyncpa [#allocation4], 0
    // Predicated region
    $region2: #{tpu_custom_call.1} parent=1 // pred_check
      _
    $region3: #{tpu_custom_call.1} parent=1 // pred_check_branch
      %17 = sbr.rel (0) target = $region5
    $region4: #{tpu_custom_call.1} parent=1 // pred_region
      %s19 = ssub.s32 256, 256
      %20 = vsyncadd [#allocation3], %s19
      %s21 = sshll.u32 [#allocation2], 4
      %s22 = int_to_ptr.vmem [resolvable:$true] %s21
      %27 = dma.hbm_to_vmem [thread:$0]  %s0, 256, %s22, [#allocation3], 32, 32, 2
    $region5: #{tpu_custom_call.1} parent=1 // pred_fallthru
      _
    // Predicated region
    $region6: #{tpu_custom_call.1} parent=1 // pred_check
      _
    $region7: #{tpu_custom_call.1} parent=1 // pred_check_branch
      %29 = sbr.rel (0) target = $region9
    $region8: #{tpu_custom_call.1} parent=1 // pred_region
      %s31 = ssub.s32 256, 256
      %32 = vsyncadd [#allocation6], %s31
      %s33 = sshll.u32 [#allocation5], 4
      %s34 = int_to_ptr.vmem [resolvable:$true] %s33
      %39 = dma.hbm_to_vmem [thread:$0]  %s1, 256, %s34, [#allocation6], 128, 128, 8
    $region9: #{tpu_custom_call.1} parent=1 // pred_fallthru
      _
    // Predicated region
    $region10: #{tpu_custom_call.1} parent=1 // pred_check
      _
    $region11: #{tpu_custom_call.1} parent=1 // pred_check_branch
      %41 = sbr.rel (0) target = $region13
    $region12: #{tpu_custom_call.1} parent=1 // pred_region
      %s43 = ssub.s32 2048, 2048
      %44 = vsyncadd [#allocation6], %s43
      %s45 = sshll.u32 [#allocation7], 4
      %s46 = int_to_ptr.vmem [resolvable:$true] %s45
      %51 = dma.hbm_to_vmem [thread:$0]  %s2, 2048, %s46, [#allocation6], 128, 128, 8
    $region13: #{tpu_custom_call.1} parent=1 // pred_fallthru
      _
    // Predicated region
    $region14: #{tpu_custom_call.1} parent=1 // pred_check
      _
    $region15: #{tpu_custom_call.1} parent=1 // pred_check_branch
      %53 = sbr.rel (0) target = $region17
    $region16: #{tpu_custom_call.1} parent=1 // pred_region
      %s55 = ssub.s32 2560, 2560
      %56 = vsyncadd [#allocation9], %s55
      %s57 = sshll.u32 [#allocation8], 4
      %s58 = int_to_ptr.vmem [resolvable:$true] %s57
      %63 = dma.hbm_to_vmem [thread:$0]  %s3, 2560, %s58, [#allocation9], 128, 128, 8
    $region17: #{tpu_custom_call.1} parent=1 // pred_fallthru
      _
    // Predicated region
    $region18: #{tpu_custom_call.1} parent=1 // pred_check
      _
    $region19: #{tpu_custom_call.1} parent=1 // pred_check_branch
      %65 = sbr.rel (0) target = $region21
    $region20: #{tpu_custom_call.1} parent=1 // pred_region
      _
    $region21: #{tpu_custom_call.1} parent=1 // pred_fallthru
      _
    // Predicated region
    $region22: #{tpu_custom_call.1} parent=1 // pred_check
      _
    $region23: #{tpu_custom_call.1} parent=1 // pred_check_branch
      %67 = sbr.rel (0) target = $region25
    $region24: #{tpu_custom_call.1} parent=1 // pred_region
      %s69 = ssub.s32 512, 512
      %70 = vsyncadd [#allocation9], %s69
      %s71 = sshll.u32 [#allocation10], 4
      %s72 = int_to_ptr.vmem [resolvable:$true] %s71
      %77 = dma.hbm_to_vmem [thread:$0]  %s5, 512, %s72, [#allocation9], 128, 128, 8
    $region25: #{tpu_custom_call.1} parent=1 // pred_fallthru
      _
    // Predicated region
    $region26: #{tpu_custom_call.1} parent=1 // pred_check
      _
    $region27: #{tpu_custom_call.1} parent=1 // pred_check_branch
      %79 = sbr.rel (0) target = $region29
    $region28: #{tpu_custom_call.1} parent=1 // pred_region
      _
    $region29: #{tpu_custom_call.1} parent=1 // pred_fallthru
      _
    // Predicated region
    $region30: #{tpu_custom_call.1} parent=1 // pred_check
      _
    $region31: #{tpu_custom_call.1} parent=1 // pred_check_branch
      %81 = sbr.rel (0) target = $region33
    $region32: #{tpu_custom_call.1} parent=1 // pred_region
      %82 = dma.done [#allocation3], 256
    $region33: #{tpu_custom_call.1} parent=1 // pred_fallthru
      _
    // Predicated region
    $region34: #{tpu_custom_call.1} parent=1 // pred_check
      _
    $region35: #{tpu_custom_call.1} parent=1 // pred_check_branch
      %84 = sbr.rel (0) target = $region37
    $region36: #{tpu_custom_call.1} parent=1 // pred_region
      %85 = dma.done [#allocation6], 256
    $region37: #{tpu_custom_call.1} parent=1 // pred_fallthru
      _
    // Predicated region
    $region38: #{tpu_custom_call.1} parent=1 // pred_check
      _
    $region39: #{tpu_custom_call.1} parent=1 // pred_check_branch
      %87 = sbr.rel (0) target = $region41
    $region40: #{tpu_custom_call.1} parent=1 // pred_region
      %88 = dma.done [#allocation6], 2048
    $region41: #{tpu_custom_call.1} parent=1 // pred_fallthru
      _
    // Predicated region
    $region42: #{tpu_custom_call.1} parent=1 // pred_check
      _
    $region43: #{tpu_custom_call.1} parent=1 // pred_check_branch
      %90 = sbr.rel (0) target = $region45
    $region44: #{tpu_custom_call.1} parent=1 // pred_region
      %91 = dma.done [#allocation9], 2560
    $region45: #{tpu_custom_call.1} parent=1 // pred_fallthru
      _
    // Predicated region
    $region46: #{tpu_custom_call.1} parent=1 // pred_check
      _
    $region47: #{tpu_custom_call.1} parent=1 // pred_check_branch
      %93 = sbr.rel (0) target = $region49
    $region48: #{tpu_custom_call.1} parent=1 // pred_region
      %94 = dma.done [#allocation9], 512
    $region49: #{tpu_custom_call.1} parent=1 // pred_fallthru
      _
    %v95 = vld [vmem:[#allocation2] sm:$0x3]
    %v96 = vmax.f32 %v95, 0.0
    %s97 = scalar_lea.vmem [#allocation2], 2
    %v98 = vld [vmem:[%s97] sm:$0x3]
    %v99 = vmax.f32 %v98, 0.0
    %s100 = scalar_lea.vmem [#allocation2], 4
    %v101 = vld [vmem:[%s100] sm:$0x3]
    %v102 = vmax.f32 %v101, 0.0
    %s103 = scalar_lea.vmem [#allocation2], 6
    %v104 = vld [vmem:[%s103] sm:$0x3]
    %v105 = vmax.f32 %v104, 0.0
    %s106 = scalar_lea.vmem [#allocation2], 8
    %v107 = vld [vmem:[%s106] sm:$0x3]
    %v108 = vmax.f32 %v107, 0.0
    %s109 = scalar_lea.vmem [#allocation2], 10
    %v110 = vld [vmem:[%s109] sm:$0x3]
    %v111 = vmax.f32 %v110, 0.0
    %s112 = scalar_lea.vmem [#allocation2], 12
    %v113 = vld [vmem:[%s112] sm:$0x3]
    %v114 = vmax.f32 %v113, 0.0
    %s115 = scalar_lea.vmem [#allocation2], 14
    %v116 = vld [vmem:[%s115] sm:$0x3]
    %v117 = vmax.f32 %v116, 0.0
    %v118 = vld [vmem:[#allocation5] sm:$0xff]
    %v119 = vld [vmem:[#allocation5 + $0x8] sm:$0xff]
    %v120 = vld [vmem:[#allocation8] sm:$0xff]
    %v121 = vld [vmem:[#allocation8 + $0x8] sm:$0xff]
    %v122 = vld [vmem:[#allocation8 + $0x10] sm:$0xff]
    %v123 = vld [vmem:[#allocation8 + $0x18] sm:$0xff]
    %v124 = vld [vmem:[%s4] sm:$0x1]
    %v126 = vlaneseq
    %v127 = vshrl.u32 %v126, 7
    %v128 = vsub.s32 0, %v127
    %v129 = vrot.slane %v124, %v128
    %vm131 = vcmask 130048
    %v133 = vsel %vm131, %v96, 0
    %135 = vmatprep.subr.mxu0 0.0
    %136 = vmatpush1.msra.mxu0 0.0
    %137 = vmatprep.subr.mxu0 0.0
    %138 = vmatpush1.msra.mxu0 0.0
    %139 = vmatprep.subr.mxu0 0.0
    %140 = vmatpush1.msra.mxu0 0.0
    %141 = vmatprep.subr.mxu0 0.0
    %142 = vmatpush1.msra.mxu0 0.0
    %143 = vmatprep.subr.mxu0 0.0
    %144 = vmatpush1.msra.mxu0 0.0
    %145 = vmatprep.subr.mxu0 0.0
    %146 = vmatpush1.msra.mxu0 0.0
    %147 = vmatprep.subr.mxu0 0.0
    %148 = vmatpush1.msra.mxu0 0.0
    %149 = vmatprep.subr.mxu0 0.0
    %150 = vmatpush1.msra.mxu0 0.0
    %151 = vmatprep.subr.mxu0 0.0
    %152 = vmatpush1.msra.mxu0 0.0
    %153 = vmatprep.subr.mxu0 0.0
    %154 = vmatpush1.msra.mxu0 0.0
    %155 = vmatprep.subr.mxu0 0.0
    %156 = vmatpush1.msra.mxu0 0.0
    %157 = vmatprep.subr.mxu0 0.0
    %158 = vmatpush1.msra.mxu0 0.0
    %159 = vmatprep.subr.mxu0 0.0
    %160 = vmatpush1.msra.mxu0 0.0
    %161 = vmatprep.subr.mxu0 0.0
    %162 = vmatpush1.msra.mxu0 0.0
    %163 = vmatprep.subr.mxu0 0.0
    %164 = vmatpush1.msra.mxu0 %v119
    %165 = vmatprep.subr.mxu0 0.0
    %166 = vmatpush1.msra.mxu0 %v118
    %167 = vmatprep.subr.mxu0 0.0
    %168 = vmatpush2.msra.mxu0 0.0
    %169 = vmatprep.subr.mxu0 0.0
    %170 = vmatpush2.msra.mxu0 0.0
    %171 = vmatprep.subr.mxu0 0.0
    %172 = vmatpush2.msra.mxu0 0.0
    %173 = vmatprep.subr.mxu0 0.0
    %174 = vmatpush2.msra.mxu0 0.0
    %175 = vmatprep.subr.mxu0 0.0
    %176 = vmatpush2.msra.mxu0 0.0
    %177 = vmatprep.subr.mxu0 0.0
    %178 = vmatpush2.msra.mxu0 0.0
    %179 = vmatprep.subr.mxu0 0.0
    %180 = vmatpush2.msra.mxu0 0.0
    %181 = vmatprep.subr.mxu0 0.0
    %182 = vmatpush2.msra.mxu0 0.0
    %183 = vmatprep.subr.mxu0 0.0
    %184 = vmatpush2.msra.mxu0 0.0
    %185 = vmatprep.subr.mxu0 0.0
    %186 = vmatpush2.msra.mxu0 0.0
    %187 = vmatprep.subr.mxu0 0.0
    %188 = vmatpush2.msra.mxu0 0.0
    %189 = vmatprep.subr.mxu0 0.0
    %190 = vmatpush2.msra.mxu0 0.0
    %191 = vmatprep.subr.mxu0 0.0
    %192 = vmatpush2.msra.mxu0 0.0
    %193 = vmatprep.subr.mxu0 0.0
    %194 = vmatpush2.msra.mxu0 0.0
    %195 = vmatprep.subr.mxu0 0.0
    %196 = vmatpush2.msra.mxu0 0.0
    %197 = vmatprep.subr.mxu0 0.0
    %198 = vmatpush2.msra.mxu0 0.0
    %199 = vmatprep.mubr.f32.mxu0 0.0
    %200 = vmatmul.mubr.f32.gmra.mxu0 %v133
    %v201 = vpop.f32.mrf.mxu0
    %v202 = vadd.f32 %v129, %v201
    %v203 = vpop.f32.mrf.mxu0
    %204 = vdwg.mxu0
    %v206 = vsel %vm131, %v99, 0
    %208 = vmatprep.subr.mxu0 0.0
    %209 = vmatpush1.msra.mxu0 0.0
    %210 = vmatprep.subr.mxu0 0.0
    %211 = vmatpush1.msra.mxu0 0.0
    %212 = vmatprep.subr.mxu0 0.0
    %213 = vmatpush1.msra.mxu0 0.0
    %214 = vmatprep.subr.mxu0 0.0
    %215 = vmatpush1.msra.mxu0 0.0
    %216 = vmatprep.subr.mxu0 0.0
    %217 = vmatpush1.msra.mxu0 0.0
    %218 = vmatprep.subr.mxu0 0.0
    %219 = vmatpush1.msra.mxu0 0.0
    %220 = vmatprep.subr.mxu0 0.0
    %221 = vmatpush1.msra.mxu0 0.0
    %222 = vmatprep.subr.mxu0 0.0
    %223 = vmatpush1.msra.mxu0 0.0
    %224 = vmatprep.subr.mxu0 0.0
    %225 = vmatpush1.msra.mxu0 0.0
    %226 = vmatprep.subr.mxu0 0.0
    %227 = vmatpush1.msra.mxu0 0.0
    %228 = vmatprep.subr.mxu0 0.0
    %229 = vmatpush1.msra.mxu0 0.0
    %230 = vmatprep.subr.mxu0 0.0
    %231 = vmatpush1.msra.mxu0 0.0
    %232 = vmatprep.subr.mxu0 0.0
    %233 = vmatpush1.msra.mxu0 0.0
    %234 = vmatprep.subr.mxu0 0.0
    %235 = vmatpush1.msra.mxu0 0.0
    %236 = vmatprep.subr.mxu0 0.0
    %237 = vmatpush1.msra.mxu0 %v119
    %238 = vmatprep.subr.mxu0 0.0
    %239 = vmatpush1.msra.mxu0 %v118
    %240 = vmatprep.subr.mxu0 0.0
    %241 = vmatpush2.msra.mxu0 0.0
    %242 = vmatprep.subr.mxu0 0.0
    %243 = vmatpush2.msra.mxu0 0.0
    %244 = vmatprep.subr.mxu0 0.0
    %245 = vmatpush2.msra.mxu0 0.0
    %246 = vmatprep.subr.mxu0 0.0
    %247 = vmatpush2.msra.mxu0 0.0
    %248 = vmatprep.subr.mxu0 0.0
    %249 = vmatpush2.msra.mxu0 0.0
    %250 = vmatprep.subr.mxu0 0.0
    %251 = vmatpush2.msra.mxu0 0.0
    %252 = vmatprep.subr.mxu0 0.0
    %253 = vmatpush2.msra.mxu0 0.0
    %254 = vmatprep.subr.mxu0 0.0
    %255 = vmatpush2.msra.mxu0 0.0
    %256 = vmatprep.subr.mxu0 0.0
    %257 = vmatpush2.msra.mxu0 0.0
    %258 = vmatprep.subr.mxu0 0.0
    %259 = vmatpush2.msra.mxu0 0.0
    %260 = vmatprep.subr.mxu0 0.0
    %261 = vmatpush2.msra.mxu0 0.0
    %262 = vmatprep.subr.mxu0 0.0
    %263 = vmatpush2.msra.mxu0 0.0
    %264 = vmatprep.subr.mxu0 0.0
    %265 = vmatpush2.msra.mxu0 0.0
    %266 = vmatprep.subr.mxu0 0.0
    %267 = vmatpush2.msra.mxu0 0.0
    %268 = vmatprep.subr.mxu0 0.0
    %269 = vmatpush2.msra.mxu0 0.0
    %270 = vmatprep.subr.mxu0 0.0
    %271 = vmatpush2.msra.mxu0 0.0
    %272 = vmatprep.mubr.f32.mxu0 0.0
    %273 = vmatmul.mubr.f32.gmra.mxu0 %v206
    %v274 = vpop.f32.mrf.mxu0
    %v275 = vadd.f32 %v129, %v274
    %v276 = vpop.f32.mrf.mxu0
    %277 = vdwg.mxu0
    %v279 = vsel %vm131, %v102, 0
    %281 = vmatprep.subr.mxu0 0.0
    %282 = vmatpush1.msra.mxu0 0.0
    %283 = vmatprep.subr.mxu0 0.0
    %284 = vmatpush1.msra.mxu0 0.0
    %285 = vmatprep.subr.mxu0 0.0
    %286 = vmatpush1.msra.mxu0 0.0
    %287 = vmatprep.subr.mxu0 0.0
    %288 = vmatpush1.msra.mxu0 0.0
    %289 = vmatprep.subr.mxu0 0.0
    %290 = vmatpush1.msra.mxu0 0.0
    %291 = vmatprep.subr.mxu0 0.0
    %292 = vmatpush1.msra.mxu0 0.0
    %293 = vmatprep.subr.mxu0 0.0
    %294 = vmatpush1.msra.mxu0 0.0
    %295 = vmatprep.subr.mxu0 0.0
    %296 = vmatpush1.msra.mxu0 0.0
    %297 = vmatprep.subr.mxu0 0.0
    %298 = vmatpush1.msra.mxu0 0.0
    %299 = vmatprep.subr.mxu0 0.0
    %300 = vmatpush1.msra.mxu0 0.0
    %301 = vmatprep.subr.mxu0 0.0
    %302 = vmatpush1.msra.mxu0 0.0
    %303 = vmatprep.subr.mxu0 0.0
    %304 = vmatpush1.msra.mxu0 0.0
    %305 = vmatprep.subr.mxu0 0.0
    %306 = vmatpush1.msra.mxu0 0.0
    %307 = vmatprep.subr.mxu0 0.0
    %308 = vmatpush1.msra.mxu0 0.0
    %309 = vmatprep.subr.mxu0 0.0
    %310 = vmatpush1.msra.mxu0 %v119
    %311 = vmatprep.subr.mxu0 0.0
    %312 = vmatpush1.msra.mxu0 %v118
    %313 = vmatprep.subr.mxu0 0.0
    %314 = vmatpush2.msra.mxu0 0.0
    %315 = vmatprep.subr.mxu0 0.0
    %316 = vmatpush2.msra.mxu0 0.0
    %317 = vmatprep.subr.mxu0 0.0
    %318 = vmatpush2.msra.mxu0 0.0
    %319 = vmatprep.subr.mxu0 0.0
    %320 = vmatpush2.msra.mxu0 0.0
    %321 = vmatprep.subr.mxu0 0.0
    %322 = vmatpush2.msra.mxu0 0.0
    %323 = vmatprep.subr.mxu0 0.0
    %324 = vmatpush2.msra.mxu0 0.0
    %325 = vmatprep.subr.mxu0 0.0
    %326 = vmatpush2.msra.mxu0 0.0
    %327 = vmatprep.subr.mxu0 0.0
    %328 = vmatpush2.msra.mxu0 0.0
    %329 = vmatprep.subr.mxu0 0.0
    %330 = vmatpush2.msra.mxu0 0.0
    %331 = vmatprep.subr.mxu0 0.0
    %332 = vmatpush2.msra.mxu0 0.0
    %333 = vmatprep.subr.mxu0 0.0
    %334 = vmatpush2.msra.mxu0 0.0
    %335 = vmatprep.subr.mxu0 0.0
    %336 = vmatpush2.msra.mxu0 0.0
    %337 = vmatprep.subr.mxu0 0.0
    %338 = vmatpush2.msra.mxu0 0.0
    %339 = vmatprep.subr.mxu0 0.0
    %340 = vmatpush2.msra.mxu0 0.0
    %341 = vmatprep.subr.mxu0 0.0
    %342 = vmatpush2.msra.mxu0 0.0
    %343 = vmatprep.subr.mxu0 0.0
    %344 = vmatpush2.msra.mxu0 0.0
    %345 = vmatprep.mubr.f32.mxu0 0.0
    %346 = vmatmul.mubr.f32.gmra.mxu0 %v279
    %v347 = vpop.f32.mrf.mxu0
    %v348 = vadd.f32 %v129, %v347
    %v349 = vpop.f32.mrf.mxu0
    %350 = vdwg.mxu0
    %v352 = vsel %vm131, %v105, 0
    %354 = vmatprep.subr.mxu0 0.0
    %355 = vmatpush1.msra.mxu0 0.0
    %356 = vmatprep.subr.mxu0 0.0
    %357 = vmatpush1.msra.mxu0 0.0
    %358 = vmatprep.subr.mxu0 0.0
    %359 = vmatpush1.msra.mxu0 0.0
    %360 = vmatprep.subr.mxu0 0.0
    %361 = vmatpush1.msra.mxu0 0.0
    %362 = vmatprep.subr.mxu0 0.0
    %363 = vmatpush1.msra.mxu0 0.0
    %364 = vmatprep.subr.mxu0 0.0
    %365 = vmatpush1.msra.mxu0 0.0
    %366 = vmatprep.subr.mxu0 0.0
    %367 = vmatpush1.msra.mxu0 0.0
    %368 = vmatprep.subr.mxu0 0.0
    %369 = vmatpush1.msra.mxu0 0.0
    %370 = vmatprep.subr.mxu0 0.0
    %371 = vmatpush1.msra.mxu0 0.0
    %372 = vmatprep.subr.mxu0 0.0
    %373 = vmatpush1.msra.mxu0 0.0
    %374 = vmatprep.subr.mxu0 0.0
    %375 = vmatpush1.msra.mxu0 0.0
    %376 = vmatprep.subr.mxu0 0.0
    %377 = vmatpush1.msra.mxu0 0.0
    %378 = vmatprep.subr.mxu0 0.0
    %379 = vmatpush1.msra.mxu0 0.0
    %380 = vmatprep.subr.mxu0 0.0
    %381 = vmatpush1.msra.mxu0 0.0
    %382 = vmatprep.subr.mxu0 0.0
    %383 = vmatpush1.msra.mxu0 %v119
    %384 = vmatprep.subr.mxu0 0.0
    %385 = vmatpush1.msra.mxu0 %v118
    %386 = vmatprep.subr.mxu0 0.0
    %387 = vmatpush2.msra.mxu0 0.0
    %388 = vmatprep.subr.mxu0 0.0
    %389 = vmatpush2.msra.mxu0 0.0
    %390 = vmatprep.subr.mxu0 0.0
    %391 = vmatpush2.msra.mxu0 0.0
    %392 = vmatprep.subr.mxu0 0.0
    %393 = vmatpush2.msra.mxu0 0.0
    %394 = vmatprep.subr.mxu0 0.0
    %395 = vmatpush2.msra.mxu0 0.0
    %396 = vmatprep.subr.mxu0 0.0
    %397 = vmatpush2.msra.mxu0 0.0
    %398 = vmatprep.subr.mxu0 0.0
    %399 = vmatpush2.msra.mxu0 0.0
    %400 = vmatprep.subr.mxu0 0.0
    %401 = vmatpush2.msra.mxu0 0.0
    %402 = vmatprep.subr.mxu0 0.0
    %403 = vmatpush2.msra.mxu0 0.0
    %404 = vmatprep.subr.mxu0 0.0
    %405 = vmatpush2.msra.mxu0 0.0
    %406 = vmatprep.subr.mxu0 0.0
    %407 = vmatpush2.msra.mxu0 0.0
    %408 = vmatprep.subr.mxu0 0.0
    %409 = vmatpush2.msra.mxu0 0.0
    %410 = vmatprep.subr.mxu0 0.0
    %411 = vmatpush2.msra.mxu0 0.0
    %412 = vmatprep.subr.mxu0 0.0
    %413 = vmatpush2.msra.mxu0 0.0
    %414 = vmatprep.subr.mxu0 0.0
    %415 = vmatpush2.msra.mxu0 0.0
    %416 = vmatprep.subr.mxu0 0.0
    %417 = vmatpush2.msra.mxu0 0.0
    %418 = vmatprep.mubr.f32.mxu0 0.0
    %419 = vmatmul.mubr.f32.gmra.mxu0 %v352
    %v420 = vpop.f32.mrf.mxu0
    %v421 = vadd.f32 %v129, %v420
    %v422 = vpop.f32.mrf.mxu0
    %423 = vdwg.mxu0
    %v425 = vsel %vm131, %v108, 0
    %427 = vmatprep.subr.mxu0 0.0
    %428 = vmatpush1.msra.mxu0 0.0
    %429 = vmatprep.subr.mxu0 0.0
    %430 = vmatpush1.msra.mxu0 0.0
    %431 = vmatprep.subr.mxu0 0.0
    %432 = vmatpush1.msra.mxu0 0.0
    %433 = vmatprep.subr.mxu0 0.0
    %434 = vmatpush1.msra.mxu0 0.0
    %435 = vmatprep.subr.mxu0 0.0
    %436 = vmatpush1.msra.mxu0 0.0
    %437 = vmatprep.subr.mxu0 0.0
    %438 = vmatpush1.msra.mxu0 0.0
    %439 = vmatprep.subr.mxu0 0.0
    %440 = vmatpush1.msra.mxu0 0.0
    %441 = vmatprep.subr.mxu0 0.0
    %442 = vmatpush1.msra.mxu0 0.0
    %443 = vmatprep.subr.mxu0 0.0
    %444 = vmatpush1.msra.mxu0 0.0
    %445 = vmatprep.subr.mxu0 0.0
    %446 = vmatpush1.msra.mxu0 0.0
    %447 = vmatprep.subr.mxu0 0.0
    %448 = vmatpush1.msra.mxu0 0.0
    %449 = vmatprep.subr.mxu0 0.0
    %450 = vmatpush1.msra.mxu0 0.0
    %451 = vmatprep.subr.mxu0 0.0
    %452 = vmatpush1.msra.mxu0 0.0
    %453 = vmatprep.subr.mxu0 0.0
    %454 = vmatpush1.msra.mxu0 0.0
    %455 = vmatprep.subr.mxu0 0.0
    %456 = vmatpush1.msra.mxu0 %v119
    %457 = vmatprep.subr.mxu0 0.0
    %458 = vmatpush1.msra.mxu0 %v118
    %459 = vmatprep.subr.mxu0 0.0
    %460 = vmatpush2.msra.mxu0 0.0
    %461 = vmatprep.subr.mxu0 0.0
    %462 = vmatpush2.msra.mxu0 0.0
    %463 = vmatprep.subr.mxu0 0.0
    %464 = vmatpush2.msra.mxu0 0.0
    %465 = vmatprep.subr.mxu0 0.0
    %466 = vmatpush2.msra.mxu0 0.0
    %467 = vmatprep.subr.mxu0 0.0
    %468 = vmatpush2.msra.mxu0 0.0
    %469 = vmatprep.subr.mxu0 0.0
    %470 = vmatpush2.msra.mxu0 0.0
    %471 = vmatprep.subr.mxu0 0.0
    %472 = vmatpush2.msra.mxu0 0.0
    %473 = vmatprep.subr.mxu0 0.0
    %474 = vmatpush2.msra.mxu0 0.0
    %475 = vmatprep.subr.mxu0 0.0
    %476 = vmatpush2.msra.mxu0 0.0
    %477 = vmatprep.subr.mxu0 0.0
    %478 = vmatpush2.msra.mxu0 0.0
    %479 = vmatprep.subr.mxu0 0.0
    %480 = vmatpush2.msra.mxu0 0.0
    %481 = vmatprep.subr.mxu0 0.0
    %482 = vmatpush2.msra.mxu0 0.0
    %483 = vmatprep.subr.mxu0 0.0
    %484 = vmatpush2.msra.mxu0 0.0
    %485 = vmatprep.subr.mxu0 0.0
    %486 = vmatpush2.msra.mxu0 0.0
    %487 = vmatprep.subr.mxu0 0.0
    %488 = vmatpush2.msra.mxu0 0.0
    %489 = vmatprep.subr.mxu0 0.0
    %490 = vmatpush2.msra.mxu0 0.0
    %491 = vmatprep.mubr.f32.mxu0 0.0
    %492 = vmatmul.mubr.f32.gmra.mxu0 %v425
    %v493 = vpop.f32.mrf.mxu0
    %v494 = vadd.f32 %v129, %v493
    %v495 = vpop.f32.mrf.mxu0
    %496 = vdwg.mxu0
    %v498 = vsel %vm131, %v111, 0
    %500 = vmatprep.subr.mxu0 0.0
    %501 = vmatpush1.msra.mxu0 0.0
    %502 = vmatprep.subr.mxu0 0.0
    %503 = vmatpush1.msra.mxu0 0.0
    %504 = vmatprep.subr.mxu0 0.0
    %505 = vmatpush1.msra.mxu0 0.0
    %506 = vmatprep.subr.mxu0 0.0
    %507 = vmatpush1.msra.mxu0 0.0
    %508 = vmatprep.subr.mxu0 0.0
    %509 = vmatpush1.msra.mxu0 0.0
    %510 = vmatprep.subr.mxu0 0.0
    %511 = vmatpush1.msra.mxu0 0.0
    %512 = vmatprep.subr.mxu0 0.0
    %513 = vmatpush1.msra.mxu0 0.0
    %514 = vmatprep.subr.mxu0 0.0
    %515 = vmatpush1.msra.mxu0 0.0
    %516 = vmatprep.subr.mxu0 0.0
    %517 = vmatpush1.msra.mxu0 0.0
    %518 = vmatprep.subr.mxu0 0.0
    %519 = vmatpush1.msra.mxu0 0.0
    %520 = vmatprep.subr.mxu0 0.0
    %521 = vmatpush1.msra.mxu0 0.0
    %522 = vmatprep.subr.mxu0 0.0
    %523 = vmatpush1.msra.mxu0 0.0
    %524 = vmatprep.subr.mxu0 0.0
    %525 = vmatpush1.msra.mxu0 0.0
    %526 = vmatprep.subr.mxu0 0.0
    %527 = vmatpush1.msra.mxu0 0.0
    %528 = vmatprep.subr.mxu0 0.0
    %529 = vmatpush1.msra.mxu0 %v119
    %530 = vmatprep.subr.mxu0 0.0
    %531 = vmatpush1.msra.mxu0 %v118
    %532 = vmatprep.subr.mxu0 0.0
    %533 = vmatpush2.msra.mxu0 0.0
    %534 = vmatprep.subr.mxu0 0.0
    %535 = vmatpush2.msra.mxu0 0.0
    %536 = vmatprep.subr.mxu0 0.0
    %537 = vmatpush2.msra.mxu0 0.0
    %538 = vmatprep.subr.mxu0 0.0
    %539 = vmatpush2.msra.mxu0 0.0
    %540 = vmatprep.subr.mxu0 0.0
    %541 = vmatpush2.msra.mxu0 0.0
    %542 = vmatprep.subr.mxu0 0.0
    %543 = vmatpush2.msra.mxu0 0.0
    %544 = vmatprep.subr.mxu0 0.0
    %545 = vmatpush2.msra.mxu0 0.0
    %546 = vmatprep.subr.mxu0 0.0
    %547 = vmatpush2.msra.mxu0 0.0
    %548 = vmatprep.subr.mxu0 0.0
    %549 = vmatpush2.msra.mxu0 0.0
    %550 = vmatprep.subr.mxu0 0.0
    %551 = vmatpush2.msra.mxu0 0.0
    %552 = vmatprep.subr.mxu0 0.0
    %553 = vmatpush2.msra.mxu0 0.0
    %554 = vmatprep.subr.mxu0 0.0
    %555 = vmatpush2.msra.mxu0 0.0
    %556 = vmatprep.subr.mxu0 0.0
    %557 = vmatpush2.msra.mxu0 0.0
    %558 = vmatprep.subr.mxu0 0.0
    %559 = vmatpush2.msra.mxu0 0.0
    %560 = vmatprep.subr.mxu0 0.0
    %561 = vmatpush2.msra.mxu0 0.0
    %562 = vmatprep.subr.mxu0 0.0
    %563 = vmatpush2.msra.mxu0 0.0
    %564 = vmatprep.mubr.f32.mxu0 0.0
    %565 = vmatmul.mubr.f32.gmra.mxu0 %v498
    %v566 = vpop.f32.mrf.mxu0
    %v567 = vadd.f32 %v129, %v566
    %v568 = vpop.f32.mrf.mxu0
    %569 = vdwg.mxu0
    %v571 = vsel %vm131, %v114, 0
    %573 = vmatprep.subr.mxu0 0.0
    %574 = vmatpush1.msra.mxu0 0.0
    %575 = vmatprep.subr.mxu0 0.0
    %576 = vmatpush1.msra.mxu0 0.0
    %577 = vmatprep.subr.mxu0 0.0
    %578 = vmatpush1.msra.mxu0 0.0
    %579 = vmatprep.subr.mxu0 0.0
    %580 = vmatpush1.msra.mxu0 0.0
    %581 = vmatprep.subr.mxu0 0.0
    %582 = vmatpush1.msra.mxu0 0.0
    %583 = vmatprep.subr.mxu0 0.0
    %584 = vmatpush1.msra.mxu0 0.0
    %585 = vmatprep.subr.mxu0 0.0
    %586 = vmatpush1.msra.mxu0 0.0
    %587 = vmatprep.subr.mxu0 0.0
    %588 = vmatpush1.msra.mxu0 0.0
    %589 = vmatprep.subr.mxu0 0.0
    %590 = vmatpush1.msra.mxu0 0.0
    %591 = vmatprep.subr.mxu0 0.0
    %592 = vmatpush1.msra.mxu0 0.0
    %593 = vmatprep.subr.mxu0 0.0
    %594 = vmatpush1.msra.mxu0 0.0
    %595 = vmatprep.subr.mxu0 0.0
    %596 = vmatpush1.msra.mxu0 0.0
    %597 = vmatprep.subr.mxu0 0.0
    %598 = vmatpush1.msra.mxu0 0.0
    %599 = vmatprep.subr.mxu0 0.0
    %600 = vmatpush1.msra.mxu0 0.0
    %601 = vmatprep.subr.mxu0 0.0
    %602 = vmatpush1.msra.mxu0 %v119
    %603 = vmatprep.subr.mxu0 0.0
    %604 = vmatpush1.msra.mxu0 %v118
    %605 = vmatprep.subr.mxu0 0.0
    %606 = vmatpush2.msra.mxu0 0.0
    %607 = vmatprep.subr.mxu0 0.0
    %608 = vmatpush2.msra.mxu0 0.0
    %609 = vmatprep.subr.mxu0 0.0
    %610 = vmatpush2.msra.mxu0 0.0
    %611 = vmatprep.subr.mxu0 0.0
    %612 = vmatpush2.msra.mxu0 0.0
    %613 = vmatprep.subr.mxu0 0.0
    %614 = vmatpush2.msra.mxu0 0.0
    %615 = vmatprep.subr.mxu0 0.0
    %616 = vmatpush2.msra.mxu0 0.0
    %617 = vmatprep.subr.mxu0 0.0
    %618 = vmatpush2.msra.mxu0 0.0
    %619 = vmatprep.subr.mxu0 0.0
    %620 = vmatpush2.msra.mxu0 0.0
    %621 = vmatprep.subr.mxu0 0.0
    %622 = vmatpush2.msra.mxu0 0.0
    %623 = vmatprep.subr.mxu0 0.0
    %624 = vmatpush2.msra.mxu0 0.0
    %625 = vmatprep.subr.mxu0 0.0
    %626 = vmatpush2.msra.mxu0 0.0
    %627 = vmatprep.subr.mxu0 0.0
    %628 = vmatpush2.msra.mxu0 0.0
    %629 = vmatprep.subr.mxu0 0.0
    %630 = vmatpush2.msra.mxu0 0.0
    %631 = vmatprep.subr.mxu0 0.0
    %632 = vmatpush2.msra.mxu0 0.0
    %633 = vmatprep.subr.mxu0 0.0
    %634 = vmatpush2.msra.mxu0 0.0
    %635 = vmatprep.subr.mxu0 0.0
    %636 = vmatpush2.msra.mxu0 0.0
    %637 = vmatprep.mubr.f32.mxu0 0.0
    %638 = vmatmul.mubr.f32.gmra.mxu0 %v571
    %v639 = vpop.f32.mrf.mxu0
    %v640 = vadd.f32 %v129, %v639
    %v641 = vpop.f32.mrf.mxu0
    %642 = vdwg.mxu0
    %v644 = vsel %vm131, %v117, 0
    %646 = vmatprep.subr.mxu0 0.0
    %647 = vmatpush1.msra.mxu0 0.0
    %648 = vmatprep.subr.mxu0 0.0
    %649 = vmatpush1.msra.mxu0 0.0
    %650 = vmatprep.subr.mxu0 0.0
    %651 = vmatpush1.msra.mxu0 0.0
    %652 = vmatprep.subr.mxu0 0.0
    %653 = vmatpush1.msra.mxu0 0.0
    %654 = vmatprep.subr.mxu0 0.0
    %655 = vmatpush1.msra.mxu0 0.0
    %656 = vmatprep.subr.mxu0 0.0
    %657 = vmatpush1.msra.mxu0 0.0
    %658 = vmatprep.subr.mxu0 0.0
    %659 = vmatpush1.msra.mxu0 0.0
    %660 = vmatprep.subr.mxu0 0.0
    %661 = vmatpush1.msra.mxu0 0.0
    %662 = vmatprep.subr.mxu0 0.0
    %663 = vmatpush1.msra.mxu0 0.0
    %664 = vmatprep.subr.mxu0 0.0
    %665 = vmatpush1.msra.mxu0 0.0
    %666 = vmatprep.subr.mxu0 0.0
    %667 = vmatpush1.msra.mxu0 0.0
    %668 = vmatprep.subr.mxu0 0.0
    %669 = vmatpush1.msra.mxu0 0.0
    %670 = vmatprep.subr.mxu0 0.0
    %671 = vmatpush1.msra.mxu0 0.0
    %672 = vmatprep.subr.mxu0 0.0
    %673 = vmatpush1.msra.mxu0 0.0
    %674 = vmatprep.subr.mxu0 0.0
    %675 = vmatpush1.msra.mxu0 %v119
    %676 = vmatprep.subr.mxu0 0.0
    %677 = vmatpush1.msra.mxu0 %v118
    %678 = vmatprep.subr.mxu0 0.0
    %679 = vmatpush2.msra.mxu0 0.0
    %680 = vmatprep.subr.mxu0 0.0
    %681 = vmatpush2.msra.mxu0 0.0
    %682 = vmatprep.subr.mxu0 0.0
    %683 = vmatpush2.msra.mxu0 0.0
    %684 = vmatprep.subr.mxu0 0.0
    %685 = vmatpush2.msra.mxu0 0.0
    %686 = vmatprep.subr.mxu0 0.0
    %687 = vmatpush2.msra.mxu0 0.0
    %688 = vmatprep.subr.mxu0 0.0
    %689 = vmatpush2.msra.mxu0 0.0
    %690 = vmatprep.subr.mxu0 0.0
    %691 = vmatpush2.msra.mxu0 0.0
    %692 = vmatprep.subr.mxu0 0.0
    %693 = vmatpush2.msra.mxu0 0.0
    %694 = vmatprep.subr.mxu0 0.0
    %695 = vmatpush2.msra.mxu0 0.0
    %696 = vmatprep.subr.mxu0 0.0
    %697 = vmatpush2.msra.mxu0 0.0
    %698 = vmatprep.subr.mxu0 0.0
    %699 = vmatpush2.msra.mxu0 0.0
    %700 = vmatprep.subr.mxu0 0.0
    %701 = vmatpush2.msra.mxu0 0.0
    %702 = vmatprep.subr.mxu0 0.0
    %703 = vmatpush2.msra.mxu0 0.0
    %704 = vmatprep.subr.mxu0 0.0
    %705 = vmatpush2.msra.mxu0 0.0
    %706 = vmatprep.subr.mxu0 0.0
    %707 = vmatpush2.msra.mxu0 0.0
    %708 = vmatprep.subr.mxu0 0.0
    %709 = vmatpush2.msra.mxu0 0.0
    %710 = vmatprep.mubr.f32.mxu0 0.0
    %711 = vmatmul.mubr.f32.gmra.mxu0 %v644
    %v712 = vpop.f32.mrf.mxu0
    %v713 = vadd.f32 %v129, %v712
    %v714 = vpop.f32.mrf.mxu0
    %715 = vdwg.mxu0
    %vm716 = vcmask 261120
    %v718 = vsel %vm716, 0.0, 0
    %720 = vmatprep.subr.mxu0 0.0
    %721 = vmatpush1.msra.mxu0 0.0
    %722 = vmatprep.subr.mxu0 0.0
    %723 = vmatpush1.msra.mxu0 0.0
    %724 = vmatprep.subr.mxu0 0.0
    %725 = vmatpush1.msra.mxu0 0.0
    %726 = vmatprep.subr.mxu0 0.0
    %727 = vmatpush1.msra.mxu0 0.0
    %728 = vmatprep.subr.mxu0 0.0
    %729 = vmatpush1.msra.mxu0 0.0
    %730 = vmatprep.subr.mxu0 0.0
    %731 = vmatpush1.msra.mxu0 0.0
    %732 = vmatprep.subr.mxu0 0.0
    %733 = vmatpush1.msra.mxu0 0.0
    %734 = vmatprep.subr.mxu0 0.0
    %735 = vmatpush1.msra.mxu0 0.0
    %736 = vmatprep.subr.mxu0 0.0
    %737 = vmatpush1.msra.mxu0 0.0
    %738 = vmatprep.subr.mxu0 0.0
    %739 = vmatpush1.msra.mxu0 0.0
    %740 = vmatprep.subr.mxu0 0.0
    %741 = vmatpush1.msra.mxu0 0.0
    %742 = vmatprep.subr.mxu0 0.0
    %743 = vmatpush1.msra.mxu0 0.0
    %744 = vmatprep.subr.mxu0 0.0
    %745 = vmatpush1.msra.mxu0 %v123
    %746 = vmatprep.subr.mxu0 0.0
    %747 = vmatpush1.msra.mxu0 %v122
    %748 = vmatprep.subr.mxu0 0.0
    %749 = vmatpush1.msra.mxu0 %v121
    %750 = vmatprep.subr.mxu0 0.0
    %751 = vmatpush1.msra.mxu0 %v120
    %752 = vmatprep.subr.mxu0 0.0
    %753 = vmatpush2.msra.mxu0 0.0
    %754 = vmatprep.subr.mxu0 0.0
    %755 = vmatpush2.msra.mxu0 0.0
    %756 = vmatprep.subr.mxu0 0.0
    %757 = vmatpush2.msra.mxu0 0.0
    %758 = vmatprep.subr.mxu0 0.0
    %759 = vmatpush2.msra.mxu0 0.0
    %760 = vmatprep.subr.mxu0 0.0
    %761 = vmatpush2.msra.mxu0 0.0
    %762 = vmatprep.subr.mxu0 0.0
    %763 = vmatpush2.msra.mxu0 0.0
    %764 = vmatprep.subr.mxu0 0.0
    %765 = vmatpush2.msra.mxu0 0.0
    %766 = vmatprep.subr.mxu0 0.0
    %767 = vmatpush2.msra.mxu0 0.0
    %768 = vmatprep.subr.mxu0 0.0
    %769 = vmatpush2.msra.mxu0 0.0
    %770 = vmatprep.subr.mxu0 0.0
    %771 = vmatpush2.msra.mxu0 0.0
    %772 = vmatprep.subr.mxu0 0.0
    %773 = vmatpush2.msra.mxu0 0.0
    %774 = vmatprep.subr.mxu0 0.0
    %775 = vmatpush2.msra.mxu0 0.0
    %776 = vmatprep.subr.mxu0 0.0
    %777 = vmatpush2.msra.mxu0 0.0
    %778 = vmatprep.subr.mxu0 0.0
    %779 = vmatpush2.msra.mxu0 0.0
    %780 = vmatprep.subr.mxu0 0.0
    %781 = vmatpush2.msra.mxu0 0.0
    %782 = vmatprep.subr.mxu0 0.0
    %783 = vmatpush2.msra.mxu0 0.0
    %784 = vmatprep.mubr.f32.mxu0 0.0
    %785 = vmatmul.mubr.f32.gmra.mxu0 %v718
    %v786 = vpop.f32.mrf.mxu0
    %v787 = vadd.f32 0.0, %v786
    %v788 = vpop.f32.mrf.mxu0
    %789 = vdwg.mxu0
    %v790 = vadd.f32 %v202, %v787
    %v791 = vxor.u32 %v790, 2147483648
    %v792 = vmul.f32 %v791, 1.442695
    %v793 = vpow.pop %v792
    %v794 = vadd.f32 %v793, 1.0
    %v795 = vrcp.pop %v794
    %v796 = vmul.f32 1.0, %v795
    %v797 = vtanh.pop %v790
    %v798 = vmul.f32 %v796, 0.0
    %800 = vrot.lane.b32.xlu0 %v797, 64
    %v801 = vpop.permute.xlu0 %800
    %v803 = vmul.f32 %v796, %v801
    %805 = vrot.lane.b32.xlu0 %v803, 32
    %v806 = vpop.permute.xlu0 %805
    %v808 = vadd.f32 %v798, %v806
    %v809 = vtanh.pop %v808
    %811 = vrot.lane.b32.xlu0 %v809, 64
    %v812 = vpop.permute.xlu0 %811
    %v814 = vmul.f32 %v796, %v812
    %816 = vrot.lane.b32.xlu0 %v814, 32
    %v817 = vpop.permute.xlu0 %816
    %v818 = vsel %vm716, %v817, 0
    %820 = vmatprep.subr.mxu0 0.0
    %821 = vmatpush1.msra.mxu0 0.0
    %822 = vmatprep.subr.mxu0 0.0
    %823 = vmatpush1.msra.mxu0 0.0
    %824 = vmatprep.subr.mxu0 0.0
    %825 = vmatpush1.msra.mxu0 0.0
    %826 = vmatprep.subr.mxu0 0.0
    %827 = vmatpush1.msra.mxu0 0.0
    %828 = vmatprep.subr.mxu0 0.0
    %829 = vmatpush1.msra.mxu0 0.0
    %830 = vmatprep.subr.mxu0 0.0
    %831 = vmatpush1.msra.mxu0 0.0
    %832 = vmatprep.subr.mxu0 0.0
    %833 = vmatpush1.msra.mxu0 0.0
    %834 = vmatprep.subr.mxu0 0.0
    %835 = vmatpush1.msra.mxu0 0.0
    %836 = vmatprep.subr.mxu0 0.0
    %837 = vmatpush1.msra.mxu0 0.0
    %838 = vmatprep.subr.mxu0 0.0
    %839 = vmatpush1.msra.mxu0 0.0
    %840 = vmatprep.subr.mxu0 0.0
    %841 = vmatpush1.msra.mxu0 0.0
    %842 = vmatprep.subr.mxu0 0.0
    %843 = vmatpush1.msra.mxu0 0.0
    %844 = vmatprep.subr.mxu0 0.0
    %845 = vmatpush1.msra.mxu0 %v123
    %846 = vmatprep.subr.mxu0 0.0
    %847 = vmatpush1.msra.mxu0 %v122
    %848 = vmatprep.subr.mxu0 0.0
    %849 = vmatpush1.msra.mxu0 %v121
    %850 = vmatprep.subr.mxu0 0.0
    %851 = vmatpush1.msra.mxu0 %v120
    %852 = vmatprep.subr.mxu0 0.0
    %853 = vmatpush2.msra.mxu0 0.0
    %854 = vmatprep.subr.mxu0 0.0
    %855 = vmatpush2.msra.mxu0 0.0
    %856 = vmatprep.subr.mxu0 0.0
    %857 = vmatpush2.msra.mxu0 0.0
    %858 = vmatprep.subr.mxu0 0.0
    %859 = vmatpush2.msra.mxu0 0.0
    %860 = vmatprep.subr.mxu0 0.0
    %861 = vmatpush2.msra.mxu0 0.0
    %862 = vmatprep.subr.mxu0 0.0
    %863 = vmatpush2.msra.mxu0 0.0
    %864 = vmatprep.subr.mxu0 0.0
    %865 = vmatpush2.msra.mxu0 0.0
    %866 = vmatprep.subr.mxu0 0.0
    %867 = vmatpush2.msra.mxu0 0.0
    %868 = vmatprep.subr.mxu0 0.0
    %869 = vmatpush2.msra.mxu0 0.0
    %870 = vmatprep.subr.mxu0 0.0
    %871 = vmatpush2.msra.mxu0 0.0
    %872 = vmatprep.subr.mxu0 0.0
    %873 = vmatpush2.msra.mxu0 0.0
    %874 = vmatprep.subr.mxu0 0.0
    %875 = vmatpush2.msra.mxu0 0.0
    %876 = vmatprep.subr.mxu0 0.0
    %877 = vmatpush2.msra.mxu0 0.0
    %878 = vmatprep.subr.mxu0 0.0
    %879 = vmatpush2.msra.mxu0 0.0
    %880 = vmatprep.subr.mxu0 0.0
    %881 = vmatpush2.msra.mxu0 0.0
    %882 = vmatprep.subr.mxu0 0.0
    %883 = vmatpush2.msra.mxu0 0.0
    %884 = vmatprep.mubr.f32.mxu0 0.0
    %885 = vmatmul.mubr.f32.gmra.mxu0 %v818
    %v886 = vpop.f32.mrf.mxu0
    %v887 = vadd.f32 0.0, %v886
    %v888 = vpop.f32.mrf.mxu0
    %889 = vdwg.mxu0
    %v890 = vadd.f32 %v275, %v887
    %v891 = vxor.u32 %v890, 2147483648
    %v892 = vmul.f32 %v891, 1.442695
    %v893 = vpow.pop %v892
    %v894 = vadd.f32 %v893, 1.0
    %v895 = vrcp.pop %v894
    %v896 = vmul.f32 1.0, %v895
    %v897 = vtanh.pop %v890
    %v898 = vmul.f32 %v896, %v808
    %900 = vrot.lane.b32.xlu0 %v897, 64
    %v901 = vpop.permute.xlu0 %900
    %v903 = vmul.f32 %v896, %v901
    %905 = vrot.lane.b32.xlu0 %v903, 32
    %v906 = vpop.permute.xlu0 %905
    %v908 = vadd.f32 %v898, %v906
    %v909 = vtanh.pop %v908
    %911 = vrot.lane.b32.xlu0 %v909, 64
    %v912 = vpop.permute.xlu0 %911
    %v914 = vmul.f32 %v896, %v912
    %916 = vrot.lane.b32.xlu0 %v914, 32
    %v917 = vpop.permute.xlu0 %916
    %v918 = vsel %vm716, %v917, 0
    %920 = vmatprep.subr.mxu0 0.0
    %921 = vmatpush1.msra.mxu0 0.0
    %922 = vmatprep.subr.mxu0 0.0
    %923 = vmatpush1.msra.mxu0 0.0
    %924 = vmatprep.subr.mxu0 0.0
    %925 = vmatpush1.msra.mxu0 0.0
    %926 = vmatprep.subr.mxu0 0.0
    %927 = vmatpush1.msra.mxu0 0.0
    %928 = vmatprep.subr.mxu0 0.0
    %929 = vmatpush1.msra.mxu0 0.0
    %930 = vmatprep.subr.mxu0 0.0
    %931 = vmatpush1.msra.mxu0 0.0
    %932 = vmatprep.subr.mxu0 0.0
    %933 = vmatpush1.msra.mxu0 0.0
    %934 = vmatprep.subr.mxu0 0.0
    %935 = vmatpush1.msra.mxu0 0.0
    %936 = vmatprep.subr.mxu0 0.0
    %937 = vmatpush1.msra.mxu0 0.0
    %938 = vmatprep.subr.mxu0 0.0
    %939 = vmatpush1.msra.mxu0 0.0
    %940 = vmatprep.subr.mxu0 0.0
    %941 = vmatpush1.msra.mxu0 0.0
    %942 = vmatprep.subr.mxu0 0.0
    %943 = vmatpush1.msra.mxu0 0.0
    %944 = vmatprep.subr.mxu0 0.0
    %945 = vmatpush1.msra.mxu0 %v123
    %946 = vmatprep.subr.mxu0 0.0
    %947 = vmatpush1.msra.mxu0 %v122
    %948 = vmatprep.subr.mxu0 0.0
    %949 = vmatpush1.msra.mxu0 %v121
    %950 = vmatprep.subr.mxu0 0.0
    %951 = vmatpush1.msra.mxu0 %v120
    %952 = vmatprep.subr.mxu0 0.0
    %953 = vmatpush2.msra.mxu0 0.0
    %954 = vmatprep.subr.mxu0 0.0
    %955 = vmatpush2.msra.mxu0 0.0
    %956 = vmatprep.subr.mxu0 0.0
    %957 = vmatpush2.msra.mxu0 0.0
    %958 = vmatprep.subr.mxu0 0.0
    %959 = vmatpush2.msra.mxu0 0.0
    %960 = vmatprep.subr.mxu0 0.0
    %961 = vmatpush2.msra.mxu0 0.0
    %962 = vmatprep.subr.mxu0 0.0
    %963 = vmatpush2.msra.mxu0 0.0
    %964 = vmatprep.subr.mxu0 0.0
    %965 = vmatpush2.msra.mxu0 0.0
    %966 = vmatprep.subr.mxu0 0.0
    %967 = vmatpush2.msra.mxu0 0.0
    %968 = vmatprep.subr.mxu0 0.0
    %969 = vmatpush2.msra.mxu0 0.0
    %970 = vmatprep.subr.mxu0 0.0
    %971 = vmatpush2.msra.mxu0 0.0
    %972 = vmatprep.subr.mxu0 0.0
    %973 = vmatpush2.msra.mxu0 0.0
    %974 = vmatprep.subr.mxu0 0.0
    %975 = vmatpush2.msra.mxu0 0.0
    %976 = vmatprep.subr.mxu0 0.0
    %977 = vmatpush2.msra.mxu0 0.0
    %978 = vmatprep.subr.mxu0 0.0
    %979 = vmatpush2.msra.mxu0 0.0
    %980 = vmatprep.subr.mxu0 0.0
    %981 = vmatpush2.msra.mxu0 0.0
    %982 = vmatprep.subr.mxu0 0.0
    %983 = vmatpush2.msra.mxu0 0.0
    %984 = vmatprep.mubr.f32.mxu0 0.0
    %985 = vmatmul.mubr.f32.gmra.mxu0 %v918
    %v986 = vpop.f32.mrf.mxu0
    %v987 = vadd.f32 0.0, %v986
    %v988 = vpop.f32.mrf.mxu0
    %989 = vdwg.mxu0
    %v990 = vadd.f32 %v348, %v987
    %v991 = vxor.u32 %v990, 2147483648
    %v992 = vmul.f32 %v991, 1.442695
    %v993 = vpow.pop %v992
    %v994 = vadd.f32 %v993, 1.0
    %v995 = vrcp.pop %v994
    %v996 = vmul.f32 1.0, %v995
    %v997 = vtanh.pop %v990
    %v998 = vmul.f32 %v996, %v908
    %1000 = vrot.lane.b32.xlu0 %v997, 64
    %v1001 = vpop.permute.xlu0 %1000
    %v1003 = vmul.f32 %v996, %v1001
    %1005 = vrot.lane.b32.xlu0 %v1003, 32
    %v1006 = vpop.permute.xlu0 %1005
    %v1008 = vadd.f32 %v998, %v1006
    %v1009 = vtanh.pop %v1008
    %1011 = vrot.lane.b32.xlu0 %v1009, 64
    %v1012 = vpop.permute.xlu0 %1011
    %v1014 = vmul.f32 %v996, %v1012
    %1016 = vrot.lane.b32.xlu0 %v1014, 32
    %v1017 = vpop.permute.xlu0 %1016
    %v1018 = vsel %vm716, %v1017, 0
    %1020 = vmatprep.subr.mxu0 0.0
    %1021 = vmatpush1.msra.mxu0 0.0
    %1022 = vmatprep.subr.mxu0 0.0
    %1023 = vmatpush1.msra.mxu0 0.0
    %1024 = vmatprep.subr.mxu0 0.0
    %1025 = vmatpush1.msra.mxu0 0.0
    %1026 = vmatprep.subr.mxu0 0.0
    %1027 = vmatpush1.msra.mxu0 0.0
    %1028 = vmatprep.subr.mxu0 0.0
    %1029 = vmatpush1.msra.mxu0 0.0
    %1030 = vmatprep.subr.mxu0 0.0
    %1031 = vmatpush1.msra.mxu0 0.0
    %1032 = vmatprep.subr.mxu0 0.0
    %1033 = vmatpush1.msra.mxu0 0.0
    %1034 = vmatprep.subr.mxu0 0.0
    %1035 = vmatpush1.msra.mxu0 0.0
    %1036 = vmatprep.subr.mxu0 0.0
    %1037 = vmatpush1.msra.mxu0 0.0
    %1038 = vmatprep.subr.mxu0 0.0
    %1039 = vmatpush1.msra.mxu0 0.0
    %1040 = vmatprep.subr.mxu0 0.0
    %1041 = vmatpush1.msra.mxu0 0.0
    %1042 = vmatprep.subr.mxu0 0.0
    %1043 = vmatpush1.msra.mxu0 0.0
    %1044 = vmatprep.subr.mxu0 0.0
    %1045 = vmatpush1.msra.mxu0 %v123
    %1046 = vmatprep.subr.mxu0 0.0
    %1047 = vmatpush1.msra.mxu0 %v122
    %1048 = vmatprep.subr.mxu0 0.0
    %1049 = vmatpush1.msra.mxu0 %v121
    %1050 = vmatprep.subr.mxu0 0.0
    %1051 = vmatpush1.msra.mxu0 %v120
    %1052 = vmatprep.subr.mxu0 0.0
    %1053 = vmatpush2.msra.mxu0 0.0
    %1054 = vmatprep.subr.mxu0 0.0
    %1055 = vmatpush2.msra.mxu0 0.0
    %1056 = vmatprep.subr.mxu0 0.0
    %1057 = vmatpush2.msra.mxu0 0.0
    %1058 = vmatprep.subr.mxu0 0.0
    %1059 = vmatpush2.msra.mxu0 0.0
    %1060 = vmatprep.subr.mxu0 0.0
    %1061 = vmatpush2.msra.mxu0 0.0
    %1062 = vmatprep.subr.mxu0 0.0
    %1063 = vmatpush2.msra.mxu0 0.0
    %1064 = vmatprep.subr.mxu0 0.0
    %1065 = vmatpush2.msra.mxu0 0.0
    %1066 = vmatprep.subr.mxu0 0.0
    %1067 = vmatpush2.msra.mxu0 0.0
    %1068 = vmatprep.subr.mxu0 0.0
    %1069 = vmatpush2.msra.mxu0 0.0
    %1070 = vmatprep.subr.mxu0 0.0
    %1071 = vmatpush2.msra.mxu0 0.0
    %1072 = vmatprep.subr.mxu0 0.0
    %1073 = vmatpush2.msra.mxu0 0.0
    %1074 = vmatprep.subr.mxu0 0.0
    %1075 = vmatpush2.msra.mxu0 0.0
    %1076 = vmatprep.subr.mxu0 0.0
    %1077 = vmatpush2.msra.mxu0 0.0
    %1078 = vmatprep.subr.mxu0 0.0
    %1079 = vmatpush2.msra.mxu0 0.0
    %1080 = vmatprep.subr.mxu0 0.0
    %1081 = vmatpush2.msra.mxu0 0.0
    %1082 = vmatprep.subr.mxu0 0.0
    %1083 = vmatpush2.msra.mxu0 0.0
    %1084 = vmatprep.mubr.f32.mxu0 0.0
    %1085 = vmatmul.mubr.f32.gmra.mxu0 %v1018
    %v1086 = vpop.f32.mrf.mxu0
    %v1087 = vadd.f32 0.0, %v1086
    %v1088 = vpop.f32.mrf.mxu0
    %1089 = vdwg.mxu0
    %v1090 = vadd.f32 %v421, %v1087
    %v1091 = vxor.u32 %v1090, 2147483648
    %v1092 = vmul.f32 %v1091, 1.442695
    %v1093 = vpow.pop %v1092
    %v1094 = vadd.f32 %v1093, 1.0
    %v1095 = vrcp.pop %v1094
    %v1096 = vmul.f32 1.0, %v1095
    %v1097 = vtanh.pop %v1090
    %v1098 = vmul.f32 %v1096, %v1008
    %1100 = vrot.lane.b32.xlu0 %v1097, 64
    %v1101 = vpop.permute.xlu0 %1100
    %v1103 = vmul.f32 %v1096, %v1101
    %1105 = vrot.lane.b32.xlu0 %v1103, 32
    %v1106 = vpop.permute.xlu0 %1105
    %v1108 = vadd.f32 %v1098, %v1106
    %v1109 = vtanh.pop %v1108
    %1111 = vrot.lane.b32.xlu0 %v1109, 64
    %v1112 = vpop.permute.xlu0 %1111
    %v1114 = vmul.f32 %v1096, %v1112
    %1116 = vrot.lane.b32.xlu0 %v1114, 32
    %v1117 = vpop.permute.xlu0 %1116
    %v1118 = vsel %vm716, %v1117, 0
    %1120 = vmatprep.subr.mxu0 0.0
    %1121 = vmatpush1.msra.mxu0 0.0
    %1122 = vmatprep.subr.mxu0 0.0
    %1123 = vmatpush1.msra.mxu0 0.0
    %1124 = vmatprep.subr.mxu0 0.0
    %1125 = vmatpush1.msra.mxu0 0.0
    %1126 = vmatprep.subr.mxu0 0.0
    %1127 = vmatpush1.msra.mxu0 0.0
    %1128 = vmatprep.subr.mxu0 0.0
    %1129 = vmatpush1.msra.mxu0 0.0
    %1130 = vmatprep.subr.mxu0 0.0
    %1131 = vmatpush1.msra.mxu0 0.0
    %1132 = vmatprep.subr.mxu0 0.0
    %1133 = vmatpush1.msra.mxu0 0.0
    %1134 = vmatprep.subr.mxu0 0.0
    %1135 = vmatpush1.msra.mxu0 0.0
    %1136 = vmatprep.subr.mxu0 0.0
    %1137 = vmatpush1.msra.mxu0 0.0
    %1138 = vmatprep.subr.mxu0 0.0
    %1139 = vmatpush1.msra.mxu0 0.0
    %1140 = vmatprep.subr.mxu0 0.0
    %1141 = vmatpush1.msra.mxu0 0.0
    %1142 = vmatprep.subr.mxu0 0.0
    %1143 = vmatpush1.msra.mxu0 0.0
    %1144 = vmatprep.subr.mxu0 0.0
    %1145 = vmatpush1.msra.mxu0 %v123
    %1146 = vmatprep.subr.mxu0 0.0
    %1147 = vmatpush1.msra.mxu0 %v122
    %1148 = vmatprep.subr.mxu0 0.0
    %1149 = vmatpush1.msra.mxu0 %v121
    %1150 = vmatprep.subr.mxu0 0.0
    %1151 = vmatpush1.msra.mxu0 %v120
    %1152 = vmatprep.subr.mxu0 0.0
    %1153 = vmatpush2.msra.mxu0 0.0
    %1154 = vmatprep.subr.mxu0 0.0
    %1155 = vmatpush2.msra.mxu0 0.0
    %1156 = vmatprep.subr.mxu0 0.0
    %1157 = vmatpush2.msra.mxu0 0.0
    %1158 = vmatprep.subr.mxu0 0.0
    %1159 = vmatpush2.msra.mxu0 0.0
    %1160 = vmatprep.subr.mxu0 0.0
    %1161 = vmatpush2.msra.mxu0 0.0
    %1162 = vmatprep.subr.mxu0 0.0
    %1163 = vmatpush2.msra.mxu0 0.0
    %1164 = vmatprep.subr.mxu0 0.0
    %1165 = vmatpush2.msra.mxu0 0.0
    %1166 = vmatprep.subr.mxu0 0.0
    %1167 = vmatpush2.msra.mxu0 0.0
    %1168 = vmatprep.subr.mxu0 0.0
    %1169 = vmatpush2.msra.mxu0 0.0
    %1170 = vmatprep.subr.mxu0 0.0
    %1171 = vmatpush2.msra.mxu0 0.0
    %1172 = vmatprep.subr.mxu0 0.0
    %1173 = vmatpush2.msra.mxu0 0.0
    %1174 = vmatprep.subr.mxu0 0.0
    %1175 = vmatpush2.msra.mxu0 0.0
    %1176 = vmatprep.subr.mxu0 0.0
    %1177 = vmatpush2.msra.mxu0 0.0
    %1178 = vmatprep.subr.mxu0 0.0
    %1179 = vmatpush2.msra.mxu0 0.0
    %1180 = vmatprep.subr.mxu0 0.0
    %1181 = vmatpush2.msra.mxu0 0.0
    %1182 = vmatprep.subr.mxu0 0.0
    %1183 = vmatpush2.msra.mxu0 0.0
    %1184 = vmatprep.mubr.f32.mxu0 0.0
    %1185 = vmatmul.mubr.f32.gmra.mxu0 %v1118
    %v1186 = vpop.f32.mrf.mxu0
    %v1187 = vadd.f32 0.0, %v1186
    %v1188 = vpop.f32.mrf.mxu0
    %1189 = vdwg.mxu0
    %v1190 = vadd.f32 %v494, %v1187
    %v1191 = vxor.u32 %v1190, 2147483648
    %v1192 = vmul.f32 %v1191, 1.442695
    %v1193 = vpow.pop %v1192
    %v1194 = vadd.f32 %v1193, 1.0
    %v1195 = vrcp.pop %v1194
    %v1196 = vmul.f32 1.0, %v1195
    %v1197 = vtanh.pop %v1190
    %v1198 = vmul.f32 %v1196, %v1108
    %1200 = vrot.lane.b32.xlu0 %v1197, 64
    %v1201 = vpop.permute.xlu0 %1200
    %v1203 = vmul.f32 %v1196, %v1201
    %1205 = vrot.lane.b32.xlu0 %v1203, 32
    %v1206 = vpop.permute.xlu0 %1205
    %v1208 = vadd.f32 %v1198, %v1206
    %v1209 = vtanh.pop %v1208
    %1211 = vrot.lane.b32.xlu0 %v1209, 64
    %v1212 = vpop.permute.xlu0 %1211
    %v1214 = vmul.f32 %v1196, %v1212
    %1216 = vrot.lane.b32.xlu0 %v1214, 32
    %v1217 = vpop.permute.xlu0 %1216
    %v1218 = vsel %vm716, %v1217, 0
    %1220 = vmatprep.subr.mxu0 0.0
    %1221 = vmatpush1.msra.mxu0 0.0
    %1222 = vmatprep.subr.mxu0 0.0
    %1223 = vmatpush1.msra.mxu0 0.0
    %1224 = vmatprep.subr.mxu0 0.0
    %1225 = vmatpush1.msra.mxu0 0.0
    %1226 = vmatprep.subr.mxu0 0.0
    %1227 = vmatpush1.msra.mxu0 0.0
    %1228 = vmatprep.subr.mxu0 0.0
    %1229 = vmatpush1.msra.mxu0 0.0
    %1230 = vmatprep.subr.mxu0 0.0
    %1231 = vmatpush1.msra.mxu0 0.0
    %1232 = vmatprep.subr.mxu0 0.0
    %1233 = vmatpush1.msra.mxu0 0.0
    %1234 = vmatprep.subr.mxu0 0.0
    %1235 = vmatpush1.msra.mxu0 0.0
    %1236 = vmatprep.subr.mxu0 0.0
    %1237 = vmatpush1.msra.mxu0 0.0
    %1238 = vmatprep.subr.mxu0 0.0
    %1239 = vmatpush1.msra.mxu0 0.0
    %1240 = vmatprep.subr.mxu0 0.0
    %1241 = vmatpush1.msra.mxu0 0.0
    %1242 = vmatprep.subr.mxu0 0.0
    %1243 = vmatpush1.msra.mxu0 0.0
    %1244 = vmatprep.subr.mxu0 0.0
    %1245 = vmatpush1.msra.mxu0 %v123
    %1246 = vmatprep.subr.mxu0 0.0
    %1247 = vmatpush1.msra.mxu0 %v122
    %1248 = vmatprep.subr.mxu0 0.0
    %1249 = vmatpush1.msra.mxu0 %v121
    %1250 = vmatprep.subr.mxu0 0.0
    %1251 = vmatpush1.msra.mxu0 %v120
    %1252 = vmatprep.subr.mxu0 0.0
    %1253 = vmatpush2.msra.mxu0 0.0
    %1254 = vmatprep.subr.mxu0 0.0
    %1255 = vmatpush2.msra.mxu0 0.0
    %1256 = vmatprep.subr.mxu0 0.0
    %1257 = vmatpush2.msra.mxu0 0.0
    %1258 = vmatprep.subr.mxu0 0.0
    %1259 = vmatpush2.msra.mxu0 0.0
    %1260 = vmatprep.subr.mxu0 0.0
    %1261 = vmatpush2.msra.mxu0 0.0
    %1262 = vmatprep.subr.mxu0 0.0
    %1263 = vmatpush2.msra.mxu0 0.0
    %1264 = vmatprep.subr.mxu0 0.0
    %1265 = vmatpush2.msra.mxu0 0.0
    %1266 = vmatprep.subr.mxu0 0.0
    %1267 = vmatpush2.msra.mxu0 0.0
    %1268 = vmatprep.subr.mxu0 0.0
    %1269 = vmatpush2.msra.mxu0 0.0
    %1270 = vmatprep.subr.mxu0 0.0
    %1271 = vmatpush2.msra.mxu0 0.0
    %1272 = vmatprep.subr.mxu0 0.0
    %1273 = vmatpush2.msra.mxu0 0.0
    %1274 = vmatprep.subr.mxu0 0.0
    %1275 = vmatpush2.msra.mxu0 0.0
    %1276 = vmatprep.subr.mxu0 0.0
    %1277 = vmatpush2.msra.mxu0 0.0
    %1278 = vmatprep.subr.mxu0 0.0
    %1279 = vmatpush2.msra.mxu0 0.0
    %1280 = vmatprep.subr.mxu0 0.0
    %1281 = vmatpush2.msra.mxu0 0.0
    %1282 = vmatprep.subr.mxu0 0.0
    %1283 = vmatpush2.msra.mxu0 0.0
    %1284 = vmatprep.mubr.f32.mxu0 0.0
    %1285 = vmatmul.mubr.f32.gmra.mxu0 %v1218
    %v1286 = vpop.f32.mrf.mxu0
    %v1287 = vadd.f32 0.0, %v1286
    %v1288 = vpop.f32.mrf.mxu0
    %1289 = vdwg.mxu0
    %v1290 = vadd.f32 %v567, %v1287
    %v1291 = vxor.u32 %v1290, 2147483648
    %v1292 = vmul.f32 %v1291, 1.442695
    %v1293 = vpow.pop %v1292
    %v1294 = vadd.f32 %v1293, 1.0
    %v1295 = vrcp.pop %v1294
    %v1296 = vmul.f32 1.0, %v1295
    %v1297 = vtanh.pop %v1290
    %v1298 = vmul.f32 %v1296, %v1208
    %1300 = vrot.lane.b32.xlu0 %v1297, 64
    %v1301 = vpop.permute.xlu0 %1300
    %v1303 = vmul.f32 %v1296, %v1301
    %1305 = vrot.lane.b32.xlu0 %v1303, 32
    %v1306 = vpop.permute.xlu0 %1305
    %v1308 = vadd.f32 %v1298, %v1306
    %v1309 = vtanh.pop %v1308
    %1311 = vrot.lane.b32.xlu0 %v1309, 64
    %v1312 = vpop.permute.xlu0 %1311
    %v1314 = vmul.f32 %v1296, %v1312
    %1316 = vrot.lane.b32.xlu0 %v1314, 32
    %v1317 = vpop.permute.xlu0 %1316
    %v1318 = vsel %vm716, %v1317, 0
    %1320 = vmatprep.subr.mxu0 0.0
    %1321 = vmatpush1.msra.mxu0 0.0
    %1322 = vmatprep.subr.mxu0 0.0
    %1323 = vmatpush1.msra.mxu0 0.0
    %1324 = vmatprep.subr.mxu0 0.0
    %1325 = vmatpush1.msra.mxu0 0.0
    %1326 = vmatprep.subr.mxu0 0.0
    %1327 = vmatpush1.msra.mxu0 0.0
    %1328 = vmatprep.subr.mxu0 0.0
    %1329 = vmatpush1.msra.mxu0 0.0
    %1330 = vmatprep.subr.mxu0 0.0
    %1331 = vmatpush1.msra.mxu0 0.0
    %1332 = vmatprep.subr.mxu0 0.0
    %1333 = vmatpush1.msra.mxu0 0.0
    %1334 = vmatprep.subr.mxu0 0.0
    %1335 = vmatpush1.msra.mxu0 0.0
    %1336 = vmatprep.subr.mxu0 0.0
    %1337 = vmatpush1.msra.mxu0 0.0
    %1338 = vmatprep.subr.mxu0 0.0
    %1339 = vmatpush1.msra.mxu0 0.0
    %1340 = vmatprep.subr.mxu0 0.0
    %1341 = vmatpush1.msra.mxu0 0.0
    %1342 = vmatprep.subr.mxu0 0.0
    %1343 = vmatpush1.msra.mxu0 0.0
    %1344 = vmatprep.subr.mxu0 0.0
    %1345 = vmatpush1.msra.mxu0 %v123
    %1346 = vmatprep.subr.mxu0 0.0
    %1347 = vmatpush1.msra.mxu0 %v122
    %1348 = vmatprep.subr.mxu0 0.0
    %1349 = vmatpush1.msra.mxu0 %v121
    %1350 = vmatprep.subr.mxu0 0.0
    %1351 = vmatpush1.msra.mxu0 %v120
    %1352 = vmatprep.subr.mxu0 0.0
    %1353 = vmatpush2.msra.mxu0 0.0
    %1354 = vmatprep.subr.mxu0 0.0
    %1355 = vmatpush2.msra.mxu0 0.0
    %1356 = vmatprep.subr.mxu0 0.0
    %1357 = vmatpush2.msra.mxu0 0.0
    %1358 = vmatprep.subr.mxu0 0.0
    %1359 = vmatpush2.msra.mxu0 0.0
    %1360 = vmatprep.subr.mxu0 0.0
    %1361 = vmatpush2.msra.mxu0 0.0
    %1362 = vmatprep.subr.mxu0 0.0
    %1363 = vmatpush2.msra.mxu0 0.0
    %1364 = vmatprep.subr.mxu0 0.0
    %1365 = vmatpush2.msra.mxu0 0.0
    %1366 = vmatprep.subr.mxu0 0.0
    %1367 = vmatpush2.msra.mxu0 0.0
    %1368 = vmatprep.subr.mxu0 0.0
    %1369 = vmatpush2.msra.mxu0 0.0
    %1370 = vmatprep.subr.mxu0 0.0
    %1371 = vmatpush2.msra.mxu0 0.0
    %1372 = vmatprep.subr.mxu0 0.0
    %1373 = vmatpush2.msra.mxu0 0.0
    %1374 = vmatprep.subr.mxu0 0.0
    %1375 = vmatpush2.msra.mxu0 0.0
    %1376 = vmatprep.subr.mxu0 0.0
    %1377 = vmatpush2.msra.mxu0 0.0
    %1378 = vmatprep.subr.mxu0 0.0
    %1379 = vmatpush2.msra.mxu0 0.0
    %1380 = vmatprep.subr.mxu0 0.0
    %1381 = vmatpush2.msra.mxu0 0.0
    %1382 = vmatprep.subr.mxu0 0.0
    %1383 = vmatpush2.msra.mxu0 0.0
    %1384 = vmatprep.mubr.f32.mxu0 0.0
    %1385 = vmatmul.mubr.f32.gmra.mxu0 %v1318
    %v1386 = vpop.f32.mrf.mxu0
    %v1387 = vadd.f32 0.0, %v1386
    %v1388 = vpop.f32.mrf.mxu0
    %1389 = vdwg.mxu0
    %v1390 = vadd.f32 %v640, %v1387
    %v1391 = vxor.u32 %v1390, 2147483648
    %v1392 = vmul.f32 %v1391, 1.442695
    %v1393 = vpow.pop %v1392
    %v1394 = vadd.f32 %v1393, 1.0
    %v1395 = vrcp.pop %v1394
    %v1396 = vmul.f32 1.0, %v1395
    %v1397 = vtanh.pop %v1390
    %v1398 = vmul.f32 %v1396, %v1308
    %1400 = vrot.lane.b32.xlu0 %v1397, 64
    %v1401 = vpop.permute.xlu0 %1400
    %v1403 = vmul.f32 %v1396, %v1401
    %1405 = vrot.lane.b32.xlu0 %v1403, 32
    %v1406 = vpop.permute.xlu0 %1405
    %v1408 = vadd.f32 %v1398, %v1406
    %v1409 = vtanh.pop %v1408
    %1411 = vrot.lane.b32.xlu0 %v1409, 64
    %v1412 = vpop.permute.xlu0 %1411
    %v1414 = vmul.f32 %v1396, %v1412
    %1416 = vrot.lane.b32.xlu0 %v1414, 32
    %v1417 = vpop.permute.xlu0 %1416
    %v1418 = vsel %vm716, %v1417, 0
    %1420 = vmatprep.subr.mxu0 0.0
    %1421 = vmatpush1.msra.mxu0 0.0
    %1422 = vmatprep.subr.mxu0 0.0
    %1423 = vmatpush1.msra.mxu0 0.0
    %1424 = vmatprep.subr.mxu0 0.0
    %1425 = vmatpush1.msra.mxu0 0.0
    %1426 = vmatprep.subr.mxu0 0.0
    %1427 = vmatpush1.msra.mxu0 0.0
    %1428 = vmatprep.subr.mxu0 0.0
    %1429 = vmatpush1.msra.mxu0 0.0
    %1430 = vmatprep.subr.mxu0 0.0
    %1431 = vmatpush1.msra.mxu0 0.0
    %1432 = vmatprep.subr.mxu0 0.0
    %1433 = vmatpush1.msra.mxu0 0.0
    %1434 = vmatprep.subr.mxu0 0.0
    %1435 = vmatpush1.msra.mxu0 0.0
    %1436 = vmatprep.subr.mxu0 0.0
    %1437 = vmatpush1.msra.mxu0 0.0
    %1438 = vmatprep.subr.mxu0 0.0
    %1439 = vmatpush1.msra.mxu0 0.0
    %1440 = vmatprep.subr.mxu0 0.0
    %1441 = vmatpush1.msra.mxu0 0.0
    %1442 = vmatprep.subr.mxu0 0.0
    %1443 = vmatpush1.msra.mxu0 0.0
    %1444 = vmatprep.subr.mxu0 0.0
    %1445 = vmatpush1.msra.mxu0 %v123
    %1446 = vmatprep.subr.mxu0 0.0
    %1447 = vmatpush1.msra.mxu0 %v122
    %1448 = vmatprep.subr.mxu0 0.0
    %1449 = vmatpush1.msra.mxu0 %v121
    %1450 = vmatprep.subr.mxu0 0.0
    %1451 = vmatpush1.msra.mxu0 %v120
    %1452 = vmatprep.subr.mxu0 0.0
    %1453 = vmatpush2.msra.mxu0 0.0
    %1454 = vmatprep.subr.mxu0 0.0
    %1455 = vmatpush2.msra.mxu0 0.0
    %1456 = vmatprep.subr.mxu0 0.0
    %1457 = vmatpush2.msra.mxu0 0.0
    %1458 = vmatprep.subr.mxu0 0.0
    %1459 = vmatpush2.msra.mxu0 0.0
    %1460 = vmatprep.subr.mxu0 0.0
    %1461 = vmatpush2.msra.mxu0 0.0
    %1462 = vmatprep.subr.mxu0 0.0
    %1463 = vmatpush2.msra.mxu0 0.0
    %1464 = vmatprep.subr.mxu0 0.0
    %1465 = vmatpush2.msra.mxu0 0.0
    %1466 = vmatprep.subr.mxu0 0.0
    %1467 = vmatpush2.msra.mxu0 0.0
    %1468 = vmatprep.subr.mxu0 0.0
    %1469 = vmatpush2.msra.mxu0 0.0
    %1470 = vmatprep.subr.mxu0 0.0
    %1471 = vmatpush2.msra.mxu0 0.0
    %1472 = vmatprep.subr.mxu0 0.0
    %1473 = vmatpush2.msra.mxu0 0.0
    %1474 = vmatprep.subr.mxu0 0.0
    %1475 = vmatpush2.msra.mxu0 0.0
    %1476 = vmatprep.subr.mxu0 0.0
    %1477 = vmatpush2.msra.mxu0 0.0
    %1478 = vmatprep.subr.mxu0 0.0
    %1479 = vmatpush2.msra.mxu0 0.0
    %1480 = vmatprep.subr.mxu0 0.0
    %1481 = vmatpush2.msra.mxu0 0.0
    %1482 = vmatprep.subr.mxu0 0.0
    %1483 = vmatpush2.msra.mxu0 0.0
    %1484 = vmatprep.mubr.f32.mxu0 0.0
    %1485 = vmatmul.mubr.f32.gmra.mxu0 %v1418
    %v1486 = vpop.f32.mrf.mxu0
    %v1487 = vadd.f32 0.0, %v1486
    %v1488 = vpop.f32.mrf.mxu0
    %1489 = vdwg.mxu0
    %v1490 = vadd.f32 %v713, %v1487
    %v1491 = vxor.u32 %v1490, 2147483648
    %v1492 = vmul.f32 %v1491, 1.442695
    %v1493 = vpow.pop %v1492
    %v1494 = vadd.f32 %v1493, 1.0
    %v1495 = vrcp.pop %v1494
    %v1496 = vmul.f32 1.0, %v1495
    %v1497 = vtanh.pop %v1490
    %v1498 = vmul.f32 %v1496, %v1408
    %1500 = vrot.lane.b32.xlu0 %v1497, 64
    %v1501 = vpop.permute.xlu0 %1500
    %v1503 = vmul.f32 %v1496, %v1501
    %1505 = vrot.lane.b32.xlu0 %v1503, 32
    %v1506 = vpop.permute.xlu0 %1505
    %v1508 = vadd.f32 %v1498, %v1506
    %v1509 = vtanh.pop %v1508
    %1511 = vrot.lane.b32.xlu0 %v1509, 64
    %v1512 = vpop.permute.xlu0 %1511
    %v1514 = vmul.f32 %v1496, %v1512
    %v1515 = vld [vmem:[#allocation7] sm:$0xff]
    %v1516 = vld [vmem:[#allocation7 + $0x8] sm:$0xff]
    %v1517 = vld [vmem:[#allocation7 + $0x10] sm:$0xff]
    %v1518 = vld [vmem:[#allocation7 + $0x18] sm:$0xff]
    %s1519 = scalar_lea.vmem [#allocation8], 32
    %v1520 = vld [vmem:[%s1519] sm:$0xff]
    %v1521 = vld [vmem:[%s1519 + $0x8] sm:$0xff]
    %v1522 = vld [vmem:[%s1519 + $0x10] sm:$0xff]
    %v1523 = vld [vmem:[%s1519 + $0x18] sm:$0xff]
    %s1524 = scalar_lea.vmem %s4, 1
    %v1525 = vld [vmem:[%s1524] sm:$0x1]
    %v1527 = vlaneseq
    %v1528 = vshrl.u32 %v1527, 7
    %v1529 = vsub.s32 0, %v1528
    %v1530 = vrot.slane %v1525, %v1529
    %1532 = vmatprep.subr.mxu0 0.0
    %1533 = vmatpush1.msra.mxu0 0.0
    %1534 = vmatprep.subr.mxu0 0.0
    %1535 = vmatpush1.msra.mxu0 0.0
    %1536 = vmatprep.subr.mxu0 0.0
    %1537 = vmatpush1.msra.mxu0 0.0
    %1538 = vmatprep.subr.mxu0 0.0
    %1539 = vmatpush1.msra.mxu0 0.0
    %1540 = vmatprep.subr.mxu0 0.0
    %1541 = vmatpush1.msra.mxu0 0.0
    %1542 = vmatprep.subr.mxu0 0.0
    %1543 = vmatpush1.msra.mxu0 0.0
    %1544 = vmatprep.subr.mxu0 0.0
    %1545 = vmatpush1.msra.mxu0 0.0
    %1546 = vmatprep.subr.mxu0 0.0
    %1547 = vmatpush1.msra.mxu0 0.0
    %1548 = vmatprep.subr.mxu0 0.0
    %1549 = vmatpush1.msra.mxu0 0.0
    %1550 = vmatprep.subr.mxu0 0.0
    %1551 = vmatpush1.msra.mxu0 0.0
    %1552 = vmatprep.subr.mxu0 0.0
    %1553 = vmatpush1.msra.mxu0 0.0
    %1554 = vmatprep.subr.mxu0 0.0
    %1555 = vmatpush1.msra.mxu0 0.0
    %1556 = vmatprep.subr.mxu0 0.0
    %1557 = vmatpush1.msra.mxu0 %v1518
    %1558 = vmatprep.subr.mxu0 0.0
    %1559 = vmatpush1.msra.mxu0 %v1517
    %1560 = vmatprep.subr.mxu0 0.0
    %1561 = vmatpush1.msra.mxu0 %v1516
    %1562 = vmatprep.subr.mxu0 0.0
    %1563 = vmatpush1.msra.mxu0 %v1515
    %1564 = vmatprep.subr.mxu0 0.0
    %1565 = vmatpush2.msra.mxu0 0.0
    %1566 = vmatprep.subr.mxu0 0.0
    %1567 = vmatpush2.msra.mxu0 0.0
    %1568 = vmatprep.subr.mxu0 0.0
    %1569 = vmatpush2.msra.mxu0 0.0
    %1570 = vmatprep.subr.mxu0 0.0
    %1571 = vmatpush2.msra.mxu0 0.0
    %1572 = vmatprep.subr.mxu0 0.0
    %1573 = vmatpush2.msra.mxu0 0.0
    %1574 = vmatprep.subr.mxu0 0.0
    %1575 = vmatpush2.msra.mxu0 0.0
    %1576 = vmatprep.subr.mxu0 0.0
    %1577 = vmatpush2.msra.mxu0 0.0
    %1578 = vmatprep.subr.mxu0 0.0
    %1579 = vmatpush2.msra.mxu0 0.0
    %1580 = vmatprep.subr.mxu0 0.0
    %1581 = vmatpush2.msra.mxu0 0.0
    %1582 = vmatprep.subr.mxu0 0.0
    %1583 = vmatpush2.msra.mxu0 0.0
    %1584 = vmatprep.subr.mxu0 0.0
    %1585 = vmatpush2.msra.mxu0 0.0
    %1586 = vmatprep.subr.mxu0 0.0
    %1587 = vmatpush2.msra.mxu0 0.0
    %1588 = vmatprep.subr.mxu0 0.0
    %1589 = vmatpush2.msra.mxu0 0.0
    %1590 = vmatprep.subr.mxu0 0.0
    %1591 = vmatpush2.msra.mxu0 0.0
    %1592 = vmatprep.subr.mxu0 0.0
    %1593 = vmatpush2.msra.mxu0 0.0
    %1594 = vmatprep.subr.mxu0 0.0
    %1595 = vmatpush2.msra.mxu0 0.0
    %1596 = vmatprep.mubr.f32.mxu0 0.0
    %1597 = vmatmul.mubr.f32.gmra.mxu0 %v818
    %v1598 = vpop.f32.mrf.mxu0
    %v1599 = vadd.f32 %v1530, %v1598
    %v1600 = vpop.f32.mrf.mxu0
    %1601 = vdwg.mxu0
    %1602 = vmatprep.subr.mxu0 0.0
    %1603 = vmatpush1.msra.mxu0 0.0
    %1604 = vmatprep.subr.mxu0 0.0
    %1605 = vmatpush1.msra.mxu0 0.0
    %1606 = vmatprep.subr.mxu0 0.0
    %1607 = vmatpush1.msra.mxu0 0.0
    %1608 = vmatprep.subr.mxu0 0.0
    %1609 = vmatpush1.msra.mxu0 0.0
    %1610 = vmatprep.subr.mxu0 0.0
    %1611 = vmatpush1.msra.mxu0 0.0
    %1612 = vmatprep.subr.mxu0 0.0
    %1613 = vmatpush1.msra.mxu0 0.0
    %1614 = vmatprep.subr.mxu0 0.0
    %1615 = vmatpush1.msra.mxu0 0.0
    %1616 = vmatprep.subr.mxu0 0.0
    %1617 = vmatpush1.msra.mxu0 0.0
    %1618 = vmatprep.subr.mxu0 0.0
    %1619 = vmatpush1.msra.mxu0 0.0
    %1620 = vmatprep.subr.mxu0 0.0
    %1621 = vmatpush1.msra.mxu0 0.0
    %1622 = vmatprep.subr.mxu0 0.0
    %1623 = vmatpush1.msra.mxu0 0.0
    %1624 = vmatprep.subr.mxu0 0.0
    %1625 = vmatpush1.msra.mxu0 0.0
    %1626 = vmatprep.subr.mxu0 0.0
    %1627 = vmatpush1.msra.mxu0 %v1518
    %1628 = vmatprep.subr.mxu0 0.0
    %1629 = vmatpush1.msra.mxu0 %v1517
    %1630 = vmatprep.subr.mxu0 0.0
    %1631 = vmatpush1.msra.mxu0 %v1516
    %1632 = vmatprep.subr.mxu0 0.0
    %1633 = vmatpush1.msra.mxu0 %v1515
    %1634 = vmatprep.subr.mxu0 0.0
    %1635 = vmatpush2.msra.mxu0 0.0
    %1636 = vmatprep.subr.mxu0 0.0
    %1637 = vmatpush2.msra.mxu0 0.0
    %1638 = vmatprep.subr.mxu0 0.0
    %1639 = vmatpush2.msra.mxu0 0.0
    %1640 = vmatprep.subr.mxu0 0.0
    %1641 = vmatpush2.msra.mxu0 0.0
    %1642 = vmatprep.subr.mxu0 0.0
    %1643 = vmatpush2.msra.mxu0 0.0
    %1644 = vmatprep.subr.mxu0 0.0
    %1645 = vmatpush2.msra.mxu0 0.0
    %1646 = vmatprep.subr.mxu0 0.0
    %1647 = vmatpush2.msra.mxu0 0.0
    %1648 = vmatprep.subr.mxu0 0.0
    %1649 = vmatpush2.msra.mxu0 0.0
    %1650 = vmatprep.subr.mxu0 0.0
    %1651 = vmatpush2.msra.mxu0 0.0
    %1652 = vmatprep.subr.mxu0 0.0
    %1653 = vmatpush2.msra.mxu0 0.0
    %1654 = vmatprep.subr.mxu0 0.0
    %1655 = vmatpush2.msra.mxu0 0.0
    %1656 = vmatprep.subr.mxu0 0.0
    %1657 = vmatpush2.msra.mxu0 0.0
    %1658 = vmatprep.subr.mxu0 0.0
    %1659 = vmatpush2.msra.mxu0 0.0
    %1660 = vmatprep.subr.mxu0 0.0
    %1661 = vmatpush2.msra.mxu0 0.0
    %1662 = vmatprep.subr.mxu0 0.0
    %1663 = vmatpush2.msra.mxu0 0.0
    %1664 = vmatprep.subr.mxu0 0.0
    %1665 = vmatpush2.msra.mxu0 0.0
    %1666 = vmatprep.mubr.f32.mxu0 0.0
    %1667 = vmatmul.mubr.f32.gmra.mxu0 %v918
    %v1668 = vpop.f32.mrf.mxu0
    %v1669 = vadd.f32 %v1530, %v1668
    %v1670 = vpop.f32.mrf.mxu0
    %1671 = vdwg.mxu0
    %1672 = vmatprep.subr.mxu0 0.0
    %1673 = vmatpush1.msra.mxu0 0.0
    %1674 = vmatprep.subr.mxu0 0.0
    %1675 = vmatpush1.msra.mxu0 0.0
    %1676 = vmatprep.subr.mxu0 0.0
    %1677 = vmatpush1.msra.mxu0 0.0
    %1678 = vmatprep.subr.mxu0 0.0
    %1679 = vmatpush1.msra.mxu0 0.0
    %1680 = vmatprep.subr.mxu0 0.0
    %1681 = vmatpush1.msra.mxu0 0.0
    %1682 = vmatprep.subr.mxu0 0.0
    %1683 = vmatpush1.msra.mxu0 0.0
    %1684 = vmatprep.subr.mxu0 0.0
    %1685 = vmatpush1.msra.mxu0 0.0
    %1686 = vmatprep.subr.mxu0 0.0
    %1687 = vmatpush1.msra.mxu0 0.0
    %1688 = vmatprep.subr.mxu0 0.0
    %1689 = vmatpush1.msra.mxu0 0.0
    %1690 = vmatprep.subr.mxu0 0.0
    %1691 = vmatpush1.msra.mxu0 0.0
    %1692 = vmatprep.subr.mxu0 0.0
    %1693 = vmatpush1.msra.mxu0 0.0
    %1694 = vmatprep.subr.mxu0 0.0
    %1695 = vmatpush1.msra.mxu0 0.0
    %1696 = vmatprep.subr.mxu0 0.0
    %1697 = vmatpush1.msra.mxu0 %v1518
    %1698 = vmatprep.subr.mxu0 0.0
    %1699 = vmatpush1.msra.mxu0 %v1517
    %1700 = vmatprep.subr.mxu0 0.0
    %1701 = vmatpush1.msra.mxu0 %v1516
    %1702 = vmatprep.subr.mxu0 0.0
    %1703 = vmatpush1.msra.mxu0 %v1515
    %1704 = vmatprep.subr.mxu0 0.0
    %1705 = vmatpush2.msra.mxu0 0.0
    %1706 = vmatprep.subr.mxu0 0.0
    %1707 = vmatpush2.msra.mxu0 0.0
    %1708 = vmatprep.subr.mxu0 0.0
    %1709 = vmatpush2.msra.mxu0 0.0
    %1710 = vmatprep.subr.mxu0 0.0
    %1711 = vmatpush2.msra.mxu0 0.0
    %1712 = vmatprep.subr.mxu0 0.0
    %1713 = vmatpush2.msra.mxu0 0.0
    %1714 = vmatprep.subr.mxu0 0.0
    %1715 = vmatpush2.msra.mxu0 0.0
    %1716 = vmatprep.subr.mxu0 0.0
    %1717 = vmatpush2.msra.mxu0 0.0
    %1718 = vmatprep.subr.mxu0 0.0
    %1719 = vmatpush2.msra.mxu0 0.0
    %1720 = vmatprep.subr.mxu0 0.0
    %1721 = vmatpush2.msra.mxu0 0.0
    %1722 = vmatprep.subr.mxu0 0.0
    %1723 = vmatpush2.msra.mxu0 0.0
    %1724 = vmatprep.subr.mxu0 0.0
    %1725 = vmatpush2.msra.mxu0 0.0
    %1726 = vmatprep.subr.mxu0 0.0
    %1727 = vmatpush2.msra.mxu0 0.0
    %1728 = vmatprep.subr.mxu0 0.0
    %1729 = vmatpush2.msra.mxu0 0.0
    %1730 = vmatprep.subr.mxu0 0.0
    %1731 = vmatpush2.msra.mxu0 0.0
    %1732 = vmatprep.subr.mxu0 0.0
    %1733 = vmatpush2.msra.mxu0 0.0
    %1734 = vmatprep.subr.mxu0 0.0
    %1735 = vmatpush2.msra.mxu0 0.0
    %1736 = vmatprep.mubr.f32.mxu0 0.0
    %1737 = vmatmul.mubr.f32.gmra.mxu0 %v1018
    %v1738 = vpop.f32.mrf.mxu0
    %v1739 = vadd.f32 %v1530, %v1738
    %v1740 = vpop.f32.mrf.mxu0
    %1741 = vdwg.mxu0
    %1742 = vmatprep.subr.mxu0 0.0
    %1743 = vmatpush1.msra.mxu0 0.0
    %1744 = vmatprep.subr.mxu0 0.0
    %1745 = vmatpush1.msra.mxu0 0.0
    %1746 = vmatprep.subr.mxu0 0.0
    %1747 = vmatpush1.msra.mxu0 0.0
    %1748 = vmatprep.subr.mxu0 0.0
    %1749 = vmatpush1.msra.mxu0 0.0
    %1750 = vmatprep.subr.mxu0 0.0
    %1751 = vmatpush1.msra.mxu0 0.0
    %1752 = vmatprep.subr.mxu0 0.0
    %1753 = vmatpush1.msra.mxu0 0.0
    %1754 = vmatprep.subr.mxu0 0.0
    %1755 = vmatpush1.msra.mxu0 0.0
    %1756 = vmatprep.subr.mxu0 0.0
    %1757 = vmatpush1.msra.mxu0 0.0
    %1758 = vmatprep.subr.mxu0 0.0
    %1759 = vmatpush1.msra.mxu0 0.0
    %1760 = vmatprep.subr.mxu0 0.0
    %1761 = vmatpush1.msra.mxu0 0.0
    %1762 = vmatprep.subr.mxu0 0.0
    %1763 = vmatpush1.msra.mxu0 0.0
    %1764 = vmatprep.subr.mxu0 0.0
    %1765 = vmatpush1.msra.mxu0 0.0
    %1766 = vmatprep.subr.mxu0 0.0
    %1767 = vmatpush1.msra.mxu0 %v1518
    %1768 = vmatprep.subr.mxu0 0.0
    %1769 = vmatpush1.msra.mxu0 %v1517
    %1770 = vmatprep.subr.mxu0 0.0
    %1771 = vmatpush1.msra.mxu0 %v1516
    %1772 = vmatprep.subr.mxu0 0.0
    %1773 = vmatpush1.msra.mxu0 %v1515
    %1774 = vmatprep.subr.mxu0 0.0
    %1775 = vmatpush2.msra.mxu0 0.0
    %1776 = vmatprep.subr.mxu0 0.0
    %1777 = vmatpush2.msra.mxu0 0.0
    %1778 = vmatprep.subr.mxu0 0.0
    %1779 = vmatpush2.msra.mxu0 0.0
    %1780 = vmatprep.subr.mxu0 0.0
    %1781 = vmatpush2.msra.mxu0 0.0
    %1782 = vmatprep.subr.mxu0 0.0
    %1783 = vmatpush2.msra.mxu0 0.0
    %1784 = vmatprep.subr.mxu0 0.0
    %1785 = vmatpush2.msra.mxu0 0.0
    %1786 = vmatprep.subr.mxu0 0.0
    %1787 = vmatpush2.msra.mxu0 0.0
    %1788 = vmatprep.subr.mxu0 0.0
    %1789 = vmatpush2.msra.mxu0 0.0
    %1790 = vmatprep.subr.mxu0 0.0
    %1791 = vmatpush2.msra.mxu0 0.0
    %1792 = vmatprep.subr.mxu0 0.0
    %1793 = vmatpush2.msra.mxu0 0.0
    %1794 = vmatprep.subr.mxu0 0.0
    %1795 = vmatpush2.msra.mxu0 0.0
    %1796 = vmatprep.subr.mxu0 0.0
    %1797 = vmatpush2.msra.mxu0 0.0
    %1798 = vmatprep.subr.mxu0 0.0
    %1799 = vmatpush2.msra.mxu0 0.0
    %1800 = vmatprep.subr.mxu0 0.0
    %1801 = vmatpush2.msra.mxu0 0.0
    %1802 = vmatprep.subr.mxu0 0.0
    %1803 = vmatpush2.msra.mxu0 0.0
    %1804 = vmatprep.subr.mxu0 0.0
    %1805 = vmatpush2.msra.mxu0 0.0
    %1806 = vmatprep.mubr.f32.mxu0 0.0
    %1807 = vmatmul.mubr.f32.gmra.mxu0 %v1118
    %v1808 = vpop.f32.mrf.mxu0
    %v1809 = vadd.f32 %v1530, %v1808
    %v1810 = vpop.f32.mrf.mxu0
    %1811 = vdwg.mxu0
    %1812 = vmatprep.subr.mxu0 0.0
    %1813 = vmatpush1.msra.mxu0 0.0
    %1814 = vmatprep.subr.mxu0 0.0
    %1815 = vmatpush1.msra.mxu0 0.0
    %1816 = vmatprep.subr.mxu0 0.0
    %1817 = vmatpush1.msra.mxu0 0.0
    %1818 = vmatprep.subr.mxu0 0.0
    %1819 = vmatpush1.msra.mxu0 0.0
    %1820 = vmatprep.subr.mxu0 0.0
    %1821 = vmatpush1.msra.mxu0 0.0
    %1822 = vmatprep.subr.mxu0 0.0
    %1823 = vmatpush1.msra.mxu0 0.0
    %1824 = vmatprep.subr.mxu0 0.0
    %1825 = vmatpush1.msra.mxu0 0.0
    %1826 = vmatprep.subr.mxu0 0.0
    %1827 = vmatpush1.msra.mxu0 0.0
    %1828 = vmatprep.subr.mxu0 0.0
    %1829 = vmatpush1.msra.mxu0 0.0
    %1830 = vmatprep.subr.mxu0 0.0
    %1831 = vmatpush1.msra.mxu0 0.0
    %1832 = vmatprep.subr.mxu0 0.0
    %1833 = vmatpush1.msra.mxu0 0.0
    %1834 = vmatprep.subr.mxu0 0.0
    %1835 = vmatpush1.msra.mxu0 0.0
    %1836 = vmatprep.subr.mxu0 0.0
    %1837 = vmatpush1.msra.mxu0 %v1518
    %1838 = vmatprep.subr.mxu0 0.0
    %1839 = vmatpush1.msra.mxu0 %v1517
    %1840 = vmatprep.subr.mxu0 0.0
    %1841 = vmatpush1.msra.mxu0 %v1516
    %1842 = vmatprep.subr.mxu0 0.0
    %1843 = vmatpush1.msra.mxu0 %v1515
    %1844 = vmatprep.subr.mxu0 0.0
    %1845 = vmatpush2.msra.mxu0 0.0
    %1846 = vmatprep.subr.mxu0 0.0
    %1847 = vmatpush2.msra.mxu0 0.0
    %1848 = vmatprep.subr.mxu0 0.0
    %1849 = vmatpush2.msra.mxu0 0.0
    %1850 = vmatprep.subr.mxu0 0.0
    %1851 = vmatpush2.msra.mxu0 0.0
    %1852 = vmatprep.subr.mxu0 0.0
    %1853 = vmatpush2.msra.mxu0 0.0
    %1854 = vmatprep.subr.mxu0 0.0
    %1855 = vmatpush2.msra.mxu0 0.0
    %1856 = vmatprep.subr.mxu0 0.0
    %1857 = vmatpush2.msra.mxu0 0.0
    %1858 = vmatprep.subr.mxu0 0.0
    %1859 = vmatpush2.msra.mxu0 0.0
    %1860 = vmatprep.subr.mxu0 0.0
    %1861 = vmatpush2.msra.mxu0 0.0
    %1862 = vmatprep.subr.mxu0 0.0
    %1863 = vmatpush2.msra.mxu0 0.0
    %1864 = vmatprep.subr.mxu0 0.0
    %1865 = vmatpush2.msra.mxu0 0.0
    %1866 = vmatprep.subr.mxu0 0.0
    %1867 = vmatpush2.msra.mxu0 0.0
    %1868 = vmatprep.subr.mxu0 0.0
    %1869 = vmatpush2.msra.mxu0 0.0
    %1870 = vmatprep.subr.mxu0 0.0
    %1871 = vmatpush2.msra.mxu0 0.0
    %1872 = vmatprep.subr.mxu0 0.0
    %1873 = vmatpush2.msra.mxu0 0.0
    %1874 = vmatprep.subr.mxu0 0.0
    %1875 = vmatpush2.msra.mxu0 0.0
    %1876 = vmatprep.mubr.f32.mxu0 0.0
    %1877 = vmatmul.mubr.f32.gmra.mxu0 %v1218
    %v1878 = vpop.f32.mrf.mxu0
    %v1879 = vadd.f32 %v1530, %v1878
    %v1880 = vpop.f32.mrf.mxu0
    %1881 = vdwg.mxu0
    %1882 = vmatprep.subr.mxu0 0.0
    %1883 = vmatpush1.msra.mxu0 0.0
    %1884 = vmatprep.subr.mxu0 0.0
    %1885 = vmatpush1.msra.mxu0 0.0
    %1886 = vmatprep.subr.mxu0 0.0
    %1887 = vmatpush1.msra.mxu0 0.0
    %1888 = vmatprep.subr.mxu0 0.0
    %1889 = vmatpush1.msra.mxu0 0.0
    %1890 = vmatprep.subr.mxu0 0.0
    %1891 = vmatpush1.msra.mxu0 0.0
    %1892 = vmatprep.subr.mxu0 0.0
    %1893 = vmatpush1.msra.mxu0 0.0
    %1894 = vmatprep.subr.mxu0 0.0
    %1895 = vmatpush1.msra.mxu0 0.0
    %1896 = vmatprep.subr.mxu0 0.0
    %1897 = vmatpush1.msra.mxu0 0.0
    %1898 = vmatprep.subr.mxu0 0.0
    %1899 = vmatpush1.msra.mxu0 0.0
    %1900 = vmatprep.subr.mxu0 0.0
    %1901 = vmatpush1.msra.mxu0 0.0
    %1902 = vmatprep.subr.mxu0 0.0
    %1903 = vmatpush1.msra.mxu0 0.0
    %1904 = vmatprep.subr.mxu0 0.0
    %1905 = vmatpush1.msra.mxu0 0.0
    %1906 = vmatprep.subr.mxu0 0.0
    %1907 = vmatpush1.msra.mxu0 %v1518
    %1908 = vmatprep.subr.mxu0 0.0
    %1909 = vmatpush1.msra.mxu0 %v1517
    %1910 = vmatprep.subr.mxu0 0.0
    %1911 = vmatpush1.msra.mxu0 %v1516
    %1912 = vmatprep.subr.mxu0 0.0
    %1913 = vmatpush1.msra.mxu0 %v1515
    %1914 = vmatprep.subr.mxu0 0.0
    %1915 = vmatpush2.msra.mxu0 0.0
    %1916 = vmatprep.subr.mxu0 0.0
    %1917 = vmatpush2.msra.mxu0 0.0
    %1918 = vmatprep.subr.mxu0 0.0
    %1919 = vmatpush2.msra.mxu0 0.0
    %1920 = vmatprep.subr.mxu0 0.0
    %1921 = vmatpush2.msra.mxu0 0.0
    %1922 = vmatprep.subr.mxu0 0.0
    %1923 = vmatpush2.msra.mxu0 0.0
    %1924 = vmatprep.subr.mxu0 0.0
    %1925 = vmatpush2.msra.mxu0 0.0
    %1926 = vmatprep.subr.mxu0 0.0
    %1927 = vmatpush2.msra.mxu0 0.0
    %1928 = vmatprep.subr.mxu0 0.0
    %1929 = vmatpush2.msra.mxu0 0.0
    %1930 = vmatprep.subr.mxu0 0.0
    %1931 = vmatpush2.msra.mxu0 0.0
    %1932 = vmatprep.subr.mxu0 0.0
    %1933 = vmatpush2.msra.mxu0 0.0
    %1934 = vmatprep.subr.mxu0 0.0
    %1935 = vmatpush2.msra.mxu0 0.0
    %1936 = vmatprep.subr.mxu0 0.0
    %1937 = vmatpush2.msra.mxu0 0.0
    %1938 = vmatprep.subr.mxu0 0.0
    %1939 = vmatpush2.msra.mxu0 0.0
    %1940 = vmatprep.subr.mxu0 0.0
    %1941 = vmatpush2.msra.mxu0 0.0
    %1942 = vmatprep.subr.mxu0 0.0
    %1943 = vmatpush2.msra.mxu0 0.0
    %1944 = vmatprep.subr.mxu0 0.0
    %1945 = vmatpush2.msra.mxu0 0.0
    %1946 = vmatprep.mubr.f32.mxu0 0.0
    %1947 = vmatmul.mubr.f32.gmra.mxu0 %v1318
    %v1948 = vpop.f32.mrf.mxu0
    %v1949 = vadd.f32 %v1530, %v1948
    %v1950 = vpop.f32.mrf.mxu0
    %1951 = vdwg.mxu0
    %1952 = vmatprep.subr.mxu0 0.0
    %1953 = vmatpush1.msra.mxu0 0.0
    %1954 = vmatprep.subr.mxu0 0.0
    %1955 = vmatpush1.msra.mxu0 0.0
    %1956 = vmatprep.subr.mxu0 0.0
    %1957 = vmatpush1.msra.mxu0 0.0
    %1958 = vmatprep.subr.mxu0 0.0
    %1959 = vmatpush1.msra.mxu0 0.0
    %1960 = vmatprep.subr.mxu0 0.0
    %1961 = vmatpush1.msra.mxu0 0.0
    %1962 = vmatprep.subr.mxu0 0.0
    %1963 = vmatpush1.msra.mxu0 0.0
    %1964 = vmatprep.subr.mxu0 0.0
    %1965 = vmatpush1.msra.mxu0 0.0
    %1966 = vmatprep.subr.mxu0 0.0
    %1967 = vmatpush1.msra.mxu0 0.0
    %1968 = vmatprep.subr.mxu0 0.0
    %1969 = vmatpush1.msra.mxu0 0.0
    %1970 = vmatprep.subr.mxu0 0.0
    %1971 = vmatpush1.msra.mxu0 0.0
    %1972 = vmatprep.subr.mxu0 0.0
    %1973 = vmatpush1.msra.mxu0 0.0
    %1974 = vmatprep.subr.mxu0 0.0
    %1975 = vmatpush1.msra.mxu0 0.0
    %1976 = vmatprep.subr.mxu0 0.0
    %1977 = vmatpush1.msra.mxu0 %v1518
    %1978 = vmatprep.subr.mxu0 0.0
    %1979 = vmatpush1.msra.mxu0 %v1517
    %1980 = vmatprep.subr.mxu0 0.0
    %1981 = vmatpush1.msra.mxu0 %v1516
    %1982 = vmatprep.subr.mxu0 0.0
    %1983 = vmatpush1.msra.mxu0 %v1515
    %1984 = vmatprep.subr.mxu0 0.0
    %1985 = vmatpush2.msra.mxu0 0.0
    %1986 = vmatprep.subr.mxu0 0.0
    %1987 = vmatpush2.msra.mxu0 0.0
    %1988 = vmatprep.subr.mxu0 0.0
    %1989 = vmatpush2.msra.mxu0 0.0
    %1990 = vmatprep.subr.mxu0 0.0
    %1991 = vmatpush2.msra.mxu0 0.0
    %1992 = vmatprep.subr.mxu0 0.0
    %1993 = vmatpush2.msra.mxu0 0.0
    %1994 = vmatprep.subr.mxu0 0.0
    %1995 = vmatpush2.msra.mxu0 0.0
    %1996 = vmatprep.subr.mxu0 0.0
    %1997 = vmatpush2.msra.mxu0 0.0
    %1998 = vmatprep.subr.mxu0 0.0
    %1999 = vmatpush2.msra.mxu0 0.0
    %2000 = vmatprep.subr.mxu0 0.0
    %2001 = vmatpush2.msra.mxu0 0.0
    %2002 = vmatprep.subr.mxu0 0.0
    %2003 = vmatpush2.msra.mxu0 0.0
    %2004 = vmatprep.subr.mxu0 0.0
    %2005 = vmatpush2.msra.mxu0 0.0
    %2006 = vmatprep.subr.mxu0 0.0
    %2007 = vmatpush2.msra.mxu0 0.0
    %2008 = vmatprep.subr.mxu0 0.0
    %2009 = vmatpush2.msra.mxu0 0.0
    %2010 = vmatprep.subr.mxu0 0.0
    %2011 = vmatpush2.msra.mxu0 0.0
    %2012 = vmatprep.subr.mxu0 0.0
    %2013 = vmatpush2.msra.mxu0 0.0
    %2014 = vmatprep.subr.mxu0 0.0
    %2015 = vmatpush2.msra.mxu0 0.0
    %2016 = vmatprep.mubr.f32.mxu0 0.0
    %2017 = vmatmul.mubr.f32.gmra.mxu0 %v1418
    %v2018 = vpop.f32.mrf.mxu0
    %v2019 = vadd.f32 %v1530, %v2018
    %v2020 = vpop.f32.mrf.mxu0
    %2021 = vdwg.mxu0
    %2023 = vrot.lane.b32.xlu0 %v1514, 32
    %v2024 = vpop.permute.xlu0 %2023
    %v2025 = vsel %vm716, %v2024, 0
    %2027 = vmatprep.subr.mxu0 0.0
    %2028 = vmatpush1.msra.mxu0 0.0
    %2029 = vmatprep.subr.mxu0 0.0
    %2030 = vmatpush1.msra.mxu0 0.0
    %2031 = vmatprep.subr.mxu0 0.0
    %2032 = vmatpush1.msra.mxu0 0.0
    %2033 = vmatprep.subr.mxu0 0.0
    %2034 = vmatpush1.msra.mxu0 0.0
    %2035 = vmatprep.subr.mxu0 0.0
    %2036 = vmatpush1.msra.mxu0 0.0
    %2037 = vmatprep.subr.mxu0 0.0
    %2038 = vmatpush1.msra.mxu0 0.0
    %2039 = vmatprep.subr.mxu0 0.0
    %2040 = vmatpush1.msra.mxu0 0.0
    %2041 = vmatprep.subr.mxu0 0.0
    %2042 = vmatpush1.msra.mxu0 0.0
    %2043 = vmatprep.subr.mxu0 0.0
    %2044 = vmatpush1.msra.mxu0 0.0
    %2045 = vmatprep.subr.mxu0 0.0
    %2046 = vmatpush1.msra.mxu0 0.0
    %2047 = vmatprep.subr.mxu0 0.0
    %2048 = vmatpush1.msra.mxu0 0.0
    %2049 = vmatprep.subr.mxu0 0.0
    %2050 = vmatpush1.msra.mxu0 0.0
    %2051 = vmatprep.subr.mxu0 0.0
    %2052 = vmatpush1.msra.mxu0 %v1518
    %2053 = vmatprep.subr.mxu0 0.0
    %2054 = vmatpush1.msra.mxu0 %v1517
    %2055 = vmatprep.subr.mxu0 0.0
    %2056 = vmatpush1.msra.mxu0 %v1516
    %2057 = vmatprep.subr.mxu0 0.0
    %2058 = vmatpush1.msra.mxu0 %v1515
    %2059 = vmatprep.subr.mxu0 0.0
    %2060 = vmatpush2.msra.mxu0 0.0
    %2061 = vmatprep.subr.mxu0 0.0
    %2062 = vmatpush2.msra.mxu0 0.0
    %2063 = vmatprep.subr.mxu0 0.0
    %2064 = vmatpush2.msra.mxu0 0.0
    %2065 = vmatprep.subr.mxu0 0.0
    %2066 = vmatpush2.msra.mxu0 0.0
    %2067 = vmatprep.subr.mxu0 0.0
    %2068 = vmatpush2.msra.mxu0 0.0
    %2069 = vmatprep.subr.mxu0 0.0
    %2070 = vmatpush2.msra.mxu0 0.0
    %2071 = vmatprep.subr.mxu0 0.0
    %2072 = vmatpush2.msra.mxu0 0.0
    %2073 = vmatprep.subr.mxu0 0.0
    %2074 = vmatpush2.msra.mxu0 0.0
    %2075 = vmatprep.subr.mxu0 0.0
    %2076 = vmatpush2.msra.mxu0 0.0
    %2077 = vmatprep.subr.mxu0 0.0
    %2078 = vmatpush2.msra.mxu0 0.0
    %2079 = vmatprep.subr.mxu0 0.0
    %2080 = vmatpush2.msra.mxu0 0.0
    %2081 = vmatprep.subr.mxu0 0.0
    %2082 = vmatpush2.msra.mxu0 0.0
    %2083 = vmatprep.subr.mxu0 0.0
    %2084 = vmatpush2.msra.mxu0 0.0
    %2085 = vmatprep.subr.mxu0 0.0
    %2086 = vmatpush2.msra.mxu0 0.0
    %2087 = vmatprep.subr.mxu0 0.0
    %2088 = vmatpush2.msra.mxu0 0.0
    %2089 = vmatprep.subr.mxu0 0.0
    %2090 = vmatpush2.msra.mxu0 0.0
    %2091 = vmatprep.mubr.f32.mxu0 0.0
    %2092 = vmatmul.mubr.f32.gmra.mxu0 %v2025
    %v2093 = vpop.f32.mrf.mxu0
    %v2094 = vadd.f32 %v1530, %v2093
    %v2095 = vpop.f32.mrf.mxu0
    %2096 = vdwg.mxu0
    %2097 = vmatprep.subr.mxu0 0.0
    %2098 = vmatpush1.msra.mxu0 0.0
    %2099 = vmatprep.subr.mxu0 0.0
    %2100 = vmatpush1.msra.mxu0 0.0
    %2101 = vmatprep.subr.mxu0 0.0
    %2102 = vmatpush1.msra.mxu0 0.0
    %2103 = vmatprep.subr.mxu0 0.0
    %2104 = vmatpush1.msra.mxu0 0.0
    %2105 = vmatprep.subr.mxu0 0.0
    %2106 = vmatpush1.msra.mxu0 0.0
    %2107 = vmatprep.subr.mxu0 0.0
    %2108 = vmatpush1.msra.mxu0 0.0
    %2109 = vmatprep.subr.mxu0 0.0
    %2110 = vmatpush1.msra.mxu0 0.0
    %2111 = vmatprep.subr.mxu0 0.0
    %2112 = vmatpush1.msra.mxu0 0.0
    %2113 = vmatprep.subr.mxu0 0.0
    %2114 = vmatpush1.msra.mxu0 0.0
    %2115 = vmatprep.subr.mxu0 0.0
    %2116 = vmatpush1.msra.mxu0 0.0
    %2117 = vmatprep.subr.mxu0 0.0
    %2118 = vmatpush1.msra.mxu0 0.0
    %2119 = vmatprep.subr.mxu0 0.0
    %2120 = vmatpush1.msra.mxu0 0.0
    %2121 = vmatprep.subr.mxu0 0.0
    %2122 = vmatpush1.msra.mxu0 %v1523
    %2123 = vmatprep.subr.mxu0 0.0
    %2124 = vmatpush1.msra.mxu0 %v1522
    %2125 = vmatprep.subr.mxu0 0.0
    %2126 = vmatpush1.msra.mxu0 %v1521
    %2127 = vmatprep.subr.mxu0 0.0
    %2128 = vmatpush1.msra.mxu0 %v1520
    %2129 = vmatprep.subr.mxu0 0.0
    %2130 = vmatpush2.msra.mxu0 0.0
    %2131 = vmatprep.subr.mxu0 0.0
    %2132 = vmatpush2.msra.mxu0 0.0
    %2133 = vmatprep.subr.mxu0 0.0
    %2134 = vmatpush2.msra.mxu0 0.0
    %2135 = vmatprep.subr.mxu0 0.0
    %2136 = vmatpush2.msra.mxu0 0.0
    %2137 = vmatprep.subr.mxu0 0.0
    %2138 = vmatpush2.msra.mxu0 0.0
    %2139 = vmatprep.subr.mxu0 0.0
    %2140 = vmatpush2.msra.mxu0 0.0
    %2141 = vmatprep.subr.mxu0 0.0
    %2142 = vmatpush2.msra.mxu0 0.0
    %2143 = vmatprep.subr.mxu0 0.0
    %2144 = vmatpush2.msra.mxu0 0.0
    %2145 = vmatprep.subr.mxu0 0.0
    %2146 = vmatpush2.msra.mxu0 0.0
    %2147 = vmatprep.subr.mxu0 0.0
    %2148 = vmatpush2.msra.mxu0 0.0
    %2149 = vmatprep.subr.mxu0 0.0
    %2150 = vmatpush2.msra.mxu0 0.0
    %2151 = vmatprep.subr.mxu0 0.0
    %2152 = vmatpush2.msra.mxu0 0.0
    %2153 = vmatprep.subr.mxu0 0.0
    %2154 = vmatpush2.msra.mxu0 0.0
    %2155 = vmatprep.subr.mxu0 0.0
    %2156 = vmatpush2.msra.mxu0 0.0
    %2157 = vmatprep.subr.mxu0 0.0
    %2158 = vmatpush2.msra.mxu0 0.0
    %2159 = vmatprep.subr.mxu0 0.0
    %2160 = vmatpush2.msra.mxu0 0.0
    %2161 = vmatprep.mubr.f32.mxu0 0.0
    %2162 = vmatmul.mubr.f32.gmra.mxu0 %v718
    %v2163 = vpop.f32.mrf.mxu0
    %v2164 = vadd.f32 0.0, %v2163
    %v2165 = vpop.f32.mrf.mxu0
    %2166 = vdwg.mxu0
    %v2167 = vadd.f32 %v1599, %v2164
    %v2168 = vxor.u32 %v2167, 2147483648
    %v2169 = vmul.f32 %v2168, 1.442695
    %v2170 = vpow.pop %v2169
    %v2171 = vadd.f32 %v2170, 1.0
    %v2172 = vrcp.pop %v2171
    %v2173 = vmul.f32 1.0, %v2172
    %v2174 = vtanh.pop %v2167
    %v2175 = vmul.f32 %v2173, 0.0
    %2177 = vrot.lane.b32.xlu0 %v2174, 64
    %v2178 = vpop.permute.xlu0 %2177
    %v2180 = vmul.f32 %v2173, %v2178
    %2182 = vrot.lane.b32.xlu0 %v2180, 32
    %v2183 = vpop.permute.xlu0 %2182
    %v2185 = vadd.f32 %v2175, %v2183
    %v2186 = vtanh.pop %v2185
    %2188 = vrot.lane.b32.xlu0 %v2186, 64
    %v2189 = vpop.permute.xlu0 %2188
    %v2191 = vmul.f32 %v2173, %v2189
    %2193 = vrot.lane.b32.xlu0 %v2191, 32
    %v2194 = vpop.permute.xlu0 %2193
    %v2195 = vsel %vm716, %v2194, 0
    %2197 = vmatprep.subr.mxu0 0.0
    %2198 = vmatpush1.msra.mxu0 0.0
    %2199 = vmatprep.subr.mxu0 0.0
    %2200 = vmatpush1.msra.mxu0 0.0
    %2201 = vmatprep.subr.mxu0 0.0
    %2202 = vmatpush1.msra.mxu0 0.0
    %2203 = vmatprep.subr.mxu0 0.0
    %2204 = vmatpush1.msra.mxu0 0.0
    %2205 = vmatprep.subr.mxu0 0.0
    %2206 = vmatpush1.msra.mxu0 0.0
    %2207 = vmatprep.subr.mxu0 0.0
    %2208 = vmatpush1.msra.mxu0 0.0
    %2209 = vmatprep.subr.mxu0 0.0
    %2210 = vmatpush1.msra.mxu0 0.0
    %2211 = vmatprep.subr.mxu0 0.0
    %2212 = vmatpush1.msra.mxu0 0.0
    %2213 = vmatprep.subr.mxu0 0.0
    %2214 = vmatpush1.msra.mxu0 0.0
    %2215 = vmatprep.subr.mxu0 0.0
    %2216 = vmatpush1.msra.mxu0 0.0
    %2217 = vmatprep.subr.mxu0 0.0
    %2218 = vmatpush1.msra.mxu0 0.0
    %2219 = vmatprep.subr.mxu0 0.0
    %2220 = vmatpush1.msra.mxu0 0.0
    %2221 = vmatprep.subr.mxu0 0.0
    %2222 = vmatpush1.msra.mxu0 %v1523
    %2223 = vmatprep.subr.mxu0 0.0
    %2224 = vmatpush1.msra.mxu0 %v1522
    %2225 = vmatprep.subr.mxu0 0.0
    %2226 = vmatpush1.msra.mxu0 %v1521
    %2227 = vmatprep.subr.mxu0 0.0
    %2228 = vmatpush1.msra.mxu0 %v1520
    %2229 = vmatprep.subr.mxu0 0.0
    %2230 = vmatpush2.msra.mxu0 0.0
    %2231 = vmatprep.subr.mxu0 0.0
    %2232 = vmatpush2.msra.mxu0 0.0
    %2233 = vmatprep.subr.mxu0 0.0
    %2234 = vmatpush2.msra.mxu0 0.0
    %2235 = vmatprep.subr.mxu0 0.0
    %2236 = vmatpush2.msra.mxu0 0.0
    %2237 = vmatprep.subr.mxu0 0.0
    %2238 = vmatpush2.msra.mxu0 0.0
    %2239 = vmatprep.subr.mxu0 0.0
    %2240 = vmatpush2.msra.mxu0 0.0
    %2241 = vmatprep.subr.mxu0 0.0
    %2242 = vmatpush2.msra.mxu0 0.0
    %2243 = vmatprep.subr.mxu0 0.0
    %2244 = vmatpush2.msra.mxu0 0.0
    %2245 = vmatprep.subr.mxu0 0.0
    %2246 = vmatpush2.msra.mxu0 0.0
    %2247 = vmatprep.subr.mxu0 0.0
    %2248 = vmatpush2.msra.mxu0 0.0
    %2249 = vmatprep.subr.mxu0 0.0
    %2250 = vmatpush2.msra.mxu0 0.0
    %2251 = vmatprep.subr.mxu0 0.0
    %2252 = vmatpush2.msra.mxu0 0.0
    %2253 = vmatprep.subr.mxu0 0.0
    %2254 = vmatpush2.msra.mxu0 0.0
    %2255 = vmatprep.subr.mxu0 0.0
    %2256 = vmatpush2.msra.mxu0 0.0
    %2257 = vmatprep.subr.mxu0 0.0
    %2258 = vmatpush2.msra.mxu0 0.0
    %2259 = vmatprep.subr.mxu0 0.0
    %2260 = vmatpush2.msra.mxu0 0.0
    %2261 = vmatprep.mubr.f32.mxu0 0.0
    %2262 = vmatmul.mubr.f32.gmra.mxu0 %v2195
    %v2263 = vpop.f32.mrf.mxu0
    %v2264 = vadd.f32 0.0, %v2263
    %v2265 = vpop.f32.mrf.mxu0
    %2266 = vdwg.mxu0
    %v2267 = vadd.f32 %v1669, %v2264
    %v2268 = vxor.u32 %v2267, 2147483648
    %v2269 = vmul.f32 %v2268, 1.442695
    %v2270 = vpow.pop %v2269
    %v2271 = vadd.f32 %v2270, 1.0
    %v2272 = vrcp.pop %v2271
    %v2273 = vmul.f32 1.0, %v2272
    %v2274 = vtanh.pop %v2267
    %v2275 = vmul.f32 %v2273, %v2185
    %2277 = vrot.lane.b32.xlu0 %v2274, 64
    %v2278 = vpop.permute.xlu0 %2277
    %v2280 = vmul.f32 %v2273, %v2278
    %2282 = vrot.lane.b32.xlu0 %v2280, 32
    %v2283 = vpop.permute.xlu0 %2282
    %v2285 = vadd.f32 %v2275, %v2283
    %v2286 = vtanh.pop %v2285
    %2288 = vrot.lane.b32.xlu0 %v2286, 64
    %v2289 = vpop.permute.xlu0 %2288
    %v2291 = vmul.f32 %v2273, %v2289
    %2293 = vrot.lane.b32.xlu0 %v2291, 32
    %v2294 = vpop.permute.xlu0 %2293
    %v2295 = vsel %vm716, %v2294, 0
    %2297 = vmatprep.subr.mxu0 0.0
    %2298 = vmatpush1.msra.mxu0 0.0
    %2299 = vmatprep.subr.mxu0 0.0
    %2300 = vmatpush1.msra.mxu0 0.0
    %2301 = vmatprep.subr.mxu0 0.0
    %2302 = vmatpush1.msra.mxu0 0.0
    %2303 = vmatprep.subr.mxu0 0.0
    %2304 = vmatpush1.msra.mxu0 0.0
    %2305 = vmatprep.subr.mxu0 0.0
    %2306 = vmatpush1.msra.mxu0 0.0
    %2307 = vmatprep.subr.mxu0 0.0
    %2308 = vmatpush1.msra.mxu0 0.0
    %2309 = vmatprep.subr.mxu0 0.0
    %2310 = vmatpush1.msra.mxu0 0.0
    %2311 = vmatprep.subr.mxu0 0.0
    %2312 = vmatpush1.msra.mxu0 0.0
    %2313 = vmatprep.subr.mxu0 0.0
    %2314 = vmatpush1.msra.mxu0 0.0
    %2315 = vmatprep.subr.mxu0 0.0
    %2316 = vmatpush1.msra.mxu0 0.0
    %2317 = vmatprep.subr.mxu0 0.0
    %2318 = vmatpush1.msra.mxu0 0.0
    %2319 = vmatprep.subr.mxu0 0.0
    %2320 = vmatpush1.msra.mxu0 0.0
    %2321 = vmatprep.subr.mxu0 0.0
    %2322 = vmatpush1.msra.mxu0 %v1523
    %2323 = vmatprep.subr.mxu0 0.0
    %2324 = vmatpush1.msra.mxu0 %v1522
    %2325 = vmatprep.subr.mxu0 0.0
    %2326 = vmatpush1.msra.mxu0 %v1521
    %2327 = vmatprep.subr.mxu0 0.0
    %2328 = vmatpush1.msra.mxu0 %v1520
    %2329 = vmatprep.subr.mxu0 0.0
    %2330 = vmatpush2.msra.mxu0 0.0
    %2331 = vmatprep.subr.mxu0 0.0
    %2332 = vmatpush2.msra.mxu0 0.0
    %2333 = vmatprep.subr.mxu0 0.0
    %2334 = vmatpush2.msra.mxu0 0.0
    %2335 = vmatprep.subr.mxu0 0.0
    %2336 = vmatpush2.msra.mxu0 0.0
    %2337 = vmatprep.subr.mxu0 0.0
    %2338 = vmatpush2.msra.mxu0 0.0
    %2339 = vmatprep.subr.mxu0 0.0
    %2340 = vmatpush2.msra.mxu0 0.0
    %2341 = vmatprep.subr.mxu0 0.0
    %2342 = vmatpush2.msra.mxu0 0.0
    %2343 = vmatprep.subr.mxu0 0.0
    %2344 = vmatpush2.msra.mxu0 0.0
    %2345 = vmatprep.subr.mxu0 0.0
    %2346 = vmatpush2.msra.mxu0 0.0
    %2347 = vmatprep.subr.mxu0 0.0
    %2348 = vmatpush2.msra.mxu0 0.0
    %2349 = vmatprep.subr.mxu0 0.0
    %2350 = vmatpush2.msra.mxu0 0.0
    %2351 = vmatprep.subr.mxu0 0.0
    %2352 = vmatpush2.msra.mxu0 0.0
    %2353 = vmatprep.subr.mxu0 0.0
    %2354 = vmatpush2.msra.mxu0 0.0
    %2355 = vmatprep.subr.mxu0 0.0
    %2356 = vmatpush2.msra.mxu0 0.0
    %2357 = vmatprep.subr.mxu0 0.0
    %2358 = vmatpush2.msra.mxu0 0.0
    %2359 = vmatprep.subr.mxu0 0.0
    %2360 = vmatpush2.msra.mxu0 0.0
    %2361 = vmatprep.mubr.f32.mxu0 0.0
    %2362 = vmatmul.mubr.f32.gmra.mxu0 %v2295
    %v2363 = vpop.f32.mrf.mxu0
    %v2364 = vadd.f32 0.0, %v2363
    %v2365 = vpop.f32.mrf.mxu0
    %2366 = vdwg.mxu0
    %v2367 = vadd.f32 %v1739, %v2364
    %v2368 = vxor.u32 %v2367, 2147483648
    %v2369 = vmul.f32 %v2368, 1.442695
    %v2370 = vpow.pop %v2369
    %v2371 = vadd.f32 %v2370, 1.0
    %v2372 = vrcp.pop %v2371
    %v2373 = vmul.f32 1.0, %v2372
    %v2374 = vtanh.pop %v2367
    %v2375 = vmul.f32 %v2373, %v2285
    %2377 = vrot.lane.b32.xlu0 %v2374, 64
    %v2378 = vpop.permute.xlu0 %2377
    %v2380 = vmul.f32 %v2373, %v2378
    %2382 = vrot.lane.b32.xlu0 %v2380, 32
    %v2383 = vpop.permute.xlu0 %2382
    %v2385 = vadd.f32 %v2375, %v2383
    %v2386 = vtanh.pop %v2385
    %2388 = vrot.lane.b32.xlu0 %v2386, 64
    %v2389 = vpop.permute.xlu0 %2388
    %v2391 = vmul.f32 %v2373, %v2389
    %2393 = vrot.lane.b32.xlu0 %v2391, 32
    %v2394 = vpop.permute.xlu0 %2393
    %v2395 = vsel %vm716, %v2394, 0
    %2397 = vmatprep.subr.mxu0 0.0
    %2398 = vmatpush1.msra.mxu0 0.0
    %2399 = vmatprep.subr.mxu0 0.0
    %2400 = vmatpush1.msra.mxu0 0.0
    %2401 = vmatprep.subr.mxu0 0.0
    %2402 = vmatpush1.msra.mxu0 0.0
    %2403 = vmatprep.subr.mxu0 0.0
    %2404 = vmatpush1.msra.mxu0 0.0
    %2405 = vmatprep.subr.mxu0 0.0
    %2406 = vmatpush1.msra.mxu0 0.0
    %2407 = vmatprep.subr.mxu0 0.0
    %2408 = vmatpush1.msra.mxu0 0.0
    %2409 = vmatprep.subr.mxu0 0.0
    %2410 = vmatpush1.msra.mxu0 0.0
    %2411 = vmatprep.subr.mxu0 0.0
    %2412 = vmatpush1.msra.mxu0 0.0
    %2413 = vmatprep.subr.mxu0 0.0
    %2414 = vmatpush1.msra.mxu0 0.0
    %2415 = vmatprep.subr.mxu0 0.0
    %2416 = vmatpush1.msra.mxu0 0.0
    %2417 = vmatprep.subr.mxu0 0.0
    %2418 = vmatpush1.msra.mxu0 0.0
    %2419 = vmatprep.subr.mxu0 0.0
    %2420 = vmatpush1.msra.mxu0 0.0
    %2421 = vmatprep.subr.mxu0 0.0
    %2422 = vmatpush1.msra.mxu0 %v1523
    %2423 = vmatprep.subr.mxu0 0.0
    %2424 = vmatpush1.msra.mxu0 %v1522
    %2425 = vmatprep.subr.mxu0 0.0
    %2426 = vmatpush1.msra.mxu0 %v1521
    %2427 = vmatprep.subr.mxu0 0.0
    %2428 = vmatpush1.msra.mxu0 %v1520
    %2429 = vmatprep.subr.mxu0 0.0
    %2430 = vmatpush2.msra.mxu0 0.0
    %2431 = vmatprep.subr.mxu0 0.0
    %2432 = vmatpush2.msra.mxu0 0.0
    %2433 = vmatprep.subr.mxu0 0.0
    %2434 = vmatpush2.msra.mxu0 0.0
    %2435 = vmatprep.subr.mxu0 0.0
    %2436 = vmatpush2.msra.mxu0 0.0
    %2437 = vmatprep.subr.mxu0 0.0
    %2438 = vmatpush2.msra.mxu0 0.0
    %2439 = vmatprep.subr.mxu0 0.0
    %2440 = vmatpush2.msra.mxu0 0.0
    %2441 = vmatprep.subr.mxu0 0.0
    %2442 = vmatpush2.msra.mxu0 0.0
    %2443 = vmatprep.subr.mxu0 0.0
    %2444 = vmatpush2.msra.mxu0 0.0
    %2445 = vmatprep.subr.mxu0 0.0
    %2446 = vmatpush2.msra.mxu0 0.0
    %2447 = vmatprep.subr.mxu0 0.0
    %2448 = vmatpush2.msra.mxu0 0.0
    %2449 = vmatprep.subr.mxu0 0.0
    %2450 = vmatpush2.msra.mxu0 0.0
    %2451 = vmatprep.subr.mxu0 0.0
    %2452 = vmatpush2.msra.mxu0 0.0
    %2453 = vmatprep.subr.mxu0 0.0
    %2454 = vmatpush2.msra.mxu0 0.0
    %2455 = vmatprep.subr.mxu0 0.0
    %2456 = vmatpush2.msra.mxu0 0.0
    %2457 = vmatprep.subr.mxu0 0.0
    %2458 = vmatpush2.msra.mxu0 0.0
    %2459 = vmatprep.subr.mxu0 0.0
    %2460 = vmatpush2.msra.mxu0 0.0
    %2461 = vmatprep.mubr.f32.mxu0 0.0
    %2462 = vmatmul.mubr.f32.gmra.mxu0 %v2395
    %v2463 = vpop.f32.mrf.mxu0
    %v2464 = vadd.f32 0.0, %v2463
    %v2465 = vpop.f32.mrf.mxu0
    %2466 = vdwg.mxu0
    %v2467 = vadd.f32 %v1809, %v2464
    %v2468 = vxor.u32 %v2467, 2147483648
    %v2469 = vmul.f32 %v2468, 1.442695
    %v2470 = vpow.pop %v2469
    %v2471 = vadd.f32 %v2470, 1.0
    %v2472 = vrcp.pop %v2471
    %v2473 = vmul.f32 1.0, %v2472
    %v2474 = vtanh.pop %v2467
    %v2475 = vmul.f32 %v2473, %v2385
    %2477 = vrot.lane.b32.xlu0 %v2474, 64
    %v2478 = vpop.permute.xlu0 %2477
    %v2480 = vmul.f32 %v2473, %v2478
    %2482 = vrot.lane.b32.xlu0 %v2480, 32
    %v2483 = vpop.permute.xlu0 %2482
    %v2485 = vadd.f32 %v2475, %v2483
    %v2486 = vtanh.pop %v2485
    %2488 = vrot.lane.b32.xlu0 %v2486, 64
    %v2489 = vpop.permute.xlu0 %2488
    %v2491 = vmul.f32 %v2473, %v2489
    %2493 = vrot.lane.b32.xlu0 %v2491, 32
    %v2494 = vpop.permute.xlu0 %2493
    %v2495 = vsel %vm716, %v2494, 0
    %2497 = vmatprep.subr.mxu0 0.0
    %2498 = vmatpush1.msra.mxu0 0.0
    %2499 = vmatprep.subr.mxu0 0.0
    %2500 = vmatpush1.msra.mxu0 0.0
    %2501 = vmatprep.subr.mxu0 0.0
    %2502 = vmatpush1.msra.mxu0 0.0
    %2503 = vmatprep.subr.mxu0 0.0
    %2504 = vmatpush1.msra.mxu0 0.0
    %2505 = vmatprep.subr.mxu0 0.0
    %2506 = vmatpush1.msra.mxu0 0.0
    %2507 = vmatprep.subr.mxu0 0.0
    %2508 = vmatpush1.msra.mxu0 0.0
    %2509 = vmatprep.subr.mxu0 0.0
    %2510 = vmatpush1.msra.mxu0 0.0
    %2511 = vmatprep.subr.mxu0 0.0
    %2512 = vmatpush1.msra.mxu0 0.0
    %2513 = vmatprep.subr.mxu0 0.0
    %2514 = vmatpush1.msra.mxu0 0.0
    %2515 = vmatprep.subr.mxu0 0.0
    %2516 = vmatpush1.msra.mxu0 0.0
    %2517 = vmatprep.subr.mxu0 0.0
    %2518 = vmatpush1.msra.mxu0 0.0
    %2519 = vmatprep.subr.mxu0 0.0
    %2520 = vmatpush1.msra.mxu0 0.0
    %2521 = vmatprep.subr.mxu0 0.0
    %2522 = vmatpush1.msra.mxu0 %v1523
    %2523 = vmatprep.subr.mxu0 0.0
    %2524 = vmatpush1.msra.mxu0 %v1522
    %2525 = vmatprep.subr.mxu0 0.0
    %2526 = vmatpush1.msra.mxu0 %v1521
    %2527 = vmatprep.subr.mxu0 0.0
    %2528 = vmatpush1.msra.mxu0 %v1520
    %2529 = vmatprep.subr.mxu0 0.0
    %2530 = vmatpush2.msra.mxu0 0.0
    %2531 = vmatprep.subr.mxu0 0.0
    %2532 = vmatpush2.msra.mxu0 0.0
    %2533 = vmatprep.subr.mxu0 0.0
    %2534 = vmatpush2.msra.mxu0 0.0
    %2535 = vmatprep.subr.mxu0 0.0
    %2536 = vmatpush2.msra.mxu0 0.0
    %2537 = vmatprep.subr.mxu0 0.0
    %2538 = vmatpush2.msra.mxu0 0.0
    %2539 = vmatprep.subr.mxu0 0.0
    %2540 = vmatpush2.msra.mxu0 0.0
    %2541 = vmatprep.subr.mxu0 0.0
    %2542 = vmatpush2.msra.mxu0 0.0
    %2543 = vmatprep.subr.mxu0 0.0
    %2544 = vmatpush2.msra.mxu0 0.0
    %2545 = vmatprep.subr.mxu0 0.0
    %2546 = vmatpush2.msra.mxu0 0.0
    %2547 = vmatprep.subr.mxu0 0.0
    %2548 = vmatpush2.msra.mxu0 0.0
    %2549 = vmatprep.subr.mxu0 0.0
    %2550 = vmatpush2.msra.mxu0 0.0
    %2551 = vmatprep.subr.mxu0 0.0
    %2552 = vmatpush2.msra.mxu0 0.0
    %2553 = vmatprep.subr.mxu0 0.0
    %2554 = vmatpush2.msra.mxu0 0.0
    %2555 = vmatprep.subr.mxu0 0.0
    %2556 = vmatpush2.msra.mxu0 0.0
    %2557 = vmatprep.subr.mxu0 0.0
    %2558 = vmatpush2.msra.mxu0 0.0
    %2559 = vmatprep.subr.mxu0 0.0
    %2560 = vmatpush2.msra.mxu0 0.0
    %2561 = vmatprep.mubr.f32.mxu0 0.0
    %2562 = vmatmul.mubr.f32.gmra.mxu0 %v2495
    %v2563 = vpop.f32.mrf.mxu0
    %v2564 = vadd.f32 0.0, %v2563
    %v2565 = vpop.f32.mrf.mxu0
    %2566 = vdwg.mxu0
    %v2567 = vadd.f32 %v1879, %v2564
    %v2568 = vxor.u32 %v2567, 2147483648
    %v2569 = vmul.f32 %v2568, 1.442695
    %v2570 = vpow.pop %v2569
    %v2571 = vadd.f32 %v2570, 1.0
    %v2572 = vrcp.pop %v2571
    %v2573 = vmul.f32 1.0, %v2572
    %v2574 = vtanh.pop %v2567
    %v2575 = vmul.f32 %v2573, %v2485
    %2577 = vrot.lane.b32.xlu0 %v2574, 64
    %v2578 = vpop.permute.xlu0 %2577
    %v2580 = vmul.f32 %v2573, %v2578
    %2582 = vrot.lane.b32.xlu0 %v2580, 32
    %v2583 = vpop.permute.xlu0 %2582
    %v2585 = vadd.f32 %v2575, %v2583
    %v2586 = vtanh.pop %v2585
    %2588 = vrot.lane.b32.xlu0 %v2586, 64
    %v2589 = vpop.permute.xlu0 %2588
    %v2591 = vmul.f32 %v2573, %v2589
    %2593 = vrot.lane.b32.xlu0 %v2591, 32
    %v2594 = vpop.permute.xlu0 %2593
    %v2595 = vsel %vm716, %v2594, 0
    %2597 = vmatprep.subr.mxu0 0.0
    %2598 = vmatpush1.msra.mxu0 0.0
    %2599 = vmatprep.subr.mxu0 0.0
    %2600 = vmatpush1.msra.mxu0 0.0
    %2601 = vmatprep.subr.mxu0 0.0
    %2602 = vmatpush1.msra.mxu0 0.0
    %2603 = vmatprep.subr.mxu0 0.0
    %2604 = vmatpush1.msra.mxu0 0.0
    %2605 = vmatprep.subr.mxu0 0.0
    %2606 = vmatpush1.msra.mxu0 0.0
    %2607 = vmatprep.subr.mxu0 0.0
    %2608 = vmatpush1.msra.mxu0 0.0
    %2609 = vmatprep.subr.mxu0 0.0
    %2610 = vmatpush1.msra.mxu0 0.0
    %2611 = vmatprep.subr.mxu0 0.0
    %2612 = vmatpush1.msra.mxu0 0.0
    %2613 = vmatprep.subr.mxu0 0.0
    %2614 = vmatpush1.msra.mxu0 0.0
    %2615 = vmatprep.subr.mxu0 0.0
    %2616 = vmatpush1.msra.mxu0 0.0
    %2617 = vmatprep.subr.mxu0 0.0
    %2618 = vmatpush1.msra.mxu0 0.0
    %2619 = vmatprep.subr.mxu0 0.0
    %2620 = vmatpush1.msra.mxu0 0.0
    %2621 = vmatprep.subr.mxu0 0.0
    %2622 = vmatpush1.msra.mxu0 %v1523
    %2623 = vmatprep.subr.mxu0 0.0
    %2624 = vmatpush1.msra.mxu0 %v1522
    %2625 = vmatprep.subr.mxu0 0.0
    %2626 = vmatpush1.msra.mxu0 %v1521
    %2627 = vmatprep.subr.mxu0 0.0
    %2628 = vmatpush1.msra.mxu0 %v1520
    %2629 = vmatprep.subr.mxu0 0.0
    %2630 = vmatpush2.msra.mxu0 0.0
    %2631 = vmatprep.subr.mxu0 0.0
    %2632 = vmatpush2.msra.mxu0 0.0
    %2633 = vmatprep.subr.mxu0 0.0
    %2634 = vmatpush2.msra.mxu0 0.0
    %2635 = vmatprep.subr.mxu0 0.0
    %2636 = vmatpush2.msra.mxu0 0.0
    %2637 = vmatprep.subr.mxu0 0.0
    %2638 = vmatpush2.msra.mxu0 0.0
    %2639 = vmatprep.subr.mxu0 0.0
    %2640 = vmatpush2.msra.mxu0 0.0
    %2641 = vmatprep.subr.mxu0 0.0
    %2642 = vmatpush2.msra.mxu0 0.0
    %2643 = vmatprep.subr.mxu0 0.0
    %2644 = vmatpush2.msra.mxu0 0.0
    %2645 = vmatprep.subr.mxu0 0.0
    %2646 = vmatpush2.msra.mxu0 0.0
    %2647 = vmatprep.subr.mxu0 0.0
    %2648 = vmatpush2.msra.mxu0 0.0
    %2649 = vmatprep.subr.mxu0 0.0
    %2650 = vmatpush2.msra.mxu0 0.0
    %2651 = vmatprep.subr.mxu0 0.0
    %2652 = vmatpush2.msra.mxu0 0.0
    %2653 = vmatprep.subr.mxu0 0.0
    %2654 = vmatpush2.msra.mxu0 0.0
    %2655 = vmatprep.subr.mxu0 0.0
    %2656 = vmatpush2.msra.mxu0 0.0
    %2657 = vmatprep.subr.mxu0 0.0
    %2658 = vmatpush2.msra.mxu0 0.0
    %2659 = vmatprep.subr.mxu0 0.0
    %2660 = vmatpush2.msra.mxu0 0.0
    %2661 = vmatprep.mubr.f32.mxu0 0.0
    %2662 = vmatmul.mubr.f32.gmra.mxu0 %v2595
    %v2663 = vpop.f32.mrf.mxu0
    %v2664 = vadd.f32 0.0, %v2663
    %v2665 = vpop.f32.mrf.mxu0
    %2666 = vdwg.mxu0
    %v2667 = vadd.f32 %v1949, %v2664
    %v2668 = vxor.u32 %v2667, 2147483648
    %v2669 = vmul.f32 %v2668, 1.442695
    %v2670 = vpow.pop %v2669
    %v2671 = vadd.f32 %v2670, 1.0
    %v2672 = vrcp.pop %v2671
    %v2673 = vmul.f32 1.0, %v2672
    %v2674 = vtanh.pop %v2667
    %v2675 = vmul.f32 %v2673, %v2585
    %2677 = vrot.lane.b32.xlu0 %v2674, 64
    %v2678 = vpop.permute.xlu0 %2677
    %v2680 = vmul.f32 %v2673, %v2678
    %2682 = vrot.lane.b32.xlu0 %v2680, 32
    %v2683 = vpop.permute.xlu0 %2682
    %v2685 = vadd.f32 %v2675, %v2683
    %v2686 = vtanh.pop %v2685
    %2688 = vrot.lane.b32.xlu0 %v2686, 64
    %v2689 = vpop.permute.xlu0 %2688
    %v2691 = vmul.f32 %v2673, %v2689
    %2693 = vrot.lane.b32.xlu0 %v2691, 32
    %v2694 = vpop.permute.xlu0 %2693
    %v2695 = vsel %vm716, %v2694, 0
    %2697 = vmatprep.subr.mxu0 0.0
    %2698 = vmatpush1.msra.mxu0 0.0
    %2699 = vmatprep.subr.mxu0 0.0
    %2700 = vmatpush1.msra.mxu0 0.0
    %2701 = vmatprep.subr.mxu0 0.0
    %2702 = vmatpush1.msra.mxu0 0.0
    %2703 = vmatprep.subr.mxu0 0.0
    %2704 = vmatpush1.msra.mxu0 0.0
    %2705 = vmatprep.subr.mxu0 0.0
    %2706 = vmatpush1.msra.mxu0 0.0
    %2707 = vmatprep.subr.mxu0 0.0
    %2708 = vmatpush1.msra.mxu0 0.0
    %2709 = vmatprep.subr.mxu0 0.0
    %2710 = vmatpush1.msra.mxu0 0.0
    %2711 = vmatprep.subr.mxu0 0.0
    %2712 = vmatpush1.msra.mxu0 0.0
    %2713 = vmatprep.subr.mxu0 0.0
    %2714 = vmatpush1.msra.mxu0 0.0
    %2715 = vmatprep.subr.mxu0 0.0
    %2716 = vmatpush1.msra.mxu0 0.0
    %2717 = vmatprep.subr.mxu0 0.0
    %2718 = vmatpush1.msra.mxu0 0.0
    %2719 = vmatprep.subr.mxu0 0.0
    %2720 = vmatpush1.msra.mxu0 0.0
    %2721 = vmatprep.subr.mxu0 0.0
    %2722 = vmatpush1.msra.mxu0 %v1523
    %2723 = vmatprep.subr.mxu0 0.0
    %2724 = vmatpush1.msra.mxu0 %v1522
    %2725 = vmatprep.subr.mxu0 0.0
    %2726 = vmatpush1.msra.mxu0 %v1521
    %2727 = vmatprep.subr.mxu0 0.0
    %2728 = vmatpush1.msra.mxu0 %v1520
    %2729 = vmatprep.subr.mxu0 0.0
    %2730 = vmatpush2.msra.mxu0 0.0
    %2731 = vmatprep.subr.mxu0 0.0
    %2732 = vmatpush2.msra.mxu0 0.0
    %2733 = vmatprep.subr.mxu0 0.0
    %2734 = vmatpush2.msra.mxu0 0.0
    %2735 = vmatprep.subr.mxu0 0.0
    %2736 = vmatpush2.msra.mxu0 0.0
    %2737 = vmatprep.subr.mxu0 0.0
    %2738 = vmatpush2.msra.mxu0 0.0
    %2739 = vmatprep.subr.mxu0 0.0
    %2740 = vmatpush2.msra.mxu0 0.0
    %2741 = vmatprep.subr.mxu0 0.0
    %2742 = vmatpush2.msra.mxu0 0.0
    %2743 = vmatprep.subr.mxu0 0.0
    %2744 = vmatpush2.msra.mxu0 0.0
    %2745 = vmatprep.subr.mxu0 0.0
    %2746 = vmatpush2.msra.mxu0 0.0
    %2747 = vmatprep.subr.mxu0 0.0
    %2748 = vmatpush2.msra.mxu0 0.0
    %2749 = vmatprep.subr.mxu0 0.0
    %2750 = vmatpush2.msra.mxu0 0.0
    %2751 = vmatprep.subr.mxu0 0.0
    %2752 = vmatpush2.msra.mxu0 0.0
    %2753 = vmatprep.subr.mxu0 0.0
    %2754 = vmatpush2.msra.mxu0 0.0
    %2755 = vmatprep.subr.mxu0 0.0
    %2756 = vmatpush2.msra.mxu0 0.0
    %2757 = vmatprep.subr.mxu0 0.0
    %2758 = vmatpush2.msra.mxu0 0.0
    %2759 = vmatprep.subr.mxu0 0.0
    %2760 = vmatpush2.msra.mxu0 0.0
    %2761 = vmatprep.mubr.f32.mxu0 0.0
    %2762 = vmatmul.mubr.f32.gmra.mxu0 %v2695
    %v2763 = vpop.f32.mrf.mxu0
    %v2764 = vadd.f32 0.0, %v2763
    %v2765 = vpop.f32.mrf.mxu0
    %2766 = vdwg.mxu0
    %v2767 = vadd.f32 %v2019, %v2764
    %v2768 = vxor.u32 %v2767, 2147483648
    %v2769 = vmul.f32 %v2768, 1.442695
    %v2770 = vpow.pop %v2769
    %v2771 = vadd.f32 %v2770, 1.0
    %v2772 = vrcp.pop %v2771
    %v2773 = vmul.f32 1.0, %v2772
    %v2774 = vtanh.pop %v2767
    %v2775 = vmul.f32 %v2773, %v2685
    %2777 = vrot.lane.b32.xlu0 %v2774, 64
    %v2778 = vpop.permute.xlu0 %2777
    %v2780 = vmul.f32 %v2773, %v2778
    %2782 = vrot.lane.b32.xlu0 %v2780, 32
    %v2783 = vpop.permute.xlu0 %2782
    %v2785 = vadd.f32 %v2775, %v2783
    %v2786 = vtanh.pop %v2785
    %2788 = vrot.lane.b32.xlu0 %v2786, 64
    %v2789 = vpop.permute.xlu0 %2788
    %v2791 = vmul.f32 %v2773, %v2789
    %2793 = vrot.lane.b32.xlu0 %v2791, 32
    %v2794 = vpop.permute.xlu0 %2793
    %v2795 = vsel %vm716, %v2794, 0
    %2797 = vmatprep.subr.mxu0 0.0
    %2798 = vmatpush1.msra.mxu0 0.0
    %2799 = vmatprep.subr.mxu0 0.0
    %2800 = vmatpush1.msra.mxu0 0.0
    %2801 = vmatprep.subr.mxu0 0.0
    %2802 = vmatpush1.msra.mxu0 0.0
    %2803 = vmatprep.subr.mxu0 0.0
    %2804 = vmatpush1.msra.mxu0 0.0
    %2805 = vmatprep.subr.mxu0 0.0
    %2806 = vmatpush1.msra.mxu0 0.0
    %2807 = vmatprep.subr.mxu0 0.0
    %2808 = vmatpush1.msra.mxu0 0.0
    %2809 = vmatprep.subr.mxu0 0.0
    %2810 = vmatpush1.msra.mxu0 0.0
    %2811 = vmatprep.subr.mxu0 0.0
    %2812 = vmatpush1.msra.mxu0 0.0
    %2813 = vmatprep.subr.mxu0 0.0
    %2814 = vmatpush1.msra.mxu0 0.0
    %2815 = vmatprep.subr.mxu0 0.0
    %2816 = vmatpush1.msra.mxu0 0.0
    %2817 = vmatprep.subr.mxu0 0.0
    %2818 = vmatpush1.msra.mxu0 0.0
    %2819 = vmatprep.subr.mxu0 0.0
    %2820 = vmatpush1.msra.mxu0 0.0
    %2821 = vmatprep.subr.mxu0 0.0
    %2822 = vmatpush1.msra.mxu0 %v1523
    %2823 = vmatprep.subr.mxu0 0.0
    %2824 = vmatpush1.msra.mxu0 %v1522
    %2825 = vmatprep.subr.mxu0 0.0
    %2826 = vmatpush1.msra.mxu0 %v1521
    %2827 = vmatprep.subr.mxu0 0.0
    %2828 = vmatpush1.msra.mxu0 %v1520
    %2829 = vmatprep.subr.mxu0 0.0
    %2830 = vmatpush2.msra.mxu0 0.0
    %2831 = vmatprep.subr.mxu0 0.0
    %2832 = vmatpush2.msra.mxu0 0.0
    %2833 = vmatprep.subr.mxu0 0.0
    %2834 = vmatpush2.msra.mxu0 0.0
    %2835 = vmatprep.subr.mxu0 0.0
    %2836 = vmatpush2.msra.mxu0 0.0
    %2837 = vmatprep.subr.mxu0 0.0
    %2838 = vmatpush2.msra.mxu0 0.0
    %2839 = vmatprep.subr.mxu0 0.0
    %2840 = vmatpush2.msra.mxu0 0.0
    %2841 = vmatprep.subr.mxu0 0.0
    %2842 = vmatpush2.msra.mxu0 0.0
    %2843 = vmatprep.subr.mxu0 0.0
    %2844 = vmatpush2.msra.mxu0 0.0
    %2845 = vmatprep.subr.mxu0 0.0
    %2846 = vmatpush2.msra.mxu0 0.0
    %2847 = vmatprep.subr.mxu0 0.0
    %2848 = vmatpush2.msra.mxu0 0.0
    %2849 = vmatprep.subr.mxu0 0.0
    %2850 = vmatpush2.msra.mxu0 0.0
    %2851 = vmatprep.subr.mxu0 0.0
    %2852 = vmatpush2.msra.mxu0 0.0
    %2853 = vmatprep.subr.mxu0 0.0
    %2854 = vmatpush2.msra.mxu0 0.0
    %2855 = vmatprep.subr.mxu0 0.0
    %2856 = vmatpush2.msra.mxu0 0.0
    %2857 = vmatprep.subr.mxu0 0.0
    %2858 = vmatpush2.msra.mxu0 0.0
    %2859 = vmatprep.subr.mxu0 0.0
    %2860 = vmatpush2.msra.mxu0 0.0
    %2861 = vmatprep.mubr.f32.mxu0 0.0
    %2862 = vmatmul.mubr.f32.gmra.mxu0 %v2795
    %v2863 = vpop.f32.mrf.mxu0
    %v2864 = vadd.f32 0.0, %v2863
    %v2865 = vpop.f32.mrf.mxu0
    %2866 = vdwg.mxu0
    %v2867 = vadd.f32 %v2094, %v2864
    %v2868 = vxor.u32 %v2867, 2147483648
    %v2869 = vmul.f32 %v2868, 1.442695
    %v2870 = vpow.pop %v2869
    %v2871 = vadd.f32 %v2870, 1.0
    %v2872 = vrcp.pop %v2871
    %v2873 = vmul.f32 1.0, %v2872
    %v2874 = vtanh.pop %v2867
    %v2875 = vmul.f32 %v2873, %v2785
    %2877 = vrot.lane.b32.xlu0 %v2874, 64
    %v2878 = vpop.permute.xlu0 %2877
    %v2880 = vmul.f32 %v2873, %v2878
    %2882 = vrot.lane.b32.xlu0 %v2880, 32
    %v2883 = vpop.permute.xlu0 %2882
    %v2885 = vadd.f32 %v2875, %v2883
    %v2886 = vtanh.pop %v2885
    %2888 = vrot.lane.b32.xlu0 %v2886, 64
    %v2889 = vpop.permute.xlu0 %2888
    %v2891 = vmul.f32 %v2873, %v2889
    %s2892 = scalar_lea.vmem [#allocation7], 32
    %v2893 = vld [vmem:[%s2892] sm:$0xff]
    %v2894 = vld [vmem:[%s2892 + $0x8] sm:$0xff]
    %v2895 = vld [vmem:[%s2892 + $0x10] sm:$0xff]
    %v2896 = vld [vmem:[%s2892 + $0x18] sm:$0xff]
    %s2897 = scalar_lea.vmem [#allocation8], 64
    %v2898 = vld [vmem:[%s2897] sm:$0xff]
    %v2899 = vld [vmem:[%s2897 + $0x8] sm:$0xff]
    %v2900 = vld [vmem:[%s2897 + $0x10] sm:$0xff]
    %v2901 = vld [vmem:[%s2897 + $0x18] sm:$0xff]
    %s2902 = scalar_lea.vmem %s4, 2
    %v2903 = vld [vmem:[%s2902] sm:$0x1]
    %v2905 = vlaneseq
    %v2906 = vshrl.u32 %v2905, 7
    %v2907 = vsub.s32 0, %v2906
    %v2908 = vrot.slane %v2903, %v2907
    %2910 = vmatprep.subr.mxu0 0.0
    %2911 = vmatpush1.msra.mxu0 0.0
    %2912 = vmatprep.subr.mxu0 0.0
    %2913 = vmatpush1.msra.mxu0 0.0
    %2914 = vmatprep.subr.mxu0 0.0
    %2915 = vmatpush1.msra.mxu0 0.0
    %2916 = vmatprep.subr.mxu0 0.0
    %2917 = vmatpush1.msra.mxu0 0.0
    %2918 = vmatprep.subr.mxu0 0.0
    %2919 = vmatpush1.msra.mxu0 0.0
    %2920 = vmatprep.subr.mxu0 0.0
    %2921 = vmatpush1.msra.mxu0 0.0
    %2922 = vmatprep.subr.mxu0 0.0
    %2923 = vmatpush1.msra.mxu0 0.0
    %2924 = vmatprep.subr.mxu0 0.0
    %2925 = vmatpush1.msra.mxu0 0.0
    %2926 = vmatprep.subr.mxu0 0.0
    %2927 = vmatpush1.msra.mxu0 0.0
    %2928 = vmatprep.subr.mxu0 0.0
    %2929 = vmatpush1.msra.mxu0 0.0
    %2930 = vmatprep.subr.mxu0 0.0
    %2931 = vmatpush1.msra.mxu0 0.0
    %2932 = vmatprep.subr.mxu0 0.0
    %2933 = vmatpush1.msra.mxu0 0.0
    %2934 = vmatprep.subr.mxu0 0.0
    %2935 = vmatpush1.msra.mxu0 %v2896
    %2936 = vmatprep.subr.mxu0 0.0
    %2937 = vmatpush1.msra.mxu0 %v2895
    %2938 = vmatprep.subr.mxu0 0.0
    %2939 = vmatpush1.msra.mxu0 %v2894
    %2940 = vmatprep.subr.mxu0 0.0
    %2941 = vmatpush1.msra.mxu0 %v2893
    %2942 = vmatprep.subr.mxu0 0.0
    %2943 = vmatpush2.msra.mxu0 0.0
    %2944 = vmatprep.subr.mxu0 0.0
    %2945 = vmatpush2.msra.mxu0 0.0
    %2946 = vmatprep.subr.mxu0 0.0
    %2947 = vmatpush2.msra.mxu0 0.0
    %2948 = vmatprep.subr.mxu0 0.0
    %2949 = vmatpush2.msra.mxu0 0.0
    %2950 = vmatprep.subr.mxu0 0.0
    %2951 = vmatpush2.msra.mxu0 0.0
    %2952 = vmatprep.subr.mxu0 0.0
    %2953 = vmatpush2.msra.mxu0 0.0
    %2954 = vmatprep.subr.mxu0 0.0
    %2955 = vmatpush2.msra.mxu0 0.0
    %2956 = vmatprep.subr.mxu0 0.0
    %2957 = vmatpush2.msra.mxu0 0.0
    %2958 = vmatprep.subr.mxu0 0.0
    %2959 = vmatpush2.msra.mxu0 0.0
    %2960 = vmatprep.subr.mxu0 0.0
    %2961 = vmatpush2.msra.mxu0 0.0
    %2962 = vmatprep.subr.mxu0 0.0
    %2963 = vmatpush2.msra.mxu0 0.0
    %2964 = vmatprep.subr.mxu0 0.0
    %2965 = vmatpush2.msra.mxu0 0.0
    %2966 = vmatprep.subr.mxu0 0.0
    %2967 = vmatpush2.msra.mxu0 0.0
    %2968 = vmatprep.subr.mxu0 0.0
    %2969 = vmatpush2.msra.mxu0 0.0
    %2970 = vmatprep.subr.mxu0 0.0
    %2971 = vmatpush2.msra.mxu0 0.0
    %2972 = vmatprep.subr.mxu0 0.0
    %2973 = vmatpush2.msra.mxu0 0.0
    %2974 = vmatprep.mubr.f32.mxu0 0.0
    %2975 = vmatmul.mubr.f32.gmra.mxu0 %v2195
    %v2976 = vpop.f32.mrf.mxu0
    %v2977 = vadd.f32 %v2908, %v2976
    %v2978 = vpop.f32.mrf.mxu0
    %2979 = vdwg.mxu0
    %2980 = vmatprep.subr.mxu0 0.0
    %2981 = vmatpush1.msra.mxu0 0.0
    %2982 = vmatprep.subr.mxu0 0.0
    %2983 = vmatpush1.msra.mxu0 0.0
    %2984 = vmatprep.subr.mxu0 0.0
    %2985 = vmatpush1.msra.mxu0 0.0
    %2986 = vmatprep.subr.mxu0 0.0
    %2987 = vmatpush1.msra.mxu0 0.0
    %2988 = vmatprep.subr.mxu0 0.0
    %2989 = vmatpush1.msra.mxu0 0.0
    %2990 = vmatprep.subr.mxu0 0.0
    %2991 = vmatpush1.msra.mxu0 0.0
    %2992 = vmatprep.subr.mxu0 0.0
    %2993 = vmatpush1.msra.mxu0 0.0
    %2994 = vmatprep.subr.mxu0 0.0
    %2995 = vmatpush1.msra.mxu0 0.0
    %2996 = vmatprep.subr.mxu0 0.0
    %2997 = vmatpush1.msra.mxu0 0.0
    %2998 = vmatprep.subr.mxu0 0.0
    %2999 = vmatpush1.msra.mxu0 0.0
    %3000 = vmatprep.subr.mxu0 0.0
    %3001 = vmatpush1.msra.mxu0 0.0
    %3002 = vmatprep.subr.mxu0 0.0
    %3003 = vmatpush1.msra.mxu0 0.0
    %3004 = vmatprep.subr.mxu0 0.0
    %3005 = vmatpush1.msra.mxu0 %v2896
    %3006 = vmatprep.subr.mxu0 0.0
    %3007 = vmatpush1.msra.mxu0 %v2895
    %3008 = vmatprep.subr.mxu0 0.0
    %3009 = vmatpush1.msra.mxu0 %v2894
    %3010 = vmatprep.subr.mxu0 0.0
    %3011 = vmatpush1.msra.mxu0 %v2893
    %3012 = vmatprep.subr.mxu0 0.0
    %3013 = vmatpush2.msra.mxu0 0.0
    %3014 = vmatprep.subr.mxu0 0.0
    %3015 = vmatpush2.msra.mxu0 0.0
    %3016 = vmatprep.subr.mxu0 0.0
    %3017 = vmatpush2.msra.mxu0 0.0
    %3018 = vmatprep.subr.mxu0 0.0
    %3019 = vmatpush2.msra.mxu0 0.0
    %3020 = vmatprep.subr.mxu0 0.0
    %3021 = vmatpush2.msra.mxu0 0.0
    %3022 = vmatprep.subr.mxu0 0.0
    %3023 = vmatpush2.msra.mxu0 0.0
    %3024 = vmatprep.subr.mxu0 0.0
    %3025 = vmatpush2.msra.mxu0 0.0
    %3026 = vmatprep.subr.mxu0 0.0
    %3027 = vmatpush2.msra.mxu0 0.0
    %3028 = vmatprep.subr.mxu0 0.0
    %3029 = vmatpush2.msra.mxu0 0.0
    %3030 = vmatprep.subr.mxu0 0.0
    %3031 = vmatpush2.msra.mxu0 0.0
    %3032 = vmatprep.subr.mxu0 0.0
    %3033 = vmatpush2.msra.mxu0 0.0
    %3034 = vmatprep.subr.mxu0 0.0
    %3035 = vmatpush2.msra.mxu0 0.0
    %3036 = vmatprep.subr.mxu0 0.0
    %3037 = vmatpush2.msra.mxu0 0.0
    %3038 = vmatprep.subr.mxu0 0.0
    %3039 = vmatpush2.msra.mxu0 0.0
    %3040 = vmatprep.subr.mxu0 0.0
    %3041 = vmatpush2.msra.mxu0 0.0
    %3042 = vmatprep.subr.mxu0 0.0
    %3043 = vmatpush2.msra.mxu0 0.0
    %3044 = vmatprep.mubr.f32.mxu0 0.0
    %3045 = vmatmul.mubr.f32.gmra.mxu0 %v2295
    %v3046 = vpop.f32.mrf.mxu0
    %v3047 = vadd.f32 %v2908, %v3046
    %v3048 = vpop.f32.mrf.mxu0
    %3049 = vdwg.mxu0
    %3050 = vmatprep.subr.mxu0 0.0
    %3051 = vmatpush1.msra.mxu0 0.0
    %3052 = vmatprep.subr.mxu0 0.0
    %3053 = vmatpush1.msra.mxu0 0.0
    %3054 = vmatprep.subr.mxu0 0.0
    %3055 = vmatpush1.msra.mxu0 0.0
    %3056 = vmatprep.subr.mxu0 0.0
    %3057 = vmatpush1.msra.mxu0 0.0
    %3058 = vmatprep.subr.mxu0 0.0
    %3059 = vmatpush1.msra.mxu0 0.0
    %3060 = vmatprep.subr.mxu0 0.0
    %3061 = vmatpush1.msra.mxu0 0.0
    %3062 = vmatprep.subr.mxu0 0.0
    %3063 = vmatpush1.msra.mxu0 0.0
    %3064 = vmatprep.subr.mxu0 0.0
    %3065 = vmatpush1.msra.mxu0 0.0
    %3066 = vmatprep.subr.mxu0 0.0
    %3067 = vmatpush1.msra.mxu0 0.0
    %3068 = vmatprep.subr.mxu0 0.0
    %3069 = vmatpush1.msra.mxu0 0.0
    %3070 = vmatprep.subr.mxu0 0.0
    %3071 = vmatpush1.msra.mxu0 0.0
    %3072 = vmatprep.subr.mxu0 0.0
    %3073 = vmatpush1.msra.mxu0 0.0
    %3074 = vmatprep.subr.mxu0 0.0
    %3075 = vmatpush1.msra.mxu0 %v2896
    %3076 = vmatprep.subr.mxu0 0.0
    %3077 = vmatpush1.msra.mxu0 %v2895
    %3078 = vmatprep.subr.mxu0 0.0
    %3079 = vmatpush1.msra.mxu0 %v2894
    %3080 = vmatprep.subr.mxu0 0.0
    %3081 = vmatpush1.msra.mxu0 %v2893
    %3082 = vmatprep.subr.mxu0 0.0
    %3083 = vmatpush2.msra.mxu0 0.0
    %3084 = vmatprep.subr.mxu0 0.0
    %3085 = vmatpush2.msra.mxu0 0.0
    %3086 = vmatprep.subr.mxu0 0.0
    %3087 = vmatpush2.msra.mxu0 0.0
    %3088 = vmatprep.subr.mxu0 0.0
    %3089 = vmatpush2.msra.mxu0 0.0
    %3090 = vmatprep.subr.mxu0 0.0
    %3091 = vmatpush2.msra.mxu0 0.0
    %3092 = vmatprep.subr.mxu0 0.0
    %3093 = vmatpush2.msra.mxu0 0.0
    %3094 = vmatprep.subr.mxu0 0.0
    %3095 = vmatpush2.msra.mxu0 0.0
    %3096 = vmatprep.subr.mxu0 0.0
    %3097 = vmatpush2.msra.mxu0 0.0
    %3098 = vmatprep.subr.mxu0 0.0
    %3099 = vmatpush2.msra.mxu0 0.0
    %3100 = vmatprep.subr.mxu0 0.0
    %3101 = vmatpush2.msra.mxu0 0.0
    %3102 = vmatprep.subr.mxu0 0.0
    %3103 = vmatpush2.msra.mxu0 0.0
    %3104 = vmatprep.subr.mxu0 0.0
    %3105 = vmatpush2.msra.mxu0 0.0
    %3106 = vmatprep.subr.mxu0 0.0
    %3107 = vmatpush2.msra.mxu0 0.0
    %3108 = vmatprep.subr.mxu0 0.0
    %3109 = vmatpush2.msra.mxu0 0.0
    %3110 = vmatprep.subr.mxu0 0.0
    %3111 = vmatpush2.msra.mxu0 0.0
    %3112 = vmatprep.subr.mxu0 0.0
    %3113 = vmatpush2.msra.mxu0 0.0
    %3114 = vmatprep.mubr.f32.mxu0 0.0
    %3115 = vmatmul.mubr.f32.gmra.mxu0 %v2395
    %v3116 = vpop.f32.mrf.mxu0
    %v3117 = vadd.f32 %v2908, %v3116
    %v3118 = vpop.f32.mrf.mxu0
    %3119 = vdwg.mxu0
    %3120 = vmatprep.subr.mxu0 0.0
    %3121 = vmatpush1.msra.mxu0 0.0
    %3122 = vmatprep.subr.mxu0 0.0
    %3123 = vmatpush1.msra.mxu0 0.0
    %3124 = vmatprep.subr.mxu0 0.0
    %3125 = vmatpush1.msra.mxu0 0.0
    %3126 = vmatprep.subr.mxu0 0.0
    %3127 = vmatpush1.msra.mxu0 0.0
    %3128 = vmatprep.subr.mxu0 0.0
    %3129 = vmatpush1.msra.mxu0 0.0
    %3130 = vmatprep.subr.mxu0 0.0
    %3131 = vmatpush1.msra.mxu0 0.0
    %3132 = vmatprep.subr.mxu0 0.0
    %3133 = vmatpush1.msra.mxu0 0.0
    %3134 = vmatprep.subr.mxu0 0.0
    %3135 = vmatpush1.msra.mxu0 0.0
    %3136 = vmatprep.subr.mxu0 0.0
    %3137 = vmatpush1.msra.mxu0 0.0
    %3138 = vmatprep.subr.mxu0 0.0
    %3139 = vmatpush1.msra.mxu0 0.0
    %3140 = vmatprep.subr.mxu0 0.0
    %3141 = vmatpush1.msra.mxu0 0.0
    %3142 = vmatprep.subr.mxu0 0.0
    %3143 = vmatpush1.msra.mxu0 0.0
    %3144 = vmatprep.subr.mxu0 0.0
    %3145 = vmatpush1.msra.mxu0 %v2896
    %3146 = vmatprep.subr.mxu0 0.0
    %3147 = vmatpush1.msra.mxu0 %v2895
    %3148 = vmatprep.subr.mxu0 0.0
    %3149 = vmatpush1.msra.mxu0 %v2894
    %3150 = vmatprep.subr.mxu0 0.0
    %3151 = vmatpush1.msra.mxu0 %v2893
    %3152 = vmatprep.subr.mxu0 0.0
    %3153 = vmatpush2.msra.mxu0 0.0
    %3154 = vmatprep.subr.mxu0 0.0
    %3155 = vmatpush2.msra.mxu0 0.0
    %3156 = vmatprep.subr.mxu0 0.0
    %3157 = vmatpush2.msra.mxu0 0.0
    %3158 = vmatprep.subr.mxu0 0.0
    %3159 = vmatpush2.msra.mxu0 0.0
    %3160 = vmatprep.subr.mxu0 0.0
    %3161 = vmatpush2.msra.mxu0 0.0
    %3162 = vmatprep.subr.mxu0 0.0
    %3163 = vmatpush2.msra.mxu0 0.0
    %3164 = vmatprep.subr.mxu0 0.0
    %3165 = vmatpush2.msra.mxu0 0.0
    %3166 = vmatprep.subr.mxu0 0.0
    %3167 = vmatpush2.msra.mxu0 0.0
    %3168 = vmatprep.subr.mxu0 0.0
    %3169 = vmatpush2.msra.mxu0 0.0
    %3170 = vmatprep.subr.mxu0 0.0
    %3171 = vmatpush2.msra.mxu0 0.0
    %3172 = vmatprep.subr.mxu0 0.0
    %3173 = vmatpush2.msra.mxu0 0.0
    %3174 = vmatprep.subr.mxu0 0.0
    %3175 = vmatpush2.msra.mxu0 0.0
    %3176 = vmatprep.subr.mxu0 0.0
    %3177 = vmatpush2.msra.mxu0 0.0
    %3178 = vmatprep.subr.mxu0 0.0
    %3179 = vmatpush2.msra.mxu0 0.0
    %3180 = vmatprep.subr.mxu0 0.0
    %3181 = vmatpush2.msra.mxu0 0.0
    %3182 = vmatprep.subr.mxu0 0.0
    %3183 = vmatpush2.msra.mxu0 0.0
    %3184 = vmatprep.mubr.f32.mxu0 0.0
    %3185 = vmatmul.mubr.f32.gmra.mxu0 %v2495
    %v3186 = vpop.f32.mrf.mxu0
    %v3187 = vadd.f32 %v2908, %v3186
    %v3188 = vpop.f32.mrf.mxu0
    %3189 = vdwg.mxu0
    %3190 = vmatprep.subr.mxu0 0.0
    %3191 = vmatpush1.msra.mxu0 0.0
    %3192 = vmatprep.subr.mxu0 0.0
    %3193 = vmatpush1.msra.mxu0 0.0
    %3194 = vmatprep.subr.mxu0 0.0
    %3195 = vmatpush1.msra.mxu0 0.0
    %3196 = vmatprep.subr.mxu0 0.0
    %3197 = vmatpush1.msra.mxu0 0.0
    %3198 = vmatprep.subr.mxu0 0.0
    %3199 = vmatpush1.msra.mxu0 0.0
    %3200 = vmatprep.subr.mxu0 0.0
    %3201 = vmatpush1.msra.mxu0 0.0
    %3202 = vmatprep.subr.mxu0 0.0
    %3203 = vmatpush1.msra.mxu0 0.0
    %3204 = vmatprep.subr.mxu0 0.0
    %3205 = vmatpush1.msra.mxu0 0.0
    %3206 = vmatprep.subr.mxu0 0.0
    %3207 = vmatpush1.msra.mxu0 0.0
    %3208 = vmatprep.subr.mxu0 0.0
    %3209 = vmatpush1.msra.mxu0 0.0
    %3210 = vmatprep.subr.mxu0 0.0
    %3211 = vmatpush1.msra.mxu0 0.0
    %3212 = vmatprep.subr.mxu0 0.0
    %3213 = vmatpush1.msra.mxu0 0.0
    %3214 = vmatprep.subr.mxu0 0.0
    %3215 = vmatpush1.msra.mxu0 %v2896
    %3216 = vmatprep.subr.mxu0 0.0
    %3217 = vmatpush1.msra.mxu0 %v2895
    %3218 = vmatprep.subr.mxu0 0.0
    %3219 = vmatpush1.msra.mxu0 %v2894
    %3220 = vmatprep.subr.mxu0 0.0
    %3221 = vmatpush1.msra.mxu0 %v2893
    %3222 = vmatprep.subr.mxu0 0.0
    %3223 = vmatpush2.msra.mxu0 0.0
    %3224 = vmatprep.subr.mxu0 0.0
    %3225 = vmatpush2.msra.mxu0 0.0
    %3226 = vmatprep.subr.mxu0 0.0
    %3227 = vmatpush2.msra.mxu0 0.0
    %3228 = vmatprep.subr.mxu0 0.0
    %3229 = vmatpush2.msra.mxu0 0.0
    %3230 = vmatprep.subr.mxu0 0.0
    %3231 = vmatpush2.msra.mxu0 0.0
    %3232 = vmatprep.subr.mxu0 0.0
    %3233 = vmatpush2.msra.mxu0 0.0
    %3234 = vmatprep.subr.mxu0 0.0
    %3235 = vmatpush2.msra.mxu0 0.0
    %3236 = vmatprep.subr.mxu0 0.0
    %3237 = vmatpush2.msra.mxu0 0.0
    %3238 = vmatprep.subr.mxu0 0.0
    %3239 = vmatpush2.msra.mxu0 0.0
    %3240 = vmatprep.subr.mxu0 0.0
    %3241 = vmatpush2.msra.mxu0 0.0
    %3242 = vmatprep.subr.mxu0 0.0
    %3243 = vmatpush2.msra.mxu0 0.0
    %3244 = vmatprep.subr.mxu0 0.0
    %3245 = vmatpush2.msra.mxu0 0.0
    %3246 = vmatprep.subr.mxu0 0.0
    %3247 = vmatpush2.msra.mxu0 0.0
    %3248 = vmatprep.subr.mxu0 0.0
    %3249 = vmatpush2.msra.mxu0 0.0
    %3250 = vmatprep.subr.mxu0 0.0
    %3251 = vmatpush2.msra.mxu0 0.0
    %3252 = vmatprep.subr.mxu0 0.0
    %3253 = vmatpush2.msra.mxu0 0.0
    %3254 = vmatprep.mubr.f32.mxu0 0.0
    %3255 = vmatmul.mubr.f32.gmra.mxu0 %v2595
    %v3256 = vpop.f32.mrf.mxu0
    %v3257 = vadd.f32 %v2908, %v3256
    %v3258 = vpop.f32.mrf.mxu0
    %3259 = vdwg.mxu0
    %3260 = vmatprep.subr.mxu0 0.0
    %3261 = vmatpush1.msra.mxu0 0.0
    %3262 = vmatprep.subr.mxu0 0.0
    %3263 = vmatpush1.msra.mxu0 0.0
    %3264 = vmatprep.subr.mxu0 0.0
    %3265 = vmatpush1.msra.mxu0 0.0
    %3266 = vmatprep.subr.mxu0 0.0
    %3267 = vmatpush1.msra.mxu0 0.0
    %3268 = vmatprep.subr.mxu0 0.0
    %3269 = vmatpush1.msra.mxu0 0.0
    %3270 = vmatprep.subr.mxu0 0.0
    %3271 = vmatpush1.msra.mxu0 0.0
    %3272 = vmatprep.subr.mxu0 0.0
    %3273 = vmatpush1.msra.mxu0 0.0
    %3274 = vmatprep.subr.mxu0 0.0
    %3275 = vmatpush1.msra.mxu0 0.0
    %3276 = vmatprep.subr.mxu0 0.0
    %3277 = vmatpush1.msra.mxu0 0.0
    %3278 = vmatprep.subr.mxu0 0.0
    %3279 = vmatpush1.msra.mxu0 0.0
    %3280 = vmatprep.subr.mxu0 0.0
    %3281 = vmatpush1.msra.mxu0 0.0
    %3282 = vmatprep.subr.mxu0 0.0
    %3283 = vmatpush1.msra.mxu0 0.0
    %3284 = vmatprep.subr.mxu0 0.0
    %3285 = vmatpush1.msra.mxu0 %v2896
    %3286 = vmatprep.subr.mxu0 0.0
    %3287 = vmatpush1.msra.mxu0 %v2895
    %3288 = vmatprep.subr.mxu0 0.0
    %3289 = vmatpush1.msra.mxu0 %v2894
    %3290 = vmatprep.subr.mxu0 0.0
    %3291 = vmatpush1.msra.mxu0 %v2893
    %3292 = vmatprep.subr.mxu0 0.0
    %3293 = vmatpush2.msra.mxu0 0.0
    %3294 = vmatprep.subr.mxu0 0.0
    %3295 = vmatpush2.msra.mxu0 0.0
    %3296 = vmatprep.subr.mxu0 0.0
    %3297 = vmatpush2.msra.mxu0 0.0
    %3298 = vmatprep.subr.mxu0 0.0
    %3299 = vmatpush2.msra.mxu0 0.0
    %3300 = vmatprep.subr.mxu0 0.0
    %3301 = vmatpush2.msra.mxu0 0.0
    %3302 = vmatprep.subr.mxu0 0.0
    %3303 = vmatpush2.msra.mxu0 0.0
    %3304 = vmatprep.subr.mxu0 0.0
    %3305 = vmatpush2.msra.mxu0 0.0
    %3306 = vmatprep.subr.mxu0 0.0
    %3307 = vmatpush2.msra.mxu0 0.0
    %3308 = vmatprep.subr.mxu0 0.0
    %3309 = vmatpush2.msra.mxu0 0.0
    %3310 = vmatprep.subr.mxu0 0.0
    %3311 = vmatpush2.msra.mxu0 0.0
    %3312 = vmatprep.subr.mxu0 0.0
    %3313 = vmatpush2.msra.mxu0 0.0
    %3314 = vmatprep.subr.mxu0 0.0
    %3315 = vmatpush2.msra.mxu0 0.0
    %3316 = vmatprep.subr.mxu0 0.0
    %3317 = vmatpush2.msra.mxu0 0.0
    %3318 = vmatprep.subr.mxu0 0.0
    %3319 = vmatpush2.msra.mxu0 0.0
    %3320 = vmatprep.subr.mxu0 0.0
    %3321 = vmatpush2.msra.mxu0 0.0
    %3322 = vmatprep.subr.mxu0 0.0
    %3323 = vmatpush2.msra.mxu0 0.0
    %3324 = vmatprep.mubr.f32.mxu0 0.0
    %3325 = vmatmul.mubr.f32.gmra.mxu0 %v2695
    %v3326 = vpop.f32.mrf.mxu0
    %v3327 = vadd.f32 %v2908, %v3326
    %v3328 = vpop.f32.mrf.mxu0
    %3329 = vdwg.mxu0
    %3330 = vmatprep.subr.mxu0 0.0
    %3331 = vmatpush1.msra.mxu0 0.0
    %3332 = vmatprep.subr.mxu0 0.0
    %3333 = vmatpush1.msra.mxu0 0.0
    %3334 = vmatprep.subr.mxu0 0.0
    %3335 = vmatpush1.msra.mxu0 0.0
    %3336 = vmatprep.subr.mxu0 0.0
    %3337 = vmatpush1.msra.mxu0 0.0
    %3338 = vmatprep.subr.mxu0 0.0
    %3339 = vmatpush1.msra.mxu0 0.0
    %3340 = vmatprep.subr.mxu0 0.0
    %3341 = vmatpush1.msra.mxu0 0.0
    %3342 = vmatprep.subr.mxu0 0.0
    %3343 = vmatpush1.msra.mxu0 0.0
    %3344 = vmatprep.subr.mxu0 0.0
    %3345 = vmatpush1.msra.mxu0 0.0
    %3346 = vmatprep.subr.mxu0 0.0
    %3347 = vmatpush1.msra.mxu0 0.0
    %3348 = vmatprep.subr.mxu0 0.0
    %3349 = vmatpush1.msra.mxu0 0.0
    %3350 = vmatprep.subr.mxu0 0.0
    %3351 = vmatpush1.msra.mxu0 0.0
    %3352 = vmatprep.subr.mxu0 0.0
    %3353 = vmatpush1.msra.mxu0 0.0
    %3354 = vmatprep.subr.mxu0 0.0
    %3355 = vmatpush1.msra.mxu0 %v2896
    %3356 = vmatprep.subr.mxu0 0.0
    %3357 = vmatpush1.msra.mxu0 %v2895
    %3358 = vmatprep.subr.mxu0 0.0
    %3359 = vmatpush1.msra.mxu0 %v2894
    %3360 = vmatprep.subr.mxu0 0.0
    %3361 = vmatpush1.msra.mxu0 %v2893
    %3362 = vmatprep.subr.mxu0 0.0
    %3363 = vmatpush2.msra.mxu0 0.0
    %3364 = vmatprep.subr.mxu0 0.0
    %3365 = vmatpush2.msra.mxu0 0.0
    %3366 = vmatprep.subr.mxu0 0.0
    %3367 = vmatpush2.msra.mxu0 0.0
    %3368 = vmatprep.subr.mxu0 0.0
    %3369 = vmatpush2.msra.mxu0 0.0
    %3370 = vmatprep.subr.mxu0 0.0
    %3371 = vmatpush2.msra.mxu0 0.0
    %3372 = vmatprep.subr.mxu0 0.0
    %3373 = vmatpush2.msra.mxu0 0.0
    %3374 = vmatprep.subr.mxu0 0.0
    %3375 = vmatpush2.msra.mxu0 0.0
    %3376 = vmatprep.subr.mxu0 0.0
    %3377 = vmatpush2.msra.mxu0 0.0
    %3378 = vmatprep.subr.mxu0 0.0
    %3379 = vmatpush2.msra.mxu0 0.0
    %3380 = vmatprep.subr.mxu0 0.0
    %3381 = vmatpush2.msra.mxu0 0.0
    %3382 = vmatprep.subr.mxu0 0.0
    %3383 = vmatpush2.msra.mxu0 0.0
    %3384 = vmatprep.subr.mxu0 0.0
    %3385 = vmatpush2.msra.mxu0 0.0
    %3386 = vmatprep.subr.mxu0 0.0
    %3387 = vmatpush2.msra.mxu0 0.0
    %3388 = vmatprep.subr.mxu0 0.0
    %3389 = vmatpush2.msra.mxu0 0.0
    %3390 = vmatprep.subr.mxu0 0.0
    %3391 = vmatpush2.msra.mxu0 0.0
    %3392 = vmatprep.subr.mxu0 0.0
    %3393 = vmatpush2.msra.mxu0 0.0
    %3394 = vmatprep.mubr.f32.mxu0 0.0
    %3395 = vmatmul.mubr.f32.gmra.mxu0 %v2795
    %v3396 = vpop.f32.mrf.mxu0
    %v3397 = vadd.f32 %v2908, %v3396
    %v3398 = vpop.f32.mrf.mxu0
    %3399 = vdwg.mxu0
    %3401 = vrot.lane.b32.xlu0 %v2891, 32
    %v3402 = vpop.permute.xlu0 %3401
    %v3403 = vsel %vm716, %v3402, 0
    %3405 = vmatprep.subr.mxu0 0.0
    %3406 = vmatpush1.msra.mxu0 0.0
    %3407 = vmatprep.subr.mxu0 0.0
    %3408 = vmatpush1.msra.mxu0 0.0
    %3409 = vmatprep.subr.mxu0 0.0
    %3410 = vmatpush1.msra.mxu0 0.0
    %3411 = vmatprep.subr.mxu0 0.0
    %3412 = vmatpush1.msra.mxu0 0.0
    %3413 = vmatprep.subr.mxu0 0.0
    %3414 = vmatpush1.msra.mxu0 0.0
    %3415 = vmatprep.subr.mxu0 0.0
    %3416 = vmatpush1.msra.mxu0 0.0
    %3417 = vmatprep.subr.mxu0 0.0
    %3418 = vmatpush1.msra.mxu0 0.0
    %3419 = vmatprep.subr.mxu0 0.0
    %3420 = vmatpush1.msra.mxu0 0.0
    %3421 = vmatprep.subr.mxu0 0.0
    %3422 = vmatpush1.msra.mxu0 0.0
    %3423 = vmatprep.subr.mxu0 0.0
    %3424 = vmatpush1.msra.mxu0 0.0
    %3425 = vmatprep.subr.mxu0 0.0
    %3426 = vmatpush1.msra.mxu0 0.0
    %3427 = vmatprep.subr.mxu0 0.0
    %3428 = vmatpush1.msra.mxu0 0.0
    %3429 = vmatprep.subr.mxu0 0.0
    %3430 = vmatpush1.msra.mxu0 %v2896
    %3431 = vmatprep.subr.mxu0 0.0
    %3432 = vmatpush1.msra.mxu0 %v2895
    %3433 = vmatprep.subr.mxu0 0.0
    %3434 = vmatpush1.msra.mxu0 %v2894
    %3435 = vmatprep.subr.mxu0 0.0
    %3436 = vmatpush1.msra.mxu0 %v2893
    %3437 = vmatprep.subr.mxu0 0.0
    %3438 = vmatpush2.msra.mxu0 0.0
    %3439 = vmatprep.subr.mxu0 0.0
    %3440 = vmatpush2.msra.mxu0 0.0
    %3441 = vmatprep.subr.mxu0 0.0
    %3442 = vmatpush2.msra.mxu0 0.0
    %3443 = vmatprep.subr.mxu0 0.0
    %3444 = vmatpush2.msra.mxu0 0.0
    %3445 = vmatprep.subr.mxu0 0.0
    %3446 = vmatpush2.msra.mxu0 0.0
    %3447 = vmatprep.subr.mxu0 0.0
    %3448 = vmatpush2.msra.mxu0 0.0
    %3449 = vmatprep.subr.mxu0 0.0
    %3450 = vmatpush2.msra.mxu0 0.0
    %3451 = vmatprep.subr.mxu0 0.0
    %3452 = vmatpush2.msra.mxu0 0.0
    %3453 = vmatprep.subr.mxu0 0.0
    %3454 = vmatpush2.msra.mxu0 0.0
    %3455 = vmatprep.subr.mxu0 0.0
    %3456 = vmatpush2.msra.mxu0 0.0
    %3457 = vmatprep.subr.mxu0 0.0
    %3458 = vmatpush2.msra.mxu0 0.0
    %3459 = vmatprep.subr.mxu0 0.0
    %3460 = vmatpush2.msra.mxu0 0.0
    %3461 = vmatprep.subr.mxu0 0.0
    %3462 = vmatpush2.msra.mxu0 0.0
    %3463 = vmatprep.subr.mxu0 0.0
    %3464 = vmatpush2.msra.mxu0 0.0
    %3465 = vmatprep.subr.mxu0 0.0
    %3466 = vmatpush2.msra.mxu0 0.0
    %3467 = vmatprep.subr.mxu0 0.0
    %3468 = vmatpush2.msra.mxu0 0.0
    %3469 = vmatprep.mubr.f32.mxu0 0.0
    %3470 = vmatmul.mubr.f32.gmra.mxu0 %v3403
    %v3471 = vpop.f32.mrf.mxu0
    %v3472 = vadd.f32 %v2908, %v3471
    %v3473 = vpop.f32.mrf.mxu0
    %3474 = vdwg.mxu0
    %3475 = vmatprep.subr.mxu0 0.0
    %3476 = vmatpush1.msra.mxu0 0.0
    %3477 = vmatprep.subr.mxu0 0.0
    %3478 = vmatpush1.msra.mxu0 0.0
    %3479 = vmatprep.subr.mxu0 0.0
    %3480 = vmatpush1.msra.mxu0 0.0
    %3481 = vmatprep.subr.mxu0 0.0
    %3482 = vmatpush1.msra.mxu0 0.0
    %3483 = vmatprep.subr.mxu0 0.0
    %3484 = vmatpush1.msra.mxu0 0.0
    %3485 = vmatprep.subr.mxu0 0.0
    %3486 = vmatpush1.msra.mxu0 0.0
    %3487 = vmatprep.subr.mxu0 0.0
    %3488 = vmatpush1.msra.mxu0 0.0
    %3489 = vmatprep.subr.mxu0 0.0
    %3490 = vmatpush1.msra.mxu0 0.0
    %3491 = vmatprep.subr.mxu0 0.0
    %3492 = vmatpush1.msra.mxu0 0.0
    %3493 = vmatprep.subr.mxu0 0.0
    %3494 = vmatpush1.msra.mxu0 0.0
    %3495 = vmatprep.subr.mxu0 0.0
    %3496 = vmatpush1.msra.mxu0 0.0
    %3497 = vmatprep.subr.mxu0 0.0
    %3498 = vmatpush1.msra.mxu0 0.0
    %3499 = vmatprep.subr.mxu0 0.0
    %3500 = vmatpush1.msra.mxu0 %v2901
    %3501 = vmatprep.subr.mxu0 0.0
    %3502 = vmatpush1.msra.mxu0 %v2900
    %3503 = vmatprep.subr.mxu0 0.0
    %3504 = vmatpush1.msra.mxu0 %v2899
    %3505 = vmatprep.subr.mxu0 0.0
    %3506 = vmatpush1.msra.mxu0 %v2898
    %3507 = vmatprep.subr.mxu0 0.0
    %3508 = vmatpush2.msra.mxu0 0.0
    %3509 = vmatprep.subr.mxu0 0.0
    %3510 = vmatpush2.msra.mxu0 0.0
    %3511 = vmatprep.subr.mxu0 0.0
    %3512 = vmatpush2.msra.mxu0 0.0
    %3513 = vmatprep.subr.mxu0 0.0
    %3514 = vmatpush2.msra.mxu0 0.0
    %3515 = vmatprep.subr.mxu0 0.0
    %3516 = vmatpush2.msra.mxu0 0.0
    %3517 = vmatprep.subr.mxu0 0.0
    %3518 = vmatpush2.msra.mxu0 0.0
    %3519 = vmatprep.subr.mxu0 0.0
    %3520 = vmatpush2.msra.mxu0 0.0
    %3521 = vmatprep.subr.mxu0 0.0
    %3522 = vmatpush2.msra.mxu0 0.0
    %3523 = vmatprep.subr.mxu0 0.0
    %3524 = vmatpush2.msra.mxu0 0.0
    %3525 = vmatprep.subr.mxu0 0.0
    %3526 = vmatpush2.msra.mxu0 0.0
    %3527 = vmatprep.subr.mxu0 0.0
    %3528 = vmatpush2.msra.mxu0 0.0
    %3529 = vmatprep.subr.mxu0 0.0
    %3530 = vmatpush2.msra.mxu0 0.0
    %3531 = vmatprep.subr.mxu0 0.0
    %3532 = vmatpush2.msra.mxu0 0.0
    %3533 = vmatprep.subr.mxu0 0.0
    %3534 = vmatpush2.msra.mxu0 0.0
    %3535 = vmatprep.subr.mxu0 0.0
    %3536 = vmatpush2.msra.mxu0 0.0
    %3537 = vmatprep.subr.mxu0 0.0
    %3538 = vmatpush2.msra.mxu0 0.0
    %3539 = vmatprep.mubr.f32.mxu0 0.0
    %3540 = vmatmul.mubr.f32.gmra.mxu0 %v718
    %v3541 = vpop.f32.mrf.mxu0
    %v3542 = vadd.f32 0.0, %v3541
    %v3543 = vpop.f32.mrf.mxu0
    %3544 = vdwg.mxu0
    %v3545 = vadd.f32 %v2977, %v3542
    %v3546 = vxor.u32 %v3545, 2147483648
    %v3547 = vmul.f32 %v3546, 1.442695
    %v3548 = vpow.pop %v3547
    %v3549 = vadd.f32 %v3548, 1.0
    %v3550 = vrcp.pop %v3549
    %v3551 = vmul.f32 1.0, %v3550
    %v3552 = vtanh.pop %v3545
    %v3553 = vmul.f32 %v3551, 0.0
    %3555 = vrot.lane.b32.xlu0 %v3552, 64
    %v3556 = vpop.permute.xlu0 %3555
    %v3558 = vmul.f32 %v3551, %v3556
    %3560 = vrot.lane.b32.xlu0 %v3558, 32
    %v3561 = vpop.permute.xlu0 %3560
    %v3563 = vadd.f32 %v3553, %v3561
    %v3564 = vtanh.pop %v3563
    %3566 = vrot.lane.b32.xlu0 %v3564, 64
    %v3567 = vpop.permute.xlu0 %3566
    %v3569 = vmul.f32 %v3551, %v3567
    %3571 = vrot.lane.b32.xlu0 %v3569, 32
    %v3572 = vpop.permute.xlu0 %3571
    %v3573 = vsel %vm716, %v3572, 0
    %3575 = vmatprep.subr.mxu0 0.0
    %3576 = vmatpush1.msra.mxu0 0.0
    %3577 = vmatprep.subr.mxu0 0.0
    %3578 = vmatpush1.msra.mxu0 0.0
    %3579 = vmatprep.subr.mxu0 0.0
    %3580 = vmatpush1.msra.mxu0 0.0
    %3581 = vmatprep.subr.mxu0 0.0
    %3582 = vmatpush1.msra.mxu0 0.0
    %3583 = vmatprep.subr.mxu0 0.0
    %3584 = vmatpush1.msra.mxu0 0.0
    %3585 = vmatprep.subr.mxu0 0.0
    %3586 = vmatpush1.msra.mxu0 0.0
    %3587 = vmatprep.subr.mxu0 0.0
    %3588 = vmatpush1.msra.mxu0 0.0
    %3589 = vmatprep.subr.mxu0 0.0
    %3590 = vmatpush1.msra.mxu0 0.0
    %3591 = vmatprep.subr.mxu0 0.0
    %3592 = vmatpush1.msra.mxu0 0.0
    %3593 = vmatprep.subr.mxu0 0.0
    %3594 = vmatpush1.msra.mxu0 0.0
    %3595 = vmatprep.subr.mxu0 0.0
    %3596 = vmatpush1.msra.mxu0 0.0
    %3597 = vmatprep.subr.mxu0 0.0
    %3598 = vmatpush1.msra.mxu0 0.0
    %3599 = vmatprep.subr.mxu0 0.0
    %3600 = vmatpush1.msra.mxu0 %v2901
    %3601 = vmatprep.subr.mxu0 0.0
    %3602 = vmatpush1.msra.mxu0 %v2900
    %3603 = vmatprep.subr.mxu0 0.0
    %3604 = vmatpush1.msra.mxu0 %v2899
    %3605 = vmatprep.subr.mxu0 0.0
    %3606 = vmatpush1.msra.mxu0 %v2898
    %3607 = vmatprep.subr.mxu0 0.0
    %3608 = vmatpush2.msra.mxu0 0.0
    %3609 = vmatprep.subr.mxu0 0.0
    %3610 = vmatpush2.msra.mxu0 0.0
    %3611 = vmatprep.subr.mxu0 0.0
    %3612 = vmatpush2.msra.mxu0 0.0
    %3613 = vmatprep.subr.mxu0 0.0
    %3614 = vmatpush2.msra.mxu0 0.0
    %3615 = vmatprep.subr.mxu0 0.0
    %3616 = vmatpush2.msra.mxu0 0.0
    %3617 = vmatprep.subr.mxu0 0.0
    %3618 = vmatpush2.msra.mxu0 0.0
    %3619 = vmatprep.subr.mxu0 0.0
    %3620 = vmatpush2.msra.mxu0 0.0
    %3621 = vmatprep.subr.mxu0 0.0
    %3622 = vmatpush2.msra.mxu0 0.0
    %3623 = vmatprep.subr.mxu0 0.0
    %3624 = vmatpush2.msra.mxu0 0.0
    %3625 = vmatprep.subr.mxu0 0.0
    %3626 = vmatpush2.msra.mxu0 0.0
    %3627 = vmatprep.subr.mxu0 0.0
    %3628 = vmatpush2.msra.mxu0 0.0
    %3629 = vmatprep.subr.mxu0 0.0
    %3630 = vmatpush2.msra.mxu0 0.0
    %3631 = vmatprep.subr.mxu0 0.0
    %3632 = vmatpush2.msra.mxu0 0.0
    %3633 = vmatprep.subr.mxu0 0.0
    %3634 = vmatpush2.msra.mxu0 0.0
    %3635 = vmatprep.subr.mxu0 0.0
    %3636 = vmatpush2.msra.mxu0 0.0
    %3637 = vmatprep.subr.mxu0 0.0
    %3638 = vmatpush2.msra.mxu0 0.0
    %3639 = vmatprep.mubr.f32.mxu0 0.0
    %3640 = vmatmul.mubr.f32.gmra.mxu0 %v3573
    %v3641 = vpop.f32.mrf.mxu0
    %v3642 = vadd.f32 0.0, %v3641
    %v3643 = vpop.f32.mrf.mxu0
    %3644 = vdwg.mxu0
    %v3645 = vadd.f32 %v3047, %v3642
    %v3646 = vxor.u32 %v3645, 2147483648
    %v3647 = vmul.f32 %v3646, 1.442695
    %v3648 = vpow.pop %v3647
    %v3649 = vadd.f32 %v3648, 1.0
    %v3650 = vrcp.pop %v3649
    %v3651 = vmul.f32 1.0, %v3650
    %v3652 = vtanh.pop %v3645
    %v3653 = vmul.f32 %v3651, %v3563
    %3655 = vrot.lane.b32.xlu0 %v3652, 64
    %v3656 = vpop.permute.xlu0 %3655
    %v3658 = vmul.f32 %v3651, %v3656
    %3660 = vrot.lane.b32.xlu0 %v3658, 32
    %v3661 = vpop.permute.xlu0 %3660
    %v3663 = vadd.f32 %v3653, %v3661
    %v3664 = vtanh.pop %v3663
    %3666 = vrot.lane.b32.xlu0 %v3664, 64
    %v3667 = vpop.permute.xlu0 %3666
    %v3669 = vmul.f32 %v3651, %v3667
    %3671 = vrot.lane.b32.xlu0 %v3669, 32
    %v3672 = vpop.permute.xlu0 %3671
    %v3673 = vsel %vm716, %v3672, 0
    %3675 = vmatprep.subr.mxu0 0.0
    %3676 = vmatpush1.msra.mxu0 0.0
    %3677 = vmatprep.subr.mxu0 0.0
    %3678 = vmatpush1.msra.mxu0 0.0
    %3679 = vmatprep.subr.mxu0 0.0
    %3680 = vmatpush1.msra.mxu0 0.0
    %3681 = vmatprep.subr.mxu0 0.0
    %3682 = vmatpush1.msra.mxu0 0.0
    %3683 = vmatprep.subr.mxu0 0.0
    %3684 = vmatpush1.msra.mxu0 0.0
    %3685 = vmatprep.subr.mxu0 0.0
    %3686 = vmatpush1.msra.mxu0 0.0
    %3687 = vmatprep.subr.mxu0 0.0
    %3688 = vmatpush1.msra.mxu0 0.0
    %3689 = vmatprep.subr.mxu0 0.0
    %3690 = vmatpush1.msra.mxu0 0.0
    %3691 = vmatprep.subr.mxu0 0.0
    %3692 = vmatpush1.msra.mxu0 0.0
    %3693 = vmatprep.subr.mxu0 0.0
    %3694 = vmatpush1.msra.mxu0 0.0
    %3695 = vmatprep.subr.mxu0 0.0
    %3696 = vmatpush1.msra.mxu0 0.0
    %3697 = vmatprep.subr.mxu0 0.0
    %3698 = vmatpush1.msra.mxu0 0.0
    %3699 = vmatprep.subr.mxu0 0.0
    %3700 = vmatpush1.msra.mxu0 %v2901
    %3701 = vmatprep.subr.mxu0 0.0
    %3702 = vmatpush1.msra.mxu0 %v2900
    %3703 = vmatprep.subr.mxu0 0.0
    %3704 = vmatpush1.msra.mxu0 %v2899
    %3705 = vmatprep.subr.mxu0 0.0
    %3706 = vmatpush1.msra.mxu0 %v2898
    %3707 = vmatprep.subr.mxu0 0.0
    %3708 = vmatpush2.msra.mxu0 0.0
    %3709 = vmatprep.subr.mxu0 0.0
    %3710 = vmatpush2.msra.mxu0 0.0
    %3711 = vmatprep.subr.mxu0 0.0
    %3712 = vmatpush2.msra.mxu0 0.0
    %3713 = vmatprep.subr.mxu0 0.0
    %3714 = vmatpush2.msra.mxu0 0.0
    %3715 = vmatprep.subr.mxu0 0.0
    %3716 = vmatpush2.msra.mxu0 0.0
    %3717 = vmatprep.subr.mxu0 0.0
    %3718 = vmatpush2.msra.mxu0 0.0
    %3719 = vmatprep.subr.mxu0 0.0
    %3720 = vmatpush2.msra.mxu0 0.0
    %3721 = vmatprep.subr.mxu0 0.0
    %3722 = vmatpush2.msra.mxu0 0.0
    %3723 = vmatprep.subr.mxu0 0.0
    %3724 = vmatpush2.msra.mxu0 0.0
    %3725 = vmatprep.subr.mxu0 0.0
    %3726 = vmatpush2.msra.mxu0 0.0
    %3727 = vmatprep.subr.mxu0 0.0
    %3728 = vmatpush2.msra.mxu0 0.0
    %3729 = vmatprep.subr.mxu0 0.0
    %3730 = vmatpush2.msra.mxu0 0.0
    %3731 = vmatprep.subr.mxu0 0.0
    %3732 = vmatpush2.msra.mxu0 0.0
    %3733 = vmatprep.subr.mxu0 0.0
    %3734 = vmatpush2.msra.mxu0 0.0
    %3735 = vmatprep.subr.mxu0 0.0
    %3736 = vmatpush2.msra.mxu0 0.0
    %3737 = vmatprep.subr.mxu0 0.0
    %3738 = vmatpush2.msra.mxu0 0.0
    %3739 = vmatprep.mubr.f32.mxu0 0.0
    %3740 = vmatmul.mubr.f32.gmra.mxu0 %v3673
    %v3741 = vpop.f32.mrf.mxu0
    %v3742 = vadd.f32 0.0, %v3741
    %v3743 = vpop.f32.mrf.mxu0
    %3744 = vdwg.mxu0
    %v3745 = vadd.f32 %v3117, %v3742
    %v3746 = vxor.u32 %v3745, 2147483648
    %v3747 = vmul.f32 %v3746, 1.442695
    %v3748 = vpow.pop %v3747
    %v3749 = vadd.f32 %v3748, 1.0
    %v3750 = vrcp.pop %v3749
    %v3751 = vmul.f32 1.0, %v3750
    %v3752 = vtanh.pop %v3745
    %v3753 = vmul.f32 %v3751, %v3663
    %3755 = vrot.lane.b32.xlu0 %v3752, 64
    %v3756 = vpop.permute.xlu0 %3755
    %v3758 = vmul.f32 %v3751, %v3756
    %3760 = vrot.lane.b32.xlu0 %v3758, 32
    %v3761 = vpop.permute.xlu0 %3760
    %v3763 = vadd.f32 %v3753, %v3761
    %v3764 = vtanh.pop %v3763
    %3766 = vrot.lane.b32.xlu0 %v3764, 64
    %v3767 = vpop.permute.xlu0 %3766
    %v3769 = vmul.f32 %v3751, %v3767
    %3771 = vrot.lane.b32.xlu0 %v3769, 32
    %v3772 = vpop.permute.xlu0 %3771
    %v3773 = vsel %vm716, %v3772, 0
    %3775 = vmatprep.subr.mxu0 0.0
    %3776 = vmatpush1.msra.mxu0 0.0
    %3777 = vmatprep.subr.mxu0 0.0
    %3778 = vmatpush1.msra.mxu0 0.0
    %3779 = vmatprep.subr.mxu0 0.0
    %3780 = vmatpush1.msra.mxu0 0.0
    %3781 = vmatprep.subr.mxu0 0.0
    %3782 = vmatpush1.msra.mxu0 0.0
    %3783 = vmatprep.subr.mxu0 0.0
    %3784 = vmatpush1.msra.mxu0 0.0
    %3785 = vmatprep.subr.mxu0 0.0
    %3786 = vmatpush1.msra.mxu0 0.0
    %3787 = vmatprep.subr.mxu0 0.0
    %3788 = vmatpush1.msra.mxu0 0.0
    %3789 = vmatprep.subr.mxu0 0.0
    %3790 = vmatpush1.msra.mxu0 0.0
    %3791 = vmatprep.subr.mxu0 0.0
    %3792 = vmatpush1.msra.mxu0 0.0
    %3793 = vmatprep.subr.mxu0 0.0
    %3794 = vmatpush1.msra.mxu0 0.0
    %3795 = vmatprep.subr.mxu0 0.0
    %3796 = vmatpush1.msra.mxu0 0.0
    %3797 = vmatprep.subr.mxu0 0.0
    %3798 = vmatpush1.msra.mxu0 0.0
    %3799 = vmatprep.subr.mxu0 0.0
    %3800 = vmatpush1.msra.mxu0 %v2901
    %3801 = vmatprep.subr.mxu0 0.0
    %3802 = vmatpush1.msra.mxu0 %v2900
    %3803 = vmatprep.subr.mxu0 0.0
    %3804 = vmatpush1.msra.mxu0 %v2899
    %3805 = vmatprep.subr.mxu0 0.0
    %3806 = vmatpush1.msra.mxu0 %v2898
    %3807 = vmatprep.subr.mxu0 0.0
    %3808 = vmatpush2.msra.mxu0 0.0
    %3809 = vmatprep.subr.mxu0 0.0
    %3810 = vmatpush2.msra.mxu0 0.0
    %3811 = vmatprep.subr.mxu0 0.0
    %3812 = vmatpush2.msra.mxu0 0.0
    %3813 = vmatprep.subr.mxu0 0.0
    %3814 = vmatpush2.msra.mxu0 0.0
    %3815 = vmatprep.subr.mxu0 0.0
    %3816 = vmatpush2.msra.mxu0 0.0
    %3817 = vmatprep.subr.mxu0 0.0
    %3818 = vmatpush2.msra.mxu0 0.0
    %3819 = vmatprep.subr.mxu0 0.0
    %3820 = vmatpush2.msra.mxu0 0.0
    %3821 = vmatprep.subr.mxu0 0.0
    %3822 = vmatpush2.msra.mxu0 0.0
    %3823 = vmatprep.subr.mxu0 0.0
    %3824 = vmatpush2.msra.mxu0 0.0
    %3825 = vmatprep.subr.mxu0 0.0
    %3826 = vmatpush2.msra.mxu0 0.0
    %3827 = vmatprep.subr.mxu0 0.0
    %3828 = vmatpush2.msra.mxu0 0.0
    %3829 = vmatprep.subr.mxu0 0.0
    %3830 = vmatpush2.msra.mxu0 0.0
    %3831 = vmatprep.subr.mxu0 0.0
    %3832 = vmatpush2.msra.mxu0 0.0
    %3833 = vmatprep.subr.mxu0 0.0
    %3834 = vmatpush2.msra.mxu0 0.0
    %3835 = vmatprep.subr.mxu0 0.0
    %3836 = vmatpush2.msra.mxu0 0.0
    %3837 = vmatprep.subr.mxu0 0.0
    %3838 = vmatpush2.msra.mxu0 0.0
    %3839 = vmatprep.mubr.f32.mxu0 0.0
    %3840 = vmatmul.mubr.f32.gmra.mxu0 %v3773
    %v3841 = vpop.f32.mrf.mxu0
    %v3842 = vadd.f32 0.0, %v3841
    %v3843 = vpop.f32.mrf.mxu0
    %3844 = vdwg.mxu0
    %v3845 = vadd.f32 %v3187, %v3842
    %v3846 = vxor.u32 %v3845, 2147483648
    %v3847 = vmul.f32 %v3846, 1.442695
    %v3848 = vpow.pop %v3847
    %v3849 = vadd.f32 %v3848, 1.0
    %v3850 = vrcp.pop %v3849
    %v3851 = vmul.f32 1.0, %v3850
    %v3852 = vtanh.pop %v3845
    %v3853 = vmul.f32 %v3851, %v3763
    %3855 = vrot.lane.b32.xlu0 %v3852, 64
    %v3856 = vpop.permute.xlu0 %3855
    %v3858 = vmul.f32 %v3851, %v3856
    %3860 = vrot.lane.b32.xlu0 %v3858, 32
    %v3861 = vpop.permute.xlu0 %3860
    %v3863 = vadd.f32 %v3853, %v3861
    %v3864 = vtanh.pop %v3863
    %3866 = vrot.lane.b32.xlu0 %v3864, 64
    %v3867 = vpop.permute.xlu0 %3866
    %v3869 = vmul.f32 %v3851, %v3867
    %3871 = vrot.lane.b32.xlu0 %v3869, 32
    %v3872 = vpop.permute.xlu0 %3871
    %v3873 = vsel %vm716, %v3872, 0
    %3875 = vmatprep.subr.mxu0 0.0
    %3876 = vmatpush1.msra.mxu0 0.0
    %3877 = vmatprep.subr.mxu0 0.0
    %3878 = vmatpush1.msra.mxu0 0.0
    %3879 = vmatprep.subr.mxu0 0.0
    %3880 = vmatpush1.msra.mxu0 0.0
    %3881 = vmatprep.subr.mxu0 0.0
    %3882 = vmatpush1.msra.mxu0 0.0
    %3883 = vmatprep.subr.mxu0 0.0
    %3884 = vmatpush1.msra.mxu0 0.0
    %3885 = vmatprep.subr.mxu0 0.0
    %3886 = vmatpush1.msra.mxu0 0.0
    %3887 = vmatprep.subr.mxu0 0.0
    %3888 = vmatpush1.msra.mxu0 0.0
    %3889 = vmatprep.subr.mxu0 0.0
    %3890 = vmatpush1.msra.mxu0 0.0
    %3891 = vmatprep.subr.mxu0 0.0
    %3892 = vmatpush1.msra.mxu0 0.0
    %3893 = vmatprep.subr.mxu0 0.0
    %3894 = vmatpush1.msra.mxu0 0.0
    %3895 = vmatprep.subr.mxu0 0.0
    %3896 = vmatpush1.msra.mxu0 0.0
    %3897 = vmatprep.subr.mxu0 0.0
    %3898 = vmatpush1.msra.mxu0 0.0
    %3899 = vmatprep.subr.mxu0 0.0
    %3900 = vmatpush1.msra.mxu0 %v2901
    %3901 = vmatprep.subr.mxu0 0.0
    %3902 = vmatpush1.msra.mxu0 %v2900
    %3903 = vmatprep.subr.mxu0 0.0
    %3904 = vmatpush1.msra.mxu0 %v2899
    %3905 = vmatprep.subr.mxu0 0.0
    %3906 = vmatpush1.msra.mxu0 %v2898
    %3907 = vmatprep.subr.mxu0 0.0
    %3908 = vmatpush2.msra.mxu0 0.0
    %3909 = vmatprep.subr.mxu0 0.0
    %3910 = vmatpush2.msra.mxu0 0.0
    %3911 = vmatprep.subr.mxu0 0.0
    %3912 = vmatpush2.msra.mxu0 0.0
    %3913 = vmatprep.subr.mxu0 0.0
    %3914 = vmatpush2.msra.mxu0 0.0
    %3915 = vmatprep.subr.mxu0 0.0
    %3916 = vmatpush2.msra.mxu0 0.0
    %3917 = vmatprep.subr.mxu0 0.0
    %3918 = vmatpush2.msra.mxu0 0.0
    %3919 = vmatprep.subr.mxu0 0.0
    %3920 = vmatpush2.msra.mxu0 0.0
    %3921 = vmatprep.subr.mxu0 0.0
    %3922 = vmatpush2.msra.mxu0 0.0
    %3923 = vmatprep.subr.mxu0 0.0
    %3924 = vmatpush2.msra.mxu0 0.0
    %3925 = vmatprep.subr.mxu0 0.0
    %3926 = vmatpush2.msra.mxu0 0.0
    %3927 = vmatprep.subr.mxu0 0.0
    %3928 = vmatpush2.msra.mxu0 0.0
    %3929 = vmatprep.subr.mxu0 0.0
    %3930 = vmatpush2.msra.mxu0 0.0
    %3931 = vmatprep.subr.mxu0 0.0
    %3932 = vmatpush2.msra.mxu0 0.0
    %3933 = vmatprep.subr.mxu0 0.0
    %3934 = vmatpush2.msra.mxu0 0.0
    %3935 = vmatprep.subr.mxu0 0.0
    %3936 = vmatpush2.msra.mxu0 0.0
    %3937 = vmatprep.subr.mxu0 0.0
    %3938 = vmatpush2.msra.mxu0 0.0
    %3939 = vmatprep.mubr.f32.mxu0 0.0
    %3940 = vmatmul.mubr.f32.gmra.mxu0 %v3873
    %v3941 = vpop.f32.mrf.mxu0
    %v3942 = vadd.f32 0.0, %v3941
    %v3943 = vpop.f32.mrf.mxu0
    %3944 = vdwg.mxu0
    %v3945 = vadd.f32 %v3257, %v3942
    %v3946 = vxor.u32 %v3945, 2147483648
    %v3947 = vmul.f32 %v3946, 1.442695
    %v3948 = vpow.pop %v3947
    %v3949 = vadd.f32 %v3948, 1.0
    %v3950 = vrcp.pop %v3949
    %v3951 = vmul.f32 1.0, %v3950
    %v3952 = vtanh.pop %v3945
    %v3953 = vmul.f32 %v3951, %v3863
    %3955 = vrot.lane.b32.xlu0 %v3952, 64
    %v3956 = vpop.permute.xlu0 %3955
    %v3958 = vmul.f32 %v3951, %v3956
    %3960 = vrot.lane.b32.xlu0 %v3958, 32
    %v3961 = vpop.permute.xlu0 %3960
    %v3963 = vadd.f32 %v3953, %v3961
    %v3964 = vtanh.pop %v3963
    %3966 = vrot.lane.b32.xlu0 %v3964, 64
    %v3967 = vpop.permute.xlu0 %3966
    %v3969 = vmul.f32 %v3951, %v3967
    %3971 = vrot.lane.b32.xlu0 %v3969, 32
    %v3972 = vpop.permute.xlu0 %3971
    %v3973 = vsel %vm716, %v3972, 0
    %3975 = vmatprep.subr.mxu0 0.0
    %3976 = vmatpush1.msra.mxu0 0.0
    %3977 = vmatprep.subr.mxu0 0.0
    %3978 = vmatpush1.msra.mxu0 0.0
    %3979 = vmatprep.subr.mxu0 0.0
    %3980 = vmatpush1.msra.mxu0 0.0
    %3981 = vmatprep.subr.mxu0 0.0
    %3982 = vmatpush1.msra.mxu0 0.0
    %3983 = vmatprep.subr.mxu0 0.0
    %3984 = vmatpush1.msra.mxu0 0.0
    %3985 = vmatprep.subr.mxu0 0.0
    %3986 = vmatpush1.msra.mxu0 0.0
    %3987 = vmatprep.subr.mxu0 0.0
    %3988 = vmatpush1.msra.mxu0 0.0
    %3989 = vmatprep.subr.mxu0 0.0
    %3990 = vmatpush1.msra.mxu0 0.0
    %3991 = vmatprep.subr.mxu0 0.0
    %3992 = vmatpush1.msra.mxu0 0.0
    %3993 = vmatprep.subr.mxu0 0.0
    %3994 = vmatpush1.msra.mxu0 0.0
    %3995 = vmatprep.subr.mxu0 0.0
    %3996 = vmatpush1.msra.mxu0 0.0
    %3997 = vmatprep.subr.mxu0 0.0
    %3998 = vmatpush1.msra.mxu0 0.0
    %3999 = vmatprep.subr.mxu0 0.0
    %4000 = vmatpush1.msra.mxu0 %v2901
    %4001 = vmatprep.subr.mxu0 0.0
    %4002 = vmatpush1.msra.mxu0 %v2900
    %4003 = vmatprep.subr.mxu0 0.0
    %4004 = vmatpush1.msra.mxu0 %v2899
    %4005 = vmatprep.subr.mxu0 0.0
    %4006 = vmatpush1.msra.mxu0 %v2898
    %4007 = vmatprep.subr.mxu0 0.0
    %4008 = vmatpush2.msra.mxu0 0.0
    %4009 = vmatprep.subr.mxu0 0.0
    %4010 = vmatpush2.msra.mxu0 0.0
    %4011 = vmatprep.subr.mxu0 0.0
    %4012 = vmatpush2.msra.mxu0 0.0
    %4013 = vmatprep.subr.mxu0 0.0
    %4014 = vmatpush2.msra.mxu0 0.0
    %4015 = vmatprep.subr.mxu0 0.0
    %4016 = vmatpush2.msra.mxu0 0.0
    %4017 = vmatprep.subr.mxu0 0.0
    %4018 = vmatpush2.msra.mxu0 0.0
    %4019 = vmatprep.subr.mxu0 0.0
    %4020 = vmatpush2.msra.mxu0 0.0
    %4021 = vmatprep.subr.mxu0 0.0
    %4022 = vmatpush2.msra.mxu0 0.0
    %4023 = vmatprep.subr.mxu0 0.0
    %4024 = vmatpush2.msra.mxu0 0.0
    %4025 = vmatprep.subr.mxu0 0.0
    %4026 = vmatpush2.msra.mxu0 0.0
    %4027 = vmatprep.subr.mxu0 0.0
    %4028 = vmatpush2.msra.mxu0 0.0
    %4029 = vmatprep.subr.mxu0 0.0
    %4030 = vmatpush2.msra.mxu0 0.0
    %4031 = vmatprep.subr.mxu0 0.0
    %4032 = vmatpush2.msra.mxu0 0.0
    %4033 = vmatprep.subr.mxu0 0.0
    %4034 = vmatpush2.msra.mxu0 0.0
    %4035 = vmatprep.subr.mxu0 0.0
    %4036 = vmatpush2.msra.mxu0 0.0
    %4037 = vmatprep.subr.mxu0 0.0
    %4038 = vmatpush2.msra.mxu0 0.0
    %4039 = vmatprep.mubr.f32.mxu0 0.0
    %4040 = vmatmul.mubr.f32.gmra.mxu0 %v3973
    %v4041 = vpop.f32.mrf.mxu0
    %v4042 = vadd.f32 0.0, %v4041
    %v4043 = vpop.f32.mrf.mxu0
    %4044 = vdwg.mxu0
    %v4045 = vadd.f32 %v3327, %v4042
    %v4046 = vxor.u32 %v4045, 2147483648
    %v4047 = vmul.f32 %v4046, 1.442695
    %v4048 = vpow.pop %v4047
    %v4049 = vadd.f32 %v4048, 1.0
    %v4050 = vrcp.pop %v4049
    %v4051 = vmul.f32 1.0, %v4050
    %v4052 = vtanh.pop %v4045
    %v4053 = vmul.f32 %v4051, %v3963
    %4055 = vrot.lane.b32.xlu0 %v4052, 64
    %v4056 = vpop.permute.xlu0 %4055
    %v4058 = vmul.f32 %v4051, %v4056
    %4060 = vrot.lane.b32.xlu0 %v4058, 32
    %v4061 = vpop.permute.xlu0 %4060
    %v4063 = vadd.f32 %v4053, %v4061
    %v4064 = vtanh.pop %v4063
    %4066 = vrot.lane.b32.xlu0 %v4064, 64
    %v4067 = vpop.permute.xlu0 %4066
    %v4069 = vmul.f32 %v4051, %v4067
    %4071 = vrot.lane.b32.xlu0 %v4069, 32
    %v4072 = vpop.permute.xlu0 %4071
    %v4073 = vsel %vm716, %v4072, 0
    %4075 = vmatprep.subr.mxu0 0.0
    %4076 = vmatpush1.msra.mxu0 0.0
    %4077 = vmatprep.subr.mxu0 0.0
    %4078 = vmatpush1.msra.mxu0 0.0
    %4079 = vmatprep.subr.mxu0 0.0
    %4080 = vmatpush1.msra.mxu0 0.0
    %4081 = vmatprep.subr.mxu0 0.0
    %4082 = vmatpush1.msra.mxu0 0.0
    %4083 = vmatprep.subr.mxu0 0.0
    %4084 = vmatpush1.msra.mxu0 0.0
    %4085 = vmatprep.subr.mxu0 0.0
    %4086 = vmatpush1.msra.mxu0 0.0
    %4087 = vmatprep.subr.mxu0 0.0
    %4088 = vmatpush1.msra.mxu0 0.0
    %4089 = vmatprep.subr.mxu0 0.0
    %4090 = vmatpush1.msra.mxu0 0.0
    %4091 = vmatprep.subr.mxu0 0.0
    %4092 = vmatpush1.msra.mxu0 0.0
    %4093 = vmatprep.subr.mxu0 0.0
    %4094 = vmatpush1.msra.mxu0 0.0
    %4095 = vmatprep.subr.mxu0 0.0
    %4096 = vmatpush1.msra.mxu0 0.0
    %4097 = vmatprep.subr.mxu0 0.0
    %4098 = vmatpush1.msra.mxu0 0.0
    %4099 = vmatprep.subr.mxu0 0.0
    %4100 = vmatpush1.msra.mxu0 %v2901
    %4101 = vmatprep.subr.mxu0 0.0
    %4102 = vmatpush1.msra.mxu0 %v2900
    %4103 = vmatprep.subr.mxu0 0.0
    %4104 = vmatpush1.msra.mxu0 %v2899
    %4105 = vmatprep.subr.mxu0 0.0
    %4106 = vmatpush1.msra.mxu0 %v2898
    %4107 = vmatprep.subr.mxu0 0.0
    %4108 = vmatpush2.msra.mxu0 0.0
    %4109 = vmatprep.subr.mxu0 0.0
    %4110 = vmatpush2.msra.mxu0 0.0
    %4111 = vmatprep.subr.mxu0 0.0
    %4112 = vmatpush2.msra.mxu0 0.0
    %4113 = vmatprep.subr.mxu0 0.0
    %4114 = vmatpush2.msra.mxu0 0.0
    %4115 = vmatprep.subr.mxu0 0.0
    %4116 = vmatpush2.msra.mxu0 0.0
    %4117 = vmatprep.subr.mxu0 0.0
    %4118 = vmatpush2.msra.mxu0 0.0
    %4119 = vmatprep.subr.mxu0 0.0
    %4120 = vmatpush2.msra.mxu0 0.0
    %4121 = vmatprep.subr.mxu0 0.0
    %4122 = vmatpush2.msra.mxu0 0.0
    %4123 = vmatprep.subr.mxu0 0.0
    %4124 = vmatpush2.msra.mxu0 0.0
    %4125 = vmatprep.subr.mxu0 0.0
    %4126 = vmatpush2.msra.mxu0 0.0
    %4127 = vmatprep.subr.mxu0 0.0
    %4128 = vmatpush2.msra.mxu0 0.0
    %4129 = vmatprep.subr.mxu0 0.0
    %4130 = vmatpush2.msra.mxu0 0.0
    %4131 = vmatprep.subr.mxu0 0.0
    %4132 = vmatpush2.msra.mxu0 0.0
    %4133 = vmatprep.subr.mxu0 0.0
    %4134 = vmatpush2.msra.mxu0 0.0
    %4135 = vmatprep.subr.mxu0 0.0
    %4136 = vmatpush2.msra.mxu0 0.0
    %4137 = vmatprep.subr.mxu0 0.0
    %4138 = vmatpush2.msra.mxu0 0.0
    %4139 = vmatprep.mubr.f32.mxu0 0.0
    %4140 = vmatmul.mubr.f32.gmra.mxu0 %v4073
    %v4141 = vpop.f32.mrf.mxu0
    %v4142 = vadd.f32 0.0, %v4141
    %v4143 = vpop.f32.mrf.mxu0
    %4144 = vdwg.mxu0
    %v4145 = vadd.f32 %v3397, %v4142
    %v4146 = vxor.u32 %v4145, 2147483648
    %v4147 = vmul.f32 %v4146, 1.442695
    %v4148 = vpow.pop %v4147
    %v4149 = vadd.f32 %v4148, 1.0
    %v4150 = vrcp.pop %v4149
    %v4151 = vmul.f32 1.0, %v4150
    %v4152 = vtanh.pop %v4145
    %v4153 = vmul.f32 %v4151, %v4063
    %4155 = vrot.lane.b32.xlu0 %v4152, 64
    %v4156 = vpop.permute.xlu0 %4155
    %v4158 = vmul.f32 %v4151, %v4156
    %4160 = vrot.lane.b32.xlu0 %v4158, 32
    %v4161 = vpop.permute.xlu0 %4160
    %v4163 = vadd.f32 %v4153, %v4161
    %v4164 = vtanh.pop %v4163
    %4166 = vrot.lane.b32.xlu0 %v4164, 64
    %v4167 = vpop.permute.xlu0 %4166
    %v4169 = vmul.f32 %v4151, %v4167
    %4171 = vrot.lane.b32.xlu0 %v4169, 32
    %v4172 = vpop.permute.xlu0 %4171
    %v4173 = vsel %vm716, %v4172, 0
    %4175 = vmatprep.subr.mxu0 0.0
    %4176 = vmatpush1.msra.mxu0 0.0
    %4177 = vmatprep.subr.mxu0 0.0
    %4178 = vmatpush1.msra.mxu0 0.0
    %4179 = vmatprep.subr.mxu0 0.0
    %4180 = vmatpush1.msra.mxu0 0.0
    %4181 = vmatprep.subr.mxu0 0.0
    %4182 = vmatpush1.msra.mxu0 0.0
    %4183 = vmatprep.subr.mxu0 0.0
    %4184 = vmatpush1.msra.mxu0 0.0
    %4185 = vmatprep.subr.mxu0 0.0
    %4186 = vmatpush1.msra.mxu0 0.0
    %4187 = vmatprep.subr.mxu0 0.0
    %4188 = vmatpush1.msra.mxu0 0.0
    %4189 = vmatprep.subr.mxu0 0.0
    %4190 = vmatpush1.msra.mxu0 0.0
    %4191 = vmatprep.subr.mxu0 0.0
    %4192 = vmatpush1.msra.mxu0 0.0
    %4193 = vmatprep.subr.mxu0 0.0
    %4194 = vmatpush1.msra.mxu0 0.0
    %4195 = vmatprep.subr.mxu0 0.0
    %4196 = vmatpush1.msra.mxu0 0.0
    %4197 = vmatprep.subr.mxu0 0.0
    %4198 = vmatpush1.msra.mxu0 0.0
    %4199 = vmatprep.subr.mxu0 0.0
    %4200 = vmatpush1.msra.mxu0 %v2901
    %4201 = vmatprep.subr.mxu0 0.0
    %4202 = vmatpush1.msra.mxu0 %v2900
    %4203 = vmatprep.subr.mxu0 0.0
    %4204 = vmatpush1.msra.mxu0 %v2899
    %4205 = vmatprep.subr.mxu0 0.0
    %4206 = vmatpush1.msra.mxu0 %v2898
    %4207 = vmatprep.subr.mxu0 0.0
    %4208 = vmatpush2.msra.mxu0 0.0
    %4209 = vmatprep.subr.mxu0 0.0
    %4210 = vmatpush2.msra.mxu0 0.0
    %4211 = vmatprep.subr.mxu0 0.0
    %4212 = vmatpush2.msra.mxu0 0.0
    %4213 = vmatprep.subr.mxu0 0.0
    %4214 = vmatpush2.msra.mxu0 0.0
    %4215 = vmatprep.subr.mxu0 0.0
    %4216 = vmatpush2.msra.mxu0 0.0
    %4217 = vmatprep.subr.mxu0 0.0
    %4218 = vmatpush2.msra.mxu0 0.0
    %4219 = vmatprep.subr.mxu0 0.0
    %4220 = vmatpush2.msra.mxu0 0.0
    %4221 = vmatprep.subr.mxu0 0.0
    %4222 = vmatpush2.msra.mxu0 0.0
    %4223 = vmatprep.subr.mxu0 0.0
    %4224 = vmatpush2.msra.mxu0 0.0
    %4225 = vmatprep.subr.mxu0 0.0
    %4226 = vmatpush2.msra.mxu0 0.0
    %4227 = vmatprep.subr.mxu0 0.0
    %4228 = vmatpush2.msra.mxu0 0.0
    %4229 = vmatprep.subr.mxu0 0.0
    %4230 = vmatpush2.msra.mxu0 0.0
    %4231 = vmatprep.subr.mxu0 0.0
    %4232 = vmatpush2.msra.mxu0 0.0
    %4233 = vmatprep.subr.mxu0 0.0
    %4234 = vmatpush2.msra.mxu0 0.0
    %4235 = vmatprep.subr.mxu0 0.0
    %4236 = vmatpush2.msra.mxu0 0.0
    %4237 = vmatprep.subr.mxu0 0.0
    %4238 = vmatpush2.msra.mxu0 0.0
    %4239 = vmatprep.mubr.f32.mxu0 0.0
    %4240 = vmatmul.mubr.f32.gmra.mxu0 %v4173
    %v4241 = vpop.f32.mrf.mxu0
    %v4242 = vadd.f32 0.0, %v4241
    %v4243 = vpop.f32.mrf.mxu0
    %4244 = vdwg.mxu0
    %v4245 = vadd.f32 %v3472, %v4242
    %v4246 = vxor.u32 %v4245, 2147483648
    %v4247 = vmul.f32 %v4246, 1.442695
    %v4248 = vpow.pop %v4247
    %v4249 = vadd.f32 %v4248, 1.0
    %v4250 = vrcp.pop %v4249
    %v4251 = vmul.f32 1.0, %v4250
    %v4252 = vtanh.pop %v4245
    %v4253 = vmul.f32 %v4251, %v4163
    %4255 = vrot.lane.b32.xlu0 %v4252, 64
    %v4256 = vpop.permute.xlu0 %4255
    %v4258 = vmul.f32 %v4251, %v4256
    %4260 = vrot.lane.b32.xlu0 %v4258, 32
    %v4261 = vpop.permute.xlu0 %4260
    %v4263 = vadd.f32 %v4253, %v4261
    %v4264 = vtanh.pop %v4263
    %4266 = vrot.lane.b32.xlu0 %v4264, 64
    %v4267 = vpop.permute.xlu0 %4266
    %v4269 = vmul.f32 %v4251, %v4267
    %s4270 = scalar_lea.vmem [#allocation7], 64
    %v4271 = vld [vmem:[%s4270] sm:$0xff]
    %v4272 = vld [vmem:[%s4270 + $0x8] sm:$0xff]
    %v4273 = vld [vmem:[%s4270 + $0x10] sm:$0xff]
    %v4274 = vld [vmem:[%s4270 + $0x18] sm:$0xff]
    %s4275 = scalar_lea.vmem [#allocation8], 96
    %v4276 = vld [vmem:[%s4275] sm:$0xff]
    %v4277 = vld [vmem:[%s4275 + $0x8] sm:$0xff]
    %v4278 = vld [vmem:[%s4275 + $0x10] sm:$0xff]
    %v4279 = vld [vmem:[%s4275 + $0x18] sm:$0xff]
    %s4280 = scalar_lea.vmem %s4, 3
    %v4281 = vld [vmem:[%s4280] sm:$0x1]
    %v4283 = vlaneseq
    %v4284 = vshrl.u32 %v4283, 7
    %v4285 = vsub.s32 0, %v4284
    %v4286 = vrot.slane %v4281, %v4285
    %4288 = vmatprep.subr.mxu0 0.0
    %4289 = vmatpush1.msra.mxu0 0.0
    %4290 = vmatprep.subr.mxu0 0.0
    %4291 = vmatpush1.msra.mxu0 0.0
    %4292 = vmatprep.subr.mxu0 0.0
    %4293 = vmatpush1.msra.mxu0 0.0
    %4294 = vmatprep.subr.mxu0 0.0
    %4295 = vmatpush1.msra.mxu0 0.0
    %4296 = vmatprep.subr.mxu0 0.0
    %4297 = vmatpush1.msra.mxu0 0.0
    %4298 = vmatprep.subr.mxu0 0.0
    %4299 = vmatpush1.msra.mxu0 0.0
    %4300 = vmatprep.subr.mxu0 0.0
    %4301 = vmatpush1.msra.mxu0 0.0
    %4302 = vmatprep.subr.mxu0 0.0
    %4303 = vmatpush1.msra.mxu0 0.0
    %4304 = vmatprep.subr.mxu0 0.0
    %4305 = vmatpush1.msra.mxu0 0.0
    %4306 = vmatprep.subr.mxu0 0.0
    %4307 = vmatpush1.msra.mxu0 0.0
    %4308 = vmatprep.subr.mxu0 0.0
    %4309 = vmatpush1.msra.mxu0 0.0
    %4310 = vmatprep.subr.mxu0 0.0
    %4311 = vmatpush1.msra.mxu0 0.0
    %4312 = vmatprep.subr.mxu0 0.0
    %4313 = vmatpush1.msra.mxu0 %v4274
    %4314 = vmatprep.subr.mxu0 0.0
    %4315 = vmatpush1.msra.mxu0 %v4273
    %4316 = vmatprep.subr.mxu0 0.0
    %4317 = vmatpush1.msra.mxu0 %v4272
    %4318 = vmatprep.subr.mxu0 0.0
    %4319 = vmatpush1.msra.mxu0 %v4271
    %4320 = vmatprep.subr.mxu0 0.0
    %4321 = vmatpush2.msra.mxu0 0.0
    %4322 = vmatprep.subr.mxu0 0.0
    %4323 = vmatpush2.msra.mxu0 0.0
    %4324 = vmatprep.subr.mxu0 0.0
    %4325 = vmatpush2.msra.mxu0 0.0
    %4326 = vmatprep.subr.mxu0 0.0
    %4327 = vmatpush2.msra.mxu0 0.0
    %4328 = vmatprep.subr.mxu0 0.0
    %4329 = vmatpush2.msra.mxu0 0.0
    %4330 = vmatprep.subr.mxu0 0.0
    %4331 = vmatpush2.msra.mxu0 0.0
    %4332 = vmatprep.subr.mxu0 0.0
    %4333 = vmatpush2.msra.mxu0 0.0
    %4334 = vmatprep.subr.mxu0 0.0
    %4335 = vmatpush2.msra.mxu0 0.0
    %4336 = vmatprep.subr.mxu0 0.0
    %4337 = vmatpush2.msra.mxu0 0.0
    %4338 = vmatprep.subr.mxu0 0.0
    %4339 = vmatpush2.msra.mxu0 0.0
    %4340 = vmatprep.subr.mxu0 0.0
    %4341 = vmatpush2.msra.mxu0 0.0
    %4342 = vmatprep.subr.mxu0 0.0
    %4343 = vmatpush2.msra.mxu0 0.0
    %4344 = vmatprep.subr.mxu0 0.0
    %4345 = vmatpush2.msra.mxu0 0.0
    %4346 = vmatprep.subr.mxu0 0.0
    %4347 = vmatpush2.msra.mxu0 0.0
    %4348 = vmatprep.subr.mxu0 0.0
    %4349 = vmatpush2.msra.mxu0 0.0
    %4350 = vmatprep.subr.mxu0 0.0
    %4351 = vmatpush2.msra.mxu0 0.0
    %4352 = vmatprep.mubr.f32.mxu0 0.0
    %4353 = vmatmul.mubr.f32.gmra.mxu0 %v3573
    %v4354 = vpop.f32.mrf.mxu0
    %v4355 = vadd.f32 %v4286, %v4354
    %v4356 = vpop.f32.mrf.mxu0
    %4357 = vdwg.mxu0
    %4358 = vmatprep.subr.mxu0 0.0
    %4359 = vmatpush1.msra.mxu0 0.0
    %4360 = vmatprep.subr.mxu0 0.0
    %4361 = vmatpush1.msra.mxu0 0.0
    %4362 = vmatprep.subr.mxu0 0.0
    %4363 = vmatpush1.msra.mxu0 0.0
    %4364 = vmatprep.subr.mxu0 0.0
    %4365 = vmatpush1.msra.mxu0 0.0
    %4366 = vmatprep.subr.mxu0 0.0
    %4367 = vmatpush1.msra.mxu0 0.0
    %4368 = vmatprep.subr.mxu0 0.0
    %4369 = vmatpush1.msra.mxu0 0.0
    %4370 = vmatprep.subr.mxu0 0.0
    %4371 = vmatpush1.msra.mxu0 0.0
    %4372 = vmatprep.subr.mxu0 0.0
    %4373 = vmatpush1.msra.mxu0 0.0
    %4374 = vmatprep.subr.mxu0 0.0
    %4375 = vmatpush1.msra.mxu0 0.0
    %4376 = vmatprep.subr.mxu0 0.0
    %4377 = vmatpush1.msra.mxu0 0.0
    %4378 = vmatprep.subr.mxu0 0.0
    %4379 = vmatpush1.msra.mxu0 0.0
    %4380 = vmatprep.subr.mxu0 0.0
    %4381 = vmatpush1.msra.mxu0 0.0
    %4382 = vmatprep.subr.mxu0 0.0
    %4383 = vmatpush1.msra.mxu0 %v4274
    %4384 = vmatprep.subr.mxu0 0.0
    %4385 = vmatpush1.msra.mxu0 %v4273
    %4386 = vmatprep.subr.mxu0 0.0
    %4387 = vmatpush1.msra.mxu0 %v4272
    %4388 = vmatprep.subr.mxu0 0.0
    %4389 = vmatpush1.msra.mxu0 %v4271
    %4390 = vmatprep.subr.mxu0 0.0
    %4391 = vmatpush2.msra.mxu0 0.0
    %4392 = vmatprep.subr.mxu0 0.0
    %4393 = vmatpush2.msra.mxu0 0.0
    %4394 = vmatprep.subr.mxu0 0.0
    %4395 = vmatpush2.msra.mxu0 0.0
    %4396 = vmatprep.subr.mxu0 0.0
    %4397 = vmatpush2.msra.mxu0 0.0
    %4398 = vmatprep.subr.mxu0 0.0
    %4399 = vmatpush2.msra.mxu0 0.0
    %4400 = vmatprep.subr.mxu0 0.0
    %4401 = vmatpush2.msra.mxu0 0.0
    %4402 = vmatprep.subr.mxu0 0.0
    %4403 = vmatpush2.msra.mxu0 0.0
    %4404 = vmatprep.subr.mxu0 0.0
    %4405 = vmatpush2.msra.mxu0 0.0
    %4406 = vmatprep.subr.mxu0 0.0
    %4407 = vmatpush2.msra.mxu0 0.0
    %4408 = vmatprep.subr.mxu0 0.0
    %4409 = vmatpush2.msra.mxu0 0.0
    %4410 = vmatprep.subr.mxu0 0.0
    %4411 = vmatpush2.msra.mxu0 0.0
    %4412 = vmatprep.subr.mxu0 0.0
    %4413 = vmatpush2.msra.mxu0 0.0
    %4414 = vmatprep.subr.mxu0 0.0
    %4415 = vmatpush2.msra.mxu0 0.0
    %4416 = vmatprep.subr.mxu0 0.0
    %4417 = vmatpush2.msra.mxu0 0.0
    %4418 = vmatprep.subr.mxu0 0.0
    %4419 = vmatpush2.msra.mxu0 0.0
    %4420 = vmatprep.subr.mxu0 0.0
    %4421 = vmatpush2.msra.mxu0 0.0
    %4422 = vmatprep.mubr.f32.mxu0 0.0
    %4423 = vmatmul.mubr.f32.gmra.mxu0 %v3673
    %v4424 = vpop.f32.mrf.mxu0
    %v4425 = vadd.f32 %v4286, %v4424
    %v4426 = vpop.f32.mrf.mxu0
    %4427 = vdwg.mxu0
    %4428 = vmatprep.subr.mxu0 0.0
    %4429 = vmatpush1.msra.mxu0 0.0
    %4430 = vmatprep.subr.mxu0 0.0
    %4431 = vmatpush1.msra.mxu0 0.0
    %4432 = vmatprep.subr.mxu0 0.0
    %4433 = vmatpush1.msra.mxu0 0.0
    %4434 = vmatprep.subr.mxu0 0.0
    %4435 = vmatpush1.msra.mxu0 0.0
    %4436 = vmatprep.subr.mxu0 0.0
    %4437 = vmatpush1.msra.mxu0 0.0
    %4438 = vmatprep.subr.mxu0 0.0
    %4439 = vmatpush1.msra.mxu0 0.0
    %4440 = vmatprep.subr.mxu0 0.0
    %4441 = vmatpush1.msra.mxu0 0.0
    %4442 = vmatprep.subr.mxu0 0.0
    %4443 = vmatpush1.msra.mxu0 0.0
    %4444 = vmatprep.subr.mxu0 0.0
    %4445 = vmatpush1.msra.mxu0 0.0
    %4446 = vmatprep.subr.mxu0 0.0
    %4447 = vmatpush1.msra.mxu0 0.0
    %4448 = vmatprep.subr.mxu0 0.0
    %4449 = vmatpush1.msra.mxu0 0.0
    %4450 = vmatprep.subr.mxu0 0.0
    %4451 = vmatpush1.msra.mxu0 0.0
    %4452 = vmatprep.subr.mxu0 0.0
    %4453 = vmatpush1.msra.mxu0 %v4274
    %4454 = vmatprep.subr.mxu0 0.0
    %4455 = vmatpush1.msra.mxu0 %v4273
    %4456 = vmatprep.subr.mxu0 0.0
    %4457 = vmatpush1.msra.mxu0 %v4272
    %4458 = vmatprep.subr.mxu0 0.0
    %4459 = vmatpush1.msra.mxu0 %v4271
    %4460 = vmatprep.subr.mxu0 0.0
    %4461 = vmatpush2.msra.mxu0 0.0
    %4462 = vmatprep.subr.mxu0 0.0
    %4463 = vmatpush2.msra.mxu0 0.0
    %4464 = vmatprep.subr.mxu0 0.0
    %4465 = vmatpush2.msra.mxu0 0.0
    %4466 = vmatprep.subr.mxu0 0.0
    %4467 = vmatpush2.msra.mxu0 0.0
    %4468 = vmatprep.subr.mxu0 0.0
    %4469 = vmatpush2.msra.mxu0 0.0
    %4470 = vmatprep.subr.mxu0 0.0
    %4471 = vmatpush2.msra.mxu0 0.0
    %4472 = vmatprep.subr.mxu0 0.0
    %4473 = vmatpush2.msra.mxu0 0.0
    %4474 = vmatprep.subr.mxu0 0.0
    %4475 = vmatpush2.msra.mxu0 0.0
    %4476 = vmatprep.subr.mxu0 0.0
    %4477 = vmatpush2.msra.mxu0 0.0
    %4478 = vmatprep.subr.mxu0 0.0
    %4479 = vmatpush2.msra.mxu0 0.0
    %4480 = vmatprep.subr.mxu0 0.0
    %4481 = vmatpush2.msra.mxu0 0.0
    %4482 = vmatprep.subr.mxu0 0.0
    %4483 = vmatpush2.msra.mxu0 0.0
    %4484 = vmatprep.subr.mxu0 0.0
    %4485 = vmatpush2.msra.mxu0 0.0
    %4486 = vmatprep.subr.mxu0 0.0
    %4487 = vmatpush2.msra.mxu0 0.0
    %4488 = vmatprep.subr.mxu0 0.0
    %4489 = vmatpush2.msra.mxu0 0.0
    %4490 = vmatprep.subr.mxu0 0.0
    %4491 = vmatpush2.msra.mxu0 0.0
    %4492 = vmatprep.mubr.f32.mxu0 0.0
    %4493 = vmatmul.mubr.f32.gmra.mxu0 %v3773
    %v4494 = vpop.f32.mrf.mxu0
    %v4495 = vadd.f32 %v4286, %v4494
    %v4496 = vpop.f32.mrf.mxu0
    %4497 = vdwg.mxu0
    %4498 = vmatprep.subr.mxu0 0.0
    %4499 = vmatpush1.msra.mxu0 0.0
    %4500 = vmatprep.subr.mxu0 0.0
    %4501 = vmatpush1.msra.mxu0 0.0
    %4502 = vmatprep.subr.mxu0 0.0
    %4503 = vmatpush1.msra.mxu0 0.0
    %4504 = vmatprep.subr.mxu0 0.0
    %4505 = vmatpush1.msra.mxu0 0.0
    %4506 = vmatprep.subr.mxu0 0.0
    %4507 = vmatpush1.msra.mxu0 0.0
    %4508 = vmatprep.subr.mxu0 0.0
    %4509 = vmatpush1.msra.mxu0 0.0
    %4510 = vmatprep.subr.mxu0 0.0
    %4511 = vmatpush1.msra.mxu0 0.0
    %4512 = vmatprep.subr.mxu0 0.0
    %4513 = vmatpush1.msra.mxu0 0.0
    %4514 = vmatprep.subr.mxu0 0.0
    %4515 = vmatpush1.msra.mxu0 0.0
    %4516 = vmatprep.subr.mxu0 0.0
    %4517 = vmatpush1.msra.mxu0 0.0
    %4518 = vmatprep.subr.mxu0 0.0
    %4519 = vmatpush1.msra.mxu0 0.0
    %4520 = vmatprep.subr.mxu0 0.0
    %4521 = vmatpush1.msra.mxu0 0.0
    %4522 = vmatprep.subr.mxu0 0.0
    %4523 = vmatpush1.msra.mxu0 %v4274
    %4524 = vmatprep.subr.mxu0 0.0
    %4525 = vmatpush1.msra.mxu0 %v4273
    %4526 = vmatprep.subr.mxu0 0.0
    %4527 = vmatpush1.msra.mxu0 %v4272
    %4528 = vmatprep.subr.mxu0 0.0
    %4529 = vmatpush1.msra.mxu0 %v4271
    %4530 = vmatprep.subr.mxu0 0.0
    %4531 = vmatpush2.msra.mxu0 0.0
    %4532 = vmatprep.subr.mxu0 0.0
    %4533 = vmatpush2.msra.mxu0 0.0
    %4534 = vmatprep.subr.mxu0 0.0
    %4535 = vmatpush2.msra.mxu0 0.0
    %4536 = vmatprep.subr.mxu0 0.0
    %4537 = vmatpush2.msra.mxu0 0.0
    %4538 = vmatprep.subr.mxu0 0.0
    %4539 = vmatpush2.msra.mxu0 0.0
    %4540 = vmatprep.subr.mxu0 0.0
    %4541 = vmatpush2.msra.mxu0 0.0
    %4542 = vmatprep.subr.mxu0 0.0
    %4543 = vmatpush2.msra.mxu0 0.0
    %4544 = vmatprep.subr.mxu0 0.0
    %4545 = vmatpush2.msra.mxu0 0.0
    %4546 = vmatprep.subr.mxu0 0.0
    %4547 = vmatpush2.msra.mxu0 0.0
    %4548 = vmatprep.subr.mxu0 0.0
    %4549 = vmatpush2.msra.mxu0 0.0
    %4550 = vmatprep.subr.mxu0 0.0
    %4551 = vmatpush2.msra.mxu0 0.0
    %4552 = vmatprep.subr.mxu0 0.0
    %4553 = vmatpush2.msra.mxu0 0.0
    %4554 = vmatprep.subr.mxu0 0.0
    %4555 = vmatpush2.msra.mxu0 0.0
    %4556 = vmatprep.subr.mxu0 0.0
    %4557 = vmatpush2.msra.mxu0 0.0
    %4558 = vmatprep.subr.mxu0 0.0
    %4559 = vmatpush2.msra.mxu0 0.0
    %4560 = vmatprep.subr.mxu0 0.0
    %4561 = vmatpush2.msra.mxu0 0.0
    %4562 = vmatprep.mubr.f32.mxu0 0.0
    %4563 = vmatmul.mubr.f32.gmra.mxu0 %v3873
    %v4564 = vpop.f32.mrf.mxu0
    %v4565 = vadd.f32 %v4286, %v4564
    %v4566 = vpop.f32.mrf.mxu0
    %4567 = vdwg.mxu0
    %4568 = vmatprep.subr.mxu0 0.0
    %4569 = vmatpush1.msra.mxu0 0.0
    %4570 = vmatprep.subr.mxu0 0.0
    %4571 = vmatpush1.msra.mxu0 0.0
    %4572 = vmatprep.subr.mxu0 0.0
    %4573 = vmatpush1.msra.mxu0 0.0
    %4574 = vmatprep.subr.mxu0 0.0
    %4575 = vmatpush1.msra.mxu0 0.0
    %4576 = vmatprep.subr.mxu0 0.0
    %4577 = vmatpush1.msra.mxu0 0.0
    %4578 = vmatprep.subr.mxu0 0.0
    %4579 = vmatpush1.msra.mxu0 0.0
    %4580 = vmatprep.subr.mxu0 0.0
    %4581 = vmatpush1.msra.mxu0 0.0
    %4582 = vmatprep.subr.mxu0 0.0
    %4583 = vmatpush1.msra.mxu0 0.0
    %4584 = vmatprep.subr.mxu0 0.0
    %4585 = vmatpush1.msra.mxu0 0.0
    %4586 = vmatprep.subr.mxu0 0.0
    %4587 = vmatpush1.msra.mxu0 0.0
    %4588 = vmatprep.subr.mxu0 0.0
    %4589 = vmatpush1.msra.mxu0 0.0
    %4590 = vmatprep.subr.mxu0 0.0
    %4591 = vmatpush1.msra.mxu0 0.0
    %4592 = vmatprep.subr.mxu0 0.0
    %4593 = vmatpush1.msra.mxu0 %v4274
    %4594 = vmatprep.subr.mxu0 0.0
    %4595 = vmatpush1.msra.mxu0 %v4273
    %4596 = vmatprep.subr.mxu0 0.0
    %4597 = vmatpush1.msra.mxu0 %v4272
    %4598 = vmatprep.subr.mxu0 0.0
    %4599 = vmatpush1.msra.mxu0 %v4271
    %4600 = vmatprep.subr.mxu0 0.0
    %4601 = vmatpush2.msra.mxu0 0.0
    %4602 = vmatprep.subr.mxu0 0.0
    %4603 = vmatpush2.msra.mxu0 0.0
    %4604 = vmatprep.subr.mxu0 0.0
    %4605 = vmatpush2.msra.mxu0 0.0
    %4606 = vmatprep.subr.mxu0 0.0
    %4607 = vmatpush2.msra.mxu0 0.0
    %4608 = vmatprep.subr.mxu0 0.0
    %4609 = vmatpush2.msra.mxu0 0.0
    %4610 = vmatprep.subr.mxu0 0.0
    %4611 = vmatpush2.msra.mxu0 0.0
    %4612 = vmatprep.subr.mxu0 0.0
    %4613 = vmatpush2.msra.mxu0 0.0
    %4614 = vmatprep.subr.mxu0 0.0
    %4615 = vmatpush2.msra.mxu0 0.0
    %4616 = vmatprep.subr.mxu0 0.0
    %4617 = vmatpush2.msra.mxu0 0.0
    %4618 = vmatprep.subr.mxu0 0.0
    %4619 = vmatpush2.msra.mxu0 0.0
    %4620 = vmatprep.subr.mxu0 0.0
    %4621 = vmatpush2.msra.mxu0 0.0
    %4622 = vmatprep.subr.mxu0 0.0
    %4623 = vmatpush2.msra.mxu0 0.0
    %4624 = vmatprep.subr.mxu0 0.0
    %4625 = vmatpush2.msra.mxu0 0.0
    %4626 = vmatprep.subr.mxu0 0.0
    %4627 = vmatpush2.msra.mxu0 0.0
    %4628 = vmatprep.subr.mxu0 0.0
    %4629 = vmatpush2.msra.mxu0 0.0
    %4630 = vmatprep.subr.mxu0 0.0
    %4631 = vmatpush2.msra.mxu0 0.0
    %4632 = vmatprep.mubr.f32.mxu0 0.0
    %4633 = vmatmul.mubr.f32.gmra.mxu0 %v3973
    %v4634 = vpop.f32.mrf.mxu0
    %v4635 = vadd.f32 %v4286, %v4634
    %v4636 = vpop.f32.mrf.mxu0
    %4637 = vdwg.mxu0
    %4638 = vmatprep.subr.mxu0 0.0
    %4639 = vmatpush1.msra.mxu0 0.0
    %4640 = vmatprep.subr.mxu0 0.0
    %4641 = vmatpush1.msra.mxu0 0.0
    %4642 = vmatprep.subr.mxu0 0.0
    %4643 = vmatpush1.msra.mxu0 0.0
    %4644 = vmatprep.subr.mxu0 0.0
    %4645 = vmatpush1.msra.mxu0 0.0
    %4646 = vmatprep.subr.mxu0 0.0
    %4647 = vmatpush1.msra.mxu0 0.0
    %4648 = vmatprep.subr.mxu0 0.0
    %4649 = vmatpush1.msra.mxu0 0.0
    %4650 = vmatprep.subr.mxu0 0.0
    %4651 = vmatpush1.msra.mxu0 0.0
    %4652 = vmatprep.subr.mxu0 0.0
    %4653 = vmatpush1.msra.mxu0 0.0
    %4654 = vmatprep.subr.mxu0 0.0
    %4655 = vmatpush1.msra.mxu0 0.0
    %4656 = vmatprep.subr.mxu0 0.0
    %4657 = vmatpush1.msra.mxu0 0.0
    %4658 = vmatprep.subr.mxu0 0.0
    %4659 = vmatpush1.msra.mxu0 0.0
    %4660 = vmatprep.subr.mxu0 0.0
    %4661 = vmatpush1.msra.mxu0 0.0
    %4662 = vmatprep.subr.mxu0 0.0
    %4663 = vmatpush1.msra.mxu0 %v4274
    %4664 = vmatprep.subr.mxu0 0.0
    %4665 = vmatpush1.msra.mxu0 %v4273
    %4666 = vmatprep.subr.mxu0 0.0
    %4667 = vmatpush1.msra.mxu0 %v4272
    %4668 = vmatprep.subr.mxu0 0.0
    %4669 = vmatpush1.msra.mxu0 %v4271
    %4670 = vmatprep.subr.mxu0 0.0
    %4671 = vmatpush2.msra.mxu0 0.0
    %4672 = vmatprep.subr.mxu0 0.0
    %4673 = vmatpush2.msra.mxu0 0.0
    %4674 = vmatprep.subr.mxu0 0.0
    %4675 = vmatpush2.msra.mxu0 0.0
    %4676 = vmatprep.subr.mxu0 0.0
    %4677 = vmatpush2.msra.mxu0 0.0
    %4678 = vmatprep.subr.mxu0 0.0
    %4679 = vmatpush2.msra.mxu0 0.0
    %4680 = vmatprep.subr.mxu0 0.0
    %4681 = vmatpush2.msra.mxu0 0.0
    %4682 = vmatprep.subr.mxu0 0.0
    %4683 = vmatpush2.msra.mxu0 0.0
    %4684 = vmatprep.subr.mxu0 0.0
    %4685 = vmatpush2.msra.mxu0 0.0
    %4686 = vmatprep.subr.mxu0 0.0
    %4687 = vmatpush2.msra.mxu0 0.0
    %4688 = vmatprep.subr.mxu0 0.0
    %4689 = vmatpush2.msra.mxu0 0.0
    %4690 = vmatprep.subr.mxu0 0.0
    %4691 = vmatpush2.msra.mxu0 0.0
    %4692 = vmatprep.subr.mxu0 0.0
    %4693 = vmatpush2.msra.mxu0 0.0
    %4694 = vmatprep.subr.mxu0 0.0
    %4695 = vmatpush2.msra.mxu0 0.0
    %4696 = vmatprep.subr.mxu0 0.0
    %4697 = vmatpush2.msra.mxu0 0.0
    %4698 = vmatprep.subr.mxu0 0.0
    %4699 = vmatpush2.msra.mxu0 0.0
    %4700 = vmatprep.subr.mxu0 0.0
    %4701 = vmatpush2.msra.mxu0 0.0
    %4702 = vmatprep.mubr.f32.mxu0 0.0
    %4703 = vmatmul.mubr.f32.gmra.mxu0 %v4073
    %v4704 = vpop.f32.mrf.mxu0
    %v4705 = vadd.f32 %v4286, %v4704
    %v4706 = vpop.f32.mrf.mxu0
    %4707 = vdwg.mxu0
    %4708 = vmatprep.subr.mxu0 0.0
    %4709 = vmatpush1.msra.mxu0 0.0
    %4710 = vmatprep.subr.mxu0 0.0
    %4711 = vmatpush1.msra.mxu0 0.0
    %4712 = vmatprep.subr.mxu0 0.0
    %4713 = vmatpush1.msra.mxu0 0.0
    %4714 = vmatprep.subr.mxu0 0.0
    %4715 = vmatpush1.msra.mxu0 0.0
    %4716 = vmatprep.subr.mxu0 0.0
    %4717 = vmatpush1.msra.mxu0 0.0
    %4718 = vmatprep.subr.mxu0 0.0
    %4719 = vmatpush1.msra.mxu0 0.0
    %4720 = vmatprep.subr.mxu0 0.0
    %4721 = vmatpush1.msra.mxu0 0.0
    %4722 = vmatprep.subr.mxu0 0.0
    %4723 = vmatpush1.msra.mxu0 0.0
    %4724 = vmatprep.subr.mxu0 0.0
    %4725 = vmatpush1.msra.mxu0 0.0
    %4726 = vmatprep.subr.mxu0 0.0
    %4727 = vmatpush1.msra.mxu0 0.0
    %4728 = vmatprep.subr.mxu0 0.0
    %4729 = vmatpush1.msra.mxu0 0.0
    %4730 = vmatprep.subr.mxu0 0.0
    %4731 = vmatpush1.msra.mxu0 0.0
    %4732 = vmatprep.subr.mxu0 0.0
    %4733 = vmatpush1.msra.mxu0 %v4274
    %4734 = vmatprep.subr.mxu0 0.0
    %4735 = vmatpush1.msra.mxu0 %v4273
    %4736 = vmatprep.subr.mxu0 0.0
    %4737 = vmatpush1.msra.mxu0 %v4272
    %4738 = vmatprep.subr.mxu0 0.0
    %4739 = vmatpush1.msra.mxu0 %v4271
    %4740 = vmatprep.subr.mxu0 0.0
    %4741 = vmatpush2.msra.mxu0 0.0
    %4742 = vmatprep.subr.mxu0 0.0
    %4743 = vmatpush2.msra.mxu0 0.0
    %4744 = vmatprep.subr.mxu0 0.0
    %4745 = vmatpush2.msra.mxu0 0.0
    %4746 = vmatprep.subr.mxu0 0.0
    %4747 = vmatpush2.msra.mxu0 0.0
    %4748 = vmatprep.subr.mxu0 0.0
    %4749 = vmatpush2.msra.mxu0 0.0
    %4750 = vmatprep.subr.mxu0 0.0
    %4751 = vmatpush2.msra.mxu0 0.0
    %4752 = vmatprep.subr.mxu0 0.0
    %4753 = vmatpush2.msra.mxu0 0.0
    %4754 = vmatprep.subr.mxu0 0.0
    %4755 = vmatpush2.msra.mxu0 0.0
    %4756 = vmatprep.subr.mxu0 0.0
    %4757 = vmatpush2.msra.mxu0 0.0
    %4758 = vmatprep.subr.mxu0 0.0
    %4759 = vmatpush2.msra.mxu0 0.0
    %4760 = vmatprep.subr.mxu0 0.0
    %4761 = vmatpush2.msra.mxu0 0.0
    %4762 = vmatprep.subr.mxu0 0.0
    %4763 = vmatpush2.msra.mxu0 0.0
    %4764 = vmatprep.subr.mxu0 0.0
    %4765 = vmatpush2.msra.mxu0 0.0
    %4766 = vmatprep.subr.mxu0 0.0
    %4767 = vmatpush2.msra.mxu0 0.0
    %4768 = vmatprep.subr.mxu0 0.0
    %4769 = vmatpush2.msra.mxu0 0.0
    %4770 = vmatprep.subr.mxu0 0.0
    %4771 = vmatpush2.msra.mxu0 0.0
    %4772 = vmatprep.mubr.f32.mxu0 0.0
    %4773 = vmatmul.mubr.f32.gmra.mxu0 %v4173
    %v4774 = vpop.f32.mrf.mxu0
    %v4775 = vadd.f32 %v4286, %v4774
    %v4776 = vpop.f32.mrf.mxu0
    %4777 = vdwg.mxu0
    %4779 = vrot.lane.b32.xlu0 %v4269, 32
    %v4780 = vpop.permute.xlu0 %4779
    %v4781 = vsel %vm716, %v4780, 0
    %4783 = vmatprep.subr.mxu0 0.0
    %4784 = vmatpush1.msra.mxu0 0.0
    %4785 = vmatprep.subr.mxu0 0.0
    %4786 = vmatpush1.msra.mxu0 0.0
    %4787 = vmatprep.subr.mxu0 0.0
    %4788 = vmatpush1.msra.mxu0 0.0
    %4789 = vmatprep.subr.mxu0 0.0
    %4790 = vmatpush1.msra.mxu0 0.0
    %4791 = vmatprep.subr.mxu0 0.0
    %4792 = vmatpush1.msra.mxu0 0.0
    %4793 = vmatprep.subr.mxu0 0.0
    %4794 = vmatpush1.msra.mxu0 0.0
    %4795 = vmatprep.subr.mxu0 0.0
    %4796 = vmatpush1.msra.mxu0 0.0
    %4797 = vmatprep.subr.mxu0 0.0
    %4798 = vmatpush1.msra.mxu0 0.0
    %4799 = vmatprep.subr.mxu0 0.0
    %4800 = vmatpush1.msra.mxu0 0.0
    %4801 = vmatprep.subr.mxu0 0.0
    %4802 = vmatpush1.msra.mxu0 0.0
    %4803 = vmatprep.subr.mxu0 0.0
    %4804 = vmatpush1.msra.mxu0 0.0
    %4805 = vmatprep.subr.mxu0 0.0
    %4806 = vmatpush1.msra.mxu0 0.0
    %4807 = vmatprep.subr.mxu0 0.0
    %4808 = vmatpush1.msra.mxu0 %v4274
    %4809 = vmatprep.subr.mxu0 0.0
    %4810 = vmatpush1.msra.mxu0 %v4273
    %4811 = vmatprep.subr.mxu0 0.0
    %4812 = vmatpush1.msra.mxu0 %v4272
    %4813 = vmatprep.subr.mxu0 0.0
    %4814 = vmatpush1.msra.mxu0 %v4271
    %4815 = vmatprep.subr.mxu0 0.0
    %4816 = vmatpush2.msra.mxu0 0.0
    %4817 = vmatprep.subr.mxu0 0.0
    %4818 = vmatpush2.msra.mxu0 0.0
    %4819 = vmatprep.subr.mxu0 0.0
    %4820 = vmatpush2.msra.mxu0 0.0
    %4821 = vmatprep.subr.mxu0 0.0
    %4822 = vmatpush2.msra.mxu0 0.0
    %4823 = vmatprep.subr.mxu0 0.0
    %4824 = vmatpush2.msra.mxu0 0.0
    %4825 = vmatprep.subr.mxu0 0.0
    %4826 = vmatpush2.msra.mxu0 0.0
    %4827 = vmatprep.subr.mxu0 0.0
    %4828 = vmatpush2.msra.mxu0 0.0
    %4829 = vmatprep.subr.mxu0 0.0
    %4830 = vmatpush2.msra.mxu0 0.0
    %4831 = vmatprep.subr.mxu0 0.0
    %4832 = vmatpush2.msra.mxu0 0.0
    %4833 = vmatprep.subr.mxu0 0.0
    %4834 = vmatpush2.msra.mxu0 0.0
    %4835 = vmatprep.subr.mxu0 0.0
    %4836 = vmatpush2.msra.mxu0 0.0
    %4837 = vmatprep.subr.mxu0 0.0
    %4838 = vmatpush2.msra.mxu0 0.0
    %4839 = vmatprep.subr.mxu0 0.0
    %4840 = vmatpush2.msra.mxu0 0.0
    %4841 = vmatprep.subr.mxu0 0.0
    %4842 = vmatpush2.msra.mxu0 0.0
    %4843 = vmatprep.subr.mxu0 0.0
    %4844 = vmatpush2.msra.mxu0 0.0
    %4845 = vmatprep.subr.mxu0 0.0
    %4846 = vmatpush2.msra.mxu0 0.0
    %4847 = vmatprep.mubr.f32.mxu0 0.0
    %4848 = vmatmul.mubr.f32.gmra.mxu0 %v4781
    %v4849 = vpop.f32.mrf.mxu0
    %v4850 = vadd.f32 %v4286, %v4849
    %v4851 = vpop.f32.mrf.mxu0
    %4852 = vdwg.mxu0
    %4853 = vmatprep.subr.mxu0 0.0
    %4854 = vmatpush1.msra.mxu0 0.0
    %4855 = vmatprep.subr.mxu0 0.0
    %4856 = vmatpush1.msra.mxu0 0.0
    %4857 = vmatprep.subr.mxu0 0.0
    %4858 = vmatpush1.msra.mxu0 0.0
    %4859 = vmatprep.subr.mxu0 0.0
    %4860 = vmatpush1.msra.mxu0 0.0
    %4861 = vmatprep.subr.mxu0 0.0
    %4862 = vmatpush1.msra.mxu0 0.0
    %4863 = vmatprep.subr.mxu0 0.0
    %4864 = vmatpush1.msra.mxu0 0.0
    %4865 = vmatprep.subr.mxu0 0.0
    %4866 = vmatpush1.msra.mxu0 0.0
    %4867 = vmatprep.subr.mxu0 0.0
    %4868 = vmatpush1.msra.mxu0 0.0
    %4869 = vmatprep.subr.mxu0 0.0
    %4870 = vmatpush1.msra.mxu0 0.0
    %4871 = vmatprep.subr.mxu0 0.0
    %4872 = vmatpush1.msra.mxu0 0.0
    %4873 = vmatprep.subr.mxu0 0.0
    %4874 = vmatpush1.msra.mxu0 0.0
    %4875 = vmatprep.subr.mxu0 0.0
    %4876 = vmatpush1.msra.mxu0 0.0
    %4877 = vmatprep.subr.mxu0 0.0
    %4878 = vmatpush1.msra.mxu0 %v4279
    %4879 = vmatprep.subr.mxu0 0.0
    %4880 = vmatpush1.msra.mxu0 %v4278
    %4881 = vmatprep.subr.mxu0 0.0
    %4882 = vmatpush1.msra.mxu0 %v4277
    %4883 = vmatprep.subr.mxu0 0.0
    %4884 = vmatpush1.msra.mxu0 %v4276
    %4885 = vmatprep.subr.mxu0 0.0
    %4886 = vmatpush2.msra.mxu0 0.0
    %4887 = vmatprep.subr.mxu0 0.0
    %4888 = vmatpush2.msra.mxu0 0.0
    %4889 = vmatprep.subr.mxu0 0.0
    %4890 = vmatpush2.msra.mxu0 0.0
    %4891 = vmatprep.subr.mxu0 0.0
    %4892 = vmatpush2.msra.mxu0 0.0
    %4893 = vmatprep.subr.mxu0 0.0
    %4894 = vmatpush2.msra.mxu0 0.0
    %4895 = vmatprep.subr.mxu0 0.0
    %4896 = vmatpush2.msra.mxu0 0.0
    %4897 = vmatprep.subr.mxu0 0.0
    %4898 = vmatpush2.msra.mxu0 0.0
    %4899 = vmatprep.subr.mxu0 0.0
    %4900 = vmatpush2.msra.mxu0 0.0
    %4901 = vmatprep.subr.mxu0 0.0
    %4902 = vmatpush2.msra.mxu0 0.0
    %4903 = vmatprep.subr.mxu0 0.0
    %4904 = vmatpush2.msra.mxu0 0.0
    %4905 = vmatprep.subr.mxu0 0.0
    %4906 = vmatpush2.msra.mxu0 0.0
    %4907 = vmatprep.subr.mxu0 0.0
    %4908 = vmatpush2.msra.mxu0 0.0
    %4909 = vmatprep.subr.mxu0 0.0
    %4910 = vmatpush2.msra.mxu0 0.0
    %4911 = vmatprep.subr.mxu0 0.0
    %4912 = vmatpush2.msra.mxu0 0.0
    %4913 = vmatprep.subr.mxu0 0.0
    %4914 = vmatpush2.msra.mxu0 0.0
    %4915 = vmatprep.subr.mxu0 0.0
    %4916 = vmatpush2.msra.mxu0 0.0
    %4917 = vmatprep.mubr.f32.mxu0 0.0
    %4918 = vmatmul.mubr.f32.gmra.mxu0 %v718
    %v4919 = vpop.f32.mrf.mxu0
    %v4920 = vadd.f32 0.0, %v4919
    %v4921 = vpop.f32.mrf.mxu0
    %4922 = vdwg.mxu0
    %v4923 = vadd.f32 %v4355, %v4920
    %v4924 = vxor.u32 %v4923, 2147483648
    %v4925 = vmul.f32 %v4924, 1.442695
    %v4926 = vpow.pop %v4925
    %v4927 = vadd.f32 %v4926, 1.0
    %v4928 = vrcp.pop %v4927
    %v4929 = vmul.f32 1.0, %v4928
    %v4930 = vtanh.pop %v4923
    %v4931 = vmul.f32 %v4929, 0.0
    %4933 = vrot.lane.b32.xlu0 %v4930, 64
    %v4934 = vpop.permute.xlu0 %4933
    %v4936 = vmul.f32 %v4929, %v4934
    %4938 = vrot.lane.b32.xlu0 %v4936, 32
    %v4939 = vpop.permute.xlu0 %4938
    %v4941 = vadd.f32 %v4931, %v4939
    %v4942 = vtanh.pop %v4941
    %4944 = vrot.lane.b32.xlu0 %v4942, 64
    %v4945 = vpop.permute.xlu0 %4944
    %v4947 = vmul.f32 %v4929, %v4945
    %4949 = vrot.lane.b32.xlu0 %v4947, 32
    %v4950 = vpop.permute.xlu0 %4949
    %v4951 = vsel %vm716, %v4950, 0
    %4953 = vmatprep.subr.mxu0 0.0
    %4954 = vmatpush1.msra.mxu0 0.0
    %4955 = vmatprep.subr.mxu0 0.0
    %4956 = vmatpush1.msra.mxu0 0.0
    %4957 = vmatprep.subr.mxu0 0.0
    %4958 = vmatpush1.msra.mxu0 0.0
    %4959 = vmatprep.subr.mxu0 0.0
    %4960 = vmatpush1.msra.mxu0 0.0
    %4961 = vmatprep.subr.mxu0 0.0
    %4962 = vmatpush1.msra.mxu0 0.0
    %4963 = vmatprep.subr.mxu0 0.0
    %4964 = vmatpush1.msra.mxu0 0.0
    %4965 = vmatprep.subr.mxu0 0.0
    %4966 = vmatpush1.msra.mxu0 0.0
    %4967 = vmatprep.subr.mxu0 0.0
    %4968 = vmatpush1.msra.mxu0 0.0
    %4969 = vmatprep.subr.mxu0 0.0
    %4970 = vmatpush1.msra.mxu0 0.0
    %4971 = vmatprep.subr.mxu0 0.0
    %4972 = vmatpush1.msra.mxu0 0.0
    %4973 = vmatprep.subr.mxu0 0.0
    %4974 = vmatpush1.msra.mxu0 0.0
    %4975 = vmatprep.subr.mxu0 0.0
    %4976 = vmatpush1.msra.mxu0 0.0
    %4977 = vmatprep.subr.mxu0 0.0
    %4978 = vmatpush1.msra.mxu0 %v4279
    %4979 = vmatprep.subr.mxu0 0.0
    %4980 = vmatpush1.msra.mxu0 %v4278
    %4981 = vmatprep.subr.mxu0 0.0
    %4982 = vmatpush1.msra.mxu0 %v4277
    %4983 = vmatprep.subr.mxu0 0.0
    %4984 = vmatpush1.msra.mxu0 %v4276
    %4985 = vmatprep.subr.mxu0 0.0
    %4986 = vmatpush2.msra.mxu0 0.0
    %4987 = vmatprep.subr.mxu0 0.0
    %4988 = vmatpush2.msra.mxu0 0.0
    %4989 = vmatprep.subr.mxu0 0.0
    %4990 = vmatpush2.msra.mxu0 0.0
    %4991 = vmatprep.subr.mxu0 0.0
    %4992 = vmatpush2.msra.mxu0 0.0
    %4993 = vmatprep.subr.mxu0 0.0
    %4994 = vmatpush2.msra.mxu0 0.0
    %4995 = vmatprep.subr.mxu0 0.0
    %4996 = vmatpush2.msra.mxu0 0.0
    %4997 = vmatprep.subr.mxu0 0.0
    %4998 = vmatpush2.msra.mxu0 0.0
    %4999 = vmatprep.subr.mxu0 0.0
    %5000 = vmatpush2.msra.mxu0 0.0
    %5001 = vmatprep.subr.mxu0 0.0
    %5002 = vmatpush2.msra.mxu0 0.0
    %5003 = vmatprep.subr.mxu0 0.0
    %5004 = vmatpush2.msra.mxu0 0.0
    %5005 = vmatprep.subr.mxu0 0.0
    %5006 = vmatpush2.msra.mxu0 0.0
    %5007 = vmatprep.subr.mxu0 0.0
    %5008 = vmatpush2.msra.mxu0 0.0
    %5009 = vmatprep.subr.mxu0 0.0
    %5010 = vmatpush2.msra.mxu0 0.0
    %5011 = vmatprep.subr.mxu0 0.0
    %5012 = vmatpush2.msra.mxu0 0.0
    %5013 = vmatprep.subr.mxu0 0.0
    %5014 = vmatpush2.msra.mxu0 0.0
    %5015 = vmatprep.subr.mxu0 0.0
    %5016 = vmatpush2.msra.mxu0 0.0
    %5017 = vmatprep.mubr.f32.mxu0 0.0
    %5018 = vmatmul.mubr.f32.gmra.mxu0 %v4951
    %v5019 = vpop.f32.mrf.mxu0
    %v5020 = vadd.f32 0.0, %v5019
    %v5021 = vpop.f32.mrf.mxu0
    %5022 = vdwg.mxu0
    %v5023 = vadd.f32 %v4425, %v5020
    %v5024 = vxor.u32 %v5023, 2147483648
    %v5025 = vmul.f32 %v5024, 1.442695
    %v5026 = vpow.pop %v5025
    %v5027 = vadd.f32 %v5026, 1.0
    %v5028 = vrcp.pop %v5027
    %v5029 = vmul.f32 1.0, %v5028
    %v5030 = vtanh.pop %v5023
    %v5031 = vmul.f32 %v5029, %v4941
    %5033 = vrot.lane.b32.xlu0 %v5030, 64
    %v5034 = vpop.permute.xlu0 %5033
    %v5036 = vmul.f32 %v5029, %v5034
    %5038 = vrot.lane.b32.xlu0 %v5036, 32
    %v5039 = vpop.permute.xlu0 %5038
    %v5041 = vadd.f32 %v5031, %v5039
    %v5042 = vtanh.pop %v5041
    %5044 = vrot.lane.b32.xlu0 %v5042, 64
    %v5045 = vpop.permute.xlu0 %5044
    %v5047 = vmul.f32 %v5029, %v5045
    %5049 = vrot.lane.b32.xlu0 %v5047, 32
    %v5050 = vpop.permute.xlu0 %5049
    %v5051 = vsel %vm716, %v5050, 0
    %5053 = vmatprep.subr.mxu0 0.0
    %5054 = vmatpush1.msra.mxu0 0.0
    %5055 = vmatprep.subr.mxu0 0.0
    %5056 = vmatpush1.msra.mxu0 0.0
    %5057 = vmatprep.subr.mxu0 0.0
    %5058 = vmatpush1.msra.mxu0 0.0
    %5059 = vmatprep.subr.mxu0 0.0
    %5060 = vmatpush1.msra.mxu0 0.0
    %5061 = vmatprep.subr.mxu0 0.0
    %5062 = vmatpush1.msra.mxu0 0.0
    %5063 = vmatprep.subr.mxu0 0.0
    %5064 = vmatpush1.msra.mxu0 0.0
    %5065 = vmatprep.subr.mxu0 0.0
    %5066 = vmatpush1.msra.mxu0 0.0
    %5067 = vmatprep.subr.mxu0 0.0
    %5068 = vmatpush1.msra.mxu0 0.0
    %5069 = vmatprep.subr.mxu0 0.0
    %5070 = vmatpush1.msra.mxu0 0.0
    %5071 = vmatprep.subr.mxu0 0.0
    %5072 = vmatpush1.msra.mxu0 0.0
    %5073 = vmatprep.subr.mxu0 0.0
    %5074 = vmatpush1.msra.mxu0 0.0
    %5075 = vmatprep.subr.mxu0 0.0
    %5076 = vmatpush1.msra.mxu0 0.0
    %5077 = vmatprep.subr.mxu0 0.0
    %5078 = vmatpush1.msra.mxu0 %v4279
    %5079 = vmatprep.subr.mxu0 0.0
    %5080 = vmatpush1.msra.mxu0 %v4278
    %5081 = vmatprep.subr.mxu0 0.0
    %5082 = vmatpush1.msra.mxu0 %v4277
    %5083 = vmatprep.subr.mxu0 0.0
    %5084 = vmatpush1.msra.mxu0 %v4276
    %5085 = vmatprep.subr.mxu0 0.0
    %5086 = vmatpush2.msra.mxu0 0.0
    %5087 = vmatprep.subr.mxu0 0.0
    %5088 = vmatpush2.msra.mxu0 0.0
    %5089 = vmatprep.subr.mxu0 0.0
    %5090 = vmatpush2.msra.mxu0 0.0
    %5091 = vmatprep.subr.mxu0 0.0
    %5092 = vmatpush2.msra.mxu0 0.0
    %5093 = vmatprep.subr.mxu0 0.0
    %5094 = vmatpush2.msra.mxu0 0.0
    %5095 = vmatprep.subr.mxu0 0.0
    %5096 = vmatpush2.msra.mxu0 0.0
    %5097 = vmatprep.subr.mxu0 0.0
    %5098 = vmatpush2.msra.mxu0 0.0
    %5099 = vmatprep.subr.mxu0 0.0
    %5100 = vmatpush2.msra.mxu0 0.0
    %5101 = vmatprep.subr.mxu0 0.0
    %5102 = vmatpush2.msra.mxu0 0.0
    %5103 = vmatprep.subr.mxu0 0.0
    %5104 = vmatpush2.msra.mxu0 0.0
    %5105 = vmatprep.subr.mxu0 0.0
    %5106 = vmatpush2.msra.mxu0 0.0
    %5107 = vmatprep.subr.mxu0 0.0
    %5108 = vmatpush2.msra.mxu0 0.0
    %5109 = vmatprep.subr.mxu0 0.0
    %5110 = vmatpush2.msra.mxu0 0.0
    %5111 = vmatprep.subr.mxu0 0.0
    %5112 = vmatpush2.msra.mxu0 0.0
    %5113 = vmatprep.subr.mxu0 0.0
    %5114 = vmatpush2.msra.mxu0 0.0
    %5115 = vmatprep.subr.mxu0 0.0
    %5116 = vmatpush2.msra.mxu0 0.0
    %5117 = vmatprep.mubr.f32.mxu0 0.0
    %5118 = vmatmul.mubr.f32.gmra.mxu0 %v5051
    %v5119 = vpop.f32.mrf.mxu0
    %v5120 = vadd.f32 0.0, %v5119
    %v5121 = vpop.f32.mrf.mxu0
    %5122 = vdwg.mxu0
    %v5123 = vadd.f32 %v4495, %v5120
    %v5124 = vxor.u32 %v5123, 2147483648
    %v5125 = vmul.f32 %v5124, 1.442695
    %v5126 = vpow.pop %v5125
    %v5127 = vadd.f32 %v5126, 1.0
    %v5128 = vrcp.pop %v5127
    %v5129 = vmul.f32 1.0, %v5128
    %v5130 = vtanh.pop %v5123
    %v5131 = vmul.f32 %v5129, %v5041
    %5133 = vrot.lane.b32.xlu0 %v5130, 64
    %v5134 = vpop.permute.xlu0 %5133
    %v5136 = vmul.f32 %v5129, %v5134
    %5138 = vrot.lane.b32.xlu0 %v5136, 32
    %v5139 = vpop.permute.xlu0 %5138
    %v5141 = vadd.f32 %v5131, %v5139
    %v5142 = vtanh.pop %v5141
    %5144 = vrot.lane.b32.xlu0 %v5142, 64
    %v5145 = vpop.permute.xlu0 %5144
    %v5147 = vmul.f32 %v5129, %v5145
    %5149 = vrot.lane.b32.xlu0 %v5147, 32
    %v5150 = vpop.permute.xlu0 %5149
    %v5151 = vsel %vm716, %v5150, 0
    %5153 = vmatprep.subr.mxu0 0.0
    %5154 = vmatpush1.msra.mxu0 0.0
    %5155 = vmatprep.subr.mxu0 0.0
    %5156 = vmatpush1.msra.mxu0 0.0
    %5157 = vmatprep.subr.mxu0 0.0
    %5158 = vmatpush1.msra.mxu0 0.0
    %5159 = vmatprep.subr.mxu0 0.0
    %5160 = vmatpush1.msra.mxu0 0.0
    %5161 = vmatprep.subr.mxu0 0.0
    %5162 = vmatpush1.msra.mxu0 0.0
    %5163 = vmatprep.subr.mxu0 0.0
    %5164 = vmatpush1.msra.mxu0 0.0
    %5165 = vmatprep.subr.mxu0 0.0
    %5166 = vmatpush1.msra.mxu0 0.0
    %5167 = vmatprep.subr.mxu0 0.0
    %5168 = vmatpush1.msra.mxu0 0.0
    %5169 = vmatprep.subr.mxu0 0.0
    %5170 = vmatpush1.msra.mxu0 0.0
    %5171 = vmatprep.subr.mxu0 0.0
    %5172 = vmatpush1.msra.mxu0 0.0
    %5173 = vmatprep.subr.mxu0 0.0
    %5174 = vmatpush1.msra.mxu0 0.0
    %5175 = vmatprep.subr.mxu0 0.0
    %5176 = vmatpush1.msra.mxu0 0.0
    %5177 = vmatprep.subr.mxu0 0.0
    %5178 = vmatpush1.msra.mxu0 %v4279
    %5179 = vmatprep.subr.mxu0 0.0
    %5180 = vmatpush1.msra.mxu0 %v4278
    %5181 = vmatprep.subr.mxu0 0.0
    %5182 = vmatpush1.msra.mxu0 %v4277
    %5183 = vmatprep.subr.mxu0 0.0
    %5184 = vmatpush1.msra.mxu0 %v4276
    %5185 = vmatprep.subr.mxu0 0.0
    %5186 = vmatpush2.msra.mxu0 0.0
    %5187 = vmatprep.subr.mxu0 0.0
    %5188 = vmatpush2.msra.mxu0 0.0
    %5189 = vmatprep.subr.mxu0 0.0
    %5190 = vmatpush2.msra.mxu0 0.0
    %5191 = vmatprep.subr.mxu0 0.0
    %5192 = vmatpush2.msra.mxu0 0.0
    %5193 = vmatprep.subr.mxu0 0.0
    %5194 = vmatpush2.msra.mxu0 0.0
    %5195 = vmatprep.subr.mxu0 0.0
    %5196 = vmatpush2.msra.mxu0 0.0
    %5197 = vmatprep.subr.mxu0 0.0
    %5198 = vmatpush2.msra.mxu0 0.0
    %5199 = vmatprep.subr.mxu0 0.0
    %5200 = vmatpush2.msra.mxu0 0.0
    %5201 = vmatprep.subr.mxu0 0.0
    %5202 = vmatpush2.msra.mxu0 0.0
    %5203 = vmatprep.subr.mxu0 0.0
    %5204 = vmatpush2.msra.mxu0 0.0
    %5205 = vmatprep.subr.mxu0 0.0
    %5206 = vmatpush2.msra.mxu0 0.0
    %5207 = vmatprep.subr.mxu0 0.0
    %5208 = vmatpush2.msra.mxu0 0.0
    %5209 = vmatprep.subr.mxu0 0.0
    %5210 = vmatpush2.msra.mxu0 0.0
    %5211 = vmatprep.subr.mxu0 0.0
    %5212 = vmatpush2.msra.mxu0 0.0
    %5213 = vmatprep.subr.mxu0 0.0
    %5214 = vmatpush2.msra.mxu0 0.0
    %5215 = vmatprep.subr.mxu0 0.0
    %5216 = vmatpush2.msra.mxu0 0.0
    %5217 = vmatprep.mubr.f32.mxu0 0.0
    %5218 = vmatmul.mubr.f32.gmra.mxu0 %v5151
    %v5219 = vpop.f32.mrf.mxu0
    %v5220 = vadd.f32 0.0, %v5219
    %v5221 = vpop.f32.mrf.mxu0
    %5222 = vdwg.mxu0
    %v5223 = vadd.f32 %v4565, %v5220
    %v5224 = vxor.u32 %v5223, 2147483648
    %v5225 = vmul.f32 %v5224, 1.442695
    %v5226 = vpow.pop %v5225
    %v5227 = vadd.f32 %v5226, 1.0
    %v5228 = vrcp.pop %v5227
    %v5229 = vmul.f32 1.0, %v5228
    %v5230 = vtanh.pop %v5223
    %v5231 = vmul.f32 %v5229, %v5141
    %5233 = vrot.lane.b32.xlu0 %v5230, 64
    %v5234 = vpop.permute.xlu0 %5233
    %v5236 = vmul.f32 %v5229, %v5234
    %5238 = vrot.lane.b32.xlu0 %v5236, 32
    %v5239 = vpop.permute.xlu0 %5238
    %v5241 = vadd.f32 %v5231, %v5239
    %v5242 = vtanh.pop %v5241
    %5244 = vrot.lane.b32.xlu0 %v5242, 64
    %v5245 = vpop.permute.xlu0 %5244
    %v5247 = vmul.f32 %v5229, %v5245
    %5249 = vrot.lane.b32.xlu0 %v5247, 32
    %v5250 = vpop.permute.xlu0 %5249
    %v5251 = vsel %vm716, %v5250, 0
    %5253 = vmatprep.subr.mxu0 0.0
    %5254 = vmatpush1.msra.mxu0 0.0
    %5255 = vmatprep.subr.mxu0 0.0
    %5256 = vmatpush1.msra.mxu0 0.0
    %5257 = vmatprep.subr.mxu0 0.0
    %5258 = vmatpush1.msra.mxu0 0.0
    %5259 = vmatprep.subr.mxu0 0.0
    %5260 = vmatpush1.msra.mxu0 0.0
    %5261 = vmatprep.subr.mxu0 0.0
    %5262 = vmatpush1.msra.mxu0 0.0
    %5263 = vmatprep.subr.mxu0 0.0
    %5264 = vmatpush1.msra.mxu0 0.0
    %5265 = vmatprep.subr.mxu0 0.0
    %5266 = vmatpush1.msra.mxu0 0.0
    %5267 = vmatprep.subr.mxu0 0.0
    %5268 = vmatpush1.msra.mxu0 0.0
    %5269 = vmatprep.subr.mxu0 0.0
    %5270 = vmatpush1.msra.mxu0 0.0
    %5271 = vmatprep.subr.mxu0 0.0
    %5272 = vmatpush1.msra.mxu0 0.0
    %5273 = vmatprep.subr.mxu0 0.0
    %5274 = vmatpush1.msra.mxu0 0.0
    %5275 = vmatprep.subr.mxu0 0.0
    %5276 = vmatpush1.msra.mxu0 0.0
    %5277 = vmatprep.subr.mxu0 0.0
    %5278 = vmatpush1.msra.mxu0 %v4279
    %5279 = vmatprep.subr.mxu0 0.0
    %5280 = vmatpush1.msra.mxu0 %v4278
    %5281 = vmatprep.subr.mxu0 0.0
    %5282 = vmatpush1.msra.mxu0 %v4277
    %5283 = vmatprep.subr.mxu0 0.0
    %5284 = vmatpush1.msra.mxu0 %v4276
    %5285 = vmatprep.subr.mxu0 0.0
    %5286 = vmatpush2.msra.mxu0 0.0
    %5287 = vmatprep.subr.mxu0 0.0
    %5288 = vmatpush2.msra.mxu0 0.0
    %5289 = vmatprep.subr.mxu0 0.0
    %5290 = vmatpush2.msra.mxu0 0.0
    %5291 = vmatprep.subr.mxu0 0.0
    %5292 = vmatpush2.msra.mxu0 0.0
    %5293 = vmatprep.subr.mxu0 0.0
    %5294 = vmatpush2.msra.mxu0 0.0
    %5295 = vmatprep.subr.mxu0 0.0
    %5296 = vmatpush2.msra.mxu0 0.0
    %5297 = vmatprep.subr.mxu0 0.0
    %5298 = vmatpush2.msra.mxu0 0.0
    %5299 = vmatprep.subr.mxu0 0.0
    %5300 = vmatpush2.msra.mxu0 0.0
    %5301 = vmatprep.subr.mxu0 0.0
    %5302 = vmatpush2.msra.mxu0 0.0
    %5303 = vmatprep.subr.mxu0 0.0
    %5304 = vmatpush2.msra.mxu0 0.0
    %5305 = vmatprep.subr.mxu0 0.0
    %5306 = vmatpush2.msra.mxu0 0.0
    %5307 = vmatprep.subr.mxu0 0.0
    %5308 = vmatpush2.msra.mxu0 0.0
    %5309 = vmatprep.subr.mxu0 0.0
    %5310 = vmatpush2.msra.mxu0 0.0
    %5311 = vmatprep.subr.mxu0 0.0
    %5312 = vmatpush2.msra.mxu0 0.0
    %5313 = vmatprep.subr.mxu0 0.0
    %5314 = vmatpush2.msra.mxu0 0.0
    %5315 = vmatprep.subr.mxu0 0.0
    %5316 = vmatpush2.msra.mxu0 0.0
    %5317 = vmatprep.mubr.f32.mxu0 0.0
    %5318 = vmatmul.mubr.f32.gmra.mxu0 %v5251
    %v5319 = vpop.f32.mrf.mxu0
    %v5320 = vadd.f32 0.0, %v5319
    %v5321 = vpop.f32.mrf.mxu0
    %5322 = vdwg.mxu0
    %v5323 = vadd.f32 %v4635, %v5320
    %v5324 = vxor.u32 %v5323, 2147483648
    %v5325 = vmul.f32 %v5324, 1.442695
    %v5326 = vpow.pop %v5325
    %v5327 = vadd.f32 %v5326, 1.0
    %v5328 = vrcp.pop %v5327
    %v5329 = vmul.f32 1.0, %v5328
    %v5330 = vtanh.pop %v5323
    %v5331 = vmul.f32 %v5329, %v5241
    %5333 = vrot.lane.b32.xlu0 %v5330, 64
    %v5334 = vpop.permute.xlu0 %5333
    %v5336 = vmul.f32 %v5329, %v5334
    %5338 = vrot.lane.b32.xlu0 %v5336, 32
    %v5339 = vpop.permute.xlu0 %5338
    %v5341 = vadd.f32 %v5331, %v5339
    %v5342 = vtanh.pop %v5341
    %5344 = vrot.lane.b32.xlu0 %v5342, 64
    %v5345 = vpop.permute.xlu0 %5344
    %v5347 = vmul.f32 %v5329, %v5345
    %5349 = vrot.lane.b32.xlu0 %v5347, 32
    %v5350 = vpop.permute.xlu0 %5349
    %v5351 = vsel %vm716, %v5350, 0
    %5353 = vmatprep.subr.mxu0 0.0
    %5354 = vmatpush1.msra.mxu0 0.0
    %5355 = vmatprep.subr.mxu0 0.0
    %5356 = vmatpush1.msra.mxu0 0.0
    %5357 = vmatprep.subr.mxu0 0.0
    %5358 = vmatpush1.msra.mxu0 0.0
    %5359 = vmatprep.subr.mxu0 0.0
    %5360 = vmatpush1.msra.mxu0 0.0
    %5361 = vmatprep.subr.mxu0 0.0
    %5362 = vmatpush1.msra.mxu0 0.0
    %5363 = vmatprep.subr.mxu0 0.0
    %5364 = vmatpush1.msra.mxu0 0.0
    %5365 = vmatprep.subr.mxu0 0.0
    %5366 = vmatpush1.msra.mxu0 0.0
    %5367 = vmatprep.subr.mxu0 0.0
    %5368 = vmatpush1.msra.mxu0 0.0
    %5369 = vmatprep.subr.mxu0 0.0
    %5370 = vmatpush1.msra.mxu0 0.0
    %5371 = vmatprep.subr.mxu0 0.0
    %5372 = vmatpush1.msra.mxu0 0.0
    %5373 = vmatprep.subr.mxu0 0.0
    %5374 = vmatpush1.msra.mxu0 0.0
    %5375 = vmatprep.subr.mxu0 0.0
    %5376 = vmatpush1.msra.mxu0 0.0
    %5377 = vmatprep.subr.mxu0 0.0
    %5378 = vmatpush1.msra.mxu0 %v4279
    %5379 = vmatprep.subr.mxu0 0.0
    %5380 = vmatpush1.msra.mxu0 %v4278
    %5381 = vmatprep.subr.mxu0 0.0
    %5382 = vmatpush1.msra.mxu0 %v4277
    %5383 = vmatprep.subr.mxu0 0.0
    %5384 = vmatpush1.msra.mxu0 %v4276
    %5385 = vmatprep.subr.mxu0 0.0
    %5386 = vmatpush2.msra.mxu0 0.0
    %5387 = vmatprep.subr.mxu0 0.0
    %5388 = vmatpush2.msra.mxu0 0.0
    %5389 = vmatprep.subr.mxu0 0.0
    %5390 = vmatpush2.msra.mxu0 0.0
    %5391 = vmatprep.subr.mxu0 0.0
    %5392 = vmatpush2.msra.mxu0 0.0
    %5393 = vmatprep.subr.mxu0 0.0
    %5394 = vmatpush2.msra.mxu0 0.0
    %5395 = vmatprep.subr.mxu0 0.0
    %5396 = vmatpush2.msra.mxu0 0.0
    %5397 = vmatprep.subr.mxu0 0.0
    %5398 = vmatpush2.msra.mxu0 0.0
    %5399 = vmatprep.subr.mxu0 0.0
    %5400 = vmatpush2.msra.mxu0 0.0
    %5401 = vmatprep.subr.mxu0 0.0
    %5402 = vmatpush2.msra.mxu0 0.0
    %5403 = vmatprep.subr.mxu0 0.0
    %5404 = vmatpush2.msra.mxu0 0.0
    %5405 = vmatprep.subr.mxu0 0.0
    %5406 = vmatpush2.msra.mxu0 0.0
    %5407 = vmatprep.subr.mxu0 0.0
    %5408 = vmatpush2.msra.mxu0 0.0
    %5409 = vmatprep.subr.mxu0 0.0
    %5410 = vmatpush2.msra.mxu0 0.0
    %5411 = vmatprep.subr.mxu0 0.0
    %5412 = vmatpush2.msra.mxu0 0.0
    %5413 = vmatprep.subr.mxu0 0.0
    %5414 = vmatpush2.msra.mxu0 0.0
    %5415 = vmatprep.subr.mxu0 0.0
    %5416 = vmatpush2.msra.mxu0 0.0
    %5417 = vmatprep.mubr.f32.mxu0 0.0
    %5418 = vmatmul.mubr.f32.gmra.mxu0 %v5351
    %v5419 = vpop.f32.mrf.mxu0
    %v5420 = vadd.f32 0.0, %v5419
    %v5421 = vpop.f32.mrf.mxu0
    %5422 = vdwg.mxu0
    %v5423 = vadd.f32 %v4705, %v5420
    %v5424 = vxor.u32 %v5423, 2147483648
    %v5425 = vmul.f32 %v5424, 1.442695
    %v5426 = vpow.pop %v5425
    %v5427 = vadd.f32 %v5426, 1.0
    %v5428 = vrcp.pop %v5427
    %v5429 = vmul.f32 1.0, %v5428
    %v5430 = vtanh.pop %v5423
    %v5431 = vmul.f32 %v5429, %v5341
    %5433 = vrot.lane.b32.xlu0 %v5430, 64
    %v5434 = vpop.permute.xlu0 %5433
    %v5436 = vmul.f32 %v5429, %v5434
    %5438 = vrot.lane.b32.xlu0 %v5436, 32
    %v5439 = vpop.permute.xlu0 %5438
    %v5441 = vadd.f32 %v5431, %v5439
    %v5442 = vtanh.pop %v5441
    %5444 = vrot.lane.b32.xlu0 %v5442, 64
    %v5445 = vpop.permute.xlu0 %5444
    %v5447 = vmul.f32 %v5429, %v5445
    %5449 = vrot.lane.b32.xlu0 %v5447, 32
    %v5450 = vpop.permute.xlu0 %5449
    %v5451 = vsel %vm716, %v5450, 0
    %5453 = vmatprep.subr.mxu0 0.0
    %5454 = vmatpush1.msra.mxu0 0.0
    %5455 = vmatprep.subr.mxu0 0.0
    %5456 = vmatpush1.msra.mxu0 0.0
    %5457 = vmatprep.subr.mxu0 0.0
    %5458 = vmatpush1.msra.mxu0 0.0
    %5459 = vmatprep.subr.mxu0 0.0
    %5460 = vmatpush1.msra.mxu0 0.0
    %5461 = vmatprep.subr.mxu0 0.0
    %5462 = vmatpush1.msra.mxu0 0.0
    %5463 = vmatprep.subr.mxu0 0.0
    %5464 = vmatpush1.msra.mxu0 0.0
    %5465 = vmatprep.subr.mxu0 0.0
    %5466 = vmatpush1.msra.mxu0 0.0
    %5467 = vmatprep.subr.mxu0 0.0
    %5468 = vmatpush1.msra.mxu0 0.0
    %5469 = vmatprep.subr.mxu0 0.0
    %5470 = vmatpush1.msra.mxu0 0.0
    %5471 = vmatprep.subr.mxu0 0.0
    %5472 = vmatpush1.msra.mxu0 0.0
    %5473 = vmatprep.subr.mxu0 0.0
    %5474 = vmatpush1.msra.mxu0 0.0
    %5475 = vmatprep.subr.mxu0 0.0
    %5476 = vmatpush1.msra.mxu0 0.0
    %5477 = vmatprep.subr.mxu0 0.0
    %5478 = vmatpush1.msra.mxu0 %v4279
    %5479 = vmatprep.subr.mxu0 0.0
    %5480 = vmatpush1.msra.mxu0 %v4278
    %5481 = vmatprep.subr.mxu0 0.0
    %5482 = vmatpush1.msra.mxu0 %v4277
    %5483 = vmatprep.subr.mxu0 0.0
    %5484 = vmatpush1.msra.mxu0 %v4276
    %5485 = vmatprep.subr.mxu0 0.0
    %5486 = vmatpush2.msra.mxu0 0.0
    %5487 = vmatprep.subr.mxu0 0.0
    %5488 = vmatpush2.msra.mxu0 0.0
    %5489 = vmatprep.subr.mxu0 0.0
    %5490 = vmatpush2.msra.mxu0 0.0
    %5491 = vmatprep.subr.mxu0 0.0
    %5492 = vmatpush2.msra.mxu0 0.0
    %5493 = vmatprep.subr.mxu0 0.0
    %5494 = vmatpush2.msra.mxu0 0.0
    %5495 = vmatprep.subr.mxu0 0.0
    %5496 = vmatpush2.msra.mxu0 0.0
    %5497 = vmatprep.subr.mxu0 0.0
    %5498 = vmatpush2.msra.mxu0 0.0
    %5499 = vmatprep.subr.mxu0 0.0
    %5500 = vmatpush2.msra.mxu0 0.0
    %5501 = vmatprep.subr.mxu0 0.0
    %5502 = vmatpush2.msra.mxu0 0.0
    %5503 = vmatprep.subr.mxu0 0.0
    %5504 = vmatpush2.msra.mxu0 0.0
    %5505 = vmatprep.subr.mxu0 0.0
    %5506 = vmatpush2.msra.mxu0 0.0
    %5507 = vmatprep.subr.mxu0 0.0
    %5508 = vmatpush2.msra.mxu0 0.0
    %5509 = vmatprep.subr.mxu0 0.0
    %5510 = vmatpush2.msra.mxu0 0.0
    %5511 = vmatprep.subr.mxu0 0.0
    %5512 = vmatpush2.msra.mxu0 0.0
    %5513 = vmatprep.subr.mxu0 0.0
    %5514 = vmatpush2.msra.mxu0 0.0
    %5515 = vmatprep.subr.mxu0 0.0
    %5516 = vmatpush2.msra.mxu0 0.0
    %5517 = vmatprep.mubr.f32.mxu0 0.0
    %5518 = vmatmul.mubr.f32.gmra.mxu0 %v5451
    %v5519 = vpop.f32.mrf.mxu0
    %v5520 = vadd.f32 0.0, %v5519
    %v5521 = vpop.f32.mrf.mxu0
    %5522 = vdwg.mxu0
    %v5523 = vadd.f32 %v4775, %v5520
    %v5524 = vxor.u32 %v5523, 2147483648
    %v5525 = vmul.f32 %v5524, 1.442695
    %v5526 = vpow.pop %v5525
    %v5527 = vadd.f32 %v5526, 1.0
    %v5528 = vrcp.pop %v5527
    %v5529 = vmul.f32 1.0, %v5528
    %v5530 = vtanh.pop %v5523
    %v5531 = vmul.f32 %v5529, %v5441
    %5533 = vrot.lane.b32.xlu0 %v5530, 64
    %v5534 = vpop.permute.xlu0 %5533
    %v5536 = vmul.f32 %v5529, %v5534
    %5538 = vrot.lane.b32.xlu0 %v5536, 32
    %v5539 = vpop.permute.xlu0 %5538
    %v5541 = vadd.f32 %v5531, %v5539
    %v5542 = vtanh.pop %v5541
    %5544 = vrot.lane.b32.xlu0 %v5542, 64
    %v5545 = vpop.permute.xlu0 %5544
    %v5547 = vmul.f32 %v5529, %v5545
    %5549 = vrot.lane.b32.xlu0 %v5547, 32
    %v5550 = vpop.permute.xlu0 %5549
    %v5551 = vsel %vm716, %v5550, 0
    %5553 = vmatprep.subr.mxu0 0.0
    %5554 = vmatpush1.msra.mxu0 0.0
    %5555 = vmatprep.subr.mxu0 0.0
    %5556 = vmatpush1.msra.mxu0 0.0
    %5557 = vmatprep.subr.mxu0 0.0
    %5558 = vmatpush1.msra.mxu0 0.0
    %5559 = vmatprep.subr.mxu0 0.0
    %5560 = vmatpush1.msra.mxu0 0.0
    %5561 = vmatprep.subr.mxu0 0.0
    %5562 = vmatpush1.msra.mxu0 0.0
    %5563 = vmatprep.subr.mxu0 0.0
    %5564 = vmatpush1.msra.mxu0 0.0
    %5565 = vmatprep.subr.mxu0 0.0
    %5566 = vmatpush1.msra.mxu0 0.0
    %5567 = vmatprep.subr.mxu0 0.0
    %5568 = vmatpush1.msra.mxu0 0.0
    %5569 = vmatprep.subr.mxu0 0.0
    %5570 = vmatpush1.msra.mxu0 0.0
    %5571 = vmatprep.subr.mxu0 0.0
    %5572 = vmatpush1.msra.mxu0 0.0
    %5573 = vmatprep.subr.mxu0 0.0
    %5574 = vmatpush1.msra.mxu0 0.0
    %5575 = vmatprep.subr.mxu0 0.0
    %5576 = vmatpush1.msra.mxu0 0.0
    %5577 = vmatprep.subr.mxu0 0.0
    %5578 = vmatpush1.msra.mxu0 %v4279
    %5579 = vmatprep.subr.mxu0 0.0
    %5580 = vmatpush1.msra.mxu0 %v4278
    %5581 = vmatprep.subr.mxu0 0.0
    %5582 = vmatpush1.msra.mxu0 %v4277
    %5583 = vmatprep.subr.mxu0 0.0
    %5584 = vmatpush1.msra.mxu0 %v4276
    %5585 = vmatprep.subr.mxu0 0.0
    %5586 = vmatpush2.msra.mxu0 0.0
    %5587 = vmatprep.subr.mxu0 0.0
    %5588 = vmatpush2.msra.mxu0 0.0
    %5589 = vmatprep.subr.mxu0 0.0
    %5590 = vmatpush2.msra.mxu0 0.0
    %5591 = vmatprep.subr.mxu0 0.0
    %5592 = vmatpush2.msra.mxu0 0.0
    %5593 = vmatprep.subr.mxu0 0.0
    %5594 = vmatpush2.msra.mxu0 0.0
    %5595 = vmatprep.subr.mxu0 0.0
    %5596 = vmatpush2.msra.mxu0 0.0
    %5597 = vmatprep.subr.mxu0 0.0
    %5598 = vmatpush2.msra.mxu0 0.0
    %5599 = vmatprep.subr.mxu0 0.0
    %5600 = vmatpush2.msra.mxu0 0.0
    %5601 = vmatprep.subr.mxu0 0.0
    %5602 = vmatpush2.msra.mxu0 0.0
    %5603 = vmatprep.subr.mxu0 0.0
    %5604 = vmatpush2.msra.mxu0 0.0
    %5605 = vmatprep.subr.mxu0 0.0
    %5606 = vmatpush2.msra.mxu0 0.0
    %5607 = vmatprep.subr.mxu0 0.0
    %5608 = vmatpush2.msra.mxu0 0.0
    %5609 = vmatprep.subr.mxu0 0.0
    %5610 = vmatpush2.msra.mxu0 0.0
    %5611 = vmatprep.subr.mxu0 0.0
    %5612 = vmatpush2.msra.mxu0 0.0
    %5613 = vmatprep.subr.mxu0 0.0
    %5614 = vmatpush2.msra.mxu0 0.0
    %5615 = vmatprep.subr.mxu0 0.0
    %5616 = vmatpush2.msra.mxu0 0.0
    %5617 = vmatprep.mubr.f32.mxu0 0.0
    %5618 = vmatmul.mubr.f32.gmra.mxu0 %v5551
    %v5619 = vpop.f32.mrf.mxu0
    %v5620 = vadd.f32 0.0, %v5619
    %v5621 = vpop.f32.mrf.mxu0
    %5622 = vdwg.mxu0
    %v5623 = vadd.f32 %v4850, %v5620
    %v5624 = vxor.u32 %v5623, 2147483648
    %v5625 = vmul.f32 %v5624, 1.442695
    %v5626 = vpow.pop %v5625
    %v5627 = vadd.f32 %v5626, 1.0
    %v5628 = vrcp.pop %v5627
    %v5629 = vmul.f32 1.0, %v5628
    %v5630 = vtanh.pop %v5623
    %v5631 = vmul.f32 %v5629, %v5541
    %5633 = vrot.lane.b32.xlu0 %v5630, 64
    %v5634 = vpop.permute.xlu0 %5633
    %v5636 = vmul.f32 %v5629, %v5634
    %5638 = vrot.lane.b32.xlu0 %v5636, 32
    %v5639 = vpop.permute.xlu0 %5638
    %v5641 = vadd.f32 %v5631, %v5639
    %v5642 = vtanh.pop %v5641
    %5644 = vrot.lane.b32.xlu0 %v5642, 64
    %v5645 = vpop.permute.xlu0 %5644
    %v5647 = vmul.f32 %v5629, %v5645
    %s5648 = scalar_lea.vmem [#allocation7], 96
    %v5649 = vld [vmem:[%s5648] sm:$0xff]
    %v5650 = vld [vmem:[%s5648 + $0x8] sm:$0xff]
    %v5651 = vld [vmem:[%s5648 + $0x10] sm:$0xff]
    %v5652 = vld [vmem:[%s5648 + $0x18] sm:$0xff]
    %s5653 = scalar_lea.vmem [#allocation8], 128
    %v5654 = vld [vmem:[%s5653] sm:$0xff]
    %v5655 = vld [vmem:[%s5653 + $0x8] sm:$0xff]
    %v5656 = vld [vmem:[%s5653 + $0x10] sm:$0xff]
    %v5657 = vld [vmem:[%s5653 + $0x18] sm:$0xff]
    %s5658 = scalar_lea.vmem %s4, 4
    %v5659 = vld [vmem:[%s5658] sm:$0x1]
    %v5661 = vlaneseq
    %v5662 = vshrl.u32 %v5661, 7
    %v5663 = vsub.s32 0, %v5662
    %v5664 = vrot.slane %v5659, %v5663
    %5666 = vmatprep.subr.mxu0 0.0
    %5667 = vmatpush1.msra.mxu0 0.0
    %5668 = vmatprep.subr.mxu0 0.0
    %5669 = vmatpush1.msra.mxu0 0.0
    %5670 = vmatprep.subr.mxu0 0.0
    %5671 = vmatpush1.msra.mxu0 0.0
    %5672 = vmatprep.subr.mxu0 0.0
    %5673 = vmatpush1.msra.mxu0 0.0
    %5674 = vmatprep.subr.mxu0 0.0
    %5675 = vmatpush1.msra.mxu0 0.0
    %5676 = vmatprep.subr.mxu0 0.0
    %5677 = vmatpush1.msra.mxu0 0.0
    %5678 = vmatprep.subr.mxu0 0.0
    %5679 = vmatpush1.msra.mxu0 0.0
    %5680 = vmatprep.subr.mxu0 0.0
    %5681 = vmatpush1.msra.mxu0 0.0
    %5682 = vmatprep.subr.mxu0 0.0
    %5683 = vmatpush1.msra.mxu0 0.0
    %5684 = vmatprep.subr.mxu0 0.0
    %5685 = vmatpush1.msra.mxu0 0.0
    %5686 = vmatprep.subr.mxu0 0.0
    %5687 = vmatpush1.msra.mxu0 0.0
    %5688 = vmatprep.subr.mxu0 0.0
    %5689 = vmatpush1.msra.mxu0 0.0
    %5690 = vmatprep.subr.mxu0 0.0
    %5691 = vmatpush1.msra.mxu0 %v5652
    %5692 = vmatprep.subr.mxu0 0.0
    %5693 = vmatpush1.msra.mxu0 %v5651
    %5694 = vmatprep.subr.mxu0 0.0
    %5695 = vmatpush1.msra.mxu0 %v5650
    %5696 = vmatprep.subr.mxu0 0.0
    %5697 = vmatpush1.msra.mxu0 %v5649
    %5698 = vmatprep.subr.mxu0 0.0
    %5699 = vmatpush2.msra.mxu0 0.0
    %5700 = vmatprep.subr.mxu0 0.0
    %5701 = vmatpush2.msra.mxu0 0.0
    %5702 = vmatprep.subr.mxu0 0.0
    %5703 = vmatpush2.msra.mxu0 0.0
    %5704 = vmatprep.subr.mxu0 0.0
    %5705 = vmatpush2.msra.mxu0 0.0
    %5706 = vmatprep.subr.mxu0 0.0
    %5707 = vmatpush2.msra.mxu0 0.0
    %5708 = vmatprep.subr.mxu0 0.0
    %5709 = vmatpush2.msra.mxu0 0.0
    %5710 = vmatprep.subr.mxu0 0.0
    %5711 = vmatpush2.msra.mxu0 0.0
    %5712 = vmatprep.subr.mxu0 0.0
    %5713 = vmatpush2.msra.mxu0 0.0
    %5714 = vmatprep.subr.mxu0 0.0
    %5715 = vmatpush2.msra.mxu0 0.0
    %5716 = vmatprep.subr.mxu0 0.0
    %5717 = vmatpush2.msra.mxu0 0.0
    %5718 = vmatprep.subr.mxu0 0.0
    %5719 = vmatpush2.msra.mxu0 0.0
    %5720 = vmatprep.subr.mxu0 0.0
    %5721 = vmatpush2.msra.mxu0 0.0
    %5722 = vmatprep.subr.mxu0 0.0
    %5723 = vmatpush2.msra.mxu0 0.0
    %5724 = vmatprep.subr.mxu0 0.0
    %5725 = vmatpush2.msra.mxu0 0.0
    %5726 = vmatprep.subr.mxu0 0.0
    %5727 = vmatpush2.msra.mxu0 0.0
    %5728 = vmatprep.subr.mxu0 0.0
    %5729 = vmatpush2.msra.mxu0 0.0
    %5730 = vmatprep.mubr.f32.mxu0 0.0
    %5731 = vmatmul.mubr.f32.gmra.mxu0 %v4951
    %v5732 = vpop.f32.mrf.mxu0
    %v5733 = vadd.f32 %v5664, %v5732
    %v5734 = vpop.f32.mrf.mxu0
    %5735 = vdwg.mxu0
    %5736 = vmatprep.subr.mxu0 0.0
    %5737 = vmatpush1.msra.mxu0 0.0
    %5738 = vmatprep.subr.mxu0 0.0
    %5739 = vmatpush1.msra.mxu0 0.0
    %5740 = vmatprep.subr.mxu0 0.0
    %5741 = vmatpush1.msra.mxu0 0.0
    %5742 = vmatprep.subr.mxu0 0.0
    %5743 = vmatpush1.msra.mxu0 0.0
    %5744 = vmatprep.subr.mxu0 0.0
    %5745 = vmatpush1.msra.mxu0 0.0
    %5746 = vmatprep.subr.mxu0 0.0
    %5747 = vmatpush1.msra.mxu0 0.0
    %5748 = vmatprep.subr.mxu0 0.0
    %5749 = vmatpush1.msra.mxu0 0.0
    %5750 = vmatprep.subr.mxu0 0.0
    %5751 = vmatpush1.msra.mxu0 0.0
    %5752 = vmatprep.subr.mxu0 0.0
    %5753 = vmatpush1.msra.mxu0 0.0
    %5754 = vmatprep.subr.mxu0 0.0
    %5755 = vmatpush1.msra.mxu0 0.0
    %5756 = vmatprep.subr.mxu0 0.0
    %5757 = vmatpush1.msra.mxu0 0.0
    %5758 = vmatprep.subr.mxu0 0.0
    %5759 = vmatpush1.msra.mxu0 0.0
    %5760 = vmatprep.subr.mxu0 0.0
    %5761 = vmatpush1.msra.mxu0 %v5652
    %5762 = vmatprep.subr.mxu0 0.0
    %5763 = vmatpush1.msra.mxu0 %v5651
    %5764 = vmatprep.subr.mxu0 0.0
    %5765 = vmatpush1.msra.mxu0 %v5650
    %5766 = vmatprep.subr.mxu0 0.0
    %5767 = vmatpush1.msra.mxu0 %v5649
    %5768 = vmatprep.subr.mxu0 0.0
    %5769 = vmatpush2.msra.mxu0 0.0
    %5770 = vmatprep.subr.mxu0 0.0
    %5771 = vmatpush2.msra.mxu0 0.0
    %5772 = vmatprep.subr.mxu0 0.0
    %5773 = vmatpush2.msra.mxu0 0.0
    %5774 = vmatprep.subr.mxu0 0.0
    %5775 = vmatpush2.msra.mxu0 0.0
    %5776 = vmatprep.subr.mxu0 0.0
    %5777 = vmatpush2.msra.mxu0 0.0
    %5778 = vmatprep.subr.mxu0 0.0
    %5779 = vmatpush2.msra.mxu0 0.0
    %5780 = vmatprep.subr.mxu0 0.0
    %5781 = vmatpush2.msra.mxu0 0.0
    %5782 = vmatprep.subr.mxu0 0.0
    %5783 = vmatpush2.msra.mxu0 0.0
    %5784 = vmatprep.subr.mxu0 0.0
    %5785 = vmatpush2.msra.mxu0 0.0
    %5786 = vmatprep.subr.mxu0 0.0
    %5787 = vmatpush2.msra.mxu0 0.0
    %5788 = vmatprep.subr.mxu0 0.0
    %5789 = vmatpush2.msra.mxu0 0.0
    %5790 = vmatprep.subr.mxu0 0.0
    %5791 = vmatpush2.msra.mxu0 0.0
    %5792 = vmatprep.subr.mxu0 0.0
    %5793 = vmatpush2.msra.mxu0 0.0
    %5794 = vmatprep.subr.mxu0 0.0
    %5795 = vmatpush2.msra.mxu0 0.0
    %5796 = vmatprep.subr.mxu0 0.0
    %5797 = vmatpush2.msra.mxu0 0.0
    %5798 = vmatprep.subr.mxu0 0.0
    %5799 = vmatpush2.msra.mxu0 0.0
    %5800 = vmatprep.mubr.f32.mxu0 0.0
    %5801 = vmatmul.mubr.f32.gmra.mxu0 %v5051
    %v5802 = vpop.f32.mrf.mxu0
    %v5803 = vadd.f32 %v5664, %v5802
    %v5804 = vpop.f32.mrf.mxu0
    %5805 = vdwg.mxu0
    %5806 = vmatprep.subr.mxu0 0.0
    %5807 = vmatpush1.msra.mxu0 0.0
    %5808 = vmatprep.subr.mxu0 0.0
    %5809 = vmatpush1.msra.mxu0 0.0
    %5810 = vmatprep.subr.mxu0 0.0
    %5811 = vmatpush1.msra.mxu0 0.0
    %5812 = vmatprep.subr.mxu0 0.0
    %5813 = vmatpush1.msra.mxu0 0.0
    %5814 = vmatprep.subr.mxu0 0.0
    %5815 = vmatpush1.msra.mxu0 0.0
    %5816 = vmatprep.subr.mxu0 0.0
    %5817 = vmatpush1.msra.mxu0 0.0
    %5818 = vmatprep.subr.mxu0 0.0
    %5819 = vmatpush1.msra.mxu0 0.0
    %5820 = vmatprep.subr.mxu0 0.0
    %5821 = vmatpush1.msra.mxu0 0.0
    %5822 = vmatprep.subr.mxu0 0.0
    %5823 = vmatpush1.msra.mxu0 0.0
    %5824 = vmatprep.subr.mxu0 0.0
    %5825 = vmatpush1.msra.mxu0 0.0
    %5826 = vmatprep.subr.mxu0 0.0
    %5827 = vmatpush1.msra.mxu0 0.0
    %5828 = vmatprep.subr.mxu0 0.0
    %5829 = vmatpush1.msra.mxu0 0.0
    %5830 = vmatprep.subr.mxu0 0.0
    %5831 = vmatpush1.msra.mxu0 %v5652
    %5832 = vmatprep.subr.mxu0 0.0
    %5833 = vmatpush1.msra.mxu0 %v5651
    %5834 = vmatprep.subr.mxu0 0.0
    %5835 = vmatpush1.msra.mxu0 %v5650
    %5836 = vmatprep.subr.mxu0 0.0
    %5837 = vmatpush1.msra.mxu0 %v5649
    %5838 = vmatprep.subr.mxu0 0.0
    %5839 = vmatpush2.msra.mxu0 0.0
    %5840 = vmatprep.subr.mxu0 0.0
    %5841 = vmatpush2.msra.mxu0 0.0
    %5842 = vmatprep.subr.mxu0 0.0
    %5843 = vmatpush2.msra.mxu0 0.0
    %5844 = vmatprep.subr.mxu0 0.0
    %5845 = vmatpush2.msra.mxu0 0.0
    %5846 = vmatprep.subr.mxu0 0.0
    %5847 = vmatpush2.msra.mxu0 0.0
    %5848 = vmatprep.subr.mxu0 0.0
    %5849 = vmatpush2.msra.mxu0 0.0
    %5850 = vmatprep.subr.mxu0 0.0
    %5851 = vmatpush2.msra.mxu0 0.0
    %5852 = vmatprep.subr.mxu0 0.0
    %5853 = vmatpush2.msra.mxu0 0.0
    %5854 = vmatprep.subr.mxu0 0.0
    %5855 = vmatpush2.msra.mxu0 0.0
    %5856 = vmatprep.subr.mxu0 0.0
    %5857 = vmatpush2.msra.mxu0 0.0
    %5858 = vmatprep.subr.mxu0 0.0
    %5859 = vmatpush2.msra.mxu0 0.0
    %5860 = vmatprep.subr.mxu0 0.0
    %5861 = vmatpush2.msra.mxu0 0.0
    %5862 = vmatprep.subr.mxu0 0.0
    %5863 = vmatpush2.msra.mxu0 0.0
    %5864 = vmatprep.subr.mxu0 0.0
    %5865 = vmatpush2.msra.mxu0 0.0
    %5866 = vmatprep.subr.mxu0 0.0
    %5867 = vmatpush2.msra.mxu0 0.0
    %5868 = vmatprep.subr.mxu0 0.0
    %5869 = vmatpush2.msra.mxu0 0.0
    %5870 = vmatprep.mubr.f32.mxu0 0.0
    %5871 = vmatmul.mubr.f32.gmra.mxu0 %v5151
    %v5872 = vpop.f32.mrf.mxu0
    %v5873 = vadd.f32 %v5664, %v5872
    %v5874 = vpop.f32.mrf.mxu0
    %5875 = vdwg.mxu0
    %5876 = vmatprep.subr.mxu0 0.0
    %5877 = vmatpush1.msra.mxu0 0.0
    %5878 = vmatprep.subr.mxu0 0.0
    %5879 = vmatpush1.msra.mxu0 0.0
    %5880 = vmatprep.subr.mxu0 0.0
    %5881 = vmatpush1.msra.mxu0 0.0
    %5882 = vmatprep.subr.mxu0 0.0
    %5883 = vmatpush1.msra.mxu0 0.0
    %5884 = vmatprep.subr.mxu0 0.0
    %5885 = vmatpush1.msra.mxu0 0.0
    %5886 = vmatprep.subr.mxu0 0.0
    %5887 = vmatpush1.msra.mxu0 0.0
    %5888 = vmatprep.subr.mxu0 0.0
    %5889 = vmatpush1.msra.mxu0 0.0
    %5890 = vmatprep.subr.mxu0 0.0
    %5891 = vmatpush1.msra.mxu0 0.0
    %5892 = vmatprep.subr.mxu0 0.0
    %5893 = vmatpush1.msra.mxu0 0.0
    %5894 = vmatprep.subr.mxu0 0.0
    %5895 = vmatpush1.msra.mxu0 0.0
    %5896 = vmatprep.subr.mxu0 0.0
    %5897 = vmatpush1.msra.mxu0 0.0
    %5898 = vmatprep.subr.mxu0 0.0
    %5899 = vmatpush1.msra.mxu0 0.0
    %5900 = vmatprep.subr.mxu0 0.0
    %5901 = vmatpush1.msra.mxu0 %v5652
    %5902 = vmatprep.subr.mxu0 0.0
    %5903 = vmatpush1.msra.mxu0 %v5651
    %5904 = vmatprep.subr.mxu0 0.0
    %5905 = vmatpush1.msra.mxu0 %v5650
    %5906 = vmatprep.subr.mxu0 0.0
    %5907 = vmatpush1.msra.mxu0 %v5649
    %5908 = vmatprep.subr.mxu0 0.0
    %5909 = vmatpush2.msra.mxu0 0.0
    %5910 = vmatprep.subr.mxu0 0.0
    %5911 = vmatpush2.msra.mxu0 0.0
    %5912 = vmatprep.subr.mxu0 0.0
    %5913 = vmatpush2.msra.mxu0 0.0
    %5914 = vmatprep.subr.mxu0 0.0
    %5915 = vmatpush2.msra.mxu0 0.0
    %5916 = vmatprep.subr.mxu0 0.0
    %5917 = vmatpush2.msra.mxu0 0.0
    %5918 = vmatprep.subr.mxu0 0.0
    %5919 = vmatpush2.msra.mxu0 0.0
    %5920 = vmatprep.subr.mxu0 0.0
    %5921 = vmatpush2.msra.mxu0 0.0
    %5922 = vmatprep.subr.mxu0 0.0
    %5923 = vmatpush2.msra.mxu0 0.0
    %5924 = vmatprep.subr.mxu0 0.0
    %5925 = vmatpush2.msra.mxu0 0.0
    %5926 = vmatprep.subr.mxu0 0.0
    %5927 = vmatpush2.msra.mxu0 0.0
    %5928 = vmatprep.subr.mxu0 0.0
    %5929 = vmatpush2.msra.mxu0 0.0
    %5930 = vmatprep.subr.mxu0 0.0
    %5931 = vmatpush2.msra.mxu0 0.0
    %5932 = vmatprep.subr.mxu0 0.0
    %5933 = vmatpush2.msra.mxu0 0.0
    %5934 = vmatprep.subr.mxu0 0.0
    %5935 = vmatpush2.msra.mxu0 0.0
    %5936 = vmatprep.subr.mxu0 0.0
    %5937 = vmatpush2.msra.mxu0 0.0
    %5938 = vmatprep.subr.mxu0 0.0
    %5939 = vmatpush2.msra.mxu0 0.0
    %5940 = vmatprep.mubr.f32.mxu0 0.0
    %5941 = vmatmul.mubr.f32.gmra.mxu0 %v5251
    %v5942 = vpop.f32.mrf.mxu0
    %v5943 = vadd.f32 %v5664, %v5942
    %v5944 = vpop.f32.mrf.mxu0
    %5945 = vdwg.mxu0
    %5946 = vmatprep.subr.mxu0 0.0
    %5947 = vmatpush1.msra.mxu0 0.0
    %5948 = vmatprep.subr.mxu0 0.0
    %5949 = vmatpush1.msra.mxu0 0.0
    %5950 = vmatprep.subr.mxu0 0.0
    %5951 = vmatpush1.msra.mxu0 0.0
    %5952 = vmatprep.subr.mxu0 0.0
    %5953 = vmatpush1.msra.mxu0 0.0
    %5954 = vmatprep.subr.mxu0 0.0
    %5955 = vmatpush1.msra.mxu0 0.0
    %5956 = vmatprep.subr.mxu0 0.0
    %5957 = vmatpush1.msra.mxu0 0.0
    %5958 = vmatprep.subr.mxu0 0.0
    %5959 = vmatpush1.msra.mxu0 0.0
    %5960 = vmatprep.subr.mxu0 0.0
    %5961 = vmatpush1.msra.mxu0 0.0
    %5962 = vmatprep.subr.mxu0 0.0
    %5963 = vmatpush1.msra.mxu0 0.0
    %5964 = vmatprep.subr.mxu0 0.0
    %5965 = vmatpush1.msra.mxu0 0.0
    %5966 = vmatprep.subr.mxu0 0.0
    %5967 = vmatpush1.msra.mxu0 0.0
    %5968 = vmatprep.subr.mxu0 0.0
    %5969 = vmatpush1.msra.mxu0 0.0
    %5970 = vmatprep.subr.mxu0 0.0
    %5971 = vmatpush1.msra.mxu0 %v5652
    %5972 = vmatprep.subr.mxu0 0.0
    %5973 = vmatpush1.msra.mxu0 %v5651
    %5974 = vmatprep.subr.mxu0 0.0
    %5975 = vmatpush1.msra.mxu0 %v5650
    %5976 = vmatprep.subr.mxu0 0.0
    %5977 = vmatpush1.msra.mxu0 %v5649
    %5978 = vmatprep.subr.mxu0 0.0
    %5979 = vmatpush2.msra.mxu0 0.0
    %5980 = vmatprep.subr.mxu0 0.0
    %5981 = vmatpush2.msra.mxu0 0.0
    %5982 = vmatprep.subr.mxu0 0.0
    %5983 = vmatpush2.msra.mxu0 0.0
    %5984 = vmatprep.subr.mxu0 0.0
    %5985 = vmatpush2.msra.mxu0 0.0
    %5986 = vmatprep.subr.mxu0 0.0
    %5987 = vmatpush2.msra.mxu0 0.0
    %5988 = vmatprep.subr.mxu0 0.0
    %5989 = vmatpush2.msra.mxu0 0.0
    %5990 = vmatprep.subr.mxu0 0.0
    %5991 = vmatpush2.msra.mxu0 0.0
    %5992 = vmatprep.subr.mxu0 0.0
    %5993 = vmatpush2.msra.mxu0 0.0
    %5994 = vmatprep.subr.mxu0 0.0
    %5995 = vmatpush2.msra.mxu0 0.0
    %5996 = vmatprep.subr.mxu0 0.0
    %5997 = vmatpush2.msra.mxu0 0.0
    %5998 = vmatprep.subr.mxu0 0.0
    %5999 = vmatpush2.msra.mxu0 0.0
    %6000 = vmatprep.subr.mxu0 0.0
    %6001 = vmatpush2.msra.mxu0 0.0
    %6002 = vmatprep.subr.mxu0 0.0
    %6003 = vmatpush2.msra.mxu0 0.0
    %6004 = vmatprep.subr.mxu0 0.0
    %6005 = vmatpush2.msra.mxu0 0.0
    %6006 = vmatprep.subr.mxu0 0.0
    %6007 = vmatpush2.msra.mxu0 0.0
    %6008 = vmatprep.subr.mxu0 0.0
    %6009 = vmatpush2.msra.mxu0 0.0
    %6010 = vmatprep.mubr.f32.mxu0 0.0
    %6011 = vmatmul.mubr.f32.gmra.mxu0 %v5351
    %v6012 = vpop.f32.mrf.mxu0
    %v6013 = vadd.f32 %v5664, %v6012
    %v6014 = vpop.f32.mrf.mxu0
    %6015 = vdwg.mxu0
    %6016 = vmatprep.subr.mxu0 0.0
    %6017 = vmatpush1.msra.mxu0 0.0
    %6018 = vmatprep.subr.mxu0 0.0
    %6019 = vmatpush1.msra.mxu0 0.0
    %6020 = vmatprep.subr.mxu0 0.0
    %6021 = vmatpush1.msra.mxu0 0.0
    %6022 = vmatprep.subr.mxu0 0.0
    %6023 = vmatpush1.msra.mxu0 0.0
    %6024 = vmatprep.subr.mxu0 0.0
    %6025 = vmatpush1.msra.mxu0 0.0
    %6026 = vmatprep.subr.mxu0 0.0
    %6027 = vmatpush1.msra.mxu0 0.0
    %6028 = vmatprep.subr.mxu0 0.0
    %6029 = vmatpush1.msra.mxu0 0.0
    %6030 = vmatprep.subr.mxu0 0.0
    %6031 = vmatpush1.msra.mxu0 0.0
    %6032 = vmatprep.subr.mxu0 0.0
    %6033 = vmatpush1.msra.mxu0 0.0
    %6034 = vmatprep.subr.mxu0 0.0
    %6035 = vmatpush1.msra.mxu0 0.0
    %6036 = vmatprep.subr.mxu0 0.0
    %6037 = vmatpush1.msra.mxu0 0.0
    %6038 = vmatprep.subr.mxu0 0.0
    %6039 = vmatpush1.msra.mxu0 0.0
    %6040 = vmatprep.subr.mxu0 0.0
    %6041 = vmatpush1.msra.mxu0 %v5652
    %6042 = vmatprep.subr.mxu0 0.0
    %6043 = vmatpush1.msra.mxu0 %v5651
    %6044 = vmatprep.subr.mxu0 0.0
    %6045 = vmatpush1.msra.mxu0 %v5650
    %6046 = vmatprep.subr.mxu0 0.0
    %6047 = vmatpush1.msra.mxu0 %v5649
    %6048 = vmatprep.subr.mxu0 0.0
    %6049 = vmatpush2.msra.mxu0 0.0
    %6050 = vmatprep.subr.mxu0 0.0
    %6051 = vmatpush2.msra.mxu0 0.0
    %6052 = vmatprep.subr.mxu0 0.0
    %6053 = vmatpush2.msra.mxu0 0.0
    %6054 = vmatprep.subr.mxu0 0.0
    %6055 = vmatpush2.msra.mxu0 0.0
    %6056 = vmatprep.subr.mxu0 0.0
    %6057 = vmatpush2.msra.mxu0 0.0
    %6058 = vmatprep.subr.mxu0 0.0
    %6059 = vmatpush2.msra.mxu0 0.0
    %6060 = vmatprep.subr.mxu0 0.0
    %6061 = vmatpush2.msra.mxu0 0.0
    %6062 = vmatprep.subr.mxu0 0.0
    %6063 = vmatpush2.msra.mxu0 0.0
    %6064 = vmatprep.subr.mxu0 0.0
    %6065 = vmatpush2.msra.mxu0 0.0
    %6066 = vmatprep.subr.mxu0 0.0
    %6067 = vmatpush2.msra.mxu0 0.0
    %6068 = vmatprep.subr.mxu0 0.0
    %6069 = vmatpush2.msra.mxu0 0.0
    %6070 = vmatprep.subr.mxu0 0.0
    %6071 = vmatpush2.msra.mxu0 0.0
    %6072 = vmatprep.subr.mxu0 0.0
    %6073 = vmatpush2.msra.mxu0 0.0
    %6074 = vmatprep.subr.mxu0 0.0
    %6075 = vmatpush2.msra.mxu0 0.0
    %6076 = vmatprep.subr.mxu0 0.0
    %6077 = vmatpush2.msra.mxu0 0.0
    %6078 = vmatprep.subr.mxu0 0.0
    %6079 = vmatpush2.msra.mxu0 0.0
    %6080 = vmatprep.mubr.f32.mxu0 0.0
    %6081 = vmatmul.mubr.f32.gmra.mxu0 %v5451
    %v6082 = vpop.f32.mrf.mxu0
    %v6083 = vadd.f32 %v5664, %v6082
    %v6084 = vpop.f32.mrf.mxu0
    %6085 = vdwg.mxu0
    %6086 = vmatprep.subr.mxu0 0.0
    %6087 = vmatpush1.msra.mxu0 0.0
    %6088 = vmatprep.subr.mxu0 0.0
    %6089 = vmatpush1.msra.mxu0 0.0
    %6090 = vmatprep.subr.mxu0 0.0
    %6091 = vmatpush1.msra.mxu0 0.0
    %6092 = vmatprep.subr.mxu0 0.0
    %6093 = vmatpush1.msra.mxu0 0.0
    %6094 = vmatprep.subr.mxu0 0.0
    %6095 = vmatpush1.msra.mxu0 0.0
    %6096 = vmatprep.subr.mxu0 0.0
    %6097 = vmatpush1.msra.mxu0 0.0
    %6098 = vmatprep.subr.mxu0 0.0
    %6099 = vmatpush1.msra.mxu0 0.0
    %6100 = vmatprep.subr.mxu0 0.0
    %6101 = vmatpush1.msra.mxu0 0.0
    %6102 = vmatprep.subr.mxu0 0.0
    %6103 = vmatpush1.msra.mxu0 0.0
    %6104 = vmatprep.subr.mxu0 0.0
    %6105 = vmatpush1.msra.mxu0 0.0
    %6106 = vmatprep.subr.mxu0 0.0
    %6107 = vmatpush1.msra.mxu0 0.0
    %6108 = vmatprep.subr.mxu0 0.0
    %6109 = vmatpush1.msra.mxu0 0.0
    %6110 = vmatprep.subr.mxu0 0.0
    %6111 = vmatpush1.msra.mxu0 %v5652
    %6112 = vmatprep.subr.mxu0 0.0
    %6113 = vmatpush1.msra.mxu0 %v5651
    %6114 = vmatprep.subr.mxu0 0.0
    %6115 = vmatpush1.msra.mxu0 %v5650
    %6116 = vmatprep.subr.mxu0 0.0
    %6117 = vmatpush1.msra.mxu0 %v5649
    %6118 = vmatprep.subr.mxu0 0.0
    %6119 = vmatpush2.msra.mxu0 0.0
    %6120 = vmatprep.subr.mxu0 0.0
    %6121 = vmatpush2.msra.mxu0 0.0
    %6122 = vmatprep.subr.mxu0 0.0
    %6123 = vmatpush2.msra.mxu0 0.0
    %6124 = vmatprep.subr.mxu0 0.0
    %6125 = vmatpush2.msra.mxu0 0.0
    %6126 = vmatprep.subr.mxu0 0.0
    %6127 = vmatpush2.msra.mxu0 0.0
    %6128 = vmatprep.subr.mxu0 0.0
    %6129 = vmatpush2.msra.mxu0 0.0
    %6130 = vmatprep.subr.mxu0 0.0
    %6131 = vmatpush2.msra.mxu0 0.0
    %6132 = vmatprep.subr.mxu0 0.0
    %6133 = vmatpush2.msra.mxu0 0.0
    %6134 = vmatprep.subr.mxu0 0.0
    %6135 = vmatpush2.msra.mxu0 0.0
    %6136 = vmatprep.subr.mxu0 0.0
    %6137 = vmatpush2.msra.mxu0 0.0
    %6138 = vmatprep.subr.mxu0 0.0
    %6139 = vmatpush2.msra.mxu0 0.0
    %6140 = vmatprep.subr.mxu0 0.0
    %6141 = vmatpush2.msra.mxu0 0.0
    %6142 = vmatprep.subr.mxu0 0.0
    %6143 = vmatpush2.msra.mxu0 0.0
    %6144 = vmatprep.subr.mxu0 0.0
    %6145 = vmatpush2.msra.mxu0 0.0
    %6146 = vmatprep.subr.mxu0 0.0
    %6147 = vmatpush2.msra.mxu0 0.0
    %6148 = vmatprep.subr.mxu0 0.0
    %6149 = vmatpush2.msra.mxu0 0.0
    %6150 = vmatprep.mubr.f32.mxu0 0.0
    %6151 = vmatmul.mubr.f32.gmra.mxu0 %v5551
    %v6152 = vpop.f32.mrf.mxu0
    %v6153 = vadd.f32 %v5664, %v6152
    %v6154 = vpop.f32.mrf.mxu0
    %6155 = vdwg.mxu0
    %6157 = vrot.lane.b32.xlu0 %v5647, 32
    %v6158 = vpop.permute.xlu0 %6157
    %v6159 = vsel %vm716, %v6158, 0
    %6161 = vmatprep.subr.mxu0 0.0
    %6162 = vmatpush1.msra.mxu0 0.0
    %6163 = vmatprep.subr.mxu0 0.0
    %6164 = vmatpush1.msra.mxu0 0.0
    %6165 = vmatprep.subr.mxu0 0.0
    %6166 = vmatpush1.msra.mxu0 0.0
    %6167 = vmatprep.subr.mxu0 0.0
    %6168 = vmatpush1.msra.mxu0 0.0
    %6169 = vmatprep.subr.mxu0 0.0
    %6170 = vmatpush1.msra.mxu0 0.0
    %6171 = vmatprep.subr.mxu0 0.0
    %6172 = vmatpush1.msra.mxu0 0.0
    %6173 = vmatprep.subr.mxu0 0.0
    %6174 = vmatpush1.msra.mxu0 0.0
    %6175 = vmatprep.subr.mxu0 0.0
    %6176 = vmatpush1.msra.mxu0 0.0
    %6177 = vmatprep.subr.mxu0 0.0
    %6178 = vmatpush1.msra.mxu0 0.0
    %6179 = vmatprep.subr.mxu0 0.0
    %6180 = vmatpush1.msra.mxu0 0.0
    %6181 = vmatprep.subr.mxu0 0.0
    %6182 = vmatpush1.msra.mxu0 0.0
    %6183 = vmatprep.subr.mxu0 0.0
    %6184 = vmatpush1.msra.mxu0 0.0
    %6185 = vmatprep.subr.mxu0 0.0
    %6186 = vmatpush1.msra.mxu0 %v5652
    %6187 = vmatprep.subr.mxu0 0.0
    %6188 = vmatpush1.msra.mxu0 %v5651
    %6189 = vmatprep.subr.mxu0 0.0
    %6190 = vmatpush1.msra.mxu0 %v5650
    %6191 = vmatprep.subr.mxu0 0.0
    %6192 = vmatpush1.msra.mxu0 %v5649
    %6193 = vmatprep.subr.mxu0 0.0
    %6194 = vmatpush2.msra.mxu0 0.0
    %6195 = vmatprep.subr.mxu0 0.0
    %6196 = vmatpush2.msra.mxu0 0.0
    %6197 = vmatprep.subr.mxu0 0.0
    %6198 = vmatpush2.msra.mxu0 0.0
    %6199 = vmatprep.subr.mxu0 0.0
    %6200 = vmatpush2.msra.mxu0 0.0
    %6201 = vmatprep.subr.mxu0 0.0
    %6202 = vmatpush2.msra.mxu0 0.0
    %6203 = vmatprep.subr.mxu0 0.0
    %6204 = vmatpush2.msra.mxu0 0.0
    %6205 = vmatprep.subr.mxu0 0.0
    %6206 = vmatpush2.msra.mxu0 0.0
    %6207 = vmatprep.subr.mxu0 0.0
    %6208 = vmatpush2.msra.mxu0 0.0
    %6209 = vmatprep.subr.mxu0 0.0
    %6210 = vmatpush2.msra.mxu0 0.0
    %6211 = vmatprep.subr.mxu0 0.0
    %6212 = vmatpush2.msra.mxu0 0.0
    %6213 = vmatprep.subr.mxu0 0.0
    %6214 = vmatpush2.msra.mxu0 0.0
    %6215 = vmatprep.subr.mxu0 0.0
    %6216 = vmatpush2.msra.mxu0 0.0
    %6217 = vmatprep.subr.mxu0 0.0
    %6218 = vmatpush2.msra.mxu0 0.0
    %6219 = vmatprep.subr.mxu0 0.0
    %6220 = vmatpush2.msra.mxu0 0.0
    %6221 = vmatprep.subr.mxu0 0.0
    %6222 = vmatpush2.msra.mxu0 0.0
    %6223 = vmatprep.subr.mxu0 0.0
    %6224 = vmatpush2.msra.mxu0 0.0
    %6225 = vmatprep.mubr.f32.mxu0 0.0
    %6226 = vmatmul.mubr.f32.gmra.mxu0 %v6159
    %v6227 = vpop.f32.mrf.mxu0
    %v6228 = vadd.f32 %v5664, %v6227
    %v6229 = vpop.f32.mrf.mxu0
    %6230 = vdwg.mxu0
    %6231 = vmatprep.subr.mxu0 0.0
    %6232 = vmatpush1.msra.mxu0 0.0
    %6233 = vmatprep.subr.mxu0 0.0
    %6234 = vmatpush1.msra.mxu0 0.0
    %6235 = vmatprep.subr.mxu0 0.0
    %6236 = vmatpush1.msra.mxu0 0.0
    %6237 = vmatprep.subr.mxu0 0.0
    %6238 = vmatpush1.msra.mxu0 0.0
    %6239 = vmatprep.subr.mxu0 0.0
    %6240 = vmatpush1.msra.mxu0 0.0
    %6241 = vmatprep.subr.mxu0 0.0
    %6242 = vmatpush1.msra.mxu0 0.0
    %6243 = vmatprep.subr.mxu0 0.0
    %6244 = vmatpush1.msra.mxu0 0.0
    %6245 = vmatprep.subr.mxu0 0.0
    %6246 = vmatpush1.msra.mxu0 0.0
    %6247 = vmatprep.subr.mxu0 0.0
    %6248 = vmatpush1.msra.mxu0 0.0
    %6249 = vmatprep.subr.mxu0 0.0
    %6250 = vmatpush1.msra.mxu0 0.0
    %6251 = vmatprep.subr.mxu0 0.0
    %6252 = vmatpush1.msra.mxu0 0.0
    %6253 = vmatprep.subr.mxu0 0.0
    %6254 = vmatpush1.msra.mxu0 0.0
    %6255 = vmatprep.subr.mxu0 0.0
    %6256 = vmatpush1.msra.mxu0 %v5657
    %6257 = vmatprep.subr.mxu0 0.0
    %6258 = vmatpush1.msra.mxu0 %v5656
    %6259 = vmatprep.subr.mxu0 0.0
    %6260 = vmatpush1.msra.mxu0 %v5655
    %6261 = vmatprep.subr.mxu0 0.0
    %6262 = vmatpush1.msra.mxu0 %v5654
    %6263 = vmatprep.subr.mxu0 0.0
    %6264 = vmatpush2.msra.mxu0 0.0
    %6265 = vmatprep.subr.mxu0 0.0
    %6266 = vmatpush2.msra.mxu0 0.0
    %6267 = vmatprep.subr.mxu0 0.0
    %6268 = vmatpush2.msra.mxu0 0.0
    %6269 = vmatprep.subr.mxu0 0.0
    %6270 = vmatpush2.msra.mxu0 0.0
    %6271 = vmatprep.subr.mxu0 0.0
    %6272 = vmatpush2.msra.mxu0 0.0
    %6273 = vmatprep.subr.mxu0 0.0
    %6274 = vmatpush2.msra.mxu0 0.0
    %6275 = vmatprep.subr.mxu0 0.0
    %6276 = vmatpush2.msra.mxu0 0.0
    %6277 = vmatprep.subr.mxu0 0.0
    %6278 = vmatpush2.msra.mxu0 0.0
    %6279 = vmatprep.subr.mxu0 0.0
    %6280 = vmatpush2.msra.mxu0 0.0
    %6281 = vmatprep.subr.mxu0 0.0
    %6282 = vmatpush2.msra.mxu0 0.0
    %6283 = vmatprep.subr.mxu0 0.0
    %6284 = vmatpush2.msra.mxu0 0.0
    %6285 = vmatprep.subr.mxu0 0.0
    %6286 = vmatpush2.msra.mxu0 0.0
    %6287 = vmatprep.subr.mxu0 0.0
    %6288 = vmatpush2.msra.mxu0 0.0
    %6289 = vmatprep.subr.mxu0 0.0
    %6290 = vmatpush2.msra.mxu0 0.0
    %6291 = vmatprep.subr.mxu0 0.0
    %6292 = vmatpush2.msra.mxu0 0.0
    %6293 = vmatprep.subr.mxu0 0.0
    %6294 = vmatpush2.msra.mxu0 0.0
    %6295 = vmatprep.mubr.f32.mxu0 0.0
    %6296 = vmatmul.mubr.f32.gmra.mxu0 %v718
    %v6297 = vpop.f32.mrf.mxu0
    %v6298 = vadd.f32 0.0, %v6297
    %v6299 = vpop.f32.mrf.mxu0
    %6300 = vdwg.mxu0
    %v6301 = vadd.f32 %v5733, %v6298
    %v6302 = vxor.u32 %v6301, 2147483648
    %v6303 = vmul.f32 %v6302, 1.442695
    %v6304 = vpow.pop %v6303
    %v6305 = vadd.f32 %v6304, 1.0
    %v6306 = vrcp.pop %v6305
    %v6307 = vmul.f32 1.0, %v6306
    %v6308 = vtanh.pop %v6301
    %v6309 = vmul.f32 %v6307, 0.0
    %6311 = vrot.lane.b32.xlu0 %v6308, 64
    %v6312 = vpop.permute.xlu0 %6311
    %v6314 = vmul.f32 %v6307, %v6312
    %6316 = vrot.lane.b32.xlu0 %v6314, 32
    %v6317 = vpop.permute.xlu0 %6316
    %v6319 = vadd.f32 %v6309, %v6317
    %v6320 = vtanh.pop %v6319
    %6322 = vrot.lane.b32.xlu0 %v6320, 64
    %v6323 = vpop.permute.xlu0 %6322
    %v6325 = vmul.f32 %v6307, %v6323
    %6327 = vrot.lane.b32.xlu0 %v6325, 32
    %v6328 = vpop.permute.xlu0 %6327
    %v6329 = vsel %vm716, %v6328, 0
    %6331 = vmatprep.subr.mxu0 0.0
    %6332 = vmatpush1.msra.mxu0 0.0
    %6333 = vmatprep.subr.mxu0 0.0
    %6334 = vmatpush1.msra.mxu0 0.0
    %6335 = vmatprep.subr.mxu0 0.0
    %6336 = vmatpush1.msra.mxu0 0.0
    %6337 = vmatprep.subr.mxu0 0.0
    %6338 = vmatpush1.msra.mxu0 0.0
    %6339 = vmatprep.subr.mxu0 0.0
    %6340 = vmatpush1.msra.mxu0 0.0
    %6341 = vmatprep.subr.mxu0 0.0
    %6342 = vmatpush1.msra.mxu0 0.0
    %6343 = vmatprep.subr.mxu0 0.0
    %6344 = vmatpush1.msra.mxu0 0.0
    %6345 = vmatprep.subr.mxu0 0.0
    %6346 = vmatpush1.msra.mxu0 0.0
    %6347 = vmatprep.subr.mxu0 0.0
    %6348 = vmatpush1.msra.mxu0 0.0
    %6349 = vmatprep.subr.mxu0 0.0
    %6350 = vmatpush1.msra.mxu0 0.0
    %6351 = vmatprep.subr.mxu0 0.0
    %6352 = vmatpush1.msra.mxu0 0.0
    %6353 = vmatprep.subr.mxu0 0.0
    %6354 = vmatpush1.msra.mxu0 0.0
    %6355 = vmatprep.subr.mxu0 0.0
    %6356 = vmatpush1.msra.mxu0 %v5657
    %6357 = vmatprep.subr.mxu0 0.0
    %6358 = vmatpush1.msra.mxu0 %v5656
    %6359 = vmatprep.subr.mxu0 0.0
    %6360 = vmatpush1.msra.mxu0 %v5655
    %6361 = vmatprep.subr.mxu0 0.0
    %6362 = vmatpush1.msra.mxu0 %v5654
    %6363 = vmatprep.subr.mxu0 0.0
    %6364 = vmatpush2.msra.mxu0 0.0
    %6365 = vmatprep.subr.mxu0 0.0
    %6366 = vmatpush2.msra.mxu0 0.0
    %6367 = vmatprep.subr.mxu0 0.0
    %6368 = vmatpush2.msra.mxu0 0.0
    %6369 = vmatprep.subr.mxu0 0.0
    %6370 = vmatpush2.msra.mxu0 0.0
    %6371 = vmatprep.subr.mxu0 0.0
    %6372 = vmatpush2.msra.mxu0 0.0
    %6373 = vmatprep.subr.mxu0 0.0
    %6374 = vmatpush2.msra.mxu0 0.0
    %6375 = vmatprep.subr.mxu0 0.0
    %6376 = vmatpush2.msra.mxu0 0.0
    %6377 = vmatprep.subr.mxu0 0.0
    %6378 = vmatpush2.msra.mxu0 0.0
    %6379 = vmatprep.subr.mxu0 0.0
    %6380 = vmatpush2.msra.mxu0 0.0
    %6381 = vmatprep.subr.mxu0 0.0
    %6382 = vmatpush2.msra.mxu0 0.0
    %6383 = vmatprep.subr.mxu0 0.0
    %6384 = vmatpush2.msra.mxu0 0.0
    %6385 = vmatprep.subr.mxu0 0.0
    %6386 = vmatpush2.msra.mxu0 0.0
    %6387 = vmatprep.subr.mxu0 0.0
    %6388 = vmatpush2.msra.mxu0 0.0
    %6389 = vmatprep.subr.mxu0 0.0
    %6390 = vmatpush2.msra.mxu0 0.0
    %6391 = vmatprep.subr.mxu0 0.0
    %6392 = vmatpush2.msra.mxu0 0.0
    %6393 = vmatprep.subr.mxu0 0.0
    %6394 = vmatpush2.msra.mxu0 0.0
    %6395 = vmatprep.mubr.f32.mxu0 0.0
    %6396 = vmatmul.mubr.f32.gmra.mxu0 %v6329
    %v6397 = vpop.f32.mrf.mxu0
    %v6398 = vadd.f32 0.0, %v6397
    %v6399 = vpop.f32.mrf.mxu0
    %6400 = vdwg.mxu0
    %v6401 = vadd.f32 %v5803, %v6398
    %v6402 = vxor.u32 %v6401, 2147483648
    %v6403 = vmul.f32 %v6402, 1.442695
    %v6404 = vpow.pop %v6403
    %v6405 = vadd.f32 %v6404, 1.0
    %v6406 = vrcp.pop %v6405
    %v6407 = vmul.f32 1.0, %v6406
    %v6408 = vtanh.pop %v6401
    %v6409 = vmul.f32 %v6407, %v6319
    %6411 = vrot.lane.b32.xlu0 %v6408, 64
    %v6412 = vpop.permute.xlu0 %6411
    %v6414 = vmul.f32 %v6407, %v6412
    %6416 = vrot.lane.b32.xlu0 %v6414, 32
    %v6417 = vpop.permute.xlu0 %6416
    %v6419 = vadd.f32 %v6409, %v6417
    %v6420 = vtanh.pop %v6419
    %6422 = vrot.lane.b32.xlu0 %v6420, 64
    %v6423 = vpop.permute.xlu0 %6422
    %v6425 = vmul.f32 %v6407, %v6423
    %6427 = vrot.lane.b32.xlu0 %v6425, 32
    %v6428 = vpop.permute.xlu0 %6427
    %v6429 = vsel %vm716, %v6428, 0
    %6431 = vmatprep.subr.mxu0 0.0
    %6432 = vmatpush1.msra.mxu0 0.0
    %6433 = vmatprep.subr.mxu0 0.0
    %6434 = vmatpush1.msra.mxu0 0.0
    %6435 = vmatprep.subr.mxu0 0.0
    %6436 = vmatpush1.msra.mxu0 0.0
    %6437 = vmatprep.subr.mxu0 0.0
    %6438 = vmatpush1.msra.mxu0 0.0
    %6439 = vmatprep.subr.mxu0 0.0
    %6440 = vmatpush1.msra.mxu0 0.0
    %6441 = vmatprep.subr.mxu0 0.0
    %6442 = vmatpush1.msra.mxu0 0.0
    %6443 = vmatprep.subr.mxu0 0.0
    %6444 = vmatpush1.msra.mxu0 0.0
    %6445 = vmatprep.subr.mxu0 0.0
    %6446 = vmatpush1.msra.mxu0 0.0
    %6447 = vmatprep.subr.mxu0 0.0
    %6448 = vmatpush1.msra.mxu0 0.0
    %6449 = vmatprep.subr.mxu0 0.0
    %6450 = vmatpush1.msra.mxu0 0.0
    %6451 = vmatprep.subr.mxu0 0.0
    %6452 = vmatpush1.msra.mxu0 0.0
    %6453 = vmatprep.subr.mxu0 0.0
    %6454 = vmatpush1.msra.mxu0 0.0
    %6455 = vmatprep.subr.mxu0 0.0
    %6456 = vmatpush1.msra.mxu0 %v5657
    %6457 = vmatprep.subr.mxu0 0.0
    %6458 = vmatpush1.msra.mxu0 %v5656
    %6459 = vmatprep.subr.mxu0 0.0
    %6460 = vmatpush1.msra.mxu0 %v5655
    %6461 = vmatprep.subr.mxu0 0.0
    %6462 = vmatpush1.msra.mxu0 %v5654
    %6463 = vmatprep.subr.mxu0 0.0
    %6464 = vmatpush2.msra.mxu0 0.0
    %6465 = vmatprep.subr.mxu0 0.0
    %6466 = vmatpush2.msra.mxu0 0.0
    %6467 = vmatprep.subr.mxu0 0.0
    %6468 = vmatpush2.msra.mxu0 0.0
    %6469 = vmatprep.subr.mxu0 0.0
    %6470 = vmatpush2.msra.mxu0 0.0
    %6471 = vmatprep.subr.mxu0 0.0
    %6472 = vmatpush2.msra.mxu0 0.0
    %6473 = vmatprep.subr.mxu0 0.0
    %6474 = vmatpush2.msra.mxu0 0.0
    %6475 = vmatprep.subr.mxu0 0.0
    %6476 = vmatpush2.msra.mxu0 0.0
    %6477 = vmatprep.subr.mxu0 0.0
    %6478 = vmatpush2.msra.mxu0 0.0
    %6479 = vmatprep.subr.mxu0 0.0
    %6480 = vmatpush2.msra.mxu0 0.0
    %6481 = vmatprep.subr.mxu0 0.0
    %6482 = vmatpush2.msra.mxu0 0.0
    %6483 = vmatprep.subr.mxu0 0.0
    %6484 = vmatpush2.msra.mxu0 0.0
    %6485 = vmatprep.subr.mxu0 0.0
    %6486 = vmatpush2.msra.mxu0 0.0
    %6487 = vmatprep.subr.mxu0 0.0
    %6488 = vmatpush2.msra.mxu0 0.0
    %6489 = vmatprep.subr.mxu0 0.0
    %6490 = vmatpush2.msra.mxu0 0.0
    %6491 = vmatprep.subr.mxu0 0.0
    %6492 = vmatpush2.msra.mxu0 0.0
    %6493 = vmatprep.subr.mxu0 0.0
    %6494 = vmatpush2.msra.mxu0 0.0
    %6495 = vmatprep.mubr.f32.mxu0 0.0
    %6496 = vmatmul.mubr.f32.gmra.mxu0 %v6429
    %v6497 = vpop.f32.mrf.mxu0
    %v6498 = vadd.f32 0.0, %v6497
    %v6499 = vpop.f32.mrf.mxu0
    %6500 = vdwg.mxu0
    %v6501 = vadd.f32 %v5873, %v6498
    %v6502 = vxor.u32 %v6501, 2147483648
    %v6503 = vmul.f32 %v6502, 1.442695
    %v6504 = vpow.pop %v6503
    %v6505 = vadd.f32 %v6504, 1.0
    %v6506 = vrcp.pop %v6505
    %v6507 = vmul.f32 1.0, %v6506
    %v6508 = vtanh.pop %v6501
    %v6509 = vmul.f32 %v6507, %v6419
    %6511 = vrot.lane.b32.xlu0 %v6508, 64
    %v6512 = vpop.permute.xlu0 %6511
    %v6514 = vmul.f32 %v6507, %v6512
    %6516 = vrot.lane.b32.xlu0 %v6514, 32
    %v6517 = vpop.permute.xlu0 %6516
    %v6519 = vadd.f32 %v6509, %v6517
    %v6520 = vtanh.pop %v6519
    %6522 = vrot.lane.b32.xlu0 %v6520, 64
    %v6523 = vpop.permute.xlu0 %6522
    %v6525 = vmul.f32 %v6507, %v6523
    %6527 = vrot.lane.b32.xlu0 %v6525, 32
    %v6528 = vpop.permute.xlu0 %6527
    %v6529 = vsel %vm716, %v6528, 0
    %6531 = vmatprep.subr.mxu0 0.0
    %6532 = vmatpush1.msra.mxu0 0.0
    %6533 = vmatprep.subr.mxu0 0.0
    %6534 = vmatpush1.msra.mxu0 0.0
    %6535 = vmatprep.subr.mxu0 0.0
    %6536 = vmatpush1.msra.mxu0 0.0
    %6537 = vmatprep.subr.mxu0 0.0
    %6538 = vmatpush1.msra.mxu0 0.0
    %6539 = vmatprep.subr.mxu0 0.0
    %6540 = vmatpush1.msra.mxu0 0.0
    %6541 = vmatprep.subr.mxu0 0.0
    %6542 = vmatpush1.msra.mxu0 0.0
    %6543 = vmatprep.subr.mxu0 0.0
    %6544 = vmatpush1.msra.mxu0 0.0
    %6545 = vmatprep.subr.mxu0 0.0
    %6546 = vmatpush1.msra.mxu0 0.0
    %6547 = vmatprep.subr.mxu0 0.0
    %6548 = vmatpush1.msra.mxu0 0.0
    %6549 = vmatprep.subr.mxu0 0.0
    %6550 = vmatpush1.msra.mxu0 0.0
    %6551 = vmatprep.subr.mxu0 0.0
    %6552 = vmatpush1.msra.mxu0 0.0
    %6553 = vmatprep.subr.mxu0 0.0
    %6554 = vmatpush1.msra.mxu0 0.0
    %6555 = vmatprep.subr.mxu0 0.0
    %6556 = vmatpush1.msra.mxu0 %v5657
    %6557 = vmatprep.subr.mxu0 0.0
    %6558 = vmatpush1.msra.mxu0 %v5656
    %6559 = vmatprep.subr.mxu0 0.0
    %6560 = vmatpush1.msra.mxu0 %v5655
    %6561 = vmatprep.subr.mxu0 0.0
    %6562 = vmatpush1.msra.mxu0 %v5654
    %6563 = vmatprep.subr.mxu0 0.0
    %6564 = vmatpush2.msra.mxu0 0.0
    %6565 = vmatprep.subr.mxu0 0.0
    %6566 = vmatpush2.msra.mxu0 0.0
    %6567 = vmatprep.subr.mxu0 0.0
    %6568 = vmatpush2.msra.mxu0 0.0
    %6569 = vmatprep.subr.mxu0 0.0
    %6570 = vmatpush2.msra.mxu0 0.0
    %6571 = vmatprep.subr.mxu0 0.0
    %6572 = vmatpush2.msra.mxu0 0.0
    %6573 = vmatprep.subr.mxu0 0.0
    %6574 = vmatpush2.msra.mxu0 0.0
    %6575 = vmatprep.subr.mxu0 0.0
    %6576 = vmatpush2.msra.mxu0 0.0
    %6577 = vmatprep.subr.mxu0 0.0
    %6578 = vmatpush2.msra.mxu0 0.0
    %6579 = vmatprep.subr.mxu0 0.0
    %6580 = vmatpush2.msra.mxu0 0.0
    %6581 = vmatprep.subr.mxu0 0.0
    %6582 = vmatpush2.msra.mxu0 0.0
    %6583 = vmatprep.subr.mxu0 0.0
    %6584 = vmatpush2.msra.mxu0 0.0
    %6585 = vmatprep.subr.mxu0 0.0
    %6586 = vmatpush2.msra.mxu0 0.0
    %6587 = vmatprep.subr.mxu0 0.0
    %6588 = vmatpush2.msra.mxu0 0.0
    %6589 = vmatprep.subr.mxu0 0.0
    %6590 = vmatpush2.msra.mxu0 0.0
    %6591 = vmatprep.subr.mxu0 0.0
    %6592 = vmatpush2.msra.mxu0 0.0
    %6593 = vmatprep.subr.mxu0 0.0
    %6594 = vmatpush2.msra.mxu0 0.0
    %6595 = vmatprep.mubr.f32.mxu0 0.0
    %6596 = vmatmul.mubr.f32.gmra.mxu0 %v6529
    %v6597 = vpop.f32.mrf.mxu0
    %v6598 = vadd.f32 0.0, %v6597
    %v6599 = vpop.f32.mrf.mxu0
    %6600 = vdwg.mxu0
    %v6601 = vadd.f32 %v5943, %v6598
    %v6602 = vxor.u32 %v6601, 2147483648
    %v6603 = vmul.f32 %v6602, 1.442695
    %v6604 = vpow.pop %v6603
    %v6605 = vadd.f32 %v6604, 1.0
    %v6606 = vrcp.pop %v6605
    %v6607 = vmul.f32 1.0, %v6606
    %v6608 = vtanh.pop %v6601
    %v6609 = vmul.f32 %v6607, %v6519
    %6611 = vrot.lane.b32.xlu0 %v6608, 64
    %v6612 = vpop.permute.xlu0 %6611
    %v6614 = vmul.f32 %v6607, %v6612
    %6616 = vrot.lane.b32.xlu0 %v6614, 32
    %v6617 = vpop.permute.xlu0 %6616
    %v6619 = vadd.f32 %v6609, %v6617
    %v6620 = vtanh.pop %v6619
    %6622 = vrot.lane.b32.xlu0 %v6620, 64
    %v6623 = vpop.permute.xlu0 %6622
    %v6625 = vmul.f32 %v6607, %v6623
    %6627 = vrot.lane.b32.xlu0 %v6625, 32
    %v6628 = vpop.permute.xlu0 %6627
    %v6629 = vsel %vm716, %v6628, 0
    %6631 = vmatprep.subr.mxu0 0.0
    %6632 = vmatpush1.msra.mxu0 0.0
    %6633 = vmatprep.subr.mxu0 0.0
    %6634 = vmatpush1.msra.mxu0 0.0
    %6635 = vmatprep.subr.mxu0 0.0
    %6636 = vmatpush1.msra.mxu0 0.0
    %6637 = vmatprep.subr.mxu0 0.0
    %6638 = vmatpush1.msra.mxu0 0.0
    %6639 = vmatprep.subr.mxu0 0.0
    %6640 = vmatpush1.msra.mxu0 0.0
    %6641 = vmatprep.subr.mxu0 0.0
    %6642 = vmatpush1.msra.mxu0 0.0
    %6643 = vmatprep.subr.mxu0 0.0
    %6644 = vmatpush1.msra.mxu0 0.0
    %6645 = vmatprep.subr.mxu0 0.0
    %6646 = vmatpush1.msra.mxu0 0.0
    %6647 = vmatprep.subr.mxu0 0.0
    %6648 = vmatpush1.msra.mxu0 0.0
    %6649 = vmatprep.subr.mxu0 0.0
    %6650 = vmatpush1.msra.mxu0 0.0
    %6651 = vmatprep.subr.mxu0 0.0
    %6652 = vmatpush1.msra.mxu0 0.0
    %6653 = vmatprep.subr.mxu0 0.0
    %6654 = vmatpush1.msra.mxu0 0.0
    %6655 = vmatprep.subr.mxu0 0.0
    %6656 = vmatpush1.msra.mxu0 %v5657
    %6657 = vmatprep.subr.mxu0 0.0
    %6658 = vmatpush1.msra.mxu0 %v5656
    %6659 = vmatprep.subr.mxu0 0.0
    %6660 = vmatpush1.msra.mxu0 %v5655
    %6661 = vmatprep.subr.mxu0 0.0
    %6662 = vmatpush1.msra.mxu0 %v5654
    %6663 = vmatprep.subr.mxu0 0.0
    %6664 = vmatpush2.msra.mxu0 0.0
    %6665 = vmatprep.subr.mxu0 0.0
    %6666 = vmatpush2.msra.mxu0 0.0
    %6667 = vmatprep.subr.mxu0 0.0
    %6668 = vmatpush2.msra.mxu0 0.0
    %6669 = vmatprep.subr.mxu0 0.0
    %6670 = vmatpush2.msra.mxu0 0.0
    %6671 = vmatprep.subr.mxu0 0.0
    %6672 = vmatpush2.msra.mxu0 0.0
    %6673 = vmatprep.subr.mxu0 0.0
    %6674 = vmatpush2.msra.mxu0 0.0
    %6675 = vmatprep.subr.mxu0 0.0
    %6676 = vmatpush2.msra.mxu0 0.0
    %6677 = vmatprep.subr.mxu0 0.0
    %6678 = vmatpush2.msra.mxu0 0.0
    %6679 = vmatprep.subr.mxu0 0.0
    %6680 = vmatpush2.msra.mxu0 0.0
    %6681 = vmatprep.subr.mxu0 0.0
    %6682 = vmatpush2.msra.mxu0 0.0
    %6683 = vmatprep.subr.mxu0 0.0
    %6684 = vmatpush2.msra.mxu0 0.0
    %6685 = vmatprep.subr.mxu0 0.0
    %6686 = vmatpush2.msra.mxu0 0.0
    %6687 = vmatprep.subr.mxu0 0.0
    %6688 = vmatpush2.msra.mxu0 0.0
    %6689 = vmatprep.subr.mxu0 0.0
    %6690 = vmatpush2.msra.mxu0 0.0
    %6691 = vmatprep.subr.mxu0 0.0
    %6692 = vmatpush2.msra.mxu0 0.0
    %6693 = vmatprep.subr.mxu0 0.0
    %6694 = vmatpush2.msra.mxu0 0.0
    %6695 = vmatprep.mubr.f32.mxu0 0.0
    %6696 = vmatmul.mubr.f32.gmra.mxu0 %v6629
    %v6697 = vpop.f32.mrf.mxu0
    %v6698 = vadd.f32 0.0, %v6697
    %v6699 = vpop.f32.mrf.mxu0
    %6700 = vdwg.mxu0
    %v6701 = vadd.f32 %v6013, %v6698
    %v6702 = vxor.u32 %v6701, 2147483648
    %v6703 = vmul.f32 %v6702, 1.442695
    %v6704 = vpow.pop %v6703
    %v6705 = vadd.f32 %v6704, 1.0
    %v6706 = vrcp.pop %v6705
    %v6707 = vmul.f32 1.0, %v6706
    %v6708 = vtanh.pop %v6701
    %v6709 = vmul.f32 %v6707, %v6619
    %6711 = vrot.lane.b32.xlu0 %v6708, 64
    %v6712 = vpop.permute.xlu0 %6711
    %v6714 = vmul.f32 %v6707, %v6712
    %6716 = vrot.lane.b32.xlu0 %v6714, 32
    %v6717 = vpop.permute.xlu0 %6716
    %v6719 = vadd.f32 %v6709, %v6717
    %v6720 = vtanh.pop %v6719
    %6722 = vrot.lane.b32.xlu0 %v6720, 64
    %v6723 = vpop.permute.xlu0 %6722
    %v6725 = vmul.f32 %v6707, %v6723
    %6727 = vrot.lane.b32.xlu0 %v6725, 32
    %v6728 = vpop.permute.xlu0 %6727
    %v6729 = vsel %vm716, %v6728, 0
    %6731 = vmatprep.subr.mxu0 0.0
    %6732 = vmatpush1.msra.mxu0 0.0
    %6733 = vmatprep.subr.mxu0 0.0
    %6734 = vmatpush1.msra.mxu0 0.0
    %6735 = vmatprep.subr.mxu0 0.0
    %6736 = vmatpush1.msra.mxu0 0.0
    %6737 = vmatprep.subr.mxu0 0.0
    %6738 = vmatpush1.msra.mxu0 0.0
    %6739 = vmatprep.subr.mxu0 0.0
    %6740 = vmatpush1.msra.mxu0 0.0
    %6741 = vmatprep.subr.mxu0 0.0
    %6742 = vmatpush1.msra.mxu0 0.0
    %6743 = vmatprep.subr.mxu0 0.0
    %6744 = vmatpush1.msra.mxu0 0.0
    %6745 = vmatprep.subr.mxu0 0.0
    %6746 = vmatpush1.msra.mxu0 0.0
    %6747 = vmatprep.subr.mxu0 0.0
    %6748 = vmatpush1.msra.mxu0 0.0
    %6749 = vmatprep.subr.mxu0 0.0
    %6750 = vmatpush1.msra.mxu0 0.0
    %6751 = vmatprep.subr.mxu0 0.0
    %6752 = vmatpush1.msra.mxu0 0.0
    %6753 = vmatprep.subr.mxu0 0.0
    %6754 = vmatpush1.msra.mxu0 0.0
    %6755 = vmatprep.subr.mxu0 0.0
    %6756 = vmatpush1.msra.mxu0 %v5657
    %6757 = vmatprep.subr.mxu0 0.0
    %6758 = vmatpush1.msra.mxu0 %v5656
    %6759 = vmatprep.subr.mxu0 0.0
    %6760 = vmatpush1.msra.mxu0 %v5655
    %6761 = vmatprep.subr.mxu0 0.0
    %6762 = vmatpush1.msra.mxu0 %v5654
    %6763 = vmatprep.subr.mxu0 0.0
    %6764 = vmatpush2.msra.mxu0 0.0
    %6765 = vmatprep.subr.mxu0 0.0
    %6766 = vmatpush2.msra.mxu0 0.0
    %6767 = vmatprep.subr.mxu0 0.0
    %6768 = vmatpush2.msra.mxu0 0.0
    %6769 = vmatprep.subr.mxu0 0.0
    %6770 = vmatpush2.msra.mxu0 0.0
    %6771 = vmatprep.subr.mxu0 0.0
    %6772 = vmatpush2.msra.mxu0 0.0
    %6773 = vmatprep.subr.mxu0 0.0
    %6774 = vmatpush2.msra.mxu0 0.0
    %6775 = vmatprep.subr.mxu0 0.0
    %6776 = vmatpush2.msra.mxu0 0.0
    %6777 = vmatprep.subr.mxu0 0.0
    %6778 = vmatpush2.msra.mxu0 0.0
    %6779 = vmatprep.subr.mxu0 0.0
    %6780 = vmatpush2.msra.mxu0 0.0
    %6781 = vmatprep.subr.mxu0 0.0
    %6782 = vmatpush2.msra.mxu0 0.0
    %6783 = vmatprep.subr.mxu0 0.0
    %6784 = vmatpush2.msra.mxu0 0.0
    %6785 = vmatprep.subr.mxu0 0.0
    %6786 = vmatpush2.msra.mxu0 0.0
    %6787 = vmatprep.subr.mxu0 0.0
    %6788 = vmatpush2.msra.mxu0 0.0
    %6789 = vmatprep.subr.mxu0 0.0
    %6790 = vmatpush2.msra.mxu0 0.0
    %6791 = vmatprep.subr.mxu0 0.0
    %6792 = vmatpush2.msra.mxu0 0.0
    %6793 = vmatprep.subr.mxu0 0.0
    %6794 = vmatpush2.msra.mxu0 0.0
    %6795 = vmatprep.mubr.f32.mxu0 0.0
    %6796 = vmatmul.mubr.f32.gmra.mxu0 %v6729
    %v6797 = vpop.f32.mrf.mxu0
    %v6798 = vadd.f32 0.0, %v6797
    %v6799 = vpop.f32.mrf.mxu0
    %6800 = vdwg.mxu0
    %v6801 = vadd.f32 %v6083, %v6798
    %v6802 = vxor.u32 %v6801, 2147483648
    %v6803 = vmul.f32 %v6802, 1.442695
    %v6804 = vpow.pop %v6803
    %v6805 = vadd.f32 %v6804, 1.0
    %v6806 = vrcp.pop %v6805
    %v6807 = vmul.f32 1.0, %v6806
    %v6808 = vtanh.pop %v6801
    %v6809 = vmul.f32 %v6807, %v6719
    %6811 = vrot.lane.b32.xlu0 %v6808, 64
    %v6812 = vpop.permute.xlu0 %6811
    %v6814 = vmul.f32 %v6807, %v6812
    %6816 = vrot.lane.b32.xlu0 %v6814, 32
    %v6817 = vpop.permute.xlu0 %6816
    %v6819 = vadd.f32 %v6809, %v6817
    %v6820 = vtanh.pop %v6819
    %6822 = vrot.lane.b32.xlu0 %v6820, 64
    %v6823 = vpop.permute.xlu0 %6822
    %v6825 = vmul.f32 %v6807, %v6823
    %6827 = vrot.lane.b32.xlu0 %v6825, 32
    %v6828 = vpop.permute.xlu0 %6827
    %v6829 = vsel %vm716, %v6828, 0
    %6831 = vmatprep.subr.mxu0 0.0
    %6832 = vmatpush1.msra.mxu0 0.0
    %6833 = vmatprep.subr.mxu0 0.0
    %6834 = vmatpush1.msra.mxu0 0.0
    %6835 = vmatprep.subr.mxu0 0.0
    %6836 = vmatpush1.msra.mxu0 0.0
    %6837 = vmatprep.subr.mxu0 0.0
    %6838 = vmatpush1.msra.mxu0 0.0
    %6839 = vmatprep.subr.mxu0 0.0
    %6840 = vmatpush1.msra.mxu0 0.0
    %6841 = vmatprep.subr.mxu0 0.0
    %6842 = vmatpush1.msra.mxu0 0.0
    %6843 = vmatprep.subr.mxu0 0.0
    %6844 = vmatpush1.msra.mxu0 0.0
    %6845 = vmatprep.subr.mxu0 0.0
    %6846 = vmatpush1.msra.mxu0 0.0
    %6847 = vmatprep.subr.mxu0 0.0
    %6848 = vmatpush1.msra.mxu0 0.0
    %6849 = vmatprep.subr.mxu0 0.0
    %6850 = vmatpush1.msra.mxu0 0.0
    %6851 = vmatprep.subr.mxu0 0.0
    %6852 = vmatpush1.msra.mxu0 0.0
    %6853 = vmatprep.subr.mxu0 0.0
    %6854 = vmatpush1.msra.mxu0 0.0
    %6855 = vmatprep.subr.mxu0 0.0
    %6856 = vmatpush1.msra.mxu0 %v5657
    %6857 = vmatprep.subr.mxu0 0.0
    %6858 = vmatpush1.msra.mxu0 %v5656
    %6859 = vmatprep.subr.mxu0 0.0
    %6860 = vmatpush1.msra.mxu0 %v5655
    %6861 = vmatprep.subr.mxu0 0.0
    %6862 = vmatpush1.msra.mxu0 %v5654
    %6863 = vmatprep.subr.mxu0 0.0
    %6864 = vmatpush2.msra.mxu0 0.0
    %6865 = vmatprep.subr.mxu0 0.0
    %6866 = vmatpush2.msra.mxu0 0.0
    %6867 = vmatprep.subr.mxu0 0.0
    %6868 = vmatpush2.msra.mxu0 0.0
    %6869 = vmatprep.subr.mxu0 0.0
    %6870 = vmatpush2.msra.mxu0 0.0
    %6871 = vmatprep.subr.mxu0 0.0
    %6872 = vmatpush2.msra.mxu0 0.0
    %6873 = vmatprep.subr.mxu0 0.0
    %6874 = vmatpush2.msra.mxu0 0.0
    %6875 = vmatprep.subr.mxu0 0.0
    %6876 = vmatpush2.msra.mxu0 0.0
    %6877 = vmatprep.subr.mxu0 0.0
    %6878 = vmatpush2.msra.mxu0 0.0
    %6879 = vmatprep.subr.mxu0 0.0
    %6880 = vmatpush2.msra.mxu0 0.0
    %6881 = vmatprep.subr.mxu0 0.0
    %6882 = vmatpush2.msra.mxu0 0.0
    %6883 = vmatprep.subr.mxu0 0.0
    %6884 = vmatpush2.msra.mxu0 0.0
    %6885 = vmatprep.subr.mxu0 0.0
    %6886 = vmatpush2.msra.mxu0 0.0
    %6887 = vmatprep.subr.mxu0 0.0
    %6888 = vmatpush2.msra.mxu0 0.0
    %6889 = vmatprep.subr.mxu0 0.0
    %6890 = vmatpush2.msra.mxu0 0.0
    %6891 = vmatprep.subr.mxu0 0.0
    %6892 = vmatpush2.msra.mxu0 0.0
    %6893 = vmatprep.subr.mxu0 0.0
    %6894 = vmatpush2.msra.mxu0 0.0
    %6895 = vmatprep.mubr.f32.mxu0 0.0
    %6896 = vmatmul.mubr.f32.gmra.mxu0 %v6829
    %v6897 = vpop.f32.mrf.mxu0
    %v6898 = vadd.f32 0.0, %v6897
    %v6899 = vpop.f32.mrf.mxu0
    %6900 = vdwg.mxu0
    %v6901 = vadd.f32 %v6153, %v6898
    %v6902 = vxor.u32 %v6901, 2147483648
    %v6903 = vmul.f32 %v6902, 1.442695
    %v6904 = vpow.pop %v6903
    %v6905 = vadd.f32 %v6904, 1.0
    %v6906 = vrcp.pop %v6905
    %v6907 = vmul.f32 1.0, %v6906
    %v6908 = vtanh.pop %v6901
    %v6909 = vmul.f32 %v6907, %v6819
    %6911 = vrot.lane.b32.xlu0 %v6908, 64
    %v6912 = vpop.permute.xlu0 %6911
    %v6914 = vmul.f32 %v6907, %v6912
    %6916 = vrot.lane.b32.xlu0 %v6914, 32
    %v6917 = vpop.permute.xlu0 %6916
    %v6919 = vadd.f32 %v6909, %v6917
    %v6920 = vtanh.pop %v6919
    %6922 = vrot.lane.b32.xlu0 %v6920, 64
    %v6923 = vpop.permute.xlu0 %6922
    %v6925 = vmul.f32 %v6907, %v6923
    %6927 = vrot.lane.b32.xlu0 %v6925, 32
    %v6928 = vpop.permute.xlu0 %6927
    %v6929 = vsel %vm716, %v6928, 0
    %6931 = vmatprep.subr.mxu0 0.0
    %6932 = vmatpush1.msra.mxu0 0.0
    %6933 = vmatprep.subr.mxu0 0.0
    %6934 = vmatpush1.msra.mxu0 0.0
    %6935 = vmatprep.subr.mxu0 0.0
    %6936 = vmatpush1.msra.mxu0 0.0
    %6937 = vmatprep.subr.mxu0 0.0
    %6938 = vmatpush1.msra.mxu0 0.0
    %6939 = vmatprep.subr.mxu0 0.0
    %6940 = vmatpush1.msra.mxu0 0.0
    %6941 = vmatprep.subr.mxu0 0.0
    %6942 = vmatpush1.msra.mxu0 0.0
    %6943 = vmatprep.subr.mxu0 0.0
    %6944 = vmatpush1.msra.mxu0 0.0
    %6945 = vmatprep.subr.mxu0 0.0
    %6946 = vmatpush1.msra.mxu0 0.0
    %6947 = vmatprep.subr.mxu0 0.0
    %6948 = vmatpush1.msra.mxu0 0.0
    %6949 = vmatprep.subr.mxu0 0.0
    %6950 = vmatpush1.msra.mxu0 0.0
    %6951 = vmatprep.subr.mxu0 0.0
    %6952 = vmatpush1.msra.mxu0 0.0
    %6953 = vmatprep.subr.mxu0 0.0
    %6954 = vmatpush1.msra.mxu0 0.0
    %6955 = vmatprep.subr.mxu0 0.0
    %6956 = vmatpush1.msra.mxu0 %v5657
    %6957 = vmatprep.subr.mxu0 0.0
    %6958 = vmatpush1.msra.mxu0 %v5656
    %6959 = vmatprep.subr.mxu0 0.0
    %6960 = vmatpush1.msra.mxu0 %v5655
    %6961 = vmatprep.subr.mxu0 0.0
    %6962 = vmatpush1.msra.mxu0 %v5654
    %6963 = vmatprep.subr.mxu0 0.0
    %6964 = vmatpush2.msra.mxu0 0.0
    %6965 = vmatprep.subr.mxu0 0.0
    %6966 = vmatpush2.msra.mxu0 0.0
    %6967 = vmatprep.subr.mxu0 0.0
    %6968 = vmatpush2.msra.mxu0 0.0
    %6969 = vmatprep.subr.mxu0 0.0
    %6970 = vmatpush2.msra.mxu0 0.0
    %6971 = vmatprep.subr.mxu0 0.0
    %6972 = vmatpush2.msra.mxu0 0.0
    %6973 = vmatprep.subr.mxu0 0.0
    %6974 = vmatpush2.msra.mxu0 0.0
    %6975 = vmatprep.subr.mxu0 0.0
    %6976 = vmatpush2.msra.mxu0 0.0
    %6977 = vmatprep.subr.mxu0 0.0
    %6978 = vmatpush2.msra.mxu0 0.0
    %6979 = vmatprep.subr.mxu0 0.0
    %6980 = vmatpush2.msra.mxu0 0.0
    %6981 = vmatprep.subr.mxu0 0.0
    %6982 = vmatpush2.msra.mxu0 0.0
    %6983 = vmatprep.subr.mxu0 0.0
    %6984 = vmatpush2.msra.mxu0 0.0
    %6985 = vmatprep.subr.mxu0 0.0
    %6986 = vmatpush2.msra.mxu0 0.0
    %6987 = vmatprep.subr.mxu0 0.0
    %6988 = vmatpush2.msra.mxu0 0.0
    %6989 = vmatprep.subr.mxu0 0.0
    %6990 = vmatpush2.msra.mxu0 0.0
    %6991 = vmatprep.subr.mxu0 0.0
    %6992 = vmatpush2.msra.mxu0 0.0
    %6993 = vmatprep.subr.mxu0 0.0
    %6994 = vmatpush2.msra.mxu0 0.0
    %6995 = vmatprep.mubr.f32.mxu0 0.0
    %6996 = vmatmul.mubr.f32.gmra.mxu0 %v6929
    %v6997 = vpop.f32.mrf.mxu0
    %v6998 = vadd.f32 0.0, %v6997
    %v6999 = vpop.f32.mrf.mxu0
    %7000 = vdwg.mxu0
    %v7001 = vadd.f32 %v6228, %v6998
    %v7002 = vxor.u32 %v7001, 2147483648
    %v7003 = vmul.f32 %v7002, 1.442695
    %v7004 = vpow.pop %v7003
    %v7005 = vadd.f32 %v7004, 1.0
    %v7006 = vrcp.pop %v7005
    %v7007 = vmul.f32 1.0, %v7006
    %v7008 = vtanh.pop %v7001
    %v7009 = vmul.f32 %v7007, %v6919
    %7011 = vrot.lane.b32.xlu0 %v7008, 64
    %v7012 = vpop.permute.xlu0 %7011
    %v7014 = vmul.f32 %v7007, %v7012
    %7016 = vrot.lane.b32.xlu0 %v7014, 32
    %v7017 = vpop.permute.xlu0 %7016
    %v7019 = vadd.f32 %v7009, %v7017
    %v7020 = vtanh.pop %v7019
    %7022 = vrot.lane.b32.xlu0 %v7020, 64
    %v7023 = vpop.permute.xlu0 %7022
    %v7025 = vmul.f32 %v7007, %v7023
    %v7026 = vld [vmem:[#allocation10] sm:$0xff]
    %v7027 = vld [vmem:[#allocation10 + $0x8] sm:$0xff]
    %v7028 = vld [vmem:[#allocation10 + $0x10] sm:$0xff]
    %v7029 = vld [vmem:[#allocation10 + $0x18] sm:$0xff]
    %v7030 = vld [vmem:[%s6] sm:$0x1]
    %v7032 = vlaneseq
    %v7033 = vshrl.u32 %v7032, 7
    %v7034 = vsub.s32 0, %v7033
    %v7035 = vrot.slane %v7030, %v7034
    %7038 = vrot.lane.b32.xlu0 %v7025, 32
    %v7039 = vpop.permute.xlu0 %7038
    %v7040 = vsel %vm716, %v7039, 0
    %7042 = vmatprep.subr.mxu0 0.0
    %7043 = vmatpush1.msra.mxu0 0.0
    %7044 = vmatprep.subr.mxu0 0.0
    %7045 = vmatpush1.msra.mxu0 0.0
    %7046 = vmatprep.subr.mxu0 0.0
    %7047 = vmatpush1.msra.mxu0 0.0
    %7048 = vmatprep.subr.mxu0 0.0
    %7049 = vmatpush1.msra.mxu0 0.0
    %7050 = vmatprep.subr.mxu0 0.0
    %7051 = vmatpush1.msra.mxu0 0.0
    %7052 = vmatprep.subr.mxu0 0.0
    %7053 = vmatpush1.msra.mxu0 0.0
    %7054 = vmatprep.subr.mxu0 0.0
    %7055 = vmatpush1.msra.mxu0 0.0
    %7056 = vmatprep.subr.mxu0 0.0
    %7057 = vmatpush1.msra.mxu0 0.0
    %7058 = vmatprep.subr.mxu0 0.0
    %7059 = vmatpush1.msra.mxu0 0.0
    %7060 = vmatprep.subr.mxu0 0.0
    %7061 = vmatpush1.msra.mxu0 0.0
    %7062 = vmatprep.subr.mxu0 0.0
    %7063 = vmatpush1.msra.mxu0 0.0
    %7064 = vmatprep.subr.mxu0 0.0
    %7065 = vmatpush1.msra.mxu0 0.0
    %7066 = vmatprep.subr.mxu0 0.0
    %7067 = vmatpush1.msra.mxu0 %v7029
    %7068 = vmatprep.subr.mxu0 0.0
    %7069 = vmatpush1.msra.mxu0 %v7028
    %7070 = vmatprep.subr.mxu0 0.0
    %7071 = vmatpush1.msra.mxu0 %v7027
    %7072 = vmatprep.subr.mxu0 0.0
    %7073 = vmatpush1.msra.mxu0 %v7026
    %7074 = vmatprep.subr.mxu0 0.0
    %7075 = vmatpush2.msra.mxu0 0.0
    %7076 = vmatprep.subr.mxu0 0.0
    %7077 = vmatpush2.msra.mxu0 0.0
    %7078 = vmatprep.subr.mxu0 0.0
    %7079 = vmatpush2.msra.mxu0 0.0
    %7080 = vmatprep.subr.mxu0 0.0
    %7081 = vmatpush2.msra.mxu0 0.0
    %7082 = vmatprep.subr.mxu0 0.0
    %7083 = vmatpush2.msra.mxu0 0.0
    %7084 = vmatprep.subr.mxu0 0.0
    %7085 = vmatpush2.msra.mxu0 0.0
    %7086 = vmatprep.subr.mxu0 0.0
    %7087 = vmatpush2.msra.mxu0 0.0
    %7088 = vmatprep.subr.mxu0 0.0
    %7089 = vmatpush2.msra.mxu0 0.0
    %7090 = vmatprep.subr.mxu0 0.0
    %7091 = vmatpush2.msra.mxu0 0.0
    %7092 = vmatprep.subr.mxu0 0.0
    %7093 = vmatpush2.msra.mxu0 0.0
    %7094 = vmatprep.subr.mxu0 0.0
    %7095 = vmatpush2.msra.mxu0 0.0
    %7096 = vmatprep.subr.mxu0 0.0
    %7097 = vmatpush2.msra.mxu0 0.0
    %7098 = vmatprep.subr.mxu0 0.0
    %7099 = vmatpush2.msra.mxu0 0.0
    %7100 = vmatprep.subr.mxu0 0.0
    %7101 = vmatpush2.msra.mxu0 0.0
    %7102 = vmatprep.subr.mxu0 0.0
    %7103 = vmatpush2.msra.mxu0 0.0
    %7104 = vmatprep.subr.mxu0 0.0
    %7105 = vmatpush2.msra.mxu0 0.0
    %7106 = vmatprep.mubr.f32.mxu0 0.0
    %7107 = vmatmul.mubr.f32.gmra.mxu0 %v7040
    %v7108 = vpop.f32.mrf.mxu0
    %v7109 = vadd.f32 %v7035, %v7108
    %v7110 = vpop.f32.mrf.mxu0
    %7111 = vdwg.mxu0
    %7112 = vst [vmem:[#allocation11] sm:$0x3] %v7109
    // Predicated region
    $region50: #{tpu_custom_call.1} parent=1 // pred_check
      _
    $region51: #{tpu_custom_call.1} parent=1 // pred_check_branch
      %7114 = sbr.rel (0) target = $region53
    $region52: #{tpu_custom_call.1} parent=1 // pred_region
      %s7116 = ssub.s32 32, 32
      %7117 = vsyncadd [#allocation4], %s7116
      %s7119 = sshll.u32 [#allocation11], 4
      %s7120 = int_to_ptr.vmem [resolvable:$true] %s7119
      %7122 = dma.vmem_to_hbm [thread:$0]  %s7120, 32, %s7, [#allocation4]
    $region53: #{tpu_custom_call.1} parent=1 // pred_fallthru
      _
    // Predicated region
    $region54: #{tpu_custom_call.1} parent=1 // pred_check
      _
    $region55: #{tpu_custom_call.1} parent=1 // pred_check_branch
      %7124 = sbr.rel (0) target = $region57
    $region56: #{tpu_custom_call.1} parent=1 // pred_region
      %7125 = dma.done [#allocation4], 32
    $region57: #{tpu_custom_call.1} parent=1 // pred_fallthru
      _
    %7126 = vsyncpa [#allocation3], 1
    %7127 = vsyncpa [#allocation6], 1
    %7128 = vsyncpa [#allocation9], 1
    %7129 = vsyncpa [#allocation4], 1

</llo_original>
